<compile_context>
chip_gen: v7x
topology: tpu7x:2x2x1
jax: 0.10.0
libtpu: 0.0.40
codegen_flags: <defaults>
</compile_context>

<pallas_src>
import jax
import jax.numpy as jnp
import numpy as np
from jax.experimental import pallas as pl
from jax.experimental.pallas import tpu as pltpu

C = 16          # image_channels (module default)
ZDIM = 2        # self.z_dimension
BN_EPS = 1e-5
LEAKY_SLOPE = 0.2

_VMEM = pl.BlockSpec(memory_space=pltpu.MemorySpace.VMEM)


# ----------------------------------------------------------------------------
# Fused Pallas kernel: entire VAE5 forward
# ----------------------------------------------------------------------------
def vae5_kernel(x_ref, enc_w_ref, enc_g_ref, enc_beta_ref, red_ref, bcast_ref,
                enc1_w_ref, enc1_b_ref, enc2_w_ref, enc2_b_ref, eps_ref,
                dec3_w_ref, dec3_b_ref, dec_w_ref, dec_b_ref,
                out_ref, mean_ref, logstd_ref, pad_ref):
    # x_ref       : (H*N, W*C)      lane-dense activations, row = h*N + n,
    #                               lane = w*C + c
    # enc_w_ref   : (4, 3, W*C, W*C) banded encoder conv weights (dx folded in)
    # enc_g_ref   : (4, 1, C)        BatchNorm gamma
    # enc_beta_ref: (4, 1, C)        BatchNorm beta
    # red_ref     : (W*C, C)         per-(w,c) -> per-channel summing matrix
    # bcast_ref   : (C, W*C)         per-channel -> per-(w,c) broadcast matrix
    # enc1_w_ref  : (W*C, W*Z) ; enc1_b_ref : (1, W*Z)   (block-diag 1x1 conv)
    # enc2_w_ref  : (W*C, W*Z) ; enc2_b_ref : (1, W*Z)
    # eps_ref     : (H*N, W*Z)       reparameterization noise
    # dec3_w_ref  : (W*Z, W*C) ; dec3_b_ref : (1, W*C)
    # dec_w_ref   : (4, 3, W*C, W*C) banded decoder (ConvTranspose) weights
    # dec_b_ref   : (4, 1, W*C)      pre-tiled decoder biases
    # out_ref     : (H*N, W*C) ; mean_ref / logstd_ref : (H*N, W*Z)
    # pad_ref     : ((H+2)*N, W*C)   VMEM scratch with a zero ROW halo only
    HN, WC = x_ref.shape
    N = (pad_ref.shape[0] - HN) // 2      # one N-row halo group top + bottom
    Cc = red_ref.shape[1]
    W = WC // Cc
    inv_m = 1.0 / (HN * W)                # 1 / (N*H*W), BN denominator

    # Zero ONLY the row-halo strips once; the interior is rewritten per layer.
    # (Column zero-padding is folded into the banded weights -> no column halo.)
    pad_ref[0:N, :] = jnp.zeros((N, WC), jnp.float32)
    pad_ref[HN + N:HN + 2 * N, :] = jnp.zeros((N, WC), jnp.float32)

    def conv3x3(feat, w_ref, l):
        # 3x3 "same" conv = three MXU matmuls on row-shifted slabs of the
        # padded scratch against banded (W*C, W*C) weights (one per dy).
        pad_ref[N:N + HN, :] = feat       # full-lane-width interior store
        acc = jnp.zeros((HN, WC), jnp.float32)
        for dy in range(3):
            acc = acc + jnp.dot(pad_ref[dy * N:dy * N + HN, :], w_ref[l, dy],
                                preferred_element_type=jnp.float32)
        return acc

    # -------- encoder: 4 x (Conv3x3 -> BatchNorm(train stats) -> LeakyReLU) --
    # Conv biases are folded away (exactly cancelled by BN mean subtraction).
    feat = x_ref[...]
    for l in range(4):
        acc = conv3x3(feat, enc_w_ref, l)
        # Single-pass BN stats: per-(w,c) lane sums folded to per-channel.
        s1 = jnp.sum(acc, axis=0, keepdims=True)                  # (1, W*C)
        s2 = jnp.sum(acc * acc, axis=0, keepdims=True)            # (1, W*C)
        mu = jnp.dot(s1, red_ref[...], preferred_element_type=jnp.float32) * inv_m
        ex2 = jnp.dot(s2, red_ref[...], preferred_element_type=jnp.float32) * inv_m
        var = ex2 - mu * mu                                       # (1, C) biased
        scale_c = enc_g_ref[l] * jax.lax.rsqrt(var + BN_EPS)
        shift_c = enc_beta_ref[l] - mu * scale_c
        scale = jnp.dot(scale_c, bcast_ref[...], preferred_element_type=jnp.float32)
        shift = jnp.dot(shift_c, bcast_ref[...], preferred_element_type=jnp.float32)
        y = acc * scale + shift
        feat = jnp.where(y > 0, y, LEAKY_SLOPE * y)

    # -------- latent: encoder1/encoder2 (block-diag 1x1), reparam, decoder3 --
    mean = jnp.dot(feat, enc1_w_ref[...],
                   preferred_element_type=jnp.float32) + enc1_b_ref[...]
    logstd = jnp.dot(feat, enc2_w_ref[...],
                     preferred_element_type=jnp.float32) + enc2_b_ref[...]
    mean_ref[...] = mean
    logstd_ref[...] = logstd
    # noise_reparameterize: z = mean + eps * exp(logstd)   (exp(logstd), no 0.5)
    z = mean + eps_ref[...] * jnp.exp(logstd)
    feat = jnp.dot(z, dec3_w_ref[...],
                   preferred_element_type=jnp.float32) + dec3_b_ref[...]

    # -------- decoder: 4 x (ConvTranspose2d(3,1,1) == flipped Conv3x3 -> ReLU)
    for l in range(4):
        feat = jnp.maximum(conv3x3(feat, dec_w_ref, l) + dec_b_ref[l], 0.0)

    out_ref[...] = feat                                           # lane-dense


# ----------------------------------------------------------------------------
# pallas_call wrapper (single launch for the whole forward)
# ----------------------------------------------------------------------------
@jax.jit
def vae5_forward(prep, x_nchw, eps_hnwz):
    N, Cin, H, W = x_nchw.shape
    Z = eps_hnwz.shape[-1]
    # NCHW -> (H, N, W, C) -> (H*N, W*C) lane-dense 2-D view.
    x2d = jnp.transpose(x_nchw, (2, 0, 3, 1)).reshape(H * N, W * Cin)
    x2d = x2d.astype(jnp.float32)
    eps2d = eps_hnwz.reshape(H * N, W * Z).astype(jnp.float32)

    out2d, mean2d, logstd2d = pl.pallas_call(
        vae5_kernel,
        out_shape=(
            jax.ShapeDtypeStruct((H * N, W * Cin), jnp.float32),
            jax.ShapeDtypeStruct((H * N, W * Z), jnp.float32),
            jax.ShapeDtypeStruct((H * N, W * Z), jnp.float32),
        ),
        in_specs=[_VMEM] * 15,
        out_specs=(_VMEM, _VMEM, _VMEM),
        scratch_shapes=[pltpu.VMEM(((H + 2) * N, W * Cin), jnp.float32)],
        compiler_params=pltpu.CompilerParams(vmem_limit_bytes=64 * 1024 * 1024),
    )(x2d, prep["enc_w"], prep["enc_gamma"], prep["enc_beta"],
      prep["red"], prep["bcast"],
      prep["enc1_w"], prep["enc1_b"], prep["enc2_w"], prep["enc2_b"], eps2d,
      prep["dec3_w"], prep["dec3_b"], prep["dec_w"], prep["dec_b"])

    def to_nchw(t2d, c):
        return jnp.transpose(t2d.reshape(H, N, W, c), (1, 3, 0, 2))

    return to_nchw(out2d, Cin), to_nchw(mean2d, Z), to_nchw(logstd2d, Z)


# ----------------------------------------------------------------------------
# Parameters (deterministic synthetic init; shapes per VAE5.__init__)
# ----------------------------------------------------------------------------
def init_params(key, c=C, zdim=ZDIM):
    ks = iter(jax.random.split(key, 32))
    params = {}
    enc = []
    for _ in range(4):
        enc.append(dict(
            w=0.1 * jax.random.normal(next(ks), (3, 3, c, c), jnp.float32),   # HWIO
            b=0.05 * jax.random.normal(next(ks), (1, c), jnp.float32),        # cancelled by BN
            gamma=1.0 + 0.1 * jax.random.normal(next(ks), (1, c), jnp.float32),
            beta=0.05 * jax.random.normal(next(ks), (1, c), jnp.float32),
        ))
    params["encoder"] = enc
    params["enc1_w"] = 0.1 * jax.random.normal(next(ks), (c, zdim), jnp.float32)
    params["enc1_b"] = 0.05 * jax.random.normal(next(ks), (1, zdim), jnp.float32)
    params["enc2_w"] = 0.1 * jax.random.normal(next(ks), (c, zdim), jnp.float32)
    params["enc2_b"] = 0.05 * jax.random.normal(next(ks), (1, zdim), jnp.float32)
    params["dec3_w"] = 0.1 * jax.random.normal(next(ks), (zdim, c), jnp.float32)
    params["dec3_b"] = 0.05 * jax.random.normal(next(ks), (1, c), jnp.float32)
    dec = []
    for _ in range(4):
        dec.append(dict(
            # PyTorch ConvTranspose2d weight layout: (Cin, Cout, kH, kW)
            wt=0.1 * jax.random.normal(next(ks), (c, c, 3, 3), jnp.float32),
            b=0.05 * jax.random.normal(next(ks), (1, c), jnp.float32),
        ))
    params["decoder"] = dec
    return params


def _convtranspose_as_conv_weight(wt):
    # ConvTranspose2d(k=3, s=1, p=1) == same-padding Conv2d with a spatially
    # flipped kernel and swapped in/out channels -> (kH, kW, Cin, Cout).
    return jnp.flip(wt, axis=(2, 3)).transpose(2, 3, 0, 1)


def _conv_banded_dx(w_hwio, W):
    # (3, 3, Cin, Cout) HWIO "same" conv kernel -> (3, W*Cin, W*Cout):
    # dy-indexed banded matrices with the dx taps and the zero column padding
    # folded in, so a 3x3 conv becomes three (HN, W*Cin) x (W*Cin, W*Cout)
    # MXU matmuls on row-shifted slabs.
    kh, kw, cin, cout = w_hwio.shape
    out = np.zeros((3, W * cin, W * cout), np.float32)
    for dy in range(3):
        for dx in range(3):
            for w in range(W):
                u = w + dx - 1
                if 0 <= u < W:
                    out[dy, u * cin:(u + 1) * cin, w * cout:(w + 1) * cout] = w_hwio[dy, dx]
    return out


def _blockdiag(w_io, W):
    # (Cin, Cout) 1x1 conv -> block-diagonal (W*Cin, W*Cout) for the lane-dense
    # (H*N, W*C) activation layout.
    cin, cout = w_io.shape
    out = np.zeros((W * cin, W * cout), np.float32)
    for w in range(W):
        out[w * cin:(w + 1) * cin, w * cout:(w + 1) * cout] = w_io
    return out


def prepare_params(params, W):
    # One-time (hoisted) preprocessing: banded/block-diag weight folding,
    # bias pre-tiling, BN-cancelled bias removal, reduction matrices.
    c = params["enc1_w"].shape[0]
    enc_w = np.stack([_conv_banded_dx(np.asarray(l["w"]), W)
                      for l in params["encoder"]])
    enc_gamma = np.stack([np.asarray(l["gamma"]) for l in params["encoder"]])
    enc_beta = np.stack([np.asarray(l["beta"]) for l in params["encoder"]])
    dec_w = np.stack([
        _conv_banded_dx(np.asarray(_convtranspose_as_conv_weight(l["wt"])), W)
        for l in params["decoder"]])
    dec_b = np.stack([np.tile(np.asarray(l["b"]), (1, W))
                      for l in params["decoder"]])                 # (4, 1, W*C)
    eye = np.eye(c, dtype=np.float32)
    return dict(
        enc_w=jnp.asarray(enc_w),
        enc_gamma=jnp.asarray(enc_gamma.astype(np.float32)),
        enc_beta=jnp.asarray(enc_beta.astype(np.float32)),
        red=jnp.asarray(np.tile(eye, (W, 1))),                     # (W*C, C)
        bcast=jnp.asarray(np.tile(eye, (1, W))),                   # (C, W*C)
        enc1_w=jnp.asarray(_blockdiag(np.asarray(params["enc1_w"]), W)),
        enc1_b=jnp.asarray(np.tile(np.asarray(params["enc1_b"]), (1, W))),
        enc2_w=jnp.asarray(_blockdiag(np.asarray(params["enc2_w"]), W)),
        enc2_b=jnp.asarray(np.tile(np.asarray(params["enc2_b"]), (1, W))),
        dec3_w=jnp.asarray(_blockdiag(np.asarray(params["dec3_w"]), W)),
        dec3_b=jnp.asarray(np.tile(np.asarray(params["dec3_b"]), (1, W))),
        dec_w=jnp.asarray(dec_w), dec_b=jnp.asarray(dec_b))


# ----------------------------------------------------------------------------
# Pure-JAX reference (PyTorch-faithful math, including the BN-cancelled biases)
# ----------------------------------------------------------------------------
def _conv_nhwc_ref(x, w, b):
    out = jax.lax.conv_general_dilated(
        x, w, window_strides=(1, 1), padding="SAME",
        dimension_numbers=("NHWC", "HWIO", "NHWC"))
    return out + b.reshape(1, 1, 1, -1)


def vae5_reference(params, x_nchw, eps_hnwz):
    N, Cin, H, W = x_nchw.shape
    Z = eps_hnwz.shape[-1]
    x = jnp.transpose(x_nchw, (0, 2, 3, 1)).astype(jnp.float32)
    feats = x
    for layer in params["encoder"]:
        y = _conv_nhwc_ref(feats, layer["w"], layer["b"])
        mu = jnp.mean(y, axis=(0, 1, 2), keepdims=True)
        var = jnp.mean((y - mu) ** 2, axis=(0, 1, 2), keepdims=True)
        y = (y - mu) * jax.lax.rsqrt(var + BN_EPS)
        y = y * layer["gamma"].reshape(1, 1, 1, -1) + layer["beta"].reshape(1, 1, 1, -1)
        feats = jnp.where(y > 0, y, LEAKY_SLOPE * y)
    f2 = feats.reshape(N * H * W, Cin)
    mean = f2 @ params["enc1_w"] + params["enc1_b"]
    logstd = f2 @ params["enc2_w"] + params["enc2_b"]
    eps2d = jnp.transpose(eps_hnwz, (1, 0, 2, 3)).reshape(N * H * W, Z)
    z = mean + eps2d * jnp.exp(logstd)
    out3 = (z @ params["dec3_w"] + params["dec3_b"]).reshape(N, H, W, Cin)
    for layer in params["decoder"]:
        w_conv = _convtranspose_as_conv_weight(layer["wt"])
        out3 = jnp.maximum(_conv_nhwc_ref(out3, w_conv, layer["b"]), 0.0)
    to_nchw = lambda t: jnp.transpose(t, (0, 3, 1, 2))
    return (to_nchw(out3),
            to_nchw(mean.reshape(N, H, W, Z)),
            to_nchw(logstd.reshape(N, H, W, Z)))


if __name__ == "__main__":
    key = jax.random.PRNGKey(0)
    pkey, xkey, nkey = jax.random.split(key, 3)
    params = init_params(pkey)

    N, H, W = 2, 16, 16
    prep = prepare_params(params, W)        # hoisted weight preprocessing

    x = jax.random.normal(xkey, (N, C, H, W), jnp.float32)   # NCHW, like PyTorch
    # TODO(synk): torch.randn(...).cuda() is non-deterministic CUDA noise; we
    # feed a fixed jax.random draw (z = mean + eps * exp(logstd) preserved).
    eps = jax.random.normal(nkey, (H, N, W, ZDIM), jnp.float32)

    out3, mean, logstd = vae5_forward(prep, x, eps)
    jax.block_until_ready((out3, mean, logstd))

    assert out3.shape == (N, C, H, W)
    assert mean.shape == (N, ZDIM, H, W) and logstd.shape == (N, ZDIM, H, W)

    ref_out3, ref_mean, ref_logstd = vae5_reference(params, x, eps)
    for got, ref in ((out3, ref_out3), (mean, ref_mean), (logstd, ref_logstd)):
        err = float(jnp.max(jnp.abs(got - ref)))
        assert jnp.allclose(got, ref, atol=5e-3, rtol=5e-3), err

    print("KERNEL_OK")
</pallas_src>

<mosaic_0001>
module attributes {stable_mosaic.version = 11 : i64} {
  func.func @vae5_kernel(%arg0: memref<32x256xf32, #tpu.memory_space<vmem>>, %arg1: memref<4x3x256x256xf32, #tpu.memory_space<vmem>>, %arg2: memref<4x1x16xf32, #tpu.memory_space<vmem>>, %arg3: memref<4x1x16xf32, #tpu.memory_space<vmem>>, %arg4: memref<256x16xf32, #tpu.memory_space<vmem>>, %arg5: memref<16x256xf32, #tpu.memory_space<vmem>>, %arg6: memref<256x32xf32, #tpu.memory_space<vmem>>, %arg7: memref<1x32xf32, #tpu.memory_space<vmem>>, %arg8: memref<256x32xf32, #tpu.memory_space<vmem>>, %arg9: memref<1x32xf32, #tpu.memory_space<vmem>>, %arg10: memref<32x32xf32, #tpu.memory_space<vmem>>, %arg11: memref<32x256xf32, #tpu.memory_space<vmem>>, %arg12: memref<1x256xf32, #tpu.memory_space<vmem>>, %arg13: memref<4x3x256x256xf32, #tpu.memory_space<vmem>>, %arg14: memref<4x1x256xf32, #tpu.memory_space<vmem>>, %arg15: memref<32x256xf32, #tpu.memory_space<vmem>>, %arg16: memref<32x32xf32, #tpu.memory_space<vmem>>, %arg17: memref<32x32xf32, #tpu.memory_space<vmem>>, %arg18: memref<36x256xf32, #tpu.memory_space<vmem>>) attributes {dimension_semantics = [], scalar_prefetch = 0 : i64, scratch_operands = 1 : i64, tpu.core_type = #tpu.core_type<tc>} {
    %cst = arith.constant 0.000000e+00 : f32
    %0 = vector.broadcast %cst : f32 to vector<2x256xf32>
    %c0 = arith.constant 0 : index
    %c0_0 = arith.constant 0 : index
    %1 = vector.load %arg18[%c0, %c0_0] : memref<36x256xf32, #tpu.memory_space<vmem>>, vector<2x256xf32>
    tpu.vector_store %arg18[%c0, %c0_0], %0 {strides = array<i32>} : memref<36x256xf32, #tpu.memory_space<vmem>>, vector<2x256xf32>,
    %cst_1 = arith.constant 0.000000e+00 : f32
    %2 = vector.broadcast %cst_1 : f32 to vector<2x256xf32>
    %c34 = arith.constant 34 : index
    %c0_2 = arith.constant 0 : index
    %3 = vector.load %arg18[%c34, %c0_2] : memref<36x256xf32, #tpu.memory_space<vmem>>, vector<2x256xf32>
    tpu.vector_store %arg18[%c34, %c0_2], %2 {strides = array<i32>} : memref<36x256xf32, #tpu.memory_space<vmem>>, vector<2x256xf32>,
    %c0_3 = arith.constant 0 : index
    %c0_4 = arith.constant 0 : index
    %4 = vector.load %arg0[%c0_3, %c0_4] : memref<32x256xf32, #tpu.memory_space<vmem>>, vector<32x256xf32>
    %c2 = arith.constant 2 : index
    %c0_5 = arith.constant 0 : index
    %5 = vector.load %arg18[%c2, %c0_5] : memref<36x256xf32, #tpu.memory_space<vmem>>, vector<32x256xf32>
    tpu.vector_store %arg18[%c2, %c0_5], %4 {strides = array<i32>} : memref<36x256xf32, #tpu.memory_space<vmem>>, vector<32x256xf32>,
    %cst_6 = arith.constant 0.000000e+00 : f32
    %6 = vector.broadcast %cst_6 : f32 to vector<32x256xf32>
    %c0_7 = arith.constant 0 : index
    %c0_8 = arith.constant 0 : index
    %7 = vector.load %arg18[%c0_7, %c0_8] : memref<36x256xf32, #tpu.memory_space<vmem>>, vector<32x256xf32>
    %c0_9 = arith.constant 0 : index
    %c0_10 = arith.constant 0 : index
    %c0_11 = arith.constant 0 : index
    %c0_12 = arith.constant 0 : index
    %8 = vector.load %arg1[%c0_9, %c0_10, %c0_11, %c0_12] : memref<4x3x256x256xf32, #tpu.memory_space<vmem>>, vector<1x1x256x256xf32>
    %9 = vector.shape_cast %8 : vector<1x1x256x256xf32> to vector<256x256xf32>
    %cst_13 = arith.constant dense<0.000000e+00> : vector<32x256xf32>
    %10 = tpu.matmul %7, %9, %cst_13 {dimension_numbers = #tpu.dot_dimension_numbers<[1], [0], [0], [1], [0, 0, 1, 1], [], []>} : vector<32x256xf32>, vector<256x256xf32>, vector<32x256xf32> -> vector<32x256xf32>
    %11 = arith.addf %6, %10 : vector<32x256xf32>
    %c2_14 = arith.constant 2 : index
    %c0_15 = arith.constant 0 : index
    %12 = vector.load %arg18[%c2_14, %c0_15] : memref<36x256xf32, #tpu.memory_space<vmem>>, vector<32x256xf32>
    %c0_16 = arith.constant 0 : index
    %c1 = arith.constant 1 : index
    %c0_17 = arith.constant 0 : index
    %c0_18 = arith.constant 0 : index
    %13 = vector.load %arg1[%c0_16, %c1, %c0_17, %c0_18] : memref<4x3x256x256xf32, #tpu.memory_space<vmem>>, vector<1x1x256x256xf32>
    %14 = vector.shape_cast %13 : vector<1x1x256x256xf32> to vector<256x256xf32>
    %cst_19 = arith.constant dense<0.000000e+00> : vector<32x256xf32>
    %15 = tpu.matmul %12, %14, %cst_19 {dimension_numbers = #tpu.dot_dimension_numbers<[1], [0], [0], [1], [0, 0, 1, 1], [], []>} : vector<32x256xf32>, vector<256x256xf32>, vector<32x256xf32> -> vector<32x256xf32>
    %16 = arith.addf %11, %15 : vector<32x256xf32>
    %c4 = arith.constant 4 : index
    %c0_20 = arith.constant 0 : index
    %17 = vector.load %arg18[%c4, %c0_20] : memref<36x256xf32, #tpu.memory_space<vmem>>, vector<32x256xf32>
    %c0_21 = arith.constant 0 : index
    %c2_22 = arith.constant 2 : index
    %c0_23 = arith.constant 0 : index
    %c0_24 = arith.constant 0 : index
    %18 = vector.load %arg1[%c0_21, %c2_22, %c0_23, %c0_24] : memref<4x3x256x256xf32, #tpu.memory_space<vmem>>, vector<1x1x256x256xf32>
    %19 = vector.shape_cast %18 : vector<1x1x256x256xf32> to vector<256x256xf32>
    %cst_25 = arith.constant dense<0.000000e+00> : vector<32x256xf32>
    %20 = tpu.matmul %17, %19, %cst_25 {dimension_numbers = #tpu.dot_dimension_numbers<[1], [0], [0], [1], [0, 0, 1, 1], [], []>} : vector<32x256xf32>, vector<256x256xf32>, vector<32x256xf32> -> vector<32x256xf32>
    %21 = arith.addf %16, %20 : vector<32x256xf32>
    %cst_26 = arith.constant dense<0.000000e+00> : vector<256xf32>
    %22 = vector.multi_reduction <add>, %21, %cst_26 [0] : vector<32x256xf32> to vector<256xf32>
    %23 = vector.shape_cast %22 : vector<256xf32> to vector<1x256xf32>
    %24 = arith.mulf %21, %21 : vector<32x256xf32>
    %cst_27 = arith.constant dense<0.000000e+00> : vector<256xf32>
    %25 = vector.multi_reduction <add>, %24, %cst_27 [0] : vector<32x256xf32> to vector<256xf32>
    %26 = vector.shape_cast %25 : vector<256xf32> to vector<1x256xf32>
    %c0_28 = arith.constant 0 : index
    %c0_29 = arith.constant 0 : index
    %27 = vector.load %arg4[%c0_28, %c0_29] : memref<256x16xf32, #tpu.memory_space<vmem>>, vector<256x16xf32>
    %cst_30 = arith.constant dense<0.000000e+00> : vector<1x16xf32>
    %28 = tpu.matmul %23, %27, %cst_30 {dimension_numbers = #tpu.dot_dimension_numbers<[1], [0], [0], [1], [0, 0, 1, 1], [], []>} : vector<1x256xf32>, vector<256x16xf32>, vector<1x16xf32> -> vector<1x16xf32>
    %cst_31 = arith.constant 0.001953125 : f32
    %29 = vector.broadcast %cst_31 : f32 to vector<1x16xf32>
    %30 = arith.mulf %28, %29 : vector<1x16xf32>
    %c0_32 = arith.constant 0 : index
    %c0_33 = arith.constant 0 : index
    %31 = vector.load %arg4[%c0_32, %c0_33] : memref<256x16xf32, #tpu.memory_space<vmem>>, vector<256x16xf32>
    %cst_34 = arith.constant dense<0.000000e+00> : vector<1x16xf32>
    %32 = tpu.matmul %26, %31, %cst_34 {dimension_numbers = #tpu.dot_dimension_numbers<[1], [0], [0], [1], [0, 0, 1, 1], [], []>} : vector<1x256xf32>, vector<256x16xf32>, vector<1x16xf32> -> vector<1x16xf32>
    %cst_35 = arith.constant 0.001953125 : f32
    %33 = vector.broadcast %cst_35 : f32 to vector<1x16xf32>
    %34 = arith.mulf %32, %33 : vector<1x16xf32>
    %35 = arith.mulf %30, %30 : vector<1x16xf32>
    %36 = arith.subf %34, %35 : vector<1x16xf32>
    %c0_36 = arith.constant 0 : index
    %c0_37 = arith.constant 0 : index
    %c0_38 = arith.constant 0 : index
    %37 = vector.load %arg2[%c0_36, %c0_37, %c0_38] : memref<4x1x16xf32, #tpu.memory_space<vmem>>, vector<1x1x16xf32>
    %38 = vector.shape_cast %37 : vector<1x1x16xf32> to vector<1x16xf32>
    %cst_39 = arith.constant 9.99999974E-6 : f32
    %39 = vector.broadcast %cst_39 : f32 to vector<1x16xf32>
    %40 = arith.addf %36, %39 : vector<1x16xf32>
    %41 = math.rsqrt %40 : vector<1x16xf32>
    %42 = arith.mulf %38, %41 : vector<1x16xf32>
    %c0_40 = arith.constant 0 : index
    %c0_41 = arith.constant 0 : index
    %c0_42 = arith.constant 0 : index
    %43 = vector.load %arg3[%c0_40, %c0_41, %c0_42] : memref<4x1x16xf32, #tpu.memory_space<vmem>>, vector<1x1x16xf32>
    %44 = vector.shape_cast %43 : vector<1x1x16xf32> to vector<1x16xf32>
    %45 = arith.mulf %30, %42 : vector<1x16xf32>
    %46 = arith.subf %44, %45 : vector<1x16xf32>
    %c0_43 = arith.constant 0 : index
    %c0_44 = arith.constant 0 : index
    %47 = vector.load %arg5[%c0_43, %c0_44] : memref<16x256xf32, #tpu.memory_space<vmem>>, vector<16x256xf32>
    %cst_45 = arith.constant dense<0.000000e+00> : vector<1x256xf32>
    %48 = tpu.matmul %42, %47, %cst_45 {dimension_numbers = #tpu.dot_dimension_numbers<[1], [0], [0], [1], [0, 0, 1, 1], [], []>} : vector<1x16xf32>, vector<16x256xf32>, vector<1x256xf32> -> vector<1x256xf32>
    %c0_46 = arith.constant 0 : index
    %c0_47 = arith.constant 0 : index
    %49 = vector.load %arg5[%c0_46, %c0_47] : memref<16x256xf32, #tpu.memory_space<vmem>>, vector<16x256xf32>
    %cst_48 = arith.constant dense<0.000000e+00> : vector<1x256xf32>
    %50 = tpu.matmul %46, %49, %cst_48 {dimension_numbers = #tpu.dot_dimension_numbers<[1], [0], [0], [1], [0, 0, 1, 1], [], []>} : vector<1x16xf32>, vector<16x256xf32>, vector<1x256xf32> -> vector<1x256xf32>
    %51 = vector.broadcast %48 : vector<1x256xf32> to vector<32x256xf32>
    %52 = arith.mulf %21, %51 : vector<32x256xf32>
    %53 = vector.broadcast %50 : vector<1x256xf32> to vector<32x256xf32>
    %54 = arith.addf %52, %53 : vector<32x256xf32>
    %cst_49 = arith.constant 0.000000e+00 : f32
    %55 = vector.broadcast %cst_49 : f32 to vector<32x256xf32>
    %56 = arith.cmpf ogt, %54, %55 : vector<32x256xf32>
    %cst_50 = arith.constant 2.000000e-01 : f32
    %57 = vector.broadcast %cst_50 : f32 to vector<32x256xf32>
    %58 = arith.mulf %57, %54 : vector<32x256xf32>
    %59 = arith.select %56, %54, %58 : vector<32x256xi1>, vector<32x256xf32>
    %c2_51 = arith.constant 2 : index
    %c0_52 = arith.constant 0 : index
    %60 = vector.load %arg18[%c2_51, %c0_52] : memref<36x256xf32, #tpu.memory_space<vmem>>, vector<32x256xf32>
    tpu.vector_store %arg18[%c2_51, %c0_52], %59 {strides = array<i32>} : memref<36x256xf32, #tpu.memory_space<vmem>>, vector<32x256xf32>,
    %cst_53 = arith.constant 0.000000e+00 : f32
    %61 = vector.broadcast %cst_53 : f32 to vector<32x256xf32>
    %c0_54 = arith.constant 0 : index
    %c0_55 = arith.constant 0 : index
    %62 = vector.load %arg18[%c0_54, %c0_55] : memref<36x256xf32, #tpu.memory_space<vmem>>, vector<32x256xf32>
    %c1_56 = arith.constant 1 : index
    %c0_57 = arith.constant 0 : index
    %c0_58 = arith.constant 0 : index
    %c0_59 = arith.constant 0 : index
    %63 = vector.load %arg1[%c1_56, %c0_57, %c0_58, %c0_59] : memref<4x3x256x256xf32, #tpu.memory_space<vmem>>, vector<1x1x256x256xf32>
    %64 = vector.shape_cast %63 : vector<1x1x256x256xf32> to vector<256x256xf32>
    %cst_60 = arith.constant dense<0.000000e+00> : vector<32x256xf32>
    %65 = tpu.matmul %62, %64, %cst_60 {dimension_numbers = #tpu.dot_dimension_numbers<[1], [0], [0], [1], [0, 0, 1, 1], [], []>} : vector<32x256xf32>, vector<256x256xf32>, vector<32x256xf32> -> vector<32x256xf32>
    %66 = arith.addf %61, %65 : vector<32x256xf32>
    %c2_61 = arith.constant 2 : index
    %c0_62 = arith.constant 0 : index
    %67 = vector.load %arg18[%c2_61, %c0_62] : memref<36x256xf32, #tpu.memory_space<vmem>>, vector<32x256xf32>
    %c1_63 = arith.constant 1 : index
    %c1_64 = arith.constant 1 : index
    %c0_65 = arith.constant 0 : index
    %c0_66 = arith.constant 0 : index
    %68 = vector.load %arg1[%c1_63, %c1_64, %c0_65, %c0_66] : memref<4x3x256x256xf32, #tpu.memory_space<vmem>>, vector<1x1x256x256xf32>
    %69 = vector.shape_cast %68 : vector<1x1x256x256xf32> to vector<256x256xf32>
    %cst_67 = arith.constant dense<0.000000e+00> : vector<32x256xf32>
    %70 = tpu.matmul %67, %69, %cst_67 {dimension_numbers = #tpu.dot_dimension_numbers<[1], [0], [0], [1], [0, 0, 1, 1], [], []>} : vector<32x256xf32>, vector<256x256xf32>, vector<32x256xf32> -> vector<32x256xf32>
    %71 = arith.addf %66, %70 : vector<32x256xf32>
    %c4_68 = arith.constant 4 : index
    %c0_69 = arith.constant 0 : index
    %72 = vector.load %arg18[%c4_68, %c0_69] : memref<36x256xf32, #tpu.memory_space<vmem>>, vector<32x256xf32>
    %c1_70 = arith.constant 1 : index
    %c2_71 = arith.constant 2 : index
    %c0_72 = arith.constant 0 : index
    %c0_73 = arith.constant 0 : index
    %73 = vector.load %arg1[%c1_70, %c2_71, %c0_72, %c0_73] : memref<4x3x256x256xf32, #tpu.memory_space<vmem>>, vector<1x1x256x256xf32>
    %74 = vector.shape_cast %73 : vector<1x1x256x256xf32> to vector<256x256xf32>
    %cst_74 = arith.constant dense<0.000000e+00> : vector<32x256xf32>
    %75 = tpu.matmul %72, %74, %cst_74 {dimension_numbers = #tpu.dot_dimension_numbers<[1], [0], [0], [1], [0, 0, 1, 1], [], []>} : vector<32x256xf32>, vector<256x256xf32>, vector<32x256xf32> -> vector<32x256xf32>
    %76 = arith.addf %71, %75 : vector<32x256xf32>
    %cst_75 = arith.constant dense<0.000000e+00> : vector<256xf32>
    %77 = vector.multi_reduction <add>, %76, %cst_75 [0] : vector<32x256xf32> to vector<256xf32>
    %78 = vector.shape_cast %77 : vector<256xf32> to vector<1x256xf32>
    %79 = arith.mulf %76, %76 : vector<32x256xf32>
    %cst_76 = arith.constant dense<0.000000e+00> : vector<256xf32>
    %80 = vector.multi_reduction <add>, %79, %cst_76 [0] : vector<32x256xf32> to vector<256xf32>
    %81 = vector.shape_cast %80 : vector<256xf32> to vector<1x256xf32>
    %c0_77 = arith.constant 0 : index
    %c0_78 = arith.constant 0 : index
    %82 = vector.load %arg4[%c0_77, %c0_78] : memref<256x16xf32, #tpu.memory_space<vmem>>, vector<256x16xf32>
    %cst_79 = arith.constant dense<0.000000e+00> : vector<1x16xf32>
    %83 = tpu.matmul %78, %82, %cst_79 {dimension_numbers = #tpu.dot_dimension_numbers<[1], [0], [0], [1], [0, 0, 1, 1], [], []>} : vector<1x256xf32>, vector<256x16xf32>, vector<1x16xf32> -> vector<1x16xf32>
    %cst_80 = arith.constant 0.001953125 : f32
    %84 = vector.broadcast %cst_80 : f32 to vector<1x16xf32>
    %85 = arith.mulf %83, %84 : vector<1x16xf32>
    %c0_81 = arith.constant 0 : index
    %c0_82 = arith.constant 0 : index
    %86 = vector.load %arg4[%c0_81, %c0_82] : memref<256x16xf32, #tpu.memory_space<vmem>>, vector<256x16xf32>
    %cst_83 = arith.constant dense<0.000000e+00> : vector<1x16xf32>
    %87 = tpu.matmul %81, %86, %cst_83 {dimension_numbers = #tpu.dot_dimension_numbers<[1], [0], [0], [1], [0, 0, 1, 1], [], []>} : vector<1x256xf32>, vector<256x16xf32>, vector<1x16xf32> -> vector<1x16xf32>
    %cst_84 = arith.constant 0.001953125 : f32
    %88 = vector.broadcast %cst_84 : f32 to vector<1x16xf32>
    %89 = arith.mulf %87, %88 : vector<1x16xf32>
    %90 = arith.mulf %85, %85 : vector<1x16xf32>
    %91 = arith.subf %89, %90 : vector<1x16xf32>
    %c1_85 = arith.constant 1 : index
    %c0_86 = arith.constant 0 : index
    %c0_87 = arith.constant 0 : index
    %92 = vector.load %arg2[%c1_85, %c0_86, %c0_87] : memref<4x1x16xf32, #tpu.memory_space<vmem>>, vector<1x1x16xf32>
    %93 = vector.shape_cast %92 : vector<1x1x16xf32> to vector<1x16xf32>
    %cst_88 = arith.constant 9.99999974E-6 : f32
    %94 = vector.broadcast %cst_88 : f32 to vector<1x16xf32>
    %95 = arith.addf %91, %94 : vector<1x16xf32>
    %96 = math.rsqrt %95 : vector<1x16xf32>
    %97 = arith.mulf %93, %96 : vector<1x16xf32>
    %c1_89 = arith.constant 1 : index
    %c0_90 = arith.constant 0 : index
    %c0_91 = arith.constant 0 : index
    %98 = vector.load %arg3[%c1_89, %c0_90, %c0_91] : memref<4x1x16xf32, #tpu.memory_space<vmem>>, vector<1x1x16xf32>
    %99 = vector.shape_cast %98 : vector<1x1x16xf32> to vector<1x16xf32>
    %100 = arith.mulf %85, %97 : vector<1x16xf32>
    %101 = arith.subf %99, %100 : vector<1x16xf32>
    %c0_92 = arith.constant 0 : index
    %c0_93 = arith.constant 0 : index
    %102 = vector.load %arg5[%c0_92, %c0_93] : memref<16x256xf32, #tpu.memory_space<vmem>>, vector<16x256xf32>
    %cst_94 = arith.constant dense<0.000000e+00> : vector<1x256xf32>
    %103 = tpu.matmul %97, %102, %cst_94 {dimension_numbers = #tpu.dot_dimension_numbers<[1], [0], [0], [1], [0, 0, 1, 1], [], []>} : vector<1x16xf32>, vector<16x256xf32>, vector<1x256xf32> -> vector<1x256xf32>
    %c0_95 = arith.constant 0 : index
    %c0_96 = arith.constant 0 : index
    %104 = vector.load %arg5[%c0_95, %c0_96] : memref<16x256xf32, #tpu.memory_space<vmem>>, vector<16x256xf32>
    %cst_97 = arith.constant dense<0.000000e+00> : vector<1x256xf32>
    %105 = tpu.matmul %101, %104, %cst_97 {dimension_numbers = #tpu.dot_dimension_numbers<[1], [0], [0], [1], [0, 0, 1, 1], [], []>} : vector<1x16xf32>, vector<16x256xf32>, vector<1x256xf32> -> vector<1x256xf32>
    %106 = vector.broadcast %103 : vector<1x256xf32> to vector<32x256xf32>
    %107 = arith.mulf %76, %106 : vector<32x256xf32>
    %108 = vector.broadcast %105 : vector<1x256xf32> to vector<32x256xf32>
    %109 = arith.addf %107, %108 : vector<32x256xf32>
    %cst_98 = arith.constant 0.000000e+00 : f32
    %110 = vector.broadcast %cst_98 : f32 to vector<32x256xf32>
    %111 = arith.cmpf ogt, %109, %110 : vector<32x256xf32>
    %cst_99 = arith.constant 2.000000e-01 : f32
    %112 = vector.broadcast %cst_99 : f32 to vector<32x256xf32>
    %113 = arith.mulf %112, %109 : vector<32x256xf32>
    %114 = arith.select %111, %109, %113 : vector<32x256xi1>, vector<32x256xf32>
    %c2_100 = arith.constant 2 : index
    %c0_101 = arith.constant 0 : index
    %115 = vector.load %arg18[%c2_100, %c0_101] : memref<36x256xf32, #tpu.memory_space<vmem>>, vector<32x256xf32>
    tpu.vector_store %arg18[%c2_100, %c0_101], %114 {strides = array<i32>} : memref<36x256xf32, #tpu.memory_space<vmem>>, vector<32x256xf32>,
    %cst_102 = arith.constant 0.000000e+00 : f32
    %116 = vector.broadcast %cst_102 : f32 to vector<32x256xf32>
    %c0_103 = arith.constant 0 : index
    %c0_104 = arith.constant 0 : index
    %117 = vector.load %arg18[%c0_103, %c0_104] : memref<36x256xf32, #tpu.memory_space<vmem>>, vector<32x256xf32>
    %c2_105 = arith.constant 2 : index
    %c0_106 = arith.constant 0 : index
    %c0_107 = arith.constant 0 : index
    %c0_108 = arith.constant 0 : index
    %118 = vector.load %arg1[%c2_105, %c0_106, %c0_107, %c0_108] : memref<4x3x256x256xf32, #tpu.memory_space<vmem>>, vector<1x1x256x256xf32>
    %119 = vector.shape_cast %118 : vector<1x1x256x256xf32> to vector<256x256xf32>
    %cst_109 = arith.constant dense<0.000000e+00> : vector<32x256xf32>
    %120 = tpu.matmul %117, %119, %cst_109 {dimension_numbers = #tpu.dot_dimension_numbers<[1], [0], [0], [1], [0, 0, 1, 1], [], []>} : vector<32x256xf32>, vector<256x256xf32>, vector<32x256xf32> -> vector<32x256xf32>
    %121 = arith.addf %116, %120 : vector<32x256xf32>
    %c2_110 = arith.constant 2 : index
    %c0_111 = arith.constant 0 : index
    %122 = vector.load %arg18[%c2_110, %c0_111] : memref<36x256xf32, #tpu.memory_space<vmem>>, vector<32x256xf32>
    %c2_112 = arith.constant 2 : index
    %c1_113 = arith.constant 1 : index
    %c0_114 = arith.constant 0 : index
    %c0_115 = arith.constant 0 : index
    %123 = vector.load %arg1[%c2_112, %c1_113, %c0_114, %c0_115] : memref<4x3x256x256xf32, #tpu.memory_space<vmem>>, vector<1x1x256x256xf32>
    %124 = vector.shape_cast %123 : vector<1x1x256x256xf32> to vector<256x256xf32>
    %cst_116 = arith.constant dense<0.000000e+00> : vector<32x256xf32>
    %125 = tpu.matmul %122, %124, %cst_116 {dimension_numbers = #tpu.dot_dimension_numbers<[1], [0], [0], [1], [0, 0, 1, 1], [], []>} : vector<32x256xf32>, vector<256x256xf32>, vector<32x256xf32> -> vector<32x256xf32>
    %126 = arith.addf %121, %125 : vector<32x256xf32>
    %c4_117 = arith.constant 4 : index
    %c0_118 = arith.constant 0 : index
    %127 = vector.load %arg18[%c4_117, %c0_118] : memref<36x256xf32, #tpu.memory_space<vmem>>, vector<32x256xf32>
    %c2_119 = arith.constant 2 : index
    %c2_120 = arith.constant 2 : index
    %c0_121 = arith.constant 0 : index
    %c0_122 = arith.constant 0 : index
    %128 = vector.load %arg1[%c2_119, %c2_120, %c0_121, %c0_122] : memref<4x3x256x256xf32, #tpu.memory_space<vmem>>, vector<1x1x256x256xf32>
    %129 = vector.shape_cast %128 : vector<1x1x256x256xf32> to vector<256x256xf32>
    %cst_123 = arith.constant dense<0.000000e+00> : vector<32x256xf32>
    %130 = tpu.matmul %127, %129, %cst_123 {dimension_numbers = #tpu.dot_dimension_numbers<[1], [0], [0], [1], [0, 0, 1, 1], [], []>} : vector<32x256xf32>, vector<256x256xf32>, vector<32x256xf32> -> vector<32x256xf32>
    %131 = arith.addf %126, %130 : vector<32x256xf32>
    %cst_124 = arith.constant dense<0.000000e+00> : vector<256xf32>
    %132 = vector.multi_reduction <add>, %131, %cst_124 [0] : vector<32x256xf32> to vector<256xf32>
    %133 = vector.shape_cast %132 : vector<256xf32> to vector<1x256xf32>
    %134 = arith.mulf %131, %131 : vector<32x256xf32>
    %cst_125 = arith.constant dense<0.000000e+00> : vector<256xf32>
    %135 = vector.multi_reduction <add>, %134, %cst_125 [0] : vector<32x256xf32> to vector<256xf32>
    %136 = vector.shape_cast %135 : vector<256xf32> to vector<1x256xf32>
    %c0_126 = arith.constant 0 : index
    %c0_127 = arith.constant 0 : index
    %137 = vector.load %arg4[%c0_126, %c0_127] : memref<256x16xf32, #tpu.memory_space<vmem>>, vector<256x16xf32>
    %cst_128 = arith.constant dense<0.000000e+00> : vector<1x16xf32>
    %138 = tpu.matmul %133, %137, %cst_128 {dimension_numbers = #tpu.dot_dimension_numbers<[1], [0], [0], [1], [0, 0, 1, 1], [], []>} : vector<1x256xf32>, vector<256x16xf32>, vector<1x16xf32> -> vector<1x16xf32>
    %cst_129 = arith.constant 0.001953125 : f32
    %139 = vector.broadcast %cst_129 : f32 to vector<1x16xf32>
    %140 = arith.mulf %138, %139 : vector<1x16xf32>
    %c0_130 = arith.constant 0 : index
    %c0_131 = arith.constant 0 : index
    %141 = vector.load %arg4[%c0_130, %c0_131] : memref<256x16xf32, #tpu.memory_space<vmem>>, vector<256x16xf32>
    %cst_132 = arith.constant dense<0.000000e+00> : vector<1x16xf32>
    %142 = tpu.matmul %136, %141, %cst_132 {dimension_numbers = #tpu.dot_dimension_numbers<[1], [0], [0], [1], [0, 0, 1, 1], [], []>} : vector<1x256xf32>, vector<256x16xf32>, vector<1x16xf32> -> vector<1x16xf32>
    %cst_133 = arith.constant 0.001953125 : f32
    %143 = vector.broadcast %cst_133 : f32 to vector<1x16xf32>
    %144 = arith.mulf %142, %143 : vector<1x16xf32>
    %145 = arith.mulf %140, %140 : vector<1x16xf32>
    %146 = arith.subf %144, %145 : vector<1x16xf32>
    %c2_134 = arith.constant 2 : index
    %c0_135 = arith.constant 0 : index
    %c0_136 = arith.constant 0 : index
    %147 = vector.load %arg2[%c2_134, %c0_135, %c0_136] : memref<4x1x16xf32, #tpu.memory_space<vmem>>, vector<1x1x16xf32>
    %148 = vector.shape_cast %147 : vector<1x1x16xf32> to vector<1x16xf32>
    %cst_137 = arith.constant 9.99999974E-6 : f32
    %149 = vector.broadcast %cst_137 : f32 to vector<1x16xf32>
    %150 = arith.addf %146, %149 : vector<1x16xf32>
    %151 = math.rsqrt %150 : vector<1x16xf32>
    %152 = arith.mulf %148, %151 : vector<1x16xf32>
    %c2_138 = arith.constant 2 : index
    %c0_139 = arith.constant 0 : index
    %c0_140 = arith.constant 0 : index
    %153 = vector.load %arg3[%c2_138, %c0_139, %c0_140] : memref<4x1x16xf32, #tpu.memory_space<vmem>>, vector<1x1x16xf32>
    %154 = vector.shape_cast %153 : vector<1x1x16xf32> to vector<1x16xf32>
    %155 = arith.mulf %140, %152 : vector<1x16xf32>
    %156 = arith.subf %154, %155 : vector<1x16xf32>
    %c0_141 = arith.constant 0 : index
    %c0_142 = arith.constant 0 : index
    %157 = vector.load %arg5[%c0_141, %c0_142] : memref<16x256xf32, #tpu.memory_space<vmem>>, vector<16x256xf32>
    %cst_143 = arith.constant dense<0.000000e+00> : vector<1x256xf32>
    %158 = tpu.matmul %152, %157, %cst_143 {dimension_numbers = #tpu.dot_dimension_numbers<[1], [0], [0], [1], [0, 0, 1, 1], [], []>} : vector<1x16xf32>, vector<16x256xf32>, vector<1x256xf32> -> vector<1x256xf32>
    %c0_144 = arith.constant 0 : index
    %c0_145 = arith.constant 0 : index
    %159 = vector.load %arg5[%c0_144, %c0_145] : memref<16x256xf32, #tpu.memory_space<vmem>>, vector<16x256xf32>
    %cst_146 = arith.constant dense<0.000000e+00> : vector<1x256xf32>
    %160 = tpu.matmul %156, %159, %cst_146 {dimension_numbers = #tpu.dot_dimension_numbers<[1], [0], [0], [1], [0, 0, 1, 1], [], []>} : vector<1x16xf32>, vector<16x256xf32>, vector<1x256xf32> -> vector<1x256xf32>
    %161 = vector.broadcast %158 : vector<1x256xf32> to vector<32x256xf32>
    %162 = arith.mulf %131, %161 : vector<32x256xf32>
    %163 = vector.broadcast %160 : vector<1x256xf32> to vector<32x256xf32>
    %164 = arith.addf %162, %163 : vector<32x256xf32>
    %cst_147 = arith.constant 0.000000e+00 : f32
    %165 = vector.broadcast %cst_147 : f32 to vector<32x256xf32>
    %166 = arith.cmpf ogt, %164, %165 : vector<32x256xf32>
    %cst_148 = arith.constant 2.000000e-01 : f32
    %167 = vector.broadcast %cst_148 : f32 to vector<32x256xf32>
    %168 = arith.mulf %167, %164 : vector<32x256xf32>
    %169 = arith.select %166, %164, %168 : vector<32x256xi1>, vector<32x256xf32>
    %c2_149 = arith.constant 2 : index
    %c0_150 = arith.constant 0 : index
    %170 = vector.load %arg18[%c2_149, %c0_150] : memref<36x256xf32, #tpu.memory_space<vmem>>, vector<32x256xf32>
    tpu.vector_store %arg18[%c2_149, %c0_150], %169 {strides = array<i32>} : memref<36x256xf32, #tpu.memory_space<vmem>>, vector<32x256xf32>,
    %cst_151 = arith.constant 0.000000e+00 : f32
    %171 = vector.broadcast %cst_151 : f32 to vector<32x256xf32>
    %c0_152 = arith.constant 0 : index
    %c0_153 = arith.constant 0 : index
    %172 = vector.load %arg18[%c0_152, %c0_153] : memref<36x256xf32, #tpu.memory_space<vmem>>, vector<32x256xf32>
    %c3 = arith.constant 3 : index
    %c0_154 = arith.constant 0 : index
    %c0_155 = arith.constant 0 : index
    %c0_156 = arith.constant 0 : index
    %173 = vector.load %arg1[%c3, %c0_154, %c0_155, %c0_156] : memref<4x3x256x256xf32, #tpu.memory_space<vmem>>, vector<1x1x256x256xf32>
    %174 = vector.shape_cast %173 : vector<1x1x256x256xf32> to vector<256x256xf32>
    %cst_157 = arith.constant dense<0.000000e+00> : vector<32x256xf32>
    %175 = tpu.matmul %172, %174, %cst_157 {dimension_numbers = #tpu.dot_dimension_numbers<[1], [0], [0], [1], [0, 0, 1, 1], [], []>} : vector<32x256xf32>, vector<256x256xf32>, vector<32x256xf32> -> vector<32x256xf32>
    %176 = arith.addf %171, %175 : vector<32x256xf32>
    %c2_158 = arith.constant 2 : index
    %c0_159 = arith.constant 0 : index
    %177 = vector.load %arg18[%c2_158, %c0_159] : memref<36x256xf32, #tpu.memory_space<vmem>>, vector<32x256xf32>
    %c3_160 = arith.constant 3 : index
    %c1_161 = arith.constant 1 : index
    %c0_162 = arith.constant 0 : index
    %c0_163 = arith.constant 0 : index
    %178 = vector.load %arg1[%c3_160, %c1_161, %c0_162, %c0_163] : memref<4x3x256x256xf32, #tpu.memory_space<vmem>>, vector<1x1x256x256xf32>
    %179 = vector.shape_cast %178 : vector<1x1x256x256xf32> to vector<256x256xf32>
    %cst_164 = arith.constant dense<0.000000e+00> : vector<32x256xf32>
    %180 = tpu.matmul %177, %179, %cst_164 {dimension_numbers = #tpu.dot_dimension_numbers<[1], [0], [0], [1], [0, 0, 1, 1], [], []>} : vector<32x256xf32>, vector<256x256xf32>, vector<32x256xf32> -> vector<32x256xf32>
    %181 = arith.addf %176, %180 : vector<32x256xf32>
    %c4_165 = arith.constant 4 : index
    %c0_166 = arith.constant 0 : index
    %182 = vector.load %arg18[%c4_165, %c0_166] : memref<36x256xf32, #tpu.memory_space<vmem>>, vector<32x256xf32>
    %c3_167 = arith.constant 3 : index
    %c2_168 = arith.constant 2 : index
    %c0_169 = arith.constant 0 : index
    %c0_170 = arith.constant 0 : index
    %183 = vector.load %arg1[%c3_167, %c2_168, %c0_169, %c0_170] : memref<4x3x256x256xf32, #tpu.memory_space<vmem>>, vector<1x1x256x256xf32>
    %184 = vector.shape_cast %183 : vector<1x1x256x256xf32> to vector<256x256xf32>
    %cst_171 = arith.constant dense<0.000000e+00> : vector<32x256xf32>
    %185 = tpu.matmul %182, %184, %cst_171 {dimension_numbers = #tpu.dot_dimension_numbers<[1], [0], [0], [1], [0, 0, 1, 1], [], []>} : vector<32x256xf32>, vector<256x256xf32>, vector<32x256xf32> -> vector<32x256xf32>
    %186 = arith.addf %181, %185 : vector<32x256xf32>
    %cst_172 = arith.constant dense<0.000000e+00> : vector<256xf32>
    %187 = vector.multi_reduction <add>, %186, %cst_172 [0] : vector<32x256xf32> to vector<256xf32>
    %188 = vector.shape_cast %187 : vector<256xf32> to vector<1x256xf32>
    %189 = arith.mulf %186, %186 : vector<32x256xf32>
    %cst_173 = arith.constant dense<0.000000e+00> : vector<256xf32>
    %190 = vector.multi_reduction <add>, %189, %cst_173 [0] : vector<32x256xf32> to vector<256xf32>
    %191 = vector.shape_cast %190 : vector<256xf32> to vector<1x256xf32>
    %c0_174 = arith.constant 0 : index
    %c0_175 = arith.constant 0 : index
    %192 = vector.load %arg4[%c0_174, %c0_175] : memref<256x16xf32, #tpu.memory_space<vmem>>, vector<256x16xf32>
    %cst_176 = arith.constant dense<0.000000e+00> : vector<1x16xf32>
    %193 = tpu.matmul %188, %192, %cst_176 {dimension_numbers = #tpu.dot_dimension_numbers<[1], [0], [0], [1], [0, 0, 1, 1], [], []>} : vector<1x256xf32>, vector<256x16xf32>, vector<1x16xf32> -> vector<1x16xf32>
    %cst_177 = arith.constant 0.001953125 : f32
    %194 = vector.broadcast %cst_177 : f32 to vector<1x16xf32>
    %195 = arith.mulf %193, %194 : vector<1x16xf32>
    %c0_178 = arith.constant 0 : index
    %c0_179 = arith.constant 0 : index
    %196 = vector.load %arg4[%c0_178, %c0_179] : memref<256x16xf32, #tpu.memory_space<vmem>>, vector<256x16xf32>
    %cst_180 = arith.constant dense<0.000000e+00> : vector<1x16xf32>
    %197 = tpu.matmul %191, %196, %cst_180 {dimension_numbers = #tpu.dot_dimension_numbers<[1], [0], [0], [1], [0, 0, 1, 1], [], []>} : vector<1x256xf32>, vector<256x16xf32>, vector<1x16xf32> -> vector<1x16xf32>
    %cst_181 = arith.constant 0.001953125 : f32
    %198 = vector.broadcast %cst_181 : f32 to vector<1x16xf32>
    %199 = arith.mulf %197, %198 : vector<1x16xf32>
    %200 = arith.mulf %195, %195 : vector<1x16xf32>
    %201 = arith.subf %199, %200 : vector<1x16xf32>
    %c3_182 = arith.constant 3 : index
    %c0_183 = arith.constant 0 : index
    %c0_184 = arith.constant 0 : index
    %202 = vector.load %arg2[%c3_182, %c0_183, %c0_184] : memref<4x1x16xf32, #tpu.memory_space<vmem>>, vector<1x1x16xf32>
    %203 = vector.shape_cast %202 : vector<1x1x16xf32> to vector<1x16xf32>
    %cst_185 = arith.constant 9.99999974E-6 : f32
    %204 = vector.broadcast %cst_185 : f32 to vector<1x16xf32>
    %205 = arith.addf %201, %204 : vector<1x16xf32>
    %206 = math.rsqrt %205 : vector<1x16xf32>
    %207 = arith.mulf %203, %206 : vector<1x16xf32>
    %c3_186 = arith.constant 3 : index
    %c0_187 = arith.constant 0 : index
    %c0_188 = arith.constant 0 : index
    %208 = vector.load %arg3[%c3_186, %c0_187, %c0_188] : memref<4x1x16xf32, #tpu.memory_space<vmem>>, vector<1x1x16xf32>
    %209 = vector.shape_cast %208 : vector<1x1x16xf32> to vector<1x16xf32>
    %210 = arith.mulf %195, %207 : vector<1x16xf32>
    %211 = arith.subf %209, %210 : vector<1x16xf32>
    %c0_189 = arith.constant 0 : index
    %c0_190 = arith.constant 0 : index
    %212 = vector.load %arg5[%c0_189, %c0_190] : memref<16x256xf32, #tpu.memory_space<vmem>>, vector<16x256xf32>
    %cst_191 = arith.constant dense<0.000000e+00> : vector<1x256xf32>
    %213 = tpu.matmul %207, %212, %cst_191 {dimension_numbers = #tpu.dot_dimension_numbers<[1], [0], [0], [1], [0, 0, 1, 1], [], []>} : vector<1x16xf32>, vector<16x256xf32>, vector<1x256xf32> -> vector<1x256xf32>
    %c0_192 = arith.constant 0 : index
    %c0_193 = arith.constant 0 : index
    %214 = vector.load %arg5[%c0_192, %c0_193] : memref<16x256xf32, #tpu.memory_space<vmem>>, vector<16x256xf32>
    %cst_194 = arith.constant dense<0.000000e+00> : vector<1x256xf32>
    %215 = tpu.matmul %211, %214, %cst_194 {dimension_numbers = #tpu.dot_dimension_numbers<[1], [0], [0], [1], [0, 0, 1, 1], [], []>} : vector<1x16xf32>, vector<16x256xf32>, vector<1x256xf32> -> vector<1x256xf32>
    %216 = vector.broadcast %213 : vector<1x256xf32> to vector<32x256xf32>
    %217 = arith.mulf %186, %216 : vector<32x256xf32>
    %218 = vector.broadcast %215 : vector<1x256xf32> to vector<32x256xf32>
    %219 = arith.addf %217, %218 : vector<32x256xf32>
    %cst_195 = arith.constant 0.000000e+00 : f32
    %220 = vector.broadcast %cst_195 : f32 to vector<32x256xf32>
    %221 = arith.cmpf ogt, %219, %220 : vector<32x256xf32>
    %cst_196 = arith.constant 2.000000e-01 : f32
    %222 = vector.broadcast %cst_196 : f32 to vector<32x256xf32>
    %223 = arith.mulf %222, %219 : vector<32x256xf32>
    %224 = arith.select %221, %219, %223 : vector<32x256xi1>, vector<32x256xf32>
    %c0_197 = arith.constant 0 : index
    %c0_198 = arith.constant 0 : index
    %225 = vector.load %arg6[%c0_197, %c0_198] : memref<256x32xf32, #tpu.memory_space<vmem>>, vector<256x32xf32>
    %cst_199 = arith.constant dense<0.000000e+00> : vector<32x32xf32>
    %226 = tpu.matmul %224, %225, %cst_199 {dimension_numbers = #tpu.dot_dimension_numbers<[1], [0], [0], [1], [0, 0, 1, 1], [], []>} : vector<32x256xf32>, vector<256x32xf32>, vector<32x32xf32> -> vector<32x32xf32>
    %c0_200 = arith.constant 0 : index
    %c0_201 = arith.constant 0 : index
    %227 = vector.load %arg7[%c0_200, %c0_201] : memref<1x32xf32, #tpu.memory_space<vmem>>, vector<1x32xf32>
    %228 = vector.broadcast %227 : vector<1x32xf32> to vector<32x32xf32>
    %229 = arith.addf %226, %228 : vector<32x32xf32>
    %c0_202 = arith.constant 0 : index
    %c0_203 = arith.constant 0 : index
    %230 = vector.load %arg8[%c0_202, %c0_203] : memref<256x32xf32, #tpu.memory_space<vmem>>, vector<256x32xf32>
    %cst_204 = arith.constant dense<0.000000e+00> : vector<32x32xf32>
    %231 = tpu.matmul %224, %230, %cst_204 {dimension_numbers = #tpu.dot_dimension_numbers<[1], [0], [0], [1], [0, 0, 1, 1], [], []>} : vector<32x256xf32>, vector<256x32xf32>, vector<32x32xf32> -> vector<32x32xf32>
    %c0_205 = arith.constant 0 : index
    %c0_206 = arith.constant 0 : index
    %232 = vector.load %arg9[%c0_205, %c0_206] : memref<1x32xf32, #tpu.memory_space<vmem>>, vector<1x32xf32>
    %233 = vector.broadcast %232 : vector<1x32xf32> to vector<32x32xf32>
    %234 = arith.addf %231, %233 : vector<32x32xf32>
    %c0_207 = arith.constant 0 : index
    %c0_208 = arith.constant 0 : index
    %235 = vector.load %arg16[%c0_207, %c0_208] : memref<32x32xf32, #tpu.memory_space<vmem>>, vector<32x32xf32>
    tpu.vector_store %arg16[%c0_207, %c0_208], %229 {strides = array<i32>} : memref<32x32xf32, #tpu.memory_space<vmem>>, vector<32x32xf32>,
    %c0_209 = arith.constant 0 : index
    %c0_210 = arith.constant 0 : index
    %236 = vector.load %arg17[%c0_209, %c0_210] : memref<32x32xf32, #tpu.memory_space<vmem>>, vector<32x32xf32>
    tpu.vector_store %arg17[%c0_209, %c0_210], %234 {strides = array<i32>} : memref<32x32xf32, #tpu.memory_space<vmem>>, vector<32x32xf32>,
    %c0_211 = arith.constant 0 : index
    %c0_212 = arith.constant 0 : index
    %237 = vector.load %arg10[%c0_211, %c0_212] : memref<32x32xf32, #tpu.memory_space<vmem>>, vector<32x32xf32>
    %238 = math.exp %234 : vector<32x32xf32>
    %239 = arith.mulf %237, %238 : vector<32x32xf32>
    %240 = arith.addf %229, %239 : vector<32x32xf32>
    %c0_213 = arith.constant 0 : index
    %c0_214 = arith.constant 0 : index
    %241 = vector.load %arg11[%c0_213, %c0_214] : memref<32x256xf32, #tpu.memory_space<vmem>>, vector<32x256xf32>
    %cst_215 = arith.constant dense<0.000000e+00> : vector<32x256xf32>
    %242 = tpu.matmul %240, %241, %cst_215 {dimension_numbers = #tpu.dot_dimension_numbers<[1], [0], [0], [1], [0, 0, 1, 1], [], []>} : vector<32x32xf32>, vector<32x256xf32>, vector<32x256xf32> -> vector<32x256xf32>
    %c0_216 = arith.constant 0 : index
    %c0_217 = arith.constant 0 : index
    %243 = vector.load %arg12[%c0_216, %c0_217] : memref<1x256xf32, #tpu.memory_space<vmem>>, vector<1x256xf32>
    %244 = vector.broadcast %243 : vector<1x256xf32> to vector<32x256xf32>
    %245 = arith.addf %242, %244 : vector<32x256xf32>
    %c2_218 = arith.constant 2 : index
    %c0_219 = arith.constant 0 : index
    %246 = vector.load %arg18[%c2_218, %c0_219] : memref<36x256xf32, #tpu.memory_space<vmem>>, vector<32x256xf32>
    tpu.vector_store %arg18[%c2_218, %c0_219], %245 {strides = array<i32>} : memref<36x256xf32, #tpu.memory_space<vmem>>, vector<32x256xf32>,
    %cst_220 = arith.constant 0.000000e+00 : f32
    %247 = vector.broadcast %cst_220 : f32 to vector<32x256xf32>
    %c0_221 = arith.constant 0 : index
    %c0_222 = arith.constant 0 : index
    %248 = vector.load %arg18[%c0_221, %c0_222] : memref<36x256xf32, #tpu.memory_space<vmem>>, vector<32x256xf32>
    %c0_223 = arith.constant 0 : index
    %c0_224 = arith.constant 0 : index
    %c0_225 = arith.constant 0 : index
    %c0_226 = arith.constant 0 : index
    %249 = vector.load %arg13[%c0_223, %c0_224, %c0_225, %c0_226] : memref<4x3x256x256xf32, #tpu.memory_space<vmem>>, vector<1x1x256x256xf32>
    %250 = vector.shape_cast %249 : vector<1x1x256x256xf32> to vector<256x256xf32>
    %cst_227 = arith.constant dense<0.000000e+00> : vector<32x256xf32>
    %251 = tpu.matmul %248, %250, %cst_227 {dimension_numbers = #tpu.dot_dimension_numbers<[1], [0], [0], [1], [0, 0, 1, 1], [], []>} : vector<32x256xf32>, vector<256x256xf32>, vector<32x256xf32> -> vector<32x256xf32>
    %252 = arith.addf %247, %251 : vector<32x256xf32>
    %c2_228 = arith.constant 2 : index
    %c0_229 = arith.constant 0 : index
    %253 = vector.load %arg18[%c2_228, %c0_229] : memref<36x256xf32, #tpu.memory_space<vmem>>, vector<32x256xf32>
    %c0_230 = arith.constant 0 : index
    %c1_231 = arith.constant 1 : index
    %c0_232 = arith.constant 0 : index
    %c0_233 = arith.constant 0 : index
    %254 = vector.load %arg13[%c0_230, %c1_231, %c0_232, %c0_233] : memref<4x3x256x256xf32, #tpu.memory_space<vmem>>, vector<1x1x256x256xf32>
    %255 = vector.shape_cast %254 : vector<1x1x256x256xf32> to vector<256x256xf32>
    %cst_234 = arith.constant dense<0.000000e+00> : vector<32x256xf32>
    %256 = tpu.matmul %253, %255, %cst_234 {dimension_numbers = #tpu.dot_dimension_numbers<[1], [0], [0], [1], [0, 0, 1, 1], [], []>} : vector<32x256xf32>, vector<256x256xf32>, vector<32x256xf32> -> vector<32x256xf32>
    %257 = arith.addf %252, %256 : vector<32x256xf32>
    %c4_235 = arith.constant 4 : index
    %c0_236 = arith.constant 0 : index
    %258 = vector.load %arg18[%c4_235, %c0_236] : memref<36x256xf32, #tpu.memory_space<vmem>>, vector<32x256xf32>
    %c0_237 = arith.constant 0 : index
    %c2_238 = arith.constant 2 : index
    %c0_239 = arith.constant 0 : index
    %c0_240 = arith.constant 0 : index
    %259 = vector.load %arg13[%c0_237, %c2_238, %c0_239, %c0_240] : memref<4x3x256x256xf32, #tpu.memory_space<vmem>>, vector<1x1x256x256xf32>
    %260 = vector.shape_cast %259 : vector<1x1x256x256xf32> to vector<256x256xf32>
    %cst_241 = arith.constant dense<0.000000e+00> : vector<32x256xf32>
    %261 = tpu.matmul %258, %260, %cst_241 {dimension_numbers = #tpu.dot_dimension_numbers<[1], [0], [0], [1], [0, 0, 1, 1], [], []>} : vector<32x256xf32>, vector<256x256xf32>, vector<32x256xf32> -> vector<32x256xf32>
    %262 = arith.addf %257, %261 : vector<32x256xf32>
    %c0_242 = arith.constant 0 : index
    %c0_243 = arith.constant 0 : index
    %c0_244 = arith.constant 0 : index
    %263 = vector.load %arg14[%c0_242, %c0_243, %c0_244] : memref<4x1x256xf32, #tpu.memory_space<vmem>>, vector<1x1x256xf32>
    %264 = vector.shape_cast %263 : vector<1x1x256xf32> to vector<1x256xf32>
    %265 = vector.broadcast %264 : vector<1x256xf32> to vector<32x256xf32>
    %266 = arith.addf %262, %265 : vector<32x256xf32>
    %cst_245 = arith.constant 0.000000e+00 : f32
    %267 = vector.broadcast %cst_245 : f32 to vector<32x256xf32>
    %268 = arith.maximumf %266, %267 : vector<32x256xf32>
    %c2_246 = arith.constant 2 : index
    %c0_247 = arith.constant 0 : index
    %269 = vector.load %arg18[%c2_246, %c0_247] : memref<36x256xf32, #tpu.memory_space<vmem>>, vector<32x256xf32>
    tpu.vector_store %arg18[%c2_246, %c0_247], %268 {strides = array<i32>} : memref<36x256xf32, #tpu.memory_space<vmem>>, vector<32x256xf32>,
    %cst_248 = arith.constant 0.000000e+00 : f32
    %270 = vector.broadcast %cst_248 : f32 to vector<32x256xf32>
    %c0_249 = arith.constant 0 : index
    %c0_250 = arith.constant 0 : index
    %271 = vector.load %arg18[%c0_249, %c0_250] : memref<36x256xf32, #tpu.memory_space<vmem>>, vector<32x256xf32>
    %c1_251 = arith.constant 1 : index
    %c0_252 = arith.constant 0 : index
    %c0_253 = arith.constant 0 : index
    %c0_254 = arith.constant 0 : index
    %272 = vector.load %arg13[%c1_251, %c0_252, %c0_253, %c0_254] : memref<4x3x256x256xf32, #tpu.memory_space<vmem>>, vector<1x1x256x256xf32>
    %273 = vector.shape_cast %272 : vector<1x1x256x256xf32> to vector<256x256xf32>
    %cst_255 = arith.constant dense<0.000000e+00> : vector<32x256xf32>
    %274 = tpu.matmul %271, %273, %cst_255 {dimension_numbers = #tpu.dot_dimension_numbers<[1], [0], [0], [1], [0, 0, 1, 1], [], []>} : vector<32x256xf32>, vector<256x256xf32>, vector<32x256xf32> -> vector<32x256xf32>
    %275 = arith.addf %270, %274 : vector<32x256xf32>
    %c2_256 = arith.constant 2 : index
    %c0_257 = arith.constant 0 : index
    %276 = vector.load %arg18[%c2_256, %c0_257] : memref<36x256xf32, #tpu.memory_space<vmem>>, vector<32x256xf32>
    %c1_258 = arith.constant 1 : index
    %c1_259 = arith.constant 1 : index
    %c0_260 = arith.constant 0 : index
    %c0_261 = arith.constant 0 : index
    %277 = vector.load %arg13[%c1_258, %c1_259, %c0_260, %c0_261] : memref<4x3x256x256xf32, #tpu.memory_space<vmem>>, vector<1x1x256x256xf32>
    %278 = vector.shape_cast %277 : vector<1x1x256x256xf32> to vector<256x256xf32>
    %cst_262 = arith.constant dense<0.000000e+00> : vector<32x256xf32>
    %279 = tpu.matmul %276, %278, %cst_262 {dimension_numbers = #tpu.dot_dimension_numbers<[1], [0], [0], [1], [0, 0, 1, 1], [], []>} : vector<32x256xf32>, vector<256x256xf32>, vector<32x256xf32> -> vector<32x256xf32>
    %280 = arith.addf %275, %279 : vector<32x256xf32>
    %c4_263 = arith.constant 4 : index
    %c0_264 = arith.constant 0 : index
    %281 = vector.load %arg18[%c4_263, %c0_264] : memref<36x256xf32, #tpu.memory_space<vmem>>, vector<32x256xf32>
    %c1_265 = arith.constant 1 : index
    %c2_266 = arith.constant 2 : index
    %c0_267 = arith.constant 0 : index
    %c0_268 = arith.constant 0 : index
    %282 = vector.load %arg13[%c1_265, %c2_266, %c0_267, %c0_268] : memref<4x3x256x256xf32, #tpu.memory_space<vmem>>, vector<1x1x256x256xf32>
    %283 = vector.shape_cast %282 : vector<1x1x256x256xf32> to vector<256x256xf32>
    %cst_269 = arith.constant dense<0.000000e+00> : vector<32x256xf32>
    %284 = tpu.matmul %281, %283, %cst_269 {dimension_numbers = #tpu.dot_dimension_numbers<[1], [0], [0], [1], [0, 0, 1, 1], [], []>} : vector<32x256xf32>, vector<256x256xf32>, vector<32x256xf32> -> vector<32x256xf32>
    %285 = arith.addf %280, %284 : vector<32x256xf32>
    %c1_270 = arith.constant 1 : index
    %c0_271 = arith.constant 0 : index
    %c0_272 = arith.constant 0 : index
    %286 = vector.load %arg14[%c1_270, %c0_271, %c0_272] : memref<4x1x256xf32, #tpu.memory_space<vmem>>, vector<1x1x256xf32>
    %287 = vector.shape_cast %286 : vector<1x1x256xf32> to vector<1x256xf32>
    %288 = vector.broadcast %287 : vector<1x256xf32> to vector<32x256xf32>
    %289 = arith.addf %285, %288 : vector<32x256xf32>
    %cst_273 = arith.constant 0.000000e+00 : f32
    %290 = vector.broadcast %cst_273 : f32 to vector<32x256xf32>
    %291 = arith.maximumf %289, %290 : vector<32x256xf32>
    %c2_274 = arith.constant 2 : index
    %c0_275 = arith.constant 0 : index
    %292 = vector.load %arg18[%c2_274, %c0_275] : memref<36x256xf32, #tpu.memory_space<vmem>>, vector<32x256xf32>
    tpu.vector_store %arg18[%c2_274, %c0_275], %291 {strides = array<i32>} : memref<36x256xf32, #tpu.memory_space<vmem>>, vector<32x256xf32>,
    %cst_276 = arith.constant 0.000000e+00 : f32
    %293 = vector.broadcast %cst_276 : f32 to vector<32x256xf32>
    %c0_277 = arith.constant 0 : index
    %c0_278 = arith.constant 0 : index
    %294 = vector.load %arg18[%c0_277, %c0_278] : memref<36x256xf32, #tpu.memory_space<vmem>>, vector<32x256xf32>
    %c2_279 = arith.constant 2 : index
    %c0_280 = arith.constant 0 : index
    %c0_281 = arith.constant 0 : index
    %c0_282 = arith.constant 0 : index
    %295 = vector.load %arg13[%c2_279, %c0_280, %c0_281, %c0_282] : memref<4x3x256x256xf32, #tpu.memory_space<vmem>>, vector<1x1x256x256xf32>
    %296 = vector.shape_cast %295 : vector<1x1x256x256xf32> to vector<256x256xf32>
    %cst_283 = arith.constant dense<0.000000e+00> : vector<32x256xf32>
    %297 = tpu.matmul %294, %296, %cst_283 {dimension_numbers = #tpu.dot_dimension_numbers<[1], [0], [0], [1], [0, 0, 1, 1], [], []>} : vector<32x256xf32>, vector<256x256xf32>, vector<32x256xf32> -> vector<32x256xf32>
    %298 = arith.addf %293, %297 : vector<32x256xf32>
    %c2_284 = arith.constant 2 : index
    %c0_285 = arith.constant 0 : index
    %299 = vector.load %arg18[%c2_284, %c0_285] : memref<36x256xf32, #tpu.memory_space<vmem>>, vector<32x256xf32>
    %c2_286 = arith.constant 2 : index
    %c1_287 = arith.constant 1 : index
    %c0_288 = arith.constant 0 : index
    %c0_289 = arith.constant 0 : index
    %300 = vector.load %arg13[%c2_286, %c1_287, %c0_288, %c0_289] : memref<4x3x256x256xf32, #tpu.memory_space<vmem>>, vector<1x1x256x256xf32>
    %301 = vector.shape_cast %300 : vector<1x1x256x256xf32> to vector<256x256xf32>
    %cst_290 = arith.constant dense<0.000000e+00> : vector<32x256xf32>
    %302 = tpu.matmul %299, %301, %cst_290 {dimension_numbers = #tpu.dot_dimension_numbers<[1], [0], [0], [1], [0, 0, 1, 1], [], []>} : vector<32x256xf32>, vector<256x256xf32>, vector<32x256xf32> -> vector<32x256xf32>
    %303 = arith.addf %298, %302 : vector<32x256xf32>
    %c4_291 = arith.constant 4 : index
    %c0_292 = arith.constant 0 : index
    %304 = vector.load %arg18[%c4_291, %c0_292] : memref<36x256xf32, #tpu.memory_space<vmem>>, vector<32x256xf32>
    %c2_293 = arith.constant 2 : index
    %c2_294 = arith.constant 2 : index
    %c0_295 = arith.constant 0 : index
    %c0_296 = arith.constant 0 : index
    %305 = vector.load %arg13[%c2_293, %c2_294, %c0_295, %c0_296] : memref<4x3x256x256xf32, #tpu.memory_space<vmem>>, vector<1x1x256x256xf32>
    %306 = vector.shape_cast %305 : vector<1x1x256x256xf32> to vector<256x256xf32>
    %cst_297 = arith.constant dense<0.000000e+00> : vector<32x256xf32>
    %307 = tpu.matmul %304, %306, %cst_297 {dimension_numbers = #tpu.dot_dimension_numbers<[1], [0], [0], [1], [0, 0, 1, 1], [], []>} : vector<32x256xf32>, vector<256x256xf32>, vector<32x256xf32> -> vector<32x256xf32>
    %308 = arith.addf %303, %307 : vector<32x256xf32>
    %c2_298 = arith.constant 2 : index
    %c0_299 = arith.constant 0 : index
    %c0_300 = arith.constant 0 : index
    %309 = vector.load %arg14[%c2_298, %c0_299, %c0_300] : memref<4x1x256xf32, #tpu.memory_space<vmem>>, vector<1x1x256xf32>
    %310 = vector.shape_cast %309 : vector<1x1x256xf32> to vector<1x256xf32>
    %311 = vector.broadcast %310 : vector<1x256xf32> to vector<32x256xf32>
    %312 = arith.addf %308, %311 : vector<32x256xf32>
    %cst_301 = arith.constant 0.000000e+00 : f32
    %313 = vector.broadcast %cst_301 : f32 to vector<32x256xf32>
    %314 = arith.maximumf %312, %313 : vector<32x256xf32>
    %c2_302 = arith.constant 2 : index
    %c0_303 = arith.constant 0 : index
    %315 = vector.load %arg18[%c2_302, %c0_303] : memref<36x256xf32, #tpu.memory_space<vmem>>, vector<32x256xf32>
    tpu.vector_store %arg18[%c2_302, %c0_303], %314 {strides = array<i32>} : memref<36x256xf32, #tpu.memory_space<vmem>>, vector<32x256xf32>,
    %cst_304 = arith.constant 0.000000e+00 : f32
    %316 = vector.broadcast %cst_304 : f32 to vector<32x256xf32>
    %c0_305 = arith.constant 0 : index
    %c0_306 = arith.constant 0 : index
    %317 = vector.load %arg18[%c0_305, %c0_306] : memref<36x256xf32, #tpu.memory_space<vmem>>, vector<32x256xf32>
    %c3_307 = arith.constant 3 : index
    %c0_308 = arith.constant 0 : index
    %c0_309 = arith.constant 0 : index
    %c0_310 = arith.constant 0 : index
    %318 = vector.load %arg13[%c3_307, %c0_308, %c0_309, %c0_310] : memref<4x3x256x256xf32, #tpu.memory_space<vmem>>, vector<1x1x256x256xf32>
    %319 = vector.shape_cast %318 : vector<1x1x256x256xf32> to vector<256x256xf32>
    %cst_311 = arith.constant dense<0.000000e+00> : vector<32x256xf32>
    %320 = tpu.matmul %317, %319, %cst_311 {dimension_numbers = #tpu.dot_dimension_numbers<[1], [0], [0], [1], [0, 0, 1, 1], [], []>} : vector<32x256xf32>, vector<256x256xf32>, vector<32x256xf32> -> vector<32x256xf32>
    %321 = arith.addf %316, %320 : vector<32x256xf32>
    %c2_312 = arith.constant 2 : index
    %c0_313 = arith.constant 0 : index
    %322 = vector.load %arg18[%c2_312, %c0_313] : memref<36x256xf32, #tpu.memory_space<vmem>>, vector<32x256xf32>
    %c3_314 = arith.constant 3 : index
    %c1_315 = arith.constant 1 : index
    %c0_316 = arith.constant 0 : index
    %c0_317 = arith.constant 0 : index
    %323 = vector.load %arg13[%c3_314, %c1_315, %c0_316, %c0_317] : memref<4x3x256x256xf32, #tpu.memory_space<vmem>>, vector<1x1x256x256xf32>
    %324 = vector.shape_cast %323 : vector<1x1x256x256xf32> to vector<256x256xf32>
    %cst_318 = arith.constant dense<0.000000e+00> : vector<32x256xf32>
    %325 = tpu.matmul %322, %324, %cst_318 {dimension_numbers = #tpu.dot_dimension_numbers<[1], [0], [0], [1], [0, 0, 1, 1], [], []>} : vector<32x256xf32>, vector<256x256xf32>, vector<32x256xf32> -> vector<32x256xf32>
    %326 = arith.addf %321, %325 : vector<32x256xf32>
    %c4_319 = arith.constant 4 : index
    %c0_320 = arith.constant 0 : index
    %327 = vector.load %arg18[%c4_319, %c0_320] : memref<36x256xf32, #tpu.memory_space<vmem>>, vector<32x256xf32>
    %c3_321 = arith.constant 3 : index
    %c2_322 = arith.constant 2 : index
    %c0_323 = arith.constant 0 : index
    %c0_324 = arith.constant 0 : index
    %328 = vector.load %arg13[%c3_321, %c2_322, %c0_323, %c0_324] : memref<4x3x256x256xf32, #tpu.memory_space<vmem>>, vector<1x1x256x256xf32>
    %329 = vector.shape_cast %328 : vector<1x1x256x256xf32> to vector<256x256xf32>
    %cst_325 = arith.constant dense<0.000000e+00> : vector<32x256xf32>
    %330 = tpu.matmul %327, %329, %cst_325 {dimension_numbers = #tpu.dot_dimension_numbers<[1], [0], [0], [1], [0, 0, 1, 1], [], []>} : vector<32x256xf32>, vector<256x256xf32>, vector<32x256xf32> -> vector<32x256xf32>
    %331 = arith.addf %326, %330 : vector<32x256xf32>
    %c3_326 = arith.constant 3 : index
    %c0_327 = arith.constant 0 : index
    %c0_328 = arith.constant 0 : index
    %332 = vector.load %arg14[%c3_326, %c0_327, %c0_328] : memref<4x1x256xf32, #tpu.memory_space<vmem>>, vector<1x1x256xf32>
    %333 = vector.shape_cast %332 : vector<1x1x256xf32> to vector<1x256xf32>
    %334 = vector.broadcast %333 : vector<1x256xf32> to vector<32x256xf32>
    %335 = arith.addf %331, %334 : vector<32x256xf32>
    %cst_329 = arith.constant 0.000000e+00 : f32
    %336 = vector.broadcast %cst_329 : f32 to vector<32x256xf32>
    %337 = arith.maximumf %335, %336 : vector<32x256xf32>
    %c0_330 = arith.constant 0 : index
    %c0_331 = arith.constant 0 : index
    %338 = vector.load %arg15[%c0_330, %c0_331] : memref<32x256xf32, #tpu.memory_space<vmem>>, vector<32x256xf32>
    tpu.vector_store %arg15[%c0_330, %c0_331], %337 {strides = array<i32>} : memref<32x256xf32, #tpu.memory_space<vmem>>, vector<32x256xf32>,
    return
  }
}

</mosaic_0001>

<llo_original>
// kernel: vae5_forward.1
$region0: #{vae5_forward.1}
  #allocation0 [shape = 'u32[]', space=smem, size = 0x4, offset = 0x4, fixed_abs, tag = 'smem constant byte address 0x4 - core index']
  #allocation1 [shape = 'u32[144,128]{1,0:T(1,128)}', space=vmem, size = 0x12000, scoped, tag = 'internal scratch']
  #allocation2 [shape = 'f32[36,256]{1,0:T(8,128)}', space=vmem, size = 0xa000, scoped, tag = 'scratch operand']
  %s0 = inlined_call_operand.hbm [shape: f32[32,256], index: 0, kind: input, shape index: {}]
  %s1 = inlined_call_operand.hbm [shape: f32[4,3,256,256], index: 1, kind: input, shape index: {}]
  %s2 = inlined_call_operand.hbm [shape: f32[4,1,16], index: 2, kind: input, shape index: {}]
  %s3 = inlined_call_operand.hbm [shape: f32[4,1,16], index: 3, kind: input, shape index: {}]
  %s4 = inlined_call_operand.hbm [shape: f32[256,16], index: 4, kind: input, shape index: {}]
  %s5 = inlined_call_operand.hbm [shape: f32[16,256], index: 5, kind: input, shape index: {}]
  %s6 = inlined_call_operand.hbm [shape: f32[256,32], index: 6, kind: input, shape index: {}]
  %s7 = inlined_call_operand.hbm [shape: f32[1,32], index: 7, kind: input, shape index: {}]
  %s8 = inlined_call_operand.hbm [shape: f32[256,32], index: 8, kind: input, shape index: {}]
  %s9 = inlined_call_operand.hbm [shape: f32[1,32], index: 9, kind: input, shape index: {}]
  %s10 = inlined_call_operand.hbm [shape: f32[32,32], index: 10, kind: input, shape index: {}]
  %s11 = inlined_call_operand.hbm [shape: f32[32,256], index: 11, kind: input, shape index: {}]
  %s12 = inlined_call_operand.hbm [shape: f32[1,256], index: 12, kind: input, shape index: {}]
  %s13 = inlined_call_operand.hbm [shape: f32[4,3,256,256], index: 13, kind: input, shape index: {}]
  %s14 = inlined_call_operand.hbm [shape: f32[4,1,256], index: 14, kind: input, shape index: {}]
  %s15 = inlined_call_operand.hbm [shape: f32[32,256], index: 15, kind: output, shape index: {0}]
  %s16 = inlined_call_operand.hbm [shape: f32[32,32], index: 16, kind: output, shape index: {1}]
  %s17 = inlined_call_operand.hbm [shape: f32[32,32], index: 17, kind: output, shape index: {2}]
  %18 = xla_tuple %s15, %s16, %s17
  %s19 = sld [smem:[#allocation0]]
  $region146: #{vae5_forward.1} parent=0
    _
  %s21 = ssub.s32 1, %s19
  %s22 = scalar_select 0, %s21, %s19
  $region1: #{vae5_forward.1} parent=0
    #allocation3 [shape = 'u8[32768]{0}', space=vmem, size = 0x8000, scoped, tag = 'input window, operand 0, single buffered']
    #allocation4 [shape = 's32[1]{0}', space=sflag, size = 0x4, scoped, tag = 'scoped memory for vae5_forward.1']
    #allocation5 [shape = 's32[1]{0}', space=sflag, size = 0x4, scoped, tag = 'scoped memory for vae5_forward.1']
    #allocation6 [shape = 'u8[3145728]{0}', space=vmem, size = 0x300000, scoped, tag = 'input window, operand 1, single buffered']
    #allocation7 [shape = 's32[1]{0}', space=sflag, size = 0x4, scoped, tag = 'scoped memory for vae5_forward.1']
    #allocation8 [shape = 'u8[2048]{0}', space=vmem, size = 0x800, scoped, tag = 'input window, operand 2, single buffered']
    #allocation9 [shape = 'u8[2048]{0}', space=vmem, size = 0x800, scoped, tag = 'input window, operand 3, single buffered']
    #allocation10 [shape = 's32[1]{0}', space=sflag, size = 0x4, scoped, tag = 'scoped memory for vae5_forward.1']
    #allocation11 [shape = 'u8[131072]{0}', space=vmem, size = 0x20000, scoped, tag = 'input window, operand 4, single buffered']
    #allocation12 [shape = 'u8[16384]{0}', space=vmem, size = 0x4000, scoped, tag = 'input window, operand 5, single buffered']
    #allocation13 [shape = 's32[1]{0}', space=sflag, size = 0x4, scoped, tag = 'scoped memory for vae5_forward.1']
    #allocation14 [shape = 'u8[131072]{0}', space=vmem, size = 0x20000, scoped, tag = 'input window, operand 6, single buffered']
    #allocation15 [shape = 'u8[512]{0}', space=vmem, size = 0x400, scoped, tag = 'input window, operand 7, single buffered']
    #allocation16 [shape = 's32[1]{0}', space=sflag, size = 0x4, scoped, tag = 'scoped memory for vae5_forward.1']
    #allocation17 [shape = 'u8[131072]{0}', space=vmem, size = 0x20000, scoped, tag = 'input window, operand 8, single buffered']
    #allocation18 [shape = 'u8[512]{0}', space=vmem, size = 0x400, scoped, tag = 'input window, operand 9, single buffered']
    #allocation19 [shape = 's32[1]{0}', space=sflag, size = 0x4, scoped, tag = 'scoped memory for vae5_forward.1']
    #allocation20 [shape = 'u8[16384]{0}', space=vmem, size = 0x4000, scoped, tag = 'input window, operand 10, single buffered']
    #allocation21 [shape = 'u8[32768]{0}', space=vmem, size = 0x8000, scoped, tag = 'input window, operand 11, single buffered']
    #allocation22 [shape = 's32[1]{0}', space=sflag, size = 0x4, scoped, tag = 'scoped memory for vae5_forward.1']
    #allocation23 [shape = 'u8[1024]{0}', space=vmem, size = 0x400, scoped, tag = 'input window, operand 12, single buffered']
    #allocation24 [shape = 'u8[3145728]{0}', space=vmem, size = 0x300000, scoped, tag = 'input window, operand 13, single buffered']
    #allocation25 [shape = 's32[1]{0}', space=sflag, size = 0x4, scoped, tag = 'scoped memory for vae5_forward.1']
    #allocation26 [shape = 'u8[4096]{0}', space=vmem, size = 0x1000, scoped, tag = 'input window, operand 14, single buffered']
    #allocation27 [shape = 'u8[32768]{0}', space=vmem, size = 0x8000, scoped, tag = 'output window, operand 0, single buffered']
    #allocation28 [shape = 'u8[16384]{0}', space=vmem, size = 0x4000, scoped, tag = 'output window, operand 1, single buffered']
    #allocation29 [shape = 's32[1]{0}', space=sflag, size = 0x4, scoped, tag = 'scoped memory for vae5_forward.1']
    #allocation30 [shape = 'u8[16384]{0}', space=vmem, size = 0x4000, scoped, tag = 'output window, operand 2, single buffered']
    %23 = vsyncpa [#allocation4], 0
    %24 = vsyncpa [#allocation7], 0
    %25 = vsyncpa [#allocation10], 0
    %26 = vsyncpa [#allocation13], 0
    %27 = vsyncpa [#allocation16], 0
    %28 = vsyncpa [#allocation19], 0
    %29 = vsyncpa [#allocation22], 0
    %30 = vsyncpa [#allocation25], 0
    %31 = vsyncpa [#allocation5], 0
    %32 = vsyncpa [#allocation29], 0
    // Predicated region
    $region2: #{vae5_forward.1} parent=1 // pred_check
      _
    $region3: #{vae5_forward.1} parent=1 // pred_check_branch
      %34 = sbr.rel (0) target = $region5
    $region4: #{vae5_forward.1} parent=1 // pred_region
      %s36 = ssub.s32 1024, 1024
      %37 = vsyncadd [#allocation4], %s36
      %s38 = sshll.u32 [#allocation3], 4
      %s39 = int_to_ptr.vmem [resolvable:$true] %s38
      %44 = dma.hbm_to_vmem [thread:$0]  %s0, 1024, %s39, [#allocation4], 256, 256, 16
    $region5: #{vae5_forward.1} parent=1 // pred_fallthru
      _
    // Predicated region
    $region6: #{vae5_forward.1} parent=1 // pred_check
      _
    $region7: #{vae5_forward.1} parent=1 // pred_check_branch
      %46 = sbr.rel (0) target = $region9
    $region8: #{vae5_forward.1} parent=1 // pred_region
      %s48 = ssub.s32 98304, 98304
      %49 = vsyncadd [#allocation7], %s48
      %s50 = sshll.u32 [#allocation6], 4
      %s51 = int_to_ptr.vmem [resolvable:$true] %s50
      %56 = dma.hbm_to_vmem [thread:$0]  %s1, 98304, %s51, [#allocation7], 256, 256, 16
    $region9: #{vae5_forward.1} parent=1 // pred_fallthru
      _
    // Predicated region
    $region10: #{vae5_forward.1} parent=1 // pred_check
      _
    $region11: #{vae5_forward.1} parent=1 // pred_check_branch
      %58 = sbr.rel (0) target = $region13
    $region12: #{vae5_forward.1} parent=1 // pred_region
      %s60 = ssub.s32 64, 64
      %61 = vsyncadd [#allocation7], %s60
      %s62 = sshll.u32 [#allocation8], 4
      %s63 = int_to_ptr.vmem [resolvable:$true] %s62
      %68 = dma.hbm_to_vmem [thread:$0]  %s2, 64, %s63, [#allocation7], 16, 16, 1
    $region13: #{vae5_forward.1} parent=1 // pred_fallthru
      _
    // Predicated region
    $region14: #{vae5_forward.1} parent=1 // pred_check
      _
    $region15: #{vae5_forward.1} parent=1 // pred_check_branch
      %70 = sbr.rel (0) target = $region17
    $region16: #{vae5_forward.1} parent=1 // pred_region
      %s72 = ssub.s32 64, 64
      %73 = vsyncadd [#allocation10], %s72
      %s74 = sshll.u32 [#allocation9], 4
      %s75 = int_to_ptr.vmem [resolvable:$true] %s74
      %80 = dma.hbm_to_vmem [thread:$0]  %s3, 64, %s75, [#allocation10], 16, 16, 1
    $region17: #{vae5_forward.1} parent=1 // pred_fallthru
      _
    // Predicated region
    $region18: #{vae5_forward.1} parent=1 // pred_check
      _
    $region19: #{vae5_forward.1} parent=1 // pred_check_branch
      %82 = sbr.rel (0) target = $region21
    $region20: #{vae5_forward.1} parent=1 // pred_region
      %s84 = ssub.s32 4096, 4096
      %85 = vsyncadd [#allocation10], %s84
      %s86 = sshll.u32 [#allocation11], 4
      %s87 = int_to_ptr.vmem [resolvable:$true] %s86
      %92 = dma.hbm_to_vmem [thread:$0]  %s4, 4096, %s87, [#allocation10], 128, 128, 8
    $region21: #{vae5_forward.1} parent=1 // pred_fallthru
      _
    // Predicated region
    $region22: #{vae5_forward.1} parent=1 // pred_check
      _
    $region23: #{vae5_forward.1} parent=1 // pred_check_branch
      %94 = sbr.rel (0) target = $region25
    $region24: #{vae5_forward.1} parent=1 // pred_region
      %s96 = ssub.s32 512, 512
      %97 = vsyncadd [#allocation13], %s96
      %s98 = sshll.u32 [#allocation12], 4
      %s99 = int_to_ptr.vmem [resolvable:$true] %s98
      %104 = dma.hbm_to_vmem [thread:$0]  %s5, 512, %s99, [#allocation13], 256, 256, 16
    $region25: #{vae5_forward.1} parent=1 // pred_fallthru
      _
    // Predicated region
    $region26: #{vae5_forward.1} parent=1 // pred_check
      _
    $region27: #{vae5_forward.1} parent=1 // pred_check_branch
      %106 = sbr.rel (0) target = $region29
    $region28: #{vae5_forward.1} parent=1 // pred_region
      %s108 = ssub.s32 4096, 4096
      %109 = vsyncadd [#allocation13], %s108
      %s110 = sshll.u32 [#allocation14], 4
      %s111 = int_to_ptr.vmem [resolvable:$true] %s110
      %116 = dma.hbm_to_vmem [thread:$0]  %s6, 4096, %s111, [#allocation13], 128, 128, 8
    $region29: #{vae5_forward.1} parent=1 // pred_fallthru
      _
    // Predicated region
    $region30: #{vae5_forward.1} parent=1 // pred_check
      _
    $region31: #{vae5_forward.1} parent=1 // pred_check_branch
      %118 = sbr.rel (0) target = $region33
    $region32: #{vae5_forward.1} parent=1 // pred_region
      %s120 = ssub.s32 16, 16
      %121 = vsyncadd [#allocation16], %s120
      %s123 = sshll.u32 [#allocation15], 4
      %s124 = int_to_ptr.vmem [resolvable:$true] %s123
      %126 = dma.hbm_to_vmem [thread:$0]  %s7, 16, %s124, [#allocation16]
    $region33: #{vae5_forward.1} parent=1 // pred_fallthru
      _
    // Predicated region
    $region34: #{vae5_forward.1} parent=1 // pred_check
      _
    $region35: #{vae5_forward.1} parent=1 // pred_check_branch
      %128 = sbr.rel (0) target = $region37
    $region36: #{vae5_forward.1} parent=1 // pred_region
      %s130 = ssub.s32 4096, 4096
      %131 = vsyncadd [#allocation16], %s130
      %s132 = sshll.u32 [#allocation17], 4
      %s133 = int_to_ptr.vmem [resolvable:$true] %s132
      %138 = dma.hbm_to_vmem [thread:$0]  %s8, 4096, %s133, [#allocation16], 128, 128, 8
    $region37: #{vae5_forward.1} parent=1 // pred_fallthru
      _
    // Predicated region
    $region38: #{vae5_forward.1} parent=1 // pred_check
      _
    $region39: #{vae5_forward.1} parent=1 // pred_check_branch
      %140 = sbr.rel (0) target = $region41
    $region40: #{vae5_forward.1} parent=1 // pred_region
      %s142 = ssub.s32 16, 16
      %143 = vsyncadd [#allocation19], %s142
      %s145 = sshll.u32 [#allocation18], 4
      %s146 = int_to_ptr.vmem [resolvable:$true] %s145
      %148 = dma.hbm_to_vmem [thread:$0]  %s9, 16, %s146, [#allocation19]
    $region41: #{vae5_forward.1} parent=1 // pred_fallthru
      _
    // Predicated region
    $region42: #{vae5_forward.1} parent=1 // pred_check
      _
    $region43: #{vae5_forward.1} parent=1 // pred_check_branch
      %150 = sbr.rel (0) target = $region45
    $region44: #{vae5_forward.1} parent=1 // pred_region
      %s152 = ssub.s32 512, 512
      %153 = vsyncadd [#allocation19], %s152
      %s154 = sshll.u32 [#allocation20], 4
      %s155 = int_to_ptr.vmem [resolvable:$true] %s154
      %160 = dma.hbm_to_vmem [thread:$0]  %s10, 512, %s155, [#allocation19], 128, 128, 8
    $region45: #{vae5_forward.1} parent=1 // pred_fallthru
      _
    // Predicated region
    $region46: #{vae5_forward.1} parent=1 // pred_check
      _
    $region47: #{vae5_forward.1} parent=1 // pred_check_branch
      %162 = sbr.rel (0) target = $region49
    $region48: #{vae5_forward.1} parent=1 // pred_region
      %s164 = ssub.s32 1024, 1024
      %165 = vsyncadd [#allocation22], %s164
      %s166 = sshll.u32 [#allocation21], 4
      %s167 = int_to_ptr.vmem [resolvable:$true] %s166
      %172 = dma.hbm_to_vmem [thread:$0]  %s11, 1024, %s167, [#allocation22], 256, 256, 16
    $region49: #{vae5_forward.1} parent=1 // pred_fallthru
      _
    // Predicated region
    $region50: #{vae5_forward.1} parent=1 // pred_check
      _
    $region51: #{vae5_forward.1} parent=1 // pred_check_branch
      %174 = sbr.rel (0) target = $region53
    $region52: #{vae5_forward.1} parent=1 // pred_region
      %s176 = ssub.s32 32, 32
      %177 = vsyncadd [#allocation22], %s176
      %s179 = sshll.u32 [#allocation23], 4
      %s180 = int_to_ptr.vmem [resolvable:$true] %s179
      %182 = dma.hbm_to_vmem [thread:$0]  %s12, 32, %s180, [#allocation22]
    $region53: #{vae5_forward.1} parent=1 // pred_fallthru
      _
    // Predicated region
    $region54: #{vae5_forward.1} parent=1 // pred_check
      _
    $region55: #{vae5_forward.1} parent=1 // pred_check_branch
      %184 = sbr.rel (0) target = $region57
    $region56: #{vae5_forward.1} parent=1 // pred_region
      %s186 = ssub.s32 98304, 98304
      %187 = vsyncadd [#allocation25], %s186
      %s188 = sshll.u32 [#allocation24], 4
      %s189 = int_to_ptr.vmem [resolvable:$true] %s188
      %194 = dma.hbm_to_vmem [thread:$0]  %s13, 98304, %s189, [#allocation25], 256, 256, 16
    $region57: #{vae5_forward.1} parent=1 // pred_fallthru
      _
    // Predicated region
    $region58: #{vae5_forward.1} parent=1 // pred_check
      _
    $region59: #{vae5_forward.1} parent=1 // pred_check_branch
      %196 = sbr.rel (0) target = $region61
    $region60: #{vae5_forward.1} parent=1 // pred_region
      %s198 = ssub.s32 128, 128
      %199 = vsyncadd [#allocation25], %s198
      %s200 = sshll.u32 [#allocation26], 4
      %s201 = int_to_ptr.vmem [resolvable:$true] %s200
      %206 = dma.hbm_to_vmem [thread:$0]  %s14, 128, %s201, [#allocation25], 32, 32, 2
    $region61: #{vae5_forward.1} parent=1 // pred_fallthru
      _
    // Predicated region
    $region62: #{vae5_forward.1} parent=1 // pred_check
      _
    $region63: #{vae5_forward.1} parent=1 // pred_check_branch
      %208 = sbr.rel (0) target = $region65
    $region64: #{vae5_forward.1} parent=1 // pred_region
      %209 = dma.done [#allocation4], 1024
    $region65: #{vae5_forward.1} parent=1 // pred_fallthru
      _
    // Predicated region
    $region66: #{vae5_forward.1} parent=1 // pred_check
      _
    $region67: #{vae5_forward.1} parent=1 // pred_check_branch
      %211 = sbr.rel (0) target = $region69
    $region68: #{vae5_forward.1} parent=1 // pred_region
      %212 = dma.done [#allocation7], 98304
    $region69: #{vae5_forward.1} parent=1 // pred_fallthru
      _
    // Predicated region
    $region70: #{vae5_forward.1} parent=1 // pred_check
      _
    $region71: #{vae5_forward.1} parent=1 // pred_check_branch
      %214 = sbr.rel (0) target = $region73
    $region72: #{vae5_forward.1} parent=1 // pred_region
      %215 = dma.done [#allocation7], 64
    $region73: #{vae5_forward.1} parent=1 // pred_fallthru
      _
    // Predicated region
    $region74: #{vae5_forward.1} parent=1 // pred_check
      _
    $region75: #{vae5_forward.1} parent=1 // pred_check_branch
      %217 = sbr.rel (0) target = $region77
    $region76: #{vae5_forward.1} parent=1 // pred_region
      %218 = dma.done [#allocation10], 64
    $region77: #{vae5_forward.1} parent=1 // pred_fallthru
      _
    // Predicated region
    $region78: #{vae5_forward.1} parent=1 // pred_check
      _
    $region79: #{vae5_forward.1} parent=1 // pred_check_branch
      %220 = sbr.rel (0) target = $region81
    $region80: #{vae5_forward.1} parent=1 // pred_region
      %221 = dma.done [#allocation10], 4096
    $region81: #{vae5_forward.1} parent=1 // pred_fallthru
      _
    // Predicated region
    $region82: #{vae5_forward.1} parent=1 // pred_check
      _
    $region83: #{vae5_forward.1} parent=1 // pred_check_branch
      %223 = sbr.rel (0) target = $region85
    $region84: #{vae5_forward.1} parent=1 // pred_region
      %224 = dma.done [#allocation13], 512
    $region85: #{vae5_forward.1} parent=1 // pred_fallthru
      _
    // Predicated region
    $region86: #{vae5_forward.1} parent=1 // pred_check
      _
    $region87: #{vae5_forward.1} parent=1 // pred_check_branch
      %226 = sbr.rel (0) target = $region89
    $region88: #{vae5_forward.1} parent=1 // pred_region
      %227 = dma.done [#allocation13], 4096
    $region89: #{vae5_forward.1} parent=1 // pred_fallthru
      _
    // Predicated region
    $region90: #{vae5_forward.1} parent=1 // pred_check
      _
    $region91: #{vae5_forward.1} parent=1 // pred_check_branch
      %229 = sbr.rel (0) target = $region93
    $region92: #{vae5_forward.1} parent=1 // pred_region
      %230 = dma.done [#allocation16], 16
    $region93: #{vae5_forward.1} parent=1 // pred_fallthru
      _
    // Predicated region
    $region94: #{vae5_forward.1} parent=1 // pred_check
      _
    $region95: #{vae5_forward.1} parent=1 // pred_check_branch
      %232 = sbr.rel (0) target = $region97
    $region96: #{vae5_forward.1} parent=1 // pred_region
      %233 = dma.done [#allocation16], 4096
    $region97: #{vae5_forward.1} parent=1 // pred_fallthru
      _
    // Predicated region
    $region98: #{vae5_forward.1} parent=1 // pred_check
      _
    $region99: #{vae5_forward.1} parent=1 // pred_check_branch
      %235 = sbr.rel (0) target = $region101
    $region100: #{vae5_forward.1} parent=1 // pred_region
      %236 = dma.done [#allocation19], 16
    $region101: #{vae5_forward.1} parent=1 // pred_fallthru
      _
    // Predicated region
    $region102: #{vae5_forward.1} parent=1 // pred_check
      _
    $region103: #{vae5_forward.1} parent=1 // pred_check_branch
      %238 = sbr.rel (0) target = $region105
    $region104: #{vae5_forward.1} parent=1 // pred_region
      %239 = dma.done [#allocation19], 512
    $region105: #{vae5_forward.1} parent=1 // pred_fallthru
      _
    // Predicated region
    $region106: #{vae5_forward.1} parent=1 // pred_check
      _
    $region107: #{vae5_forward.1} parent=1 // pred_check_branch
      %241 = sbr.rel (0) target = $region109
    $region108: #{vae5_forward.1} parent=1 // pred_region
      %242 = dma.done [#allocation22], 1024
    $region109: #{vae5_forward.1} parent=1 // pred_fallthru
      _
    // Predicated region
    $region110: #{vae5_forward.1} parent=1 // pred_check
      _
    $region111: #{vae5_forward.1} parent=1 // pred_check_branch
      %244 = sbr.rel (0) target = $region113
    $region112: #{vae5_forward.1} parent=1 // pred_region
      %245 = dma.done [#allocation22], 32
    $region113: #{vae5_forward.1} parent=1 // pred_fallthru
      _
    // Predicated region
    $region114: #{vae5_forward.1} parent=1 // pred_check
      _
    $region115: #{vae5_forward.1} parent=1 // pred_check_branch
      %247 = sbr.rel (0) target = $region117
    $region116: #{vae5_forward.1} parent=1 // pred_region
      %248 = dma.done [#allocation25], 98304
    $region117: #{vae5_forward.1} parent=1 // pred_fallthru
      _
    // Predicated region
    $region118: #{vae5_forward.1} parent=1 // pred_check
      _
    $region119: #{vae5_forward.1} parent=1 // pred_check_branch
      %250 = sbr.rel (0) target = $region121
    $region120: #{vae5_forward.1} parent=1 // pred_region
      %251 = dma.done [#allocation25], 128
    $region121: #{vae5_forward.1} parent=1 // pred_fallthru
      _
    %252 = vst [vmem:[#allocation2] sm:$0x3] 0.0
    %253 = vst [vmem:[#allocation2 + $0x8] sm:$0x3] 0.0
    %254 = vst [vmem:[#allocation2 + $0x40] sm:$0xc] 0.0
    %255 = vst [vmem:[#allocation2 + $0x48] sm:$0xc] 0.0
    %v256 = vld [vmem:[#allocation3] sm:$0xff]
    %v257 = vld [vmem:[#allocation3 + $0x8] sm:$0xff]
    %v258 = vld [vmem:[#allocation3 + $0x10] sm:$0xff]
    %v259 = vld [vmem:[#allocation3 + $0x18] sm:$0xff]
    %v260 = vld [vmem:[#allocation3 + $0x20] sm:$0xff]
    %v261 = vld [vmem:[#allocation3 + $0x28] sm:$0xff]
    %v262 = vld [vmem:[#allocation3 + $0x30] sm:$0xff]
    %v263 = vld [vmem:[#allocation3 + $0x38] sm:$0xff]
    %vm272 = vcmask 1041408
    %v273 = vrot.slane %v256, 6
    %v274 = vrot.slane %v257, 6
    %v275 = vrot.slane %v258, 6
    %v276 = vsel %vm272, %v273, %v275
    %v277 = vrot.slane %v259, 6
    %v278 = vsel %vm272, %v274, %v277
    %v279 = vrot.slane %v260, 6
    %v280 = vsel %vm272, %v275, %v279
    %v281 = vrot.slane %v261, 6
    %v282 = vsel %vm272, %v277, %v281
    %v283 = vrot.slane %v262, 6
    %v284 = vsel %vm272, %v279, %v283
    %v285 = vrot.slane %v263, 6
    %v286 = vsel %vm272, %v281, %v285
    %297 = vst [vmem:[#allocation2] sm:$0xfc] %v273
    %298 = vst [vmem:[#allocation2 + $0x8] sm:$0xfc] %v274
    %299 = vst [vmem:[#allocation2 + $0x10] sm:$0xff] %v276
    %300 = vst [vmem:[#allocation2 + $0x18] sm:$0xff] %v278
    %301 = vst [vmem:[#allocation2 + $0x20] sm:$0xff] %v280
    %302 = vst [vmem:[#allocation2 + $0x28] sm:$0xff] %v282
    %303 = vst [vmem:[#allocation2 + $0x30] sm:$0xff] %v284
    %304 = vst [vmem:[#allocation2 + $0x38] sm:$0xff] %v286
    %305 = vst [vmem:[#allocation2 + $0x40] sm:$0x3] %v283
    %306 = vst [vmem:[#allocation2 + $0x48] sm:$0x3] %v285
    %v307 = vld [vmem:[#allocation2] sm:$0xff]
    %v308 = vld [vmem:[#allocation2 + $0x8] sm:$0xff]
    %v309 = vld [vmem:[#allocation2 + $0x10] sm:$0xff]
    %v310 = vld [vmem:[#allocation2 + $0x18] sm:$0xff]
    %v311 = vld [vmem:[#allocation2 + $0x20] sm:$0xff]
    %v312 = vld [vmem:[#allocation2 + $0x28] sm:$0xff]
    %v313 = vld [vmem:[#allocation2 + $0x30] sm:$0xff]
    %v314 = vld [vmem:[#allocation2 + $0x38] sm:$0xff]
    %v315 = vld [vmem:[#allocation6] sm:$0xff]
    %v316 = vld [vmem:[#allocation6 + $0x8] sm:$0xff]
    %v317 = vld [vmem:[#allocation6 + $0x10] sm:$0xff]
    %v318 = vld [vmem:[#allocation6 + $0x18] sm:$0xff]
    %v319 = vld [vmem:[#allocation6 + $0x20] sm:$0xff]
    %v320 = vld [vmem:[#allocation6 + $0x28] sm:$0xff]
    %v321 = vld [vmem:[#allocation6 + $0x30] sm:$0xff]
    %v322 = vld [vmem:[#allocation6 + $0x38] sm:$0xff]
    %v323 = vld [vmem:[#allocation6 + $0x40] sm:$0xff]
    %v324 = vld [vmem:[#allocation6 + $0x48] sm:$0xff]
    %v325 = vld [vmem:[#allocation6 + $0x50] sm:$0xff]
    %v326 = vld [vmem:[#allocation6 + $0x58] sm:$0xff]
    %v327 = vld [vmem:[#allocation6 + $0x60] sm:$0xff]
    %v328 = vld [vmem:[#allocation6 + $0x68] sm:$0xff]
    %v329 = vld [vmem:[#allocation6 + $0x70] sm:$0xff]
    %v330 = vld [vmem:[#allocation6 + $0x78] sm:$0xff]
    %v331 = vld [vmem:[#allocation6 + $0x80] sm:$0xff]
    %v332 = vld [vmem:[#allocation6 + $0x88] sm:$0xff]
    %v333 = vld [vmem:[#allocation6 + $0x90] sm:$0xff]
    %v334 = vld [vmem:[#allocation6 + $0x98] sm:$0xff]
    %v335 = vld [vmem:[#allocation6 + $0xa0] sm:$0xff]
    %v336 = vld [vmem:[#allocation6 + $0xa8] sm:$0xff]
    %v337 = vld [vmem:[#allocation6 + $0xb0] sm:$0xff]
    %v338 = vld [vmem:[#allocation6 + $0xb8] sm:$0xff]
    %v339 = vld [vmem:[#allocation6 + $0xc0] sm:$0xff]
    %v340 = vld [vmem:[#allocation6 + $0xc8] sm:$0xff]
    %v341 = vld [vmem:[#allocation6 + $0xd0] sm:$0xff]
    %v342 = vld [vmem:[#allocation6 + $0xd8] sm:$0xff]
    %v343 = vld [vmem:[#allocation6 + $0xe0] sm:$0xff]
    %v344 = vld [vmem:[#allocation6 + $0xe8] sm:$0xff]
    %v345 = vld [vmem:[#allocation6 + $0xf0] sm:$0xff]
    %v346 = vld [vmem:[#allocation6 + $0xf8] sm:$0xff]
    %v347 = vld [vmem:[#allocation6 + $0x100] sm:$0xff]
    %v348 = vld [vmem:[#allocation6 + $0x108] sm:$0xff]
    %v349 = vld [vmem:[#allocation6 + $0x110] sm:$0xff]
    %v350 = vld [vmem:[#allocation6 + $0x118] sm:$0xff]
    %v351 = vld [vmem:[#allocation6 + $0x120] sm:$0xff]
    %v352 = vld [vmem:[#allocation6 + $0x128] sm:$0xff]
    %v353 = vld [vmem:[#allocation6 + $0x130] sm:$0xff]
    %v354 = vld [vmem:[#allocation6 + $0x138] sm:$0xff]
    %v355 = vld [vmem:[#allocation6 + $0x140] sm:$0xff]
    %v356 = vld [vmem:[#allocation6 + $0x148] sm:$0xff]
    %v357 = vld [vmem:[#allocation6 + $0x150] sm:$0xff]
    %v358 = vld [vmem:[#allocation6 + $0x158] sm:$0xff]
    %v359 = vld [vmem:[#allocation6 + $0x160] sm:$0xff]
    %v360 = vld [vmem:[#allocation6 + $0x168] sm:$0xff]
    %v361 = vld [vmem:[#allocation6 + $0x170] sm:$0xff]
    %v362 = vld [vmem:[#allocation6 + $0x178] sm:$0xff]
    %v363 = vld [vmem:[#allocation6 + $0x180] sm:$0xff]
    %v364 = vld [vmem:[#allocation6 + $0x188] sm:$0xff]
    %v365 = vld [vmem:[#allocation6 + $0x190] sm:$0xff]
    %v366 = vld [vmem:[#allocation6 + $0x198] sm:$0xff]
    %v367 = vld [vmem:[#allocation6 + $0x1a0] sm:$0xff]
    %v368 = vld [vmem:[#allocation6 + $0x1a8] sm:$0xff]
    %v369 = vld [vmem:[#allocation6 + $0x1b0] sm:$0xff]
    %v370 = vld [vmem:[#allocation6 + $0x1b8] sm:$0xff]
    %v371 = vld [vmem:[#allocation6 + $0x1c0] sm:$0xff]
    %v372 = vld [vmem:[#allocation6 + $0x1c8] sm:$0xff]
    %v373 = vld [vmem:[#allocation6 + $0x1d0] sm:$0xff]
    %v374 = vld [vmem:[#allocation6 + $0x1d8] sm:$0xff]
    %v375 = vld [vmem:[#allocation6 + $0x1e0] sm:$0xff]
    %v376 = vld [vmem:[#allocation6 + $0x1e8] sm:$0xff]
    %v377 = vld [vmem:[#allocation6 + $0x1f0] sm:$0xff]
    %v378 = vld [vmem:[#allocation6 + $0x1f8] sm:$0xff]
    %v379 = vld [vmem:[#allocation2] sm:$0xfc]
    %v380 = vld [vmem:[#allocation2 + $0x8] sm:$0xfc]
    %v381 = vld [vmem:[#allocation2 + $0x40] sm:$0x3]
    %v382 = vld [vmem:[#allocation2 + $0x48] sm:$0x3]
    %s383 = scalar_lea.vmem [#allocation6], 512
    %v384 = vld [vmem:[%s383] sm:$0xff]
    %v385 = vld [vmem:[%s383 + $0x8] sm:$0xff]
    %v386 = vld [vmem:[%s383 + $0x10] sm:$0xff]
    %v387 = vld [vmem:[%s383 + $0x18] sm:$0xff]
    %v388 = vld [vmem:[%s383 + $0x20] sm:$0xff]
    %v389 = vld [vmem:[%s383 + $0x28] sm:$0xff]
    %v390 = vld [vmem:[%s383 + $0x30] sm:$0xff]
    %v391 = vld [vmem:[%s383 + $0x38] sm:$0xff]
    %v392 = vld [vmem:[%s383 + $0x40] sm:$0xff]
    %v393 = vld [vmem:[%s383 + $0x48] sm:$0xff]
    %v394 = vld [vmem:[%s383 + $0x50] sm:$0xff]
    %v395 = vld [vmem:[%s383 + $0x58] sm:$0xff]
    %v396 = vld [vmem:[%s383 + $0x60] sm:$0xff]
    %v397 = vld [vmem:[%s383 + $0x68] sm:$0xff]
    %v398 = vld [vmem:[%s383 + $0x70] sm:$0xff]
    %v399 = vld [vmem:[%s383 + $0x78] sm:$0xff]
    %v400 = vld [vmem:[%s383 + $0x80] sm:$0xff]
    %v401 = vld [vmem:[%s383 + $0x88] sm:$0xff]
    %v402 = vld [vmem:[%s383 + $0x90] sm:$0xff]
    %v403 = vld [vmem:[%s383 + $0x98] sm:$0xff]
    %v404 = vld [vmem:[%s383 + $0xa0] sm:$0xff]
    %v405 = vld [vmem:[%s383 + $0xa8] sm:$0xff]
    %v406 = vld [vmem:[%s383 + $0xb0] sm:$0xff]
    %v407 = vld [vmem:[%s383 + $0xb8] sm:$0xff]
    %v408 = vld [vmem:[%s383 + $0xc0] sm:$0xff]
    %v409 = vld [vmem:[%s383 + $0xc8] sm:$0xff]
    %v410 = vld [vmem:[%s383 + $0xd0] sm:$0xff]
    %v411 = vld [vmem:[%s383 + $0xd8] sm:$0xff]
    %v412 = vld [vmem:[%s383 + $0xe0] sm:$0xff]
    %v413 = vld [vmem:[%s383 + $0xe8] sm:$0xff]
    %v414 = vld [vmem:[%s383 + $0xf0] sm:$0xff]
    %v415 = vld [vmem:[%s383 + $0xf8] sm:$0xff]
    %v416 = vld [vmem:[%s383 + $0x100] sm:$0xff]
    %v417 = vld [vmem:[%s383 + $0x108] sm:$0xff]
    %v418 = vld [vmem:[%s383 + $0x110] sm:$0xff]
    %v419 = vld [vmem:[%s383 + $0x118] sm:$0xff]
    %v420 = vld [vmem:[%s383 + $0x120] sm:$0xff]
    %v421 = vld [vmem:[%s383 + $0x128] sm:$0xff]
    %v422 = vld [vmem:[%s383 + $0x130] sm:$0xff]
    %v423 = vld [vmem:[%s383 + $0x138] sm:$0xff]
    %v424 = vld [vmem:[%s383 + $0x140] sm:$0xff]
    %v425 = vld [vmem:[%s383 + $0x148] sm:$0xff]
    %v426 = vld [vmem:[%s383 + $0x150] sm:$0xff]
    %v427 = vld [vmem:[%s383 + $0x158] sm:$0xff]
    %v428 = vld [vmem:[%s383 + $0x160] sm:$0xff]
    %v429 = vld [vmem:[%s383 + $0x168] sm:$0xff]
    %v430 = vld [vmem:[%s383 + $0x170] sm:$0xff]
    %v431 = vld [vmem:[%s383 + $0x178] sm:$0xff]
    %v432 = vld [vmem:[%s383 + $0x180] sm:$0xff]
    %v433 = vld [vmem:[%s383 + $0x188] sm:$0xff]
    %v434 = vld [vmem:[%s383 + $0x190] sm:$0xff]
    %v435 = vld [vmem:[%s383 + $0x198] sm:$0xff]
    %v436 = vld [vmem:[%s383 + $0x1a0] sm:$0xff]
    %v437 = vld [vmem:[%s383 + $0x1a8] sm:$0xff]
    %v438 = vld [vmem:[%s383 + $0x1b0] sm:$0xff]
    %v439 = vld [vmem:[%s383 + $0x1b8] sm:$0xff]
    %v440 = vld [vmem:[%s383 + $0x1c0] sm:$0xff]
    %v441 = vld [vmem:[%s383 + $0x1c8] sm:$0xff]
    %v442 = vld [vmem:[%s383 + $0x1d0] sm:$0xff]
    %v443 = vld [vmem:[%s383 + $0x1d8] sm:$0xff]
    %v444 = vld [vmem:[%s383 + $0x1e0] sm:$0xff]
    %v445 = vld [vmem:[%s383 + $0x1e8] sm:$0xff]
    %v446 = vld [vmem:[%s383 + $0x1f0] sm:$0xff]
    %v447 = vld [vmem:[%s383 + $0x1f8] sm:$0xff]
    %vm458 = vcmask 1045504
    %v459 = vrot.slane %v379, 2
    %v460 = vrot.slane %v309, 2
    %v461 = vsel %vm458, %v459, %v460
    %v462 = vrot.slane %v380, 2
    %v463 = vrot.slane %v310, 2
    %v464 = vsel %vm458, %v462, %v463
    %v465 = vrot.slane %v311, 2
    %v466 = vsel %vm458, %v460, %v465
    %v467 = vrot.slane %v312, 2
    %v468 = vsel %vm458, %v463, %v467
    %v469 = vrot.slane %v313, 2
    %v470 = vsel %vm458, %v465, %v469
    %v471 = vrot.slane %v314, 2
    %v472 = vsel %vm458, %v467, %v471
    %v473 = vrot.slane %v381, 2
    %v474 = vsel %vm458, %v469, %v473
    %v475 = vrot.slane %v382, 2
    %v476 = vsel %vm458, %v471, %v475
    %485 = vmatprep.subr.mxu0 %v385
    %486 = vmatpush1.msra.mxu0 %v384
    %487 = vmatprep.subr.mxu0 %v387
    %488 = vmatpush1.msra.mxu0 %v386
    %489 = vmatprep.subr.mxu0 %v389
    %490 = vmatpush1.msra.mxu0 %v388
    %491 = vmatprep.subr.mxu0 %v391
    %492 = vmatpush1.msra.mxu0 %v390
    %493 = vmatprep.subr.mxu0 %v393
    %494 = vmatpush1.msra.mxu0 %v392
    %495 = vmatprep.subr.mxu0 %v395
    %496 = vmatpush1.msra.mxu0 %v394
    %497 = vmatprep.subr.mxu0 %v397
    %498 = vmatpush1.msra.mxu0 %v396
    %499 = vmatprep.subr.mxu0 %v399
    %500 = vmatpush1.msra.mxu0 %v398
    %501 = vmatprep.subr.mxu0 %v401
    %502 = vmatpush1.msra.mxu0 %v400
    %503 = vmatprep.subr.mxu0 %v403
    %504 = vmatpush1.msra.mxu0 %v402
    %505 = vmatprep.subr.mxu0 %v405
    %506 = vmatpush1.msra.mxu0 %v404
    %507 = vmatprep.subr.mxu0 %v407
    %508 = vmatpush1.msra.mxu0 %v406
    %509 = vmatprep.subr.mxu0 %v409
    %510 = vmatpush1.msra.mxu0 %v408
    %511 = vmatprep.subr.mxu0 %v411
    %512 = vmatpush1.msra.mxu0 %v410
    %513 = vmatprep.subr.mxu0 %v413
    %514 = vmatpush1.msra.mxu0 %v412
    %515 = vmatprep.subr.mxu0 %v415
    %516 = vmatpush1.msra.mxu0 %v414
    %517 = vmatprep.subr.mxu0 %v417
    %518 = vmatpush1.msra.mxu0 %v416
    %519 = vmatprep.subr.mxu0 %v419
    %520 = vmatpush1.msra.mxu0 %v418
    %521 = vmatprep.subr.mxu0 %v421
    %522 = vmatpush1.msra.mxu0 %v420
    %523 = vmatprep.subr.mxu0 %v423
    %524 = vmatpush1.msra.mxu0 %v422
    %525 = vmatprep.subr.mxu0 %v425
    %526 = vmatpush1.msra.mxu0 %v424
    %527 = vmatprep.subr.mxu0 %v427
    %528 = vmatpush1.msra.mxu0 %v426
    %529 = vmatprep.subr.mxu0 %v429
    %530 = vmatpush1.msra.mxu0 %v428
    %531 = vmatprep.subr.mxu0 %v431
    %532 = vmatpush1.msra.mxu0 %v430
    %533 = vmatprep.subr.mxu0 %v433
    %534 = vmatpush1.msra.mxu0 %v432
    %535 = vmatprep.subr.mxu0 %v435
    %536 = vmatpush1.msra.mxu0 %v434
    %537 = vmatprep.subr.mxu0 %v437
    %538 = vmatpush1.msra.mxu0 %v436
    %539 = vmatprep.subr.mxu0 %v439
    %540 = vmatpush1.msra.mxu0 %v438
    %541 = vmatprep.subr.mxu0 %v441
    %542 = vmatpush1.msra.mxu0 %v440
    %543 = vmatprep.subr.mxu0 %v443
    %544 = vmatpush1.msra.mxu0 %v442
    %545 = vmatprep.subr.mxu0 %v445
    %546 = vmatpush1.msra.mxu0 %v444
    %547 = vmatprep.subr.mxu0 %v447
    %548 = vmatpush1.msra.mxu0 %v446
    %549 = vmatprep.mubr.f32.mxu0 %v464
    %550 = vmatmul.mubr.f32.gmra.mrb[0].mxu0 %v461
    %v551 = vpop.f32.mrb[0].mxu0
    %v552 = vadd.f32 0.0, %v551
    %v553 = vpop.f32.mrb[0].mxu0
    %v554 = vadd.f32 0.0, %v553
    %555 = vmatprep.mubr.f32.mxu0 %v468
    %556 = vmatmul.mubr.f32.gmra.mrb[0].mxu0 %v466
    %v557 = vpop.f32.mrb[0].mxu0
    %v558 = vadd.f32 0.0, %v557
    %v559 = vpop.f32.mrb[0].mxu0
    %v560 = vadd.f32 0.0, %v559
    %561 = vmatprep.mubr.f32.mxu0 %v472
    %562 = vmatmul.mubr.f32.gmra.mrb[0].mxu0 %v470
    %v563 = vpop.f32.mrb[0].mxu0
    %v564 = vadd.f32 0.0, %v563
    %v565 = vpop.f32.mrb[0].mxu0
    %v566 = vadd.f32 0.0, %v565
    %567 = vmatprep.mubr.f32.mxu0 %v476
    %568 = vmatmul.mubr.f32.gmra.mrb[0].mxu0 %v474
    %v569 = vpop.f32.mrb[0].mxu0
    %v570 = vadd.f32 0.0, %v569
    %v571 = vpop.f32.mrb[0].mxu0
    %v572 = vadd.f32 0.0, %v571
    %573 = vdwg.mxu0
    %574 = vmatprep.subr.mxu0 %v316
    %575 = vmatpush1.msra.mxu0 %v315
    %576 = vmatprep.subr.mxu0 %v318
    %577 = vmatpush1.msra.mxu0 %v317
    %578 = vmatprep.subr.mxu0 %v320
    %579 = vmatpush1.msra.mxu0 %v319
    %580 = vmatprep.subr.mxu0 %v322
    %581 = vmatpush1.msra.mxu0 %v321
    %582 = vmatprep.subr.mxu0 %v324
    %583 = vmatpush1.msra.mxu0 %v323
    %584 = vmatprep.subr.mxu0 %v326
    %585 = vmatpush1.msra.mxu0 %v325
    %586 = vmatprep.subr.mxu0 %v328
    %587 = vmatpush1.msra.mxu0 %v327
    %588 = vmatprep.subr.mxu0 %v330
    %589 = vmatpush1.msra.mxu0 %v329
    %590 = vmatprep.subr.mxu0 %v332
    %591 = vmatpush1.msra.mxu0 %v331
    %592 = vmatprep.subr.mxu0 %v334
    %593 = vmatpush1.msra.mxu0 %v333
    %594 = vmatprep.subr.mxu0 %v336
    %595 = vmatpush1.msra.mxu0 %v335
    %596 = vmatprep.subr.mxu0 %v338
    %597 = vmatpush1.msra.mxu0 %v337
    %598 = vmatprep.subr.mxu0 %v340
    %599 = vmatpush1.msra.mxu0 %v339
    %600 = vmatprep.subr.mxu0 %v342
    %601 = vmatpush1.msra.mxu0 %v341
    %602 = vmatprep.subr.mxu0 %v344
    %603 = vmatpush1.msra.mxu0 %v343
    %604 = vmatprep.subr.mxu0 %v346
    %605 = vmatpush1.msra.mxu0 %v345
    %606 = vmatprep.subr.mxu0 %v348
    %607 = vmatpush1.msra.mxu0 %v347
    %608 = vmatprep.subr.mxu0 %v350
    %609 = vmatpush1.msra.mxu0 %v349
    %610 = vmatprep.subr.mxu0 %v352
    %611 = vmatpush1.msra.mxu0 %v351
    %612 = vmatprep.subr.mxu0 %v354
    %613 = vmatpush1.msra.mxu0 %v353
    %614 = vmatprep.subr.mxu0 %v356
    %615 = vmatpush1.msra.mxu0 %v355
    %616 = vmatprep.subr.mxu0 %v358
    %617 = vmatpush1.msra.mxu0 %v357
    %618 = vmatprep.subr.mxu0 %v360
    %619 = vmatpush1.msra.mxu0 %v359
    %620 = vmatprep.subr.mxu0 %v362
    %621 = vmatpush1.msra.mxu0 %v361
    %622 = vmatprep.subr.mxu0 %v364
    %623 = vmatpush1.msra.mxu0 %v363
    %624 = vmatprep.subr.mxu0 %v366
    %625 = vmatpush1.msra.mxu0 %v365
    %626 = vmatprep.subr.mxu0 %v368
    %627 = vmatpush1.msra.mxu0 %v367
    %628 = vmatprep.subr.mxu0 %v370
    %629 = vmatpush1.msra.mxu0 %v369
    %630 = vmatprep.subr.mxu0 %v372
    %631 = vmatpush1.msra.mxu0 %v371
    %632 = vmatprep.subr.mxu0 %v374
    %633 = vmatpush1.msra.mxu0 %v373
    %634 = vmatprep.subr.mxu0 %v376
    %635 = vmatpush1.msra.mxu0 %v375
    %636 = vmatprep.subr.mxu0 %v378
    %637 = vmatpush1.msra.mxu0 %v377
    %638 = vmatprep.mubr.f32.mxu0 %v308
    %639 = vmatmul.mubr.f32.gmra.mrb[0].mxu0 %v307
    %v640 = vpop.f32.mrb[0].mxu0
    %v641 = vadd.f32 %v552, %v640
    %v642 = vpop.f32.mrb[0].mxu0
    %v643 = vadd.f32 %v554, %v642
    %644 = vmatprep.mubr.f32.mxu0 %v310
    %645 = vmatmul.mubr.f32.gmra.mrb[0].mxu0 %v309
    %v646 = vpop.f32.mrb[0].mxu0
    %v647 = vadd.f32 %v558, %v646
    %v648 = vpop.f32.mrb[0].mxu0
    %v649 = vadd.f32 %v560, %v648
    %650 = vmatprep.mubr.f32.mxu0 %v312
    %651 = vmatmul.mubr.f32.gmra.mrb[0].mxu0 %v311
    %v652 = vpop.f32.mrb[0].mxu0
    %v653 = vadd.f32 %v564, %v652
    %v654 = vpop.f32.mrb[0].mxu0
    %v655 = vadd.f32 %v566, %v654
    %656 = vmatprep.mubr.f32.mxu0 %v314
    %657 = vmatmul.mubr.f32.gmra.mrb[0].mxu0 %v313
    %v658 = vpop.f32.mrb[0].mxu0
    %v659 = vadd.f32 %v570, %v658
    %v660 = vpop.f32.mrb[0].mxu0
    %v661 = vadd.f32 %v572, %v660
    %662 = vdwg.mxu0
    %v663 = vld [vmem:[#allocation2] sm:$0xf0]
    %v664 = vld [vmem:[#allocation2 + $0x8] sm:$0xf0]
    %v665 = vld [vmem:[#allocation2 + $0x40] sm:$0xf]
    %v666 = vld [vmem:[#allocation2 + $0x48] sm:$0xf]
    %s667 = scalar_lea.vmem [#allocation6], 1024
    %v668 = vld [vmem:[%s667] sm:$0xff]
    %v669 = vld [vmem:[%s667 + $0x8] sm:$0xff]
    %v670 = vld [vmem:[%s667 + $0x10] sm:$0xff]
    %v671 = vld [vmem:[%s667 + $0x18] sm:$0xff]
    %v672 = vld [vmem:[%s667 + $0x20] sm:$0xff]
    %v673 = vld [vmem:[%s667 + $0x28] sm:$0xff]
    %v674 = vld [vmem:[%s667 + $0x30] sm:$0xff]
    %v675 = vld [vmem:[%s667 + $0x38] sm:$0xff]
    %v676 = vld [vmem:[%s667 + $0x40] sm:$0xff]
    %v677 = vld [vmem:[%s667 + $0x48] sm:$0xff]
    %v678 = vld [vmem:[%s667 + $0x50] sm:$0xff]
    %v679 = vld [vmem:[%s667 + $0x58] sm:$0xff]
    %v680 = vld [vmem:[%s667 + $0x60] sm:$0xff]
    %v681 = vld [vmem:[%s667 + $0x68] sm:$0xff]
    %v682 = vld [vmem:[%s667 + $0x70] sm:$0xff]
    %v683 = vld [vmem:[%s667 + $0x78] sm:$0xff]
    %v684 = vld [vmem:[%s667 + $0x80] sm:$0xff]
    %v685 = vld [vmem:[%s667 + $0x88] sm:$0xff]
    %v686 = vld [vmem:[%s667 + $0x90] sm:$0xff]
    %v687 = vld [vmem:[%s667 + $0x98] sm:$0xff]
    %v688 = vld [vmem:[%s667 + $0xa0] sm:$0xff]
    %v689 = vld [vmem:[%s667 + $0xa8] sm:$0xff]
    %v690 = vld [vmem:[%s667 + $0xb0] sm:$0xff]
    %v691 = vld [vmem:[%s667 + $0xb8] sm:$0xff]
    %v692 = vld [vmem:[%s667 + $0xc0] sm:$0xff]
    %v693 = vld [vmem:[%s667 + $0xc8] sm:$0xff]
    %v694 = vld [vmem:[%s667 + $0xd0] sm:$0xff]
    %v695 = vld [vmem:[%s667 + $0xd8] sm:$0xff]
    %v696 = vld [vmem:[%s667 + $0xe0] sm:$0xff]
    %v697 = vld [vmem:[%s667 + $0xe8] sm:$0xff]
    %v698 = vld [vmem:[%s667 + $0xf0] sm:$0xff]
    %v699 = vld [vmem:[%s667 + $0xf8] sm:$0xff]
    %v700 = vld [vmem:[%s667 + $0x100] sm:$0xff]
    %v701 = vld [vmem:[%s667 + $0x108] sm:$0xff]
    %v702 = vld [vmem:[%s667 + $0x110] sm:$0xff]
    %v703 = vld [vmem:[%s667 + $0x118] sm:$0xff]
    %v704 = vld [vmem:[%s667 + $0x120] sm:$0xff]
    %v705 = vld [vmem:[%s667 + $0x128] sm:$0xff]
    %v706 = vld [vmem:[%s667 + $0x130] sm:$0xff]
    %v707 = vld [vmem:[%s667 + $0x138] sm:$0xff]
    %v708 = vld [vmem:[%s667 + $0x140] sm:$0xff]
    %v709 = vld [vmem:[%s667 + $0x148] sm:$0xff]
    %v710 = vld [vmem:[%s667 + $0x150] sm:$0xff]
    %v711 = vld [vmem:[%s667 + $0x158] sm:$0xff]
    %v712 = vld [vmem:[%s667 + $0x160] sm:$0xff]
    %v713 = vld [vmem:[%s667 + $0x168] sm:$0xff]
    %v714 = vld [vmem:[%s667 + $0x170] sm:$0xff]
    %v715 = vld [vmem:[%s667 + $0x178] sm:$0xff]
    %v716 = vld [vmem:[%s667 + $0x180] sm:$0xff]
    %v717 = vld [vmem:[%s667 + $0x188] sm:$0xff]
    %v718 = vld [vmem:[%s667 + $0x190] sm:$0xff]
    %v719 = vld [vmem:[%s667 + $0x198] sm:$0xff]
    %v720 = vld [vmem:[%s667 + $0x1a0] sm:$0xff]
    %v721 = vld [vmem:[%s667 + $0x1a8] sm:$0xff]
    %v722 = vld [vmem:[%s667 + $0x1b0] sm:$0xff]
    %v723 = vld [vmem:[%s667 + $0x1b8] sm:$0xff]
    %v724 = vld [vmem:[%s667 + $0x1c0] sm:$0xff]
    %v725 = vld [vmem:[%s667 + $0x1c8] sm:$0xff]
    %v726 = vld [vmem:[%s667 + $0x1d0] sm:$0xff]
    %v727 = vld [vmem:[%s667 + $0x1d8] sm:$0xff]
    %v728 = vld [vmem:[%s667 + $0x1e0] sm:$0xff]
    %v729 = vld [vmem:[%s667 + $0x1e8] sm:$0xff]
    %v730 = vld [vmem:[%s667 + $0x1f0] sm:$0xff]
    %v731 = vld [vmem:[%s667 + $0x1f8] sm:$0xff]
    %vm736 = vcmask 1043456
    %v737 = vrot.slane %v663, 4
    %v738 = vrot.slane %v309, 4
    %v739 = vsel %vm736, %v737, %v738
    %v740 = vrot.slane %v664, 4
    %v741 = vrot.slane %v310, 4
    %v742 = vsel %vm736, %v740, %v741
    %v743 = vrot.slane %v311, 4
    %v744 = vsel %vm736, %v738, %v743
    %v745 = vrot.slane %v312, 4
    %v746 = vsel %vm736, %v741, %v745
    %v747 = vrot.slane %v313, 4
    %v748 = vsel %vm736, %v743, %v747
    %v749 = vrot.slane %v314, 4
    %v750 = vsel %vm736, %v745, %v749
    %v751 = vrot.slane %v665, 4
    %v752 = vsel %vm736, %v747, %v751
    %v753 = vrot.slane %v666, 4
    %v754 = vsel %vm736, %v749, %v753
    %763 = vmatprep.subr.mxu0 %v669
    %764 = vmatpush1.msra.mxu0 %v668
    %765 = vmatprep.subr.mxu0 %v671
    %766 = vmatpush1.msra.mxu0 %v670
    %767 = vmatprep.subr.mxu0 %v673
    %768 = vmatpush1.msra.mxu0 %v672
    %769 = vmatprep.subr.mxu0 %v675
    %770 = vmatpush1.msra.mxu0 %v674
    %771 = vmatprep.subr.mxu0 %v677
    %772 = vmatpush1.msra.mxu0 %v676
    %773 = vmatprep.subr.mxu0 %v679
    %774 = vmatpush1.msra.mxu0 %v678
    %775 = vmatprep.subr.mxu0 %v681
    %776 = vmatpush1.msra.mxu0 %v680
    %777 = vmatprep.subr.mxu0 %v683
    %778 = vmatpush1.msra.mxu0 %v682
    %779 = vmatprep.subr.mxu0 %v685
    %780 = vmatpush1.msra.mxu0 %v684
    %781 = vmatprep.subr.mxu0 %v687
    %782 = vmatpush1.msra.mxu0 %v686
    %783 = vmatprep.subr.mxu0 %v689
    %784 = vmatpush1.msra.mxu0 %v688
    %785 = vmatprep.subr.mxu0 %v691
    %786 = vmatpush1.msra.mxu0 %v690
    %787 = vmatprep.subr.mxu0 %v693
    %788 = vmatpush1.msra.mxu0 %v692
    %789 = vmatprep.subr.mxu0 %v695
    %790 = vmatpush1.msra.mxu0 %v694
    %791 = vmatprep.subr.mxu0 %v697
    %792 = vmatpush1.msra.mxu0 %v696
    %793 = vmatprep.subr.mxu0 %v699
    %794 = vmatpush1.msra.mxu0 %v698
    %795 = vmatprep.subr.mxu0 %v701
    %796 = vmatpush1.msra.mxu0 %v700
    %797 = vmatprep.subr.mxu0 %v703
    %798 = vmatpush1.msra.mxu0 %v702
    %799 = vmatprep.subr.mxu0 %v705
    %800 = vmatpush1.msra.mxu0 %v704
    %801 = vmatprep.subr.mxu0 %v707
    %802 = vmatpush1.msra.mxu0 %v706
    %803 = vmatprep.subr.mxu0 %v709
    %804 = vmatpush1.msra.mxu0 %v708
    %805 = vmatprep.subr.mxu0 %v711
    %806 = vmatpush1.msra.mxu0 %v710
    %807 = vmatprep.subr.mxu0 %v713
    %808 = vmatpush1.msra.mxu0 %v712
    %809 = vmatprep.subr.mxu0 %v715
    %810 = vmatpush1.msra.mxu0 %v714
    %811 = vmatprep.subr.mxu0 %v717
    %812 = vmatpush1.msra.mxu0 %v716
    %813 = vmatprep.subr.mxu0 %v719
    %814 = vmatpush1.msra.mxu0 %v718
    %815 = vmatprep.subr.mxu0 %v721
    %816 = vmatpush1.msra.mxu0 %v720
    %817 = vmatprep.subr.mxu0 %v723
    %818 = vmatpush1.msra.mxu0 %v722
    %819 = vmatprep.subr.mxu0 %v725
    %820 = vmatpush1.msra.mxu0 %v724
    %821 = vmatprep.subr.mxu0 %v727
    %822 = vmatpush1.msra.mxu0 %v726
    %823 = vmatprep.subr.mxu0 %v729
    %824 = vmatpush1.msra.mxu0 %v728
    %825 = vmatprep.subr.mxu0 %v731
    %826 = vmatpush1.msra.mxu0 %v730
    %827 = vmatprep.mubr.f32.mxu0 %v742
    %828 = vmatmul.mubr.f32.gmra.mrb[0].mxu0 %v739
    %v829 = vpop.f32.mrb[0].mxu0
    %v830 = vadd.f32 0.0, %v829
    %v831 = vpop.f32.mrb[0].mxu0
    %v832 = vadd.f32 0.0, %v831
    %833 = vmatprep.mubr.f32.mxu0 %v746
    %834 = vmatmul.mubr.f32.gmra.mrb[0].mxu0 %v744
    %v835 = vpop.f32.mrb[0].mxu0
    %v836 = vadd.f32 0.0, %v835
    %v837 = vpop.f32.mrb[0].mxu0
    %v838 = vadd.f32 0.0, %v837
    %839 = vmatprep.mubr.f32.mxu0 %v750
    %840 = vmatmul.mubr.f32.gmra.mrb[0].mxu0 %v748
    %v841 = vpop.f32.mrb[0].mxu0
    %v842 = vadd.f32 0.0, %v841
    %v843 = vpop.f32.mrb[0].mxu0
    %v844 = vadd.f32 0.0, %v843
    %845 = vmatprep.mubr.f32.mxu0 %v754
    %846 = vmatmul.mubr.f32.gmra.mrb[0].mxu0 %v752
    %v847 = vpop.f32.mrb[0].mxu0
    %v848 = vadd.f32 0.0, %v847
    %v849 = vpop.f32.mrb[0].mxu0
    %v850 = vadd.f32 0.0, %v849
    %851 = vdwg.mxu0
    %v852 = vadd.f32 %v641, %v830
    %v853 = vadd.f32 %v643, %v832
    %v854 = vadd.f32 %v647, %v836
    %v855 = vadd.f32 %v649, %v838
    %v856 = vadd.f32 %v653, %v842
    %v857 = vadd.f32 %v655, %v844
    %v858 = vadd.f32 %v659, %v848
    %v859 = vadd.f32 %v661, %v850
    %v860 = vadd.f32 %v852, %v854
    %v861 = vadd.f32 %v860, %v856
    %v862 = vadd.f32 %v861, %v858
    %v863 = vrot.slane %v862, 4
    %v864 = vadd.f32 %v862, %v863
    %v865 = vrot.slane %v864, 2
    %v866 = vadd.f32 %v864, %v865
    %v867 = vrot.slane %v866, 1
    %v868 = vadd.f32 %v866, %v867
    %v869 = vadd.f32 %v853, %v855
    %v870 = vadd.f32 %v869, %v857
    %v871 = vadd.f32 %v870, %v859
    %v872 = vrot.slane %v871, 4
    %v873 = vadd.f32 %v871, %v872
    %v874 = vrot.slane %v873, 2
    %v875 = vadd.f32 %v873, %v874
    %v876 = vrot.slane %v875, 1
    %v877 = vadd.f32 %v875, %v876
    %v878 = vmul.f32 %v852, %v852
    %v879 = vmul.f32 %v853, %v853
    %v880 = vmul.f32 %v854, %v854
    %v881 = vmul.f32 %v855, %v855
    %v882 = vmul.f32 %v856, %v856
    %v883 = vmul.f32 %v857, %v857
    %v884 = vmul.f32 %v858, %v858
    %v885 = vmul.f32 %v859, %v859
    %v886 = vadd.f32 %v878, %v880
    %v887 = vadd.f32 %v886, %v882
    %v888 = vadd.f32 %v887, %v884
    %v889 = vrot.slane %v888, 4
    %v890 = vadd.f32 %v888, %v889
    %v891 = vrot.slane %v890, 2
    %v892 = vadd.f32 %v890, %v891
    %v893 = vrot.slane %v892, 1
    %v894 = vadd.f32 %v892, %v893
    %v895 = vadd.f32 %v879, %v881
    %v896 = vadd.f32 %v895, %v883
    %v897 = vadd.f32 %v896, %v885
    %v898 = vrot.slane %v897, 4
    %v899 = vadd.f32 %v897, %v898
    %v900 = vrot.slane %v899, 2
    %v901 = vadd.f32 %v899, %v900
    %v902 = vrot.slane %v901, 1
    %v903 = vadd.f32 %v901, %v902
    %v904 = vld [vmem:[#allocation11] sm:$0xff]
    %v905 = vld [vmem:[#allocation11 + $0x8] sm:$0xff]
    %v906 = vld [vmem:[#allocation11 + $0x10] sm:$0xff]
    %v907 = vld [vmem:[#allocation11 + $0x18] sm:$0xff]
    %v908 = vld [vmem:[#allocation11 + $0x20] sm:$0xff]
    %v909 = vld [vmem:[#allocation11 + $0x28] sm:$0xff]
    %v910 = vld [vmem:[#allocation11 + $0x30] sm:$0xff]
    %v911 = vld [vmem:[#allocation11 + $0x38] sm:$0xff]
    %v912 = vld [vmem:[#allocation11 + $0x40] sm:$0xff]
    %v913 = vld [vmem:[#allocation11 + $0x48] sm:$0xff]
    %v914 = vld [vmem:[#allocation11 + $0x50] sm:$0xff]
    %v915 = vld [vmem:[#allocation11 + $0x58] sm:$0xff]
    %v916 = vld [vmem:[#allocation11 + $0x60] sm:$0xff]
    %v917 = vld [vmem:[#allocation11 + $0x68] sm:$0xff]
    %v918 = vld [vmem:[#allocation11 + $0x70] sm:$0xff]
    %v919 = vld [vmem:[#allocation11 + $0x78] sm:$0xff]
    %v920 = vld [vmem:[#allocation11 + $0x80] sm:$0xff]
    %v921 = vld [vmem:[#allocation11 + $0x88] sm:$0xff]
    %v922 = vld [vmem:[#allocation11 + $0x90] sm:$0xff]
    %v923 = vld [vmem:[#allocation11 + $0x98] sm:$0xff]
    %v924 = vld [vmem:[#allocation11 + $0xa0] sm:$0xff]
    %v925 = vld [vmem:[#allocation11 + $0xa8] sm:$0xff]
    %v926 = vld [vmem:[#allocation11 + $0xb0] sm:$0xff]
    %v927 = vld [vmem:[#allocation11 + $0xb8] sm:$0xff]
    %v928 = vld [vmem:[#allocation11 + $0xc0] sm:$0xff]
    %v929 = vld [vmem:[#allocation11 + $0xc8] sm:$0xff]
    %v930 = vld [vmem:[#allocation11 + $0xd0] sm:$0xff]
    %v931 = vld [vmem:[#allocation11 + $0xd8] sm:$0xff]
    %v932 = vld [vmem:[#allocation11 + $0xe0] sm:$0xff]
    %v933 = vld [vmem:[#allocation11 + $0xe8] sm:$0xff]
    %v934 = vld [vmem:[#allocation11 + $0xf0] sm:$0xff]
    %v935 = vld [vmem:[#allocation11 + $0xf8] sm:$0xff]
    %936 = vmatprep.subr.mxu0 0.0
    %937 = vmatpush1.msra.mxu0 %v904
    %938 = vmatprep.subr.mxu0 0.0
    %939 = vmatpush1.msra.mxu0 %v905
    %940 = vmatprep.subr.mxu0 0.0
    %941 = vmatpush1.msra.mxu0 %v906
    %942 = vmatprep.subr.mxu0 0.0
    %943 = vmatpush1.msra.mxu0 %v907
    %944 = vmatprep.subr.mxu0 0.0
    %945 = vmatpush1.msra.mxu0 %v908
    %946 = vmatprep.subr.mxu0 0.0
    %947 = vmatpush1.msra.mxu0 %v909
    %948 = vmatprep.subr.mxu0 0.0
    %949 = vmatpush1.msra.mxu0 %v910
    %950 = vmatprep.subr.mxu0 0.0
    %951 = vmatpush1.msra.mxu0 %v911
    %952 = vmatprep.subr.mxu0 0.0
    %953 = vmatpush1.msra.mxu0 %v912
    %954 = vmatprep.subr.mxu0 0.0
    %955 = vmatpush1.msra.mxu0 %v913
    %956 = vmatprep.subr.mxu0 0.0
    %957 = vmatpush1.msra.mxu0 %v914
    %958 = vmatprep.subr.mxu0 0.0
    %959 = vmatpush1.msra.mxu0 %v915
    %960 = vmatprep.subr.mxu0 0.0
    %961 = vmatpush1.msra.mxu0 %v916
    %962 = vmatprep.subr.mxu0 0.0
    %963 = vmatpush1.msra.mxu0 %v917
    %964 = vmatprep.subr.mxu0 0.0
    %965 = vmatpush1.msra.mxu0 %v918
    %966 = vmatprep.subr.mxu0 0.0
    %967 = vmatpush1.msra.mxu0 %v919
    %968 = vmatprep.subr.mxu0 0.0
    %969 = vmatpush1.msra.mxu0 %v920
    %970 = vmatprep.subr.mxu0 0.0
    %971 = vmatpush1.msra.mxu0 %v921
    %972 = vmatprep.subr.mxu0 0.0
    %973 = vmatpush1.msra.mxu0 %v922
    %974 = vmatprep.subr.mxu0 0.0
    %975 = vmatpush1.msra.mxu0 %v923
    %976 = vmatprep.subr.mxu0 0.0
    %977 = vmatpush1.msra.mxu0 %v924
    %978 = vmatprep.subr.mxu0 0.0
    %979 = vmatpush1.msra.mxu0 %v925
    %980 = vmatprep.subr.mxu0 0.0
    %981 = vmatpush1.msra.mxu0 %v926
    %982 = vmatprep.subr.mxu0 0.0
    %983 = vmatpush1.msra.mxu0 %v927
    %984 = vmatprep.subr.mxu0 0.0
    %985 = vmatpush1.msra.mxu0 %v928
    %986 = vmatprep.subr.mxu0 0.0
    %987 = vmatpush1.msra.mxu0 %v929
    %988 = vmatprep.subr.mxu0 0.0
    %989 = vmatpush1.msra.mxu0 %v930
    %990 = vmatprep.subr.mxu0 0.0
    %991 = vmatpush1.msra.mxu0 %v931
    %992 = vmatprep.subr.mxu0 0.0
    %993 = vmatpush1.msra.mxu0 %v932
    %994 = vmatprep.subr.mxu0 0.0
    %995 = vmatpush1.msra.mxu0 %v933
    %996 = vmatprep.subr.mxu0 0.0
    %997 = vmatpush1.msra.mxu0 %v934
    %998 = vmatprep.subr.mxu0 0.0
    %999 = vmatpush1.msra.mxu0 %v935
    %1000 = vmatprep.mubr.f32.mxu0 %v877
    %1001 = vmatmul.mubr.f32.gmra.mrb[0].mxu0 %v868
    %v1002 = vpop.f32.mrb[0].mxu0
    %v1003 = vadd.f32 0.0, %v1002
    %v1004 = vpop.f32.mrb[0].mxu0
    %1005 = vdwg.mxu0
    %v1006 = vmul.f32 %v1003, 0.001953125
    %1007 = vmatprep.subr.mxu0 0.0
    %1008 = vmatpush1.msra.mxu0 %v904
    %1009 = vmatprep.subr.mxu0 0.0
    %1010 = vmatpush1.msra.mxu0 %v905
    %1011 = vmatprep.subr.mxu0 0.0
    %1012 = vmatpush1.msra.mxu0 %v906
    %1013 = vmatprep.subr.mxu0 0.0
    %1014 = vmatpush1.msra.mxu0 %v907
    %1015 = vmatprep.subr.mxu0 0.0
    %1016 = vmatpush1.msra.mxu0 %v908
    %1017 = vmatprep.subr.mxu0 0.0
    %1018 = vmatpush1.msra.mxu0 %v909
    %1019 = vmatprep.subr.mxu0 0.0
    %1020 = vmatpush1.msra.mxu0 %v910
    %1021 = vmatprep.subr.mxu0 0.0
    %1022 = vmatpush1.msra.mxu0 %v911
    %1023 = vmatprep.subr.mxu0 0.0
    %1024 = vmatpush1.msra.mxu0 %v912
    %1025 = vmatprep.subr.mxu0 0.0
    %1026 = vmatpush1.msra.mxu0 %v913
    %1027 = vmatprep.subr.mxu0 0.0
    %1028 = vmatpush1.msra.mxu0 %v914
    %1029 = vmatprep.subr.mxu0 0.0
    %1030 = vmatpush1.msra.mxu0 %v915
    %1031 = vmatprep.subr.mxu0 0.0
    %1032 = vmatpush1.msra.mxu0 %v916
    %1033 = vmatprep.subr.mxu0 0.0
    %1034 = vmatpush1.msra.mxu0 %v917
    %1035 = vmatprep.subr.mxu0 0.0
    %1036 = vmatpush1.msra.mxu0 %v918
    %1037 = vmatprep.subr.mxu0 0.0
    %1038 = vmatpush1.msra.mxu0 %v919
    %1039 = vmatprep.subr.mxu0 0.0
    %1040 = vmatpush1.msra.mxu0 %v920
    %1041 = vmatprep.subr.mxu0 0.0
    %1042 = vmatpush1.msra.mxu0 %v921
    %1043 = vmatprep.subr.mxu0 0.0
    %1044 = vmatpush1.msra.mxu0 %v922
    %1045 = vmatprep.subr.mxu0 0.0
    %1046 = vmatpush1.msra.mxu0 %v923
    %1047 = vmatprep.subr.mxu0 0.0
    %1048 = vmatpush1.msra.mxu0 %v924
    %1049 = vmatprep.subr.mxu0 0.0
    %1050 = vmatpush1.msra.mxu0 %v925
    %1051 = vmatprep.subr.mxu0 0.0
    %1052 = vmatpush1.msra.mxu0 %v926
    %1053 = vmatprep.subr.mxu0 0.0
    %1054 = vmatpush1.msra.mxu0 %v927
    %1055 = vmatprep.subr.mxu0 0.0
    %1056 = vmatpush1.msra.mxu0 %v928
    %1057 = vmatprep.subr.mxu0 0.0
    %1058 = vmatpush1.msra.mxu0 %v929
    %1059 = vmatprep.subr.mxu0 0.0
    %1060 = vmatpush1.msra.mxu0 %v930
    %1061 = vmatprep.subr.mxu0 0.0
    %1062 = vmatpush1.msra.mxu0 %v931
    %1063 = vmatprep.subr.mxu0 0.0
    %1064 = vmatpush1.msra.mxu0 %v932
    %1065 = vmatprep.subr.mxu0 0.0
    %1066 = vmatpush1.msra.mxu0 %v933
    %1067 = vmatprep.subr.mxu0 0.0
    %1068 = vmatpush1.msra.mxu0 %v934
    %1069 = vmatprep.subr.mxu0 0.0
    %1070 = vmatpush1.msra.mxu0 %v935
    %1071 = vmatprep.mubr.f32.mxu0 %v903
    %1072 = vmatmul.mubr.f32.gmra.mrb[0].mxu0 %v894
    %v1073 = vpop.f32.mrb[0].mxu0
    %v1074 = vadd.f32 0.0, %v1073
    %v1075 = vpop.f32.mrb[0].mxu0
    %1076 = vdwg.mxu0
    %v1077 = vmul.f32 %v1074, 0.001953125
    %v1078 = vmul.f32 %v1006, %v1006
    %v1079 = vsub.f32 %v1077, %v1078
    %v1080 = vld [vmem:[#allocation8] sm:$0x1]
    %v1081 = vadd.f32 %v1079, 1e-05
    %v1082 = vrsqrt.pop %v1081
    %v1083 = vmul.f32 %v1080, %v1082
    %v1084 = vld [vmem:[#allocation9] sm:$0x1]
    %v1085 = vmul.f32 %v1006, %v1083
    %v1086 = vsub.f32 %v1084, %v1085
    %v1087 = vld [vmem:[#allocation12] sm:$0xff]
    %v1088 = vld [vmem:[#allocation12 + $0x8] sm:$0xff]
    %v1089 = vld [vmem:[#allocation12 + $0x10] sm:$0xff]
    %v1090 = vld [vmem:[#allocation12 + $0x18] sm:$0xff]
    %vm1091 = vcmask 130048
    %v1093 = vsel %vm1091, %v1083, 0
    %1095 = vmatprep.subr.mxu0 %v1088
    %1096 = vmatpush1.msra.mxu0 %v1087
    %1097 = vmatprep.subr.mxu0 %v1090
    %1098 = vmatpush1.msra.mxu0 %v1089
    %1099 = vmatprep.subr.mxu0 0.0
    %1100 = vmatpush1.msra.mxu0 0.0
    %1101 = vmatprep.subr.mxu0 0.0
    %1102 = vmatpush1.msra.mxu0 0.0
    %1103 = vmatprep.subr.mxu0 0.0
    %1104 = vmatpush1.msra.mxu0 0.0
    %1105 = vmatprep.subr.mxu0 0.0
    %1106 = vmatpush1.msra.mxu0 0.0
    %1107 = vmatprep.subr.mxu0 0.0
    %1108 = vmatpush1.msra.mxu0 0.0
    %1109 = vmatprep.subr.mxu0 0.0
    %1110 = vmatpush1.msra.mxu0 0.0
    %1111 = vmatprep.subr.mxu0 0.0
    %1112 = vmatpush1.msra.mxu0 0.0
    %1113 = vmatprep.subr.mxu0 0.0
    %1114 = vmatpush1.msra.mxu0 0.0
    %1115 = vmatprep.subr.mxu0 0.0
    %1116 = vmatpush1.msra.mxu0 0.0
    %1117 = vmatprep.subr.mxu0 0.0
    %1118 = vmatpush1.msra.mxu0 0.0
    %1119 = vmatprep.subr.mxu0 0.0
    %1120 = vmatpush1.msra.mxu0 0.0
    %1121 = vmatprep.subr.mxu0 0.0
    %1122 = vmatpush1.msra.mxu0 0.0
    %1123 = vmatprep.subr.mxu0 0.0
    %1124 = vmatpush1.msra.mxu0 0.0
    %1125 = vmatprep.subr.mxu0 0.0
    %1126 = vmatpush1.msra.mxu0 0.0
    %1127 = vmatprep.subr.mxu0 0.0
    %1128 = vmatpush1.msra.mxu0 0.0
    %1129 = vmatprep.subr.mxu0 0.0
    %1130 = vmatpush1.msra.mxu0 0.0
    %1131 = vmatprep.subr.mxu0 0.0
    %1132 = vmatpush1.msra.mxu0 0.0
    %1133 = vmatprep.subr.mxu0 0.0
    %1134 = vmatpush1.msra.mxu0 0.0
    %1135 = vmatprep.subr.mxu0 0.0
    %1136 = vmatpush1.msra.mxu0 0.0
    %1137 = vmatprep.subr.mxu0 0.0
    %1138 = vmatpush1.msra.mxu0 0.0
    %1139 = vmatprep.subr.mxu0 0.0
    %1140 = vmatpush1.msra.mxu0 0.0
    %1141 = vmatprep.subr.mxu0 0.0
    %1142 = vmatpush1.msra.mxu0 0.0
    %1143 = vmatprep.subr.mxu0 0.0
    %1144 = vmatpush1.msra.mxu0 0.0
    %1145 = vmatprep.subr.mxu0 0.0
    %1146 = vmatpush1.msra.mxu0 0.0
    %1147 = vmatprep.subr.mxu0 0.0
    %1148 = vmatpush1.msra.mxu0 0.0
    %1149 = vmatprep.subr.mxu0 0.0
    %1150 = vmatpush1.msra.mxu0 0.0
    %1151 = vmatprep.subr.mxu0 0.0
    %1152 = vmatpush1.msra.mxu0 0.0
    %1153 = vmatprep.subr.mxu0 0.0
    %1154 = vmatpush1.msra.mxu0 0.0
    %1155 = vmatprep.subr.mxu0 0.0
    %1156 = vmatpush1.msra.mxu0 0.0
    %1157 = vmatprep.subr.mxu0 0.0
    %1158 = vmatpush1.msra.mxu0 0.0
    %1159 = vmatprep.mubr.f32.mxu0 0.0
    %1160 = vmatmul.mubr.f32.gmra.mrb[0].mxu0 %v1093
    %v1161 = vpop.f32.mrb[0].mxu0
    %v1162 = vadd.f32 0.0, %v1161
    %v1163 = vpop.f32.mrb[0].mxu0
    %v1164 = vadd.f32 0.0, %v1163
    %1165 = vdwg.mxu0
    %v1167 = vsel %vm1091, %v1086, 0
    %1169 = vmatprep.subr.mxu0 %v1088
    %1170 = vmatpush1.msra.mxu0 %v1087
    %1171 = vmatprep.subr.mxu0 %v1090
    %1172 = vmatpush1.msra.mxu0 %v1089
    %1173 = vmatprep.subr.mxu0 0.0
    %1174 = vmatpush1.msra.mxu0 0.0
    %1175 = vmatprep.subr.mxu0 0.0
    %1176 = vmatpush1.msra.mxu0 0.0
    %1177 = vmatprep.subr.mxu0 0.0
    %1178 = vmatpush1.msra.mxu0 0.0
    %1179 = vmatprep.subr.mxu0 0.0
    %1180 = vmatpush1.msra.mxu0 0.0
    %1181 = vmatprep.subr.mxu0 0.0
    %1182 = vmatpush1.msra.mxu0 0.0
    %1183 = vmatprep.subr.mxu0 0.0
    %1184 = vmatpush1.msra.mxu0 0.0
    %1185 = vmatprep.subr.mxu0 0.0
    %1186 = vmatpush1.msra.mxu0 0.0
    %1187 = vmatprep.subr.mxu0 0.0
    %1188 = vmatpush1.msra.mxu0 0.0
    %1189 = vmatprep.subr.mxu0 0.0
    %1190 = vmatpush1.msra.mxu0 0.0
    %1191 = vmatprep.subr.mxu0 0.0
    %1192 = vmatpush1.msra.mxu0 0.0
    %1193 = vmatprep.subr.mxu0 0.0
    %1194 = vmatpush1.msra.mxu0 0.0
    %1195 = vmatprep.subr.mxu0 0.0
    %1196 = vmatpush1.msra.mxu0 0.0
    %1197 = vmatprep.subr.mxu0 0.0
    %1198 = vmatpush1.msra.mxu0 0.0
    %1199 = vmatprep.subr.mxu0 0.0
    %1200 = vmatpush1.msra.mxu0 0.0
    %1201 = vmatprep.subr.mxu0 0.0
    %1202 = vmatpush1.msra.mxu0 0.0
    %1203 = vmatprep.subr.mxu0 0.0
    %1204 = vmatpush1.msra.mxu0 0.0
    %1205 = vmatprep.subr.mxu0 0.0
    %1206 = vmatpush1.msra.mxu0 0.0
    %1207 = vmatprep.subr.mxu0 0.0
    %1208 = vmatpush1.msra.mxu0 0.0
    %1209 = vmatprep.subr.mxu0 0.0
    %1210 = vmatpush1.msra.mxu0 0.0
    %1211 = vmatprep.subr.mxu0 0.0
    %1212 = vmatpush1.msra.mxu0 0.0
    %1213 = vmatprep.subr.mxu0 0.0
    %1214 = vmatpush1.msra.mxu0 0.0
    %1215 = vmatprep.subr.mxu0 0.0
    %1216 = vmatpush1.msra.mxu0 0.0
    %1217 = vmatprep.subr.mxu0 0.0
    %1218 = vmatpush1.msra.mxu0 0.0
    %1219 = vmatprep.subr.mxu0 0.0
    %1220 = vmatpush1.msra.mxu0 0.0
    %1221 = vmatprep.subr.mxu0 0.0
    %1222 = vmatpush1.msra.mxu0 0.0
    %1223 = vmatprep.subr.mxu0 0.0
    %1224 = vmatpush1.msra.mxu0 0.0
    %1225 = vmatprep.subr.mxu0 0.0
    %1226 = vmatpush1.msra.mxu0 0.0
    %1227 = vmatprep.subr.mxu0 0.0
    %1228 = vmatpush1.msra.mxu0 0.0
    %1229 = vmatprep.subr.mxu0 0.0
    %1230 = vmatpush1.msra.mxu0 0.0
    %1231 = vmatprep.subr.mxu0 0.0
    %1232 = vmatpush1.msra.mxu0 0.0
    %1233 = vmatprep.mubr.f32.mxu0 0.0
    %1234 = vmatmul.mubr.f32.gmra.mrb[0].mxu0 %v1167
    %v1235 = vpop.f32.mrb[0].mxu0
    %v1236 = vadd.f32 0.0, %v1235
    %v1237 = vpop.f32.mrb[0].mxu0
    %v1238 = vadd.f32 0.0, %v1237
    %1239 = vdwg.mxu0
    %v1240 = vlaneseq
    %v1241 = vshrl.u32 %v1240, 7
    %v1242 = vsub.s32 0, %v1241
    %v1243 = vrot.slane %v1162, %v1242
    %v1244 = vlaneseq
    %v1245 = vshrl.u32 %v1244, 7
    %v1246 = vsub.s32 0, %v1245
    %v1247 = vrot.slane %v1164, %v1246
    %v1248 = vmul.f32 %v852, %v1243
    %v1249 = vmul.f32 %v853, %v1247
    %v1250 = vmul.f32 %v854, %v1243
    %v1251 = vmul.f32 %v855, %v1247
    %v1252 = vmul.f32 %v856, %v1243
    %v1253 = vmul.f32 %v857, %v1247
    %v1254 = vmul.f32 %v858, %v1243
    %v1255 = vmul.f32 %v859, %v1247
    %v1256 = vlaneseq
    %v1257 = vshrl.u32 %v1256, 7
    %v1258 = vsub.s32 0, %v1257
    %v1259 = vrot.slane %v1236, %v1258
    %v1260 = vlaneseq
    %v1261 = vshrl.u32 %v1260, 7
    %v1262 = vsub.s32 0, %v1261
    %v1263 = vrot.slane %v1238, %v1262
    %v1264 = vadd.f32 %v1248, %v1259
    %v1265 = vadd.f32 %v1249, %v1263
    %v1266 = vadd.f32 %v1250, %v1259
    %v1267 = vadd.f32 %v1251, %v1263
    %v1268 = vadd.f32 %v1252, %v1259
    %v1269 = vadd.f32 %v1253, %v1263
    %v1270 = vadd.f32 %v1254, %v1259
    %v1271 = vadd.f32 %v1255, %v1263
    %vm1272 = vcmp.gt.f32.partialorder %v1264, 0.0
    %vm1273 = vcmp.gt.f32.partialorder %v1265, 0.0
    %vm1274 = vcmp.gt.f32.partialorder %v1266, 0.0
    %vm1275 = vcmp.gt.f32.partialorder %v1267, 0.0
    %vm1276 = vcmp.gt.f32.partialorder %v1268, 0.0
    %vm1277 = vcmp.gt.f32.partialorder %v1269, 0.0
    %vm1278 = vcmp.gt.f32.partialorder %v1270, 0.0
    %vm1279 = vcmp.gt.f32.partialorder %v1271, 0.0
    %v1280 = vmul.f32 %v1264, 0.2
    %v1281 = vmul.f32 %v1265, 0.2
    %v1282 = vmul.f32 %v1266, 0.2
    %v1283 = vmul.f32 %v1267, 0.2
    %v1284 = vmul.f32 %v1268, 0.2
    %v1285 = vmul.f32 %v1269, 0.2
    %v1286 = vmul.f32 %v1270, 0.2
    %v1287 = vmul.f32 %v1271, 0.2
    %v1288 = vsel %vm1272, %v1264, %v1280
    %v1289 = vsel %vm1273, %v1265, %v1281
    %v1290 = vsel %vm1274, %v1266, %v1282
    %v1291 = vsel %vm1275, %v1267, %v1283
    %v1292 = vsel %vm1276, %v1268, %v1284
    %v1293 = vsel %vm1277, %v1269, %v1285
    %v1294 = vsel %vm1278, %v1270, %v1286
    %v1295 = vsel %vm1279, %v1271, %v1287
    %v1304 = vrot.slane %v1288, 6
    %v1305 = vrot.slane %v1289, 6
    %v1306 = vrot.slane %v1290, 6
    %v1307 = vsel %vm272, %v1304, %v1306
    %v1308 = vrot.slane %v1291, 6
    %v1309 = vsel %vm272, %v1305, %v1308
    %v1310 = vrot.slane %v1292, 6
    %v1311 = vsel %vm272, %v1306, %v1310
    %v1312 = vrot.slane %v1293, 6
    %v1313 = vsel %vm272, %v1308, %v1312
    %v1314 = vrot.slane %v1294, 6
    %v1315 = vsel %vm272, %v1310, %v1314
    %v1316 = vrot.slane %v1295, 6
    %v1317 = vsel %vm272, %v1312, %v1316
    %1328 = vst [vmem:[#allocation2] sm:$0xfc] %v1304
    %1329 = vst [vmem:[#allocation2 + $0x8] sm:$0xfc] %v1305
    %1330 = vst [vmem:[#allocation2 + $0x10] sm:$0xff] %v1307
    %1331 = vst [vmem:[#allocation2 + $0x18] sm:$0xff] %v1309
    %1332 = vst [vmem:[#allocation2 + $0x20] sm:$0xff] %v1311
    %1333 = vst [vmem:[#allocation2 + $0x28] sm:$0xff] %v1313
    %1334 = vst [vmem:[#allocation2 + $0x30] sm:$0xff] %v1315
    %1335 = vst [vmem:[#allocation2 + $0x38] sm:$0xff] %v1317
    %1336 = vst [vmem:[#allocation2 + $0x40] sm:$0x3] %v1314
    %1337 = vst [vmem:[#allocation2 + $0x48] sm:$0x3] %v1316
    %v1338 = vld [vmem:[#allocation2] sm:$0xff]
    %v1339 = vld [vmem:[#allocation2 + $0x8] sm:$0xff]
    %v1340 = vld [vmem:[#allocation2 + $0x10] sm:$0xff]
    %v1341 = vld [vmem:[#allocation2 + $0x18] sm:$0xff]
    %v1342 = vld [vmem:[#allocation2 + $0x20] sm:$0xff]
    %v1343 = vld [vmem:[#allocation2 + $0x28] sm:$0xff]
    %v1344 = vld [vmem:[#allocation2 + $0x30] sm:$0xff]
    %v1345 = vld [vmem:[#allocation2 + $0x38] sm:$0xff]
    %s1346 = scalar_lea.vmem [#allocation6], 1536
    %v1347 = vld [vmem:[%s1346] sm:$0xff]
    %v1348 = vld [vmem:[%s1346 + $0x8] sm:$0xff]
    %v1349 = vld [vmem:[%s1346 + $0x10] sm:$0xff]
    %v1350 = vld [vmem:[%s1346 + $0x18] sm:$0xff]
    %v1351 = vld [vmem:[%s1346 + $0x20] sm:$0xff]
    %v1352 = vld [vmem:[%s1346 + $0x28] sm:$0xff]
    %v1353 = vld [vmem:[%s1346 + $0x30] sm:$0xff]
    %v1354 = vld [vmem:[%s1346 + $0x38] sm:$0xff]
    %v1355 = vld [vmem:[%s1346 + $0x40] sm:$0xff]
    %v1356 = vld [vmem:[%s1346 + $0x48] sm:$0xff]
    %v1357 = vld [vmem:[%s1346 + $0x50] sm:$0xff]
    %v1358 = vld [vmem:[%s1346 + $0x58] sm:$0xff]
    %v1359 = vld [vmem:[%s1346 + $0x60] sm:$0xff]
    %v1360 = vld [vmem:[%s1346 + $0x68] sm:$0xff]
    %v1361 = vld [vmem:[%s1346 + $0x70] sm:$0xff]
    %v1362 = vld [vmem:[%s1346 + $0x78] sm:$0xff]
    %v1363 = vld [vmem:[%s1346 + $0x80] sm:$0xff]
    %v1364 = vld [vmem:[%s1346 + $0x88] sm:$0xff]
    %v1365 = vld [vmem:[%s1346 + $0x90] sm:$0xff]
    %v1366 = vld [vmem:[%s1346 + $0x98] sm:$0xff]
    %v1367 = vld [vmem:[%s1346 + $0xa0] sm:$0xff]
    %v1368 = vld [vmem:[%s1346 + $0xa8] sm:$0xff]
    %v1369 = vld [vmem:[%s1346 + $0xb0] sm:$0xff]
    %v1370 = vld [vmem:[%s1346 + $0xb8] sm:$0xff]
    %v1371 = vld [vmem:[%s1346 + $0xc0] sm:$0xff]
    %v1372 = vld [vmem:[%s1346 + $0xc8] sm:$0xff]
    %v1373 = vld [vmem:[%s1346 + $0xd0] sm:$0xff]
    %v1374 = vld [vmem:[%s1346 + $0xd8] sm:$0xff]
    %v1375 = vld [vmem:[%s1346 + $0xe0] sm:$0xff]
    %v1376 = vld [vmem:[%s1346 + $0xe8] sm:$0xff]
    %v1377 = vld [vmem:[%s1346 + $0xf0] sm:$0xff]
    %v1378 = vld [vmem:[%s1346 + $0xf8] sm:$0xff]
    %v1379 = vld [vmem:[%s1346 + $0x100] sm:$0xff]
    %v1380 = vld [vmem:[%s1346 + $0x108] sm:$0xff]
    %v1381 = vld [vmem:[%s1346 + $0x110] sm:$0xff]
    %v1382 = vld [vmem:[%s1346 + $0x118] sm:$0xff]
    %v1383 = vld [vmem:[%s1346 + $0x120] sm:$0xff]
    %v1384 = vld [vmem:[%s1346 + $0x128] sm:$0xff]
    %v1385 = vld [vmem:[%s1346 + $0x130] sm:$0xff]
    %v1386 = vld [vmem:[%s1346 + $0x138] sm:$0xff]
    %v1387 = vld [vmem:[%s1346 + $0x140] sm:$0xff]
    %v1388 = vld [vmem:[%s1346 + $0x148] sm:$0xff]
    %v1389 = vld [vmem:[%s1346 + $0x150] sm:$0xff]
    %v1390 = vld [vmem:[%s1346 + $0x158] sm:$0xff]
    %v1391 = vld [vmem:[%s1346 + $0x160] sm:$0xff]
    %v1392 = vld [vmem:[%s1346 + $0x168] sm:$0xff]
    %v1393 = vld [vmem:[%s1346 + $0x170] sm:$0xff]
    %v1394 = vld [vmem:[%s1346 + $0x178] sm:$0xff]
    %v1395 = vld [vmem:[%s1346 + $0x180] sm:$0xff]
    %v1396 = vld [vmem:[%s1346 + $0x188] sm:$0xff]
    %v1397 = vld [vmem:[%s1346 + $0x190] sm:$0xff]
    %v1398 = vld [vmem:[%s1346 + $0x198] sm:$0xff]
    %v1399 = vld [vmem:[%s1346 + $0x1a0] sm:$0xff]
    %v1400 = vld [vmem:[%s1346 + $0x1a8] sm:$0xff]
    %v1401 = vld [vmem:[%s1346 + $0x1b0] sm:$0xff]
    %v1402 = vld [vmem:[%s1346 + $0x1b8] sm:$0xff]
    %v1403 = vld [vmem:[%s1346 + $0x1c0] sm:$0xff]
    %v1404 = vld [vmem:[%s1346 + $0x1c8] sm:$0xff]
    %v1405 = vld [vmem:[%s1346 + $0x1d0] sm:$0xff]
    %v1406 = vld [vmem:[%s1346 + $0x1d8] sm:$0xff]
    %v1407 = vld [vmem:[%s1346 + $0x1e0] sm:$0xff]
    %v1408 = vld [vmem:[%s1346 + $0x1e8] sm:$0xff]
    %v1409 = vld [vmem:[%s1346 + $0x1f0] sm:$0xff]
    %v1410 = vld [vmem:[%s1346 + $0x1f8] sm:$0xff]
    %v1411 = vld [vmem:[#allocation2] sm:$0xfc]
    %v1412 = vld [vmem:[#allocation2 + $0x8] sm:$0xfc]
    %v1413 = vld [vmem:[#allocation2 + $0x40] sm:$0x3]
    %v1414 = vld [vmem:[#allocation2 + $0x48] sm:$0x3]
    %s1415 = scalar_lea.vmem [#allocation6], 2048
    %v1416 = vld [vmem:[%s1415] sm:$0xff]
    %v1417 = vld [vmem:[%s1415 + $0x8] sm:$0xff]
    %v1418 = vld [vmem:[%s1415 + $0x10] sm:$0xff]
    %v1419 = vld [vmem:[%s1415 + $0x18] sm:$0xff]
    %v1420 = vld [vmem:[%s1415 + $0x20] sm:$0xff]
    %v1421 = vld [vmem:[%s1415 + $0x28] sm:$0xff]
    %v1422 = vld [vmem:[%s1415 + $0x30] sm:$0xff]
    %v1423 = vld [vmem:[%s1415 + $0x38] sm:$0xff]
    %v1424 = vld [vmem:[%s1415 + $0x40] sm:$0xff]
    %v1425 = vld [vmem:[%s1415 + $0x48] sm:$0xff]
    %v1426 = vld [vmem:[%s1415 + $0x50] sm:$0xff]
    %v1427 = vld [vmem:[%s1415 + $0x58] sm:$0xff]
    %v1428 = vld [vmem:[%s1415 + $0x60] sm:$0xff]
    %v1429 = vld [vmem:[%s1415 + $0x68] sm:$0xff]
    %v1430 = vld [vmem:[%s1415 + $0x70] sm:$0xff]
    %v1431 = vld [vmem:[%s1415 + $0x78] sm:$0xff]
    %v1432 = vld [vmem:[%s1415 + $0x80] sm:$0xff]
    %v1433 = vld [vmem:[%s1415 + $0x88] sm:$0xff]
    %v1434 = vld [vmem:[%s1415 + $0x90] sm:$0xff]
    %v1435 = vld [vmem:[%s1415 + $0x98] sm:$0xff]
    %v1436 = vld [vmem:[%s1415 + $0xa0] sm:$0xff]
    %v1437 = vld [vmem:[%s1415 + $0xa8] sm:$0xff]
    %v1438 = vld [vmem:[%s1415 + $0xb0] sm:$0xff]
    %v1439 = vld [vmem:[%s1415 + $0xb8] sm:$0xff]
    %v1440 = vld [vmem:[%s1415 + $0xc0] sm:$0xff]
    %v1441 = vld [vmem:[%s1415 + $0xc8] sm:$0xff]
    %v1442 = vld [vmem:[%s1415 + $0xd0] sm:$0xff]
    %v1443 = vld [vmem:[%s1415 + $0xd8] sm:$0xff]
    %v1444 = vld [vmem:[%s1415 + $0xe0] sm:$0xff]
    %v1445 = vld [vmem:[%s1415 + $0xe8] sm:$0xff]
    %v1446 = vld [vmem:[%s1415 + $0xf0] sm:$0xff]
    %v1447 = vld [vmem:[%s1415 + $0xf8] sm:$0xff]
    %v1448 = vld [vmem:[%s1415 + $0x100] sm:$0xff]
    %v1449 = vld [vmem:[%s1415 + $0x108] sm:$0xff]
    %v1450 = vld [vmem:[%s1415 + $0x110] sm:$0xff]
    %v1451 = vld [vmem:[%s1415 + $0x118] sm:$0xff]
    %v1452 = vld [vmem:[%s1415 + $0x120] sm:$0xff]
    %v1453 = vld [vmem:[%s1415 + $0x128] sm:$0xff]
    %v1454 = vld [vmem:[%s1415 + $0x130] sm:$0xff]
    %v1455 = vld [vmem:[%s1415 + $0x138] sm:$0xff]
    %v1456 = vld [vmem:[%s1415 + $0x140] sm:$0xff]
    %v1457 = vld [vmem:[%s1415 + $0x148] sm:$0xff]
    %v1458 = vld [vmem:[%s1415 + $0x150] sm:$0xff]
    %v1459 = vld [vmem:[%s1415 + $0x158] sm:$0xff]
    %v1460 = vld [vmem:[%s1415 + $0x160] sm:$0xff]
    %v1461 = vld [vmem:[%s1415 + $0x168] sm:$0xff]
    %v1462 = vld [vmem:[%s1415 + $0x170] sm:$0xff]
    %v1463 = vld [vmem:[%s1415 + $0x178] sm:$0xff]
    %v1464 = vld [vmem:[%s1415 + $0x180] sm:$0xff]
    %v1465 = vld [vmem:[%s1415 + $0x188] sm:$0xff]
    %v1466 = vld [vmem:[%s1415 + $0x190] sm:$0xff]
    %v1467 = vld [vmem:[%s1415 + $0x198] sm:$0xff]
    %v1468 = vld [vmem:[%s1415 + $0x1a0] sm:$0xff]
    %v1469 = vld [vmem:[%s1415 + $0x1a8] sm:$0xff]
    %v1470 = vld [vmem:[%s1415 + $0x1b0] sm:$0xff]
    %v1471 = vld [vmem:[%s1415 + $0x1b8] sm:$0xff]
    %v1472 = vld [vmem:[%s1415 + $0x1c0] sm:$0xff]
    %v1473 = vld [vmem:[%s1415 + $0x1c8] sm:$0xff]
    %v1474 = vld [vmem:[%s1415 + $0x1d0] sm:$0xff]
    %v1475 = vld [vmem:[%s1415 + $0x1d8] sm:$0xff]
    %v1476 = vld [vmem:[%s1415 + $0x1e0] sm:$0xff]
    %v1477 = vld [vmem:[%s1415 + $0x1e8] sm:$0xff]
    %v1478 = vld [vmem:[%s1415 + $0x1f0] sm:$0xff]
    %v1479 = vld [vmem:[%s1415 + $0x1f8] sm:$0xff]
    %v1490 = vrot.slane %v1411, 2
    %v1491 = vrot.slane %v1340, 2
    %v1492 = vsel %vm458, %v1490, %v1491
    %v1493 = vrot.slane %v1412, 2
    %v1494 = vrot.slane %v1341, 2
    %v1495 = vsel %vm458, %v1493, %v1494
    %v1496 = vrot.slane %v1342, 2
    %v1497 = vsel %vm458, %v1491, %v1496
    %v1498 = vrot.slane %v1343, 2
    %v1499 = vsel %vm458, %v1494, %v1498
    %v1500 = vrot.slane %v1344, 2
    %v1501 = vsel %vm458, %v1496, %v1500
    %v1502 = vrot.slane %v1345, 2
    %v1503 = vsel %vm458, %v1498, %v1502
    %v1504 = vrot.slane %v1413, 2
    %v1505 = vsel %vm458, %v1500, %v1504
    %v1506 = vrot.slane %v1414, 2
    %v1507 = vsel %vm458, %v1502, %v1506
    %1516 = vmatprep.subr.mxu0 %v1417
    %1517 = vmatpush1.msra.mxu0 %v1416
    %1518 = vmatprep.subr.mxu0 %v1419
    %1519 = vmatpush1.msra.mxu0 %v1418
    %1520 = vmatprep.subr.mxu0 %v1421
    %1521 = vmatpush1.msra.mxu0 %v1420
    %1522 = vmatprep.subr.mxu0 %v1423
    %1523 = vmatpush1.msra.mxu0 %v1422
    %1524 = vmatprep.subr.mxu0 %v1425
    %1525 = vmatpush1.msra.mxu0 %v1424
    %1526 = vmatprep.subr.mxu0 %v1427
    %1527 = vmatpush1.msra.mxu0 %v1426
    %1528 = vmatprep.subr.mxu0 %v1429
    %1529 = vmatpush1.msra.mxu0 %v1428
    %1530 = vmatprep.subr.mxu0 %v1431
    %1531 = vmatpush1.msra.mxu0 %v1430
    %1532 = vmatprep.subr.mxu0 %v1433
    %1533 = vmatpush1.msra.mxu0 %v1432
    %1534 = vmatprep.subr.mxu0 %v1435
    %1535 = vmatpush1.msra.mxu0 %v1434
    %1536 = vmatprep.subr.mxu0 %v1437
    %1537 = vmatpush1.msra.mxu0 %v1436
    %1538 = vmatprep.subr.mxu0 %v1439
    %1539 = vmatpush1.msra.mxu0 %v1438
    %1540 = vmatprep.subr.mxu0 %v1441
    %1541 = vmatpush1.msra.mxu0 %v1440
    %1542 = vmatprep.subr.mxu0 %v1443
    %1543 = vmatpush1.msra.mxu0 %v1442
    %1544 = vmatprep.subr.mxu0 %v1445
    %1545 = vmatpush1.msra.mxu0 %v1444
    %1546 = vmatprep.subr.mxu0 %v1447
    %1547 = vmatpush1.msra.mxu0 %v1446
    %1548 = vmatprep.subr.mxu0 %v1449
    %1549 = vmatpush1.msra.mxu0 %v1448
    %1550 = vmatprep.subr.mxu0 %v1451
    %1551 = vmatpush1.msra.mxu0 %v1450
    %1552 = vmatprep.subr.mxu0 %v1453
    %1553 = vmatpush1.msra.mxu0 %v1452
    %1554 = vmatprep.subr.mxu0 %v1455
    %1555 = vmatpush1.msra.mxu0 %v1454
    %1556 = vmatprep.subr.mxu0 %v1457
    %1557 = vmatpush1.msra.mxu0 %v1456
    %1558 = vmatprep.subr.mxu0 %v1459
    %1559 = vmatpush1.msra.mxu0 %v1458
    %1560 = vmatprep.subr.mxu0 %v1461
    %1561 = vmatpush1.msra.mxu0 %v1460
    %1562 = vmatprep.subr.mxu0 %v1463
    %1563 = vmatpush1.msra.mxu0 %v1462
    %1564 = vmatprep.subr.mxu0 %v1465
    %1565 = vmatpush1.msra.mxu0 %v1464
    %1566 = vmatprep.subr.mxu0 %v1467
    %1567 = vmatpush1.msra.mxu0 %v1466
    %1568 = vmatprep.subr.mxu0 %v1469
    %1569 = vmatpush1.msra.mxu0 %v1468
    %1570 = vmatprep.subr.mxu0 %v1471
    %1571 = vmatpush1.msra.mxu0 %v1470
    %1572 = vmatprep.subr.mxu0 %v1473
    %1573 = vmatpush1.msra.mxu0 %v1472
    %1574 = vmatprep.subr.mxu0 %v1475
    %1575 = vmatpush1.msra.mxu0 %v1474
    %1576 = vmatprep.subr.mxu0 %v1477
    %1577 = vmatpush1.msra.mxu0 %v1476
    %1578 = vmatprep.subr.mxu0 %v1479
    %1579 = vmatpush1.msra.mxu0 %v1478
    %1580 = vmatprep.mubr.f32.mxu0 %v1495
    %1581 = vmatmul.mubr.f32.gmra.mrb[0].mxu0 %v1492
    %v1582 = vpop.f32.mrb[0].mxu0
    %v1583 = vadd.f32 0.0, %v1582
    %v1584 = vpop.f32.mrb[0].mxu0
    %v1585 = vadd.f32 0.0, %v1584
    %1586 = vmatprep.mubr.f32.mxu0 %v1499
    %1587 = vmatmul.mubr.f32.gmra.mrb[0].mxu0 %v1497
    %v1588 = vpop.f32.mrb[0].mxu0
    %v1589 = vadd.f32 0.0, %v1588
    %v1590 = vpop.f32.mrb[0].mxu0
    %v1591 = vadd.f32 0.0, %v1590
    %1592 = vmatprep.mubr.f32.mxu0 %v1503
    %1593 = vmatmul.mubr.f32.gmra.mrb[0].mxu0 %v1501
    %v1594 = vpop.f32.mrb[0].mxu0
    %v1595 = vadd.f32 0.0, %v1594
    %v1596 = vpop.f32.mrb[0].mxu0
    %v1597 = vadd.f32 0.0, %v1596
    %1598 = vmatprep.mubr.f32.mxu0 %v1507
    %1599 = vmatmul.mubr.f32.gmra.mrb[0].mxu0 %v1505
    %v1600 = vpop.f32.mrb[0].mxu0
    %v1601 = vadd.f32 0.0, %v1600
    %v1602 = vpop.f32.mrb[0].mxu0
    %v1603 = vadd.f32 0.0, %v1602
    %1604 = vdwg.mxu0
    %1605 = vmatprep.subr.mxu0 %v1348
    %1606 = vmatpush1.msra.mxu0 %v1347
    %1607 = vmatprep.subr.mxu0 %v1350
    %1608 = vmatpush1.msra.mxu0 %v1349
    %1609 = vmatprep.subr.mxu0 %v1352
    %1610 = vmatpush1.msra.mxu0 %v1351
    %1611 = vmatprep.subr.mxu0 %v1354
    %1612 = vmatpush1.msra.mxu0 %v1353
    %1613 = vmatprep.subr.mxu0 %v1356
    %1614 = vmatpush1.msra.mxu0 %v1355
    %1615 = vmatprep.subr.mxu0 %v1358
    %1616 = vmatpush1.msra.mxu0 %v1357
    %1617 = vmatprep.subr.mxu0 %v1360
    %1618 = vmatpush1.msra.mxu0 %v1359
    %1619 = vmatprep.subr.mxu0 %v1362
    %1620 = vmatpush1.msra.mxu0 %v1361
    %1621 = vmatprep.subr.mxu0 %v1364
    %1622 = vmatpush1.msra.mxu0 %v1363
    %1623 = vmatprep.subr.mxu0 %v1366
    %1624 = vmatpush1.msra.mxu0 %v1365
    %1625 = vmatprep.subr.mxu0 %v1368
    %1626 = vmatpush1.msra.mxu0 %v1367
    %1627 = vmatprep.subr.mxu0 %v1370
    %1628 = vmatpush1.msra.mxu0 %v1369
    %1629 = vmatprep.subr.mxu0 %v1372
    %1630 = vmatpush1.msra.mxu0 %v1371
    %1631 = vmatprep.subr.mxu0 %v1374
    %1632 = vmatpush1.msra.mxu0 %v1373
    %1633 = vmatprep.subr.mxu0 %v1376
    %1634 = vmatpush1.msra.mxu0 %v1375
    %1635 = vmatprep.subr.mxu0 %v1378
    %1636 = vmatpush1.msra.mxu0 %v1377
    %1637 = vmatprep.subr.mxu0 %v1380
    %1638 = vmatpush1.msra.mxu0 %v1379
    %1639 = vmatprep.subr.mxu0 %v1382
    %1640 = vmatpush1.msra.mxu0 %v1381
    %1641 = vmatprep.subr.mxu0 %v1384
    %1642 = vmatpush1.msra.mxu0 %v1383
    %1643 = vmatprep.subr.mxu0 %v1386
    %1644 = vmatpush1.msra.mxu0 %v1385
    %1645 = vmatprep.subr.mxu0 %v1388
    %1646 = vmatpush1.msra.mxu0 %v1387
    %1647 = vmatprep.subr.mxu0 %v1390
    %1648 = vmatpush1.msra.mxu0 %v1389
    %1649 = vmatprep.subr.mxu0 %v1392
    %1650 = vmatpush1.msra.mxu0 %v1391
    %1651 = vmatprep.subr.mxu0 %v1394
    %1652 = vmatpush1.msra.mxu0 %v1393
    %1653 = vmatprep.subr.mxu0 %v1396
    %1654 = vmatpush1.msra.mxu0 %v1395
    %1655 = vmatprep.subr.mxu0 %v1398
    %1656 = vmatpush1.msra.mxu0 %v1397
    %1657 = vmatprep.subr.mxu0 %v1400
    %1658 = vmatpush1.msra.mxu0 %v1399
    %1659 = vmatprep.subr.mxu0 %v1402
    %1660 = vmatpush1.msra.mxu0 %v1401
    %1661 = vmatprep.subr.mxu0 %v1404
    %1662 = vmatpush1.msra.mxu0 %v1403
    %1663 = vmatprep.subr.mxu0 %v1406
    %1664 = vmatpush1.msra.mxu0 %v1405
    %1665 = vmatprep.subr.mxu0 %v1408
    %1666 = vmatpush1.msra.mxu0 %v1407
    %1667 = vmatprep.subr.mxu0 %v1410
    %1668 = vmatpush1.msra.mxu0 %v1409
    %1669 = vmatprep.mubr.f32.mxu0 %v1339
    %1670 = vmatmul.mubr.f32.gmra.mrb[0].mxu0 %v1338
    %v1671 = vpop.f32.mrb[0].mxu0
    %v1672 = vadd.f32 %v1583, %v1671
    %v1673 = vpop.f32.mrb[0].mxu0
    %v1674 = vadd.f32 %v1585, %v1673
    %1675 = vmatprep.mubr.f32.mxu0 %v1341
    %1676 = vmatmul.mubr.f32.gmra.mrb[0].mxu0 %v1340
    %v1677 = vpop.f32.mrb[0].mxu0
    %v1678 = vadd.f32 %v1589, %v1677
    %v1679 = vpop.f32.mrb[0].mxu0
    %v1680 = vadd.f32 %v1591, %v1679
    %1681 = vmatprep.mubr.f32.mxu0 %v1343
    %1682 = vmatmul.mubr.f32.gmra.mrb[0].mxu0 %v1342
    %v1683 = vpop.f32.mrb[0].mxu0
    %v1684 = vadd.f32 %v1595, %v1683
    %v1685 = vpop.f32.mrb[0].mxu0
    %v1686 = vadd.f32 %v1597, %v1685
    %1687 = vmatprep.mubr.f32.mxu0 %v1345
    %1688 = vmatmul.mubr.f32.gmra.mrb[0].mxu0 %v1344
    %v1689 = vpop.f32.mrb[0].mxu0
    %v1690 = vadd.f32 %v1601, %v1689
    %v1691 = vpop.f32.mrb[0].mxu0
    %v1692 = vadd.f32 %v1603, %v1691
    %1693 = vdwg.mxu0
    %v1694 = vld [vmem:[#allocation2] sm:$0xf0]
    %v1695 = vld [vmem:[#allocation2 + $0x8] sm:$0xf0]
    %v1696 = vld [vmem:[#allocation2 + $0x40] sm:$0xf]
    %v1697 = vld [vmem:[#allocation2 + $0x48] sm:$0xf]
    %s1698 = scalar_lea.vmem [#allocation6], 2560
    %v1699 = vld [vmem:[%s1698] sm:$0xff]
    %v1700 = vld [vmem:[%s1698 + $0x8] sm:$0xff]
    %v1701 = vld [vmem:[%s1698 + $0x10] sm:$0xff]
    %v1702 = vld [vmem:[%s1698 + $0x18] sm:$0xff]
    %v1703 = vld [vmem:[%s1698 + $0x20] sm:$0xff]
    %v1704 = vld [vmem:[%s1698 + $0x28] sm:$0xff]
    %v1705 = vld [vmem:[%s1698 + $0x30] sm:$0xff]
    %v1706 = vld [vmem:[%s1698 + $0x38] sm:$0xff]
    %v1707 = vld [vmem:[%s1698 + $0x40] sm:$0xff]
    %v1708 = vld [vmem:[%s1698 + $0x48] sm:$0xff]
    %v1709 = vld [vmem:[%s1698 + $0x50] sm:$0xff]
    %v1710 = vld [vmem:[%s1698 + $0x58] sm:$0xff]
    %v1711 = vld [vmem:[%s1698 + $0x60] sm:$0xff]
    %v1712 = vld [vmem:[%s1698 + $0x68] sm:$0xff]
    %v1713 = vld [vmem:[%s1698 + $0x70] sm:$0xff]
    %v1714 = vld [vmem:[%s1698 + $0x78] sm:$0xff]
    %v1715 = vld [vmem:[%s1698 + $0x80] sm:$0xff]
    %v1716 = vld [vmem:[%s1698 + $0x88] sm:$0xff]
    %v1717 = vld [vmem:[%s1698 + $0x90] sm:$0xff]
    %v1718 = vld [vmem:[%s1698 + $0x98] sm:$0xff]
    %v1719 = vld [vmem:[%s1698 + $0xa0] sm:$0xff]
    %v1720 = vld [vmem:[%s1698 + $0xa8] sm:$0xff]
    %v1721 = vld [vmem:[%s1698 + $0xb0] sm:$0xff]
    %v1722 = vld [vmem:[%s1698 + $0xb8] sm:$0xff]
    %v1723 = vld [vmem:[%s1698 + $0xc0] sm:$0xff]
    %v1724 = vld [vmem:[%s1698 + $0xc8] sm:$0xff]
    %v1725 = vld [vmem:[%s1698 + $0xd0] sm:$0xff]
    %v1726 = vld [vmem:[%s1698 + $0xd8] sm:$0xff]
    %v1727 = vld [vmem:[%s1698 + $0xe0] sm:$0xff]
    %v1728 = vld [vmem:[%s1698 + $0xe8] sm:$0xff]
    %v1729 = vld [vmem:[%s1698 + $0xf0] sm:$0xff]
    %v1730 = vld [vmem:[%s1698 + $0xf8] sm:$0xff]
    %v1731 = vld [vmem:[%s1698 + $0x100] sm:$0xff]
    %v1732 = vld [vmem:[%s1698 + $0x108] sm:$0xff]
    %v1733 = vld [vmem:[%s1698 + $0x110] sm:$0xff]
    %v1734 = vld [vmem:[%s1698 + $0x118] sm:$0xff]
    %v1735 = vld [vmem:[%s1698 + $0x120] sm:$0xff]
    %v1736 = vld [vmem:[%s1698 + $0x128] sm:$0xff]
    %v1737 = vld [vmem:[%s1698 + $0x130] sm:$0xff]
    %v1738 = vld [vmem:[%s1698 + $0x138] sm:$0xff]
    %v1739 = vld [vmem:[%s1698 + $0x140] sm:$0xff]
    %v1740 = vld [vmem:[%s1698 + $0x148] sm:$0xff]
    %v1741 = vld [vmem:[%s1698 + $0x150] sm:$0xff]
    %v1742 = vld [vmem:[%s1698 + $0x158] sm:$0xff]
    %v1743 = vld [vmem:[%s1698 + $0x160] sm:$0xff]
    %v1744 = vld [vmem:[%s1698 + $0x168] sm:$0xff]
    %v1745 = vld [vmem:[%s1698 + $0x170] sm:$0xff]
    %v1746 = vld [vmem:[%s1698 + $0x178] sm:$0xff]
    %v1747 = vld [vmem:[%s1698 + $0x180] sm:$0xff]
    %v1748 = vld [vmem:[%s1698 + $0x188] sm:$0xff]
    %v1749 = vld [vmem:[%s1698 + $0x190] sm:$0xff]
    %v1750 = vld [vmem:[%s1698 + $0x198] sm:$0xff]
    %v1751 = vld [vmem:[%s1698 + $0x1a0] sm:$0xff]
    %v1752 = vld [vmem:[%s1698 + $0x1a8] sm:$0xff]
    %v1753 = vld [vmem:[%s1698 + $0x1b0] sm:$0xff]
    %v1754 = vld [vmem:[%s1698 + $0x1b8] sm:$0xff]
    %v1755 = vld [vmem:[%s1698 + $0x1c0] sm:$0xff]
    %v1756 = vld [vmem:[%s1698 + $0x1c8] sm:$0xff]
    %v1757 = vld [vmem:[%s1698 + $0x1d0] sm:$0xff]
    %v1758 = vld [vmem:[%s1698 + $0x1d8] sm:$0xff]
    %v1759 = vld [vmem:[%s1698 + $0x1e0] sm:$0xff]
    %v1760 = vld [vmem:[%s1698 + $0x1e8] sm:$0xff]
    %v1761 = vld [vmem:[%s1698 + $0x1f0] sm:$0xff]
    %v1762 = vld [vmem:[%s1698 + $0x1f8] sm:$0xff]
    %v1767 = vrot.slane %v1694, 4
    %v1768 = vrot.slane %v1340, 4
    %v1769 = vsel %vm736, %v1767, %v1768
    %v1770 = vrot.slane %v1695, 4
    %v1771 = vrot.slane %v1341, 4
    %v1772 = vsel %vm736, %v1770, %v1771
    %v1773 = vrot.slane %v1342, 4
    %v1774 = vsel %vm736, %v1768, %v1773
    %v1775 = vrot.slane %v1343, 4
    %v1776 = vsel %vm736, %v1771, %v1775
    %v1777 = vrot.slane %v1344, 4
    %v1778 = vsel %vm736, %v1773, %v1777
    %v1779 = vrot.slane %v1345, 4
    %v1780 = vsel %vm736, %v1775, %v1779
    %v1781 = vrot.slane %v1696, 4
    %v1782 = vsel %vm736, %v1777, %v1781
    %v1783 = vrot.slane %v1697, 4
    %v1784 = vsel %vm736, %v1779, %v1783
    %1793 = vmatprep.subr.mxu0 %v1700
    %1794 = vmatpush1.msra.mxu0 %v1699
    %1795 = vmatprep.subr.mxu0 %v1702
    %1796 = vmatpush1.msra.mxu0 %v1701
    %1797 = vmatprep.subr.mxu0 %v1704
    %1798 = vmatpush1.msra.mxu0 %v1703
    %1799 = vmatprep.subr.mxu0 %v1706
    %1800 = vmatpush1.msra.mxu0 %v1705
    %1801 = vmatprep.subr.mxu0 %v1708
    %1802 = vmatpush1.msra.mxu0 %v1707
    %1803 = vmatprep.subr.mxu0 %v1710
    %1804 = vmatpush1.msra.mxu0 %v1709
    %1805 = vmatprep.subr.mxu0 %v1712
    %1806 = vmatpush1.msra.mxu0 %v1711
    %1807 = vmatprep.subr.mxu0 %v1714
    %1808 = vmatpush1.msra.mxu0 %v1713
    %1809 = vmatprep.subr.mxu0 %v1716
    %1810 = vmatpush1.msra.mxu0 %v1715
    %1811 = vmatprep.subr.mxu0 %v1718
    %1812 = vmatpush1.msra.mxu0 %v1717
    %1813 = vmatprep.subr.mxu0 %v1720
    %1814 = vmatpush1.msra.mxu0 %v1719
    %1815 = vmatprep.subr.mxu0 %v1722
    %1816 = vmatpush1.msra.mxu0 %v1721
    %1817 = vmatprep.subr.mxu0 %v1724
    %1818 = vmatpush1.msra.mxu0 %v1723
    %1819 = vmatprep.subr.mxu0 %v1726
    %1820 = vmatpush1.msra.mxu0 %v1725
    %1821 = vmatprep.subr.mxu0 %v1728
    %1822 = vmatpush1.msra.mxu0 %v1727
    %1823 = vmatprep.subr.mxu0 %v1730
    %1824 = vmatpush1.msra.mxu0 %v1729
    %1825 = vmatprep.subr.mxu0 %v1732
    %1826 = vmatpush1.msra.mxu0 %v1731
    %1827 = vmatprep.subr.mxu0 %v1734
    %1828 = vmatpush1.msra.mxu0 %v1733
    %1829 = vmatprep.subr.mxu0 %v1736
    %1830 = vmatpush1.msra.mxu0 %v1735
    %1831 = vmatprep.subr.mxu0 %v1738
    %1832 = vmatpush1.msra.mxu0 %v1737
    %1833 = vmatprep.subr.mxu0 %v1740
    %1834 = vmatpush1.msra.mxu0 %v1739
    %1835 = vmatprep.subr.mxu0 %v1742
    %1836 = vmatpush1.msra.mxu0 %v1741
    %1837 = vmatprep.subr.mxu0 %v1744
    %1838 = vmatpush1.msra.mxu0 %v1743
    %1839 = vmatprep.subr.mxu0 %v1746
    %1840 = vmatpush1.msra.mxu0 %v1745
    %1841 = vmatprep.subr.mxu0 %v1748
    %1842 = vmatpush1.msra.mxu0 %v1747
    %1843 = vmatprep.subr.mxu0 %v1750
    %1844 = vmatpush1.msra.mxu0 %v1749
    %1845 = vmatprep.subr.mxu0 %v1752
    %1846 = vmatpush1.msra.mxu0 %v1751
    %1847 = vmatprep.subr.mxu0 %v1754
    %1848 = vmatpush1.msra.mxu0 %v1753
    %1849 = vmatprep.subr.mxu0 %v1756
    %1850 = vmatpush1.msra.mxu0 %v1755
    %1851 = vmatprep.subr.mxu0 %v1758
    %1852 = vmatpush1.msra.mxu0 %v1757
    %1853 = vmatprep.subr.mxu0 %v1760
    %1854 = vmatpush1.msra.mxu0 %v1759
    %1855 = vmatprep.subr.mxu0 %v1762
    %1856 = vmatpush1.msra.mxu0 %v1761
    %1857 = vmatprep.mubr.f32.mxu0 %v1772
    %1858 = vmatmul.mubr.f32.gmra.mrb[0].mxu0 %v1769
    %v1859 = vpop.f32.mrb[0].mxu0
    %v1860 = vadd.f32 0.0, %v1859
    %v1861 = vpop.f32.mrb[0].mxu0
    %v1862 = vadd.f32 0.0, %v1861
    %1863 = vmatprep.mubr.f32.mxu0 %v1776
    %1864 = vmatmul.mubr.f32.gmra.mrb[0].mxu0 %v1774
    %v1865 = vpop.f32.mrb[0].mxu0
    %v1866 = vadd.f32 0.0, %v1865
    %v1867 = vpop.f32.mrb[0].mxu0
    %v1868 = vadd.f32 0.0, %v1867
    %1869 = vmatprep.mubr.f32.mxu0 %v1780
    %1870 = vmatmul.mubr.f32.gmra.mrb[0].mxu0 %v1778
    %v1871 = vpop.f32.mrb[0].mxu0
    %v1872 = vadd.f32 0.0, %v1871
    %v1873 = vpop.f32.mrb[0].mxu0
    %v1874 = vadd.f32 0.0, %v1873
    %1875 = vmatprep.mubr.f32.mxu0 %v1784
    %1876 = vmatmul.mubr.f32.gmra.mrb[0].mxu0 %v1782
    %v1877 = vpop.f32.mrb[0].mxu0
    %v1878 = vadd.f32 0.0, %v1877
    %v1879 = vpop.f32.mrb[0].mxu0
    %v1880 = vadd.f32 0.0, %v1879
    %1881 = vdwg.mxu0
    %v1882 = vadd.f32 %v1672, %v1860
    %v1883 = vadd.f32 %v1674, %v1862
    %v1884 = vadd.f32 %v1678, %v1866
    %v1885 = vadd.f32 %v1680, %v1868
    %v1886 = vadd.f32 %v1684, %v1872
    %v1887 = vadd.f32 %v1686, %v1874
    %v1888 = vadd.f32 %v1690, %v1878
    %v1889 = vadd.f32 %v1692, %v1880
    %v1890 = vadd.f32 %v1882, %v1884
    %v1891 = vadd.f32 %v1890, %v1886
    %v1892 = vadd.f32 %v1891, %v1888
    %v1893 = vrot.slane %v1892, 4
    %v1894 = vadd.f32 %v1892, %v1893
    %v1895 = vrot.slane %v1894, 2
    %v1896 = vadd.f32 %v1894, %v1895
    %v1897 = vrot.slane %v1896, 1
    %v1898 = vadd.f32 %v1896, %v1897
    %v1899 = vadd.f32 %v1883, %v1885
    %v1900 = vadd.f32 %v1899, %v1887
    %v1901 = vadd.f32 %v1900, %v1889
    %v1902 = vrot.slane %v1901, 4
    %v1903 = vadd.f32 %v1901, %v1902
    %v1904 = vrot.slane %v1903, 2
    %v1905 = vadd.f32 %v1903, %v1904
    %v1906 = vrot.slane %v1905, 1
    %v1907 = vadd.f32 %v1905, %v1906
    %v1908 = vmul.f32 %v1882, %v1882
    %v1909 = vmul.f32 %v1883, %v1883
    %v1910 = vmul.f32 %v1884, %v1884
    %v1911 = vmul.f32 %v1885, %v1885
    %v1912 = vmul.f32 %v1886, %v1886
    %v1913 = vmul.f32 %v1887, %v1887
    %v1914 = vmul.f32 %v1888, %v1888
    %v1915 = vmul.f32 %v1889, %v1889
    %v1916 = vadd.f32 %v1908, %v1910
    %v1917 = vadd.f32 %v1916, %v1912
    %v1918 = vadd.f32 %v1917, %v1914
    %v1919 = vrot.slane %v1918, 4
    %v1920 = vadd.f32 %v1918, %v1919
    %v1921 = vrot.slane %v1920, 2
    %v1922 = vadd.f32 %v1920, %v1921
    %v1923 = vrot.slane %v1922, 1
    %v1924 = vadd.f32 %v1922, %v1923
    %v1925 = vadd.f32 %v1909, %v1911
    %v1926 = vadd.f32 %v1925, %v1913
    %v1927 = vadd.f32 %v1926, %v1915
    %v1928 = vrot.slane %v1927, 4
    %v1929 = vadd.f32 %v1927, %v1928
    %v1930 = vrot.slane %v1929, 2
    %v1931 = vadd.f32 %v1929, %v1930
    %v1932 = vrot.slane %v1931, 1
    %v1933 = vadd.f32 %v1931, %v1932
    %v1934 = vld [vmem:[#allocation11] sm:$0xff]
    %v1935 = vld [vmem:[#allocation11 + $0x8] sm:$0xff]
    %v1936 = vld [vmem:[#allocation11 + $0x10] sm:$0xff]
    %v1937 = vld [vmem:[#allocation11 + $0x18] sm:$0xff]
    %v1938 = vld [vmem:[#allocation11 + $0x20] sm:$0xff]
    %v1939 = vld [vmem:[#allocation11 + $0x28] sm:$0xff]
    %v1940 = vld [vmem:[#allocation11 + $0x30] sm:$0xff]
    %v1941 = vld [vmem:[#allocation11 + $0x38] sm:$0xff]
    %v1942 = vld [vmem:[#allocation11 + $0x40] sm:$0xff]
    %v1943 = vld [vmem:[#allocation11 + $0x48] sm:$0xff]
    %v1944 = vld [vmem:[#allocation11 + $0x50] sm:$0xff]
    %v1945 = vld [vmem:[#allocation11 + $0x58] sm:$0xff]
    %v1946 = vld [vmem:[#allocation11 + $0x60] sm:$0xff]
    %v1947 = vld [vmem:[#allocation11 + $0x68] sm:$0xff]
    %v1948 = vld [vmem:[#allocation11 + $0x70] sm:$0xff]
    %v1949 = vld [vmem:[#allocation11 + $0x78] sm:$0xff]
    %v1950 = vld [vmem:[#allocation11 + $0x80] sm:$0xff]
    %v1951 = vld [vmem:[#allocation11 + $0x88] sm:$0xff]
    %v1952 = vld [vmem:[#allocation11 + $0x90] sm:$0xff]
    %v1953 = vld [vmem:[#allocation11 + $0x98] sm:$0xff]
    %v1954 = vld [vmem:[#allocation11 + $0xa0] sm:$0xff]
    %v1955 = vld [vmem:[#allocation11 + $0xa8] sm:$0xff]
    %v1956 = vld [vmem:[#allocation11 + $0xb0] sm:$0xff]
    %v1957 = vld [vmem:[#allocation11 + $0xb8] sm:$0xff]
    %v1958 = vld [vmem:[#allocation11 + $0xc0] sm:$0xff]
    %v1959 = vld [vmem:[#allocation11 + $0xc8] sm:$0xff]
    %v1960 = vld [vmem:[#allocation11 + $0xd0] sm:$0xff]
    %v1961 = vld [vmem:[#allocation11 + $0xd8] sm:$0xff]
    %v1962 = vld [vmem:[#allocation11 + $0xe0] sm:$0xff]
    %v1963 = vld [vmem:[#allocation11 + $0xe8] sm:$0xff]
    %v1964 = vld [vmem:[#allocation11 + $0xf0] sm:$0xff]
    %v1965 = vld [vmem:[#allocation11 + $0xf8] sm:$0xff]
    %1966 = vmatprep.subr.mxu0 0.0
    %1967 = vmatpush1.msra.mxu0 %v1934
    %1968 = vmatprep.subr.mxu0 0.0
    %1969 = vmatpush1.msra.mxu0 %v1935
    %1970 = vmatprep.subr.mxu0 0.0
    %1971 = vmatpush1.msra.mxu0 %v1936
    %1972 = vmatprep.subr.mxu0 0.0
    %1973 = vmatpush1.msra.mxu0 %v1937
    %1974 = vmatprep.subr.mxu0 0.0
    %1975 = vmatpush1.msra.mxu0 %v1938
    %1976 = vmatprep.subr.mxu0 0.0
    %1977 = vmatpush1.msra.mxu0 %v1939
    %1978 = vmatprep.subr.mxu0 0.0
    %1979 = vmatpush1.msra.mxu0 %v1940
    %1980 = vmatprep.subr.mxu0 0.0
    %1981 = vmatpush1.msra.mxu0 %v1941
    %1982 = vmatprep.subr.mxu0 0.0
    %1983 = vmatpush1.msra.mxu0 %v1942
    %1984 = vmatprep.subr.mxu0 0.0
    %1985 = vmatpush1.msra.mxu0 %v1943
    %1986 = vmatprep.subr.mxu0 0.0
    %1987 = vmatpush1.msra.mxu0 %v1944
    %1988 = vmatprep.subr.mxu0 0.0
    %1989 = vmatpush1.msra.mxu0 %v1945
    %1990 = vmatprep.subr.mxu0 0.0
    %1991 = vmatpush1.msra.mxu0 %v1946
    %1992 = vmatprep.subr.mxu0 0.0
    %1993 = vmatpush1.msra.mxu0 %v1947
    %1994 = vmatprep.subr.mxu0 0.0
    %1995 = vmatpush1.msra.mxu0 %v1948
    %1996 = vmatprep.subr.mxu0 0.0
    %1997 = vmatpush1.msra.mxu0 %v1949
    %1998 = vmatprep.subr.mxu0 0.0
    %1999 = vmatpush1.msra.mxu0 %v1950
    %2000 = vmatprep.subr.mxu0 0.0
    %2001 = vmatpush1.msra.mxu0 %v1951
    %2002 = vmatprep.subr.mxu0 0.0
    %2003 = vmatpush1.msra.mxu0 %v1952
    %2004 = vmatprep.subr.mxu0 0.0
    %2005 = vmatpush1.msra.mxu0 %v1953
    %2006 = vmatprep.subr.mxu0 0.0
    %2007 = vmatpush1.msra.mxu0 %v1954
    %2008 = vmatprep.subr.mxu0 0.0
    %2009 = vmatpush1.msra.mxu0 %v1955
    %2010 = vmatprep.subr.mxu0 0.0
    %2011 = vmatpush1.msra.mxu0 %v1956
    %2012 = vmatprep.subr.mxu0 0.0
    %2013 = vmatpush1.msra.mxu0 %v1957
    %2014 = vmatprep.subr.mxu0 0.0
    %2015 = vmatpush1.msra.mxu0 %v1958
    %2016 = vmatprep.subr.mxu0 0.0
    %2017 = vmatpush1.msra.mxu0 %v1959
    %2018 = vmatprep.subr.mxu0 0.0
    %2019 = vmatpush1.msra.mxu0 %v1960
    %2020 = vmatprep.subr.mxu0 0.0
    %2021 = vmatpush1.msra.mxu0 %v1961
    %2022 = vmatprep.subr.mxu0 0.0
    %2023 = vmatpush1.msra.mxu0 %v1962
    %2024 = vmatprep.subr.mxu0 0.0
    %2025 = vmatpush1.msra.mxu0 %v1963
    %2026 = vmatprep.subr.mxu0 0.0
    %2027 = vmatpush1.msra.mxu0 %v1964
    %2028 = vmatprep.subr.mxu0 0.0
    %2029 = vmatpush1.msra.mxu0 %v1965
    %2030 = vmatprep.mubr.f32.mxu0 %v1907
    %2031 = vmatmul.mubr.f32.gmra.mrb[0].mxu0 %v1898
    %v2032 = vpop.f32.mrb[0].mxu0
    %v2033 = vadd.f32 0.0, %v2032
    %v2034 = vpop.f32.mrb[0].mxu0
    %2035 = vdwg.mxu0
    %v2036 = vmul.f32 %v2033, 0.001953125
    %2037 = vmatprep.subr.mxu0 0.0
    %2038 = vmatpush1.msra.mxu0 %v1934
    %2039 = vmatprep.subr.mxu0 0.0
    %2040 = vmatpush1.msra.mxu0 %v1935
    %2041 = vmatprep.subr.mxu0 0.0
    %2042 = vmatpush1.msra.mxu0 %v1936
    %2043 = vmatprep.subr.mxu0 0.0
    %2044 = vmatpush1.msra.mxu0 %v1937
    %2045 = vmatprep.subr.mxu0 0.0
    %2046 = vmatpush1.msra.mxu0 %v1938
    %2047 = vmatprep.subr.mxu0 0.0
    %2048 = vmatpush1.msra.mxu0 %v1939
    %2049 = vmatprep.subr.mxu0 0.0
    %2050 = vmatpush1.msra.mxu0 %v1940
    %2051 = vmatprep.subr.mxu0 0.0
    %2052 = vmatpush1.msra.mxu0 %v1941
    %2053 = vmatprep.subr.mxu0 0.0
    %2054 = vmatpush1.msra.mxu0 %v1942
    %2055 = vmatprep.subr.mxu0 0.0
    %2056 = vmatpush1.msra.mxu0 %v1943
    %2057 = vmatprep.subr.mxu0 0.0
    %2058 = vmatpush1.msra.mxu0 %v1944
    %2059 = vmatprep.subr.mxu0 0.0
    %2060 = vmatpush1.msra.mxu0 %v1945
    %2061 = vmatprep.subr.mxu0 0.0
    %2062 = vmatpush1.msra.mxu0 %v1946
    %2063 = vmatprep.subr.mxu0 0.0
    %2064 = vmatpush1.msra.mxu0 %v1947
    %2065 = vmatprep.subr.mxu0 0.0
    %2066 = vmatpush1.msra.mxu0 %v1948
    %2067 = vmatprep.subr.mxu0 0.0
    %2068 = vmatpush1.msra.mxu0 %v1949
    %2069 = vmatprep.subr.mxu0 0.0
    %2070 = vmatpush1.msra.mxu0 %v1950
    %2071 = vmatprep.subr.mxu0 0.0
    %2072 = vmatpush1.msra.mxu0 %v1951
    %2073 = vmatprep.subr.mxu0 0.0
    %2074 = vmatpush1.msra.mxu0 %v1952
    %2075 = vmatprep.subr.mxu0 0.0
    %2076 = vmatpush1.msra.mxu0 %v1953
    %2077 = vmatprep.subr.mxu0 0.0
    %2078 = vmatpush1.msra.mxu0 %v1954
    %2079 = vmatprep.subr.mxu0 0.0
    %2080 = vmatpush1.msra.mxu0 %v1955
    %2081 = vmatprep.subr.mxu0 0.0
    %2082 = vmatpush1.msra.mxu0 %v1956
    %2083 = vmatprep.subr.mxu0 0.0
    %2084 = vmatpush1.msra.mxu0 %v1957
    %2085 = vmatprep.subr.mxu0 0.0
    %2086 = vmatpush1.msra.mxu0 %v1958
    %2087 = vmatprep.subr.mxu0 0.0
    %2088 = vmatpush1.msra.mxu0 %v1959
    %2089 = vmatprep.subr.mxu0 0.0
    %2090 = vmatpush1.msra.mxu0 %v1960
    %2091 = vmatprep.subr.mxu0 0.0
    %2092 = vmatpush1.msra.mxu0 %v1961
    %2093 = vmatprep.subr.mxu0 0.0
    %2094 = vmatpush1.msra.mxu0 %v1962
    %2095 = vmatprep.subr.mxu0 0.0
    %2096 = vmatpush1.msra.mxu0 %v1963
    %2097 = vmatprep.subr.mxu0 0.0
    %2098 = vmatpush1.msra.mxu0 %v1964
    %2099 = vmatprep.subr.mxu0 0.0
    %2100 = vmatpush1.msra.mxu0 %v1965
    %2101 = vmatprep.mubr.f32.mxu0 %v1933
    %2102 = vmatmul.mubr.f32.gmra.mrb[0].mxu0 %v1924
    %v2103 = vpop.f32.mrb[0].mxu0
    %v2104 = vadd.f32 0.0, %v2103
    %v2105 = vpop.f32.mrb[0].mxu0
    %2106 = vdwg.mxu0
    %v2107 = vmul.f32 %v2104, 0.001953125
    %v2108 = vmul.f32 %v2036, %v2036
    %v2109 = vsub.f32 %v2107, %v2108
    %s2110 = scalar_lea.vmem [#allocation8], 1
    %v2111 = vld [vmem:[%s2110] sm:$0x1]
    %v2112 = vadd.f32 %v2109, 1e-05
    %v2113 = vrsqrt.pop %v2112
    %v2114 = vmul.f32 %v2111, %v2113
    %s2115 = scalar_lea.vmem [#allocation9], 1
    %v2116 = vld [vmem:[%s2115] sm:$0x1]
    %v2117 = vmul.f32 %v2036, %v2114
    %v2118 = vsub.f32 %v2116, %v2117
    %v2119 = vld [vmem:[#allocation12] sm:$0xff]
    %v2120 = vld [vmem:[#allocation12 + $0x8] sm:$0xff]
    %v2121 = vld [vmem:[#allocation12 + $0x10] sm:$0xff]
    %v2122 = vld [vmem:[#allocation12 + $0x18] sm:$0xff]
    %v2124 = vsel %vm1091, %v2114, 0
    %2126 = vmatprep.subr.mxu0 %v2120
    %2127 = vmatpush1.msra.mxu0 %v2119
    %2128 = vmatprep.subr.mxu0 %v2122
    %2129 = vmatpush1.msra.mxu0 %v2121
    %2130 = vmatprep.subr.mxu0 0.0
    %2131 = vmatpush1.msra.mxu0 0.0
    %2132 = vmatprep.subr.mxu0 0.0
    %2133 = vmatpush1.msra.mxu0 0.0
    %2134 = vmatprep.subr.mxu0 0.0
    %2135 = vmatpush1.msra.mxu0 0.0
    %2136 = vmatprep.subr.mxu0 0.0
    %2137 = vmatpush1.msra.mxu0 0.0
    %2138 = vmatprep.subr.mxu0 0.0
    %2139 = vmatpush1.msra.mxu0 0.0
    %2140 = vmatprep.subr.mxu0 0.0
    %2141 = vmatpush1.msra.mxu0 0.0
    %2142 = vmatprep.subr.mxu0 0.0
    %2143 = vmatpush1.msra.mxu0 0.0
    %2144 = vmatprep.subr.mxu0 0.0
    %2145 = vmatpush1.msra.mxu0 0.0
    %2146 = vmatprep.subr.mxu0 0.0
    %2147 = vmatpush1.msra.mxu0 0.0
    %2148 = vmatprep.subr.mxu0 0.0
    %2149 = vmatpush1.msra.mxu0 0.0
    %2150 = vmatprep.subr.mxu0 0.0
    %2151 = vmatpush1.msra.mxu0 0.0
    %2152 = vmatprep.subr.mxu0 0.0
    %2153 = vmatpush1.msra.mxu0 0.0
    %2154 = vmatprep.subr.mxu0 0.0
    %2155 = vmatpush1.msra.mxu0 0.0
    %2156 = vmatprep.subr.mxu0 0.0
    %2157 = vmatpush1.msra.mxu0 0.0
    %2158 = vmatprep.subr.mxu0 0.0
    %2159 = vmatpush1.msra.mxu0 0.0
    %2160 = vmatprep.subr.mxu0 0.0
    %2161 = vmatpush1.msra.mxu0 0.0
    %2162 = vmatprep.subr.mxu0 0.0
    %2163 = vmatpush1.msra.mxu0 0.0
    %2164 = vmatprep.subr.mxu0 0.0
    %2165 = vmatpush1.msra.mxu0 0.0
    %2166 = vmatprep.subr.mxu0 0.0
    %2167 = vmatpush1.msra.mxu0 0.0
    %2168 = vmatprep.subr.mxu0 0.0
    %2169 = vmatpush1.msra.mxu0 0.0
    %2170 = vmatprep.subr.mxu0 0.0
    %2171 = vmatpush1.msra.mxu0 0.0
    %2172 = vmatprep.subr.mxu0 0.0
    %2173 = vmatpush1.msra.mxu0 0.0
    %2174 = vmatprep.subr.mxu0 0.0
    %2175 = vmatpush1.msra.mxu0 0.0
    %2176 = vmatprep.subr.mxu0 0.0
    %2177 = vmatpush1.msra.mxu0 0.0
    %2178 = vmatprep.subr.mxu0 0.0
    %2179 = vmatpush1.msra.mxu0 0.0
    %2180 = vmatprep.subr.mxu0 0.0
    %2181 = vmatpush1.msra.mxu0 0.0
    %2182 = vmatprep.subr.mxu0 0.0
    %2183 = vmatpush1.msra.mxu0 0.0
    %2184 = vmatprep.subr.mxu0 0.0
    %2185 = vmatpush1.msra.mxu0 0.0
    %2186 = vmatprep.subr.mxu0 0.0
    %2187 = vmatpush1.msra.mxu0 0.0
    %2188 = vmatprep.subr.mxu0 0.0
    %2189 = vmatpush1.msra.mxu0 0.0
    %2190 = vmatprep.mubr.f32.mxu0 0.0
    %2191 = vmatmul.mubr.f32.gmra.mrb[0].mxu0 %v2124
    %v2192 = vpop.f32.mrb[0].mxu0
    %v2193 = vadd.f32 0.0, %v2192
    %v2194 = vpop.f32.mrb[0].mxu0
    %v2195 = vadd.f32 0.0, %v2194
    %2196 = vdwg.mxu0
    %v2198 = vsel %vm1091, %v2118, 0
    %2200 = vmatprep.subr.mxu0 %v2120
    %2201 = vmatpush1.msra.mxu0 %v2119
    %2202 = vmatprep.subr.mxu0 %v2122
    %2203 = vmatpush1.msra.mxu0 %v2121
    %2204 = vmatprep.subr.mxu0 0.0
    %2205 = vmatpush1.msra.mxu0 0.0
    %2206 = vmatprep.subr.mxu0 0.0
    %2207 = vmatpush1.msra.mxu0 0.0
    %2208 = vmatprep.subr.mxu0 0.0
    %2209 = vmatpush1.msra.mxu0 0.0
    %2210 = vmatprep.subr.mxu0 0.0
    %2211 = vmatpush1.msra.mxu0 0.0
    %2212 = vmatprep.subr.mxu0 0.0
    %2213 = vmatpush1.msra.mxu0 0.0
    %2214 = vmatprep.subr.mxu0 0.0
    %2215 = vmatpush1.msra.mxu0 0.0
    %2216 = vmatprep.subr.mxu0 0.0
    %2217 = vmatpush1.msra.mxu0 0.0
    %2218 = vmatprep.subr.mxu0 0.0
    %2219 = vmatpush1.msra.mxu0 0.0
    %2220 = vmatprep.subr.mxu0 0.0
    %2221 = vmatpush1.msra.mxu0 0.0
    %2222 = vmatprep.subr.mxu0 0.0
    %2223 = vmatpush1.msra.mxu0 0.0
    %2224 = vmatprep.subr.mxu0 0.0
    %2225 = vmatpush1.msra.mxu0 0.0
    %2226 = vmatprep.subr.mxu0 0.0
    %2227 = vmatpush1.msra.mxu0 0.0
    %2228 = vmatprep.subr.mxu0 0.0
    %2229 = vmatpush1.msra.mxu0 0.0
    %2230 = vmatprep.subr.mxu0 0.0
    %2231 = vmatpush1.msra.mxu0 0.0
    %2232 = vmatprep.subr.mxu0 0.0
    %2233 = vmatpush1.msra.mxu0 0.0
    %2234 = vmatprep.subr.mxu0 0.0
    %2235 = vmatpush1.msra.mxu0 0.0
    %2236 = vmatprep.subr.mxu0 0.0
    %2237 = vmatpush1.msra.mxu0 0.0
    %2238 = vmatprep.subr.mxu0 0.0
    %2239 = vmatpush1.msra.mxu0 0.0
    %2240 = vmatprep.subr.mxu0 0.0
    %2241 = vmatpush1.msra.mxu0 0.0
    %2242 = vmatprep.subr.mxu0 0.0
    %2243 = vmatpush1.msra.mxu0 0.0
    %2244 = vmatprep.subr.mxu0 0.0
    %2245 = vmatpush1.msra.mxu0 0.0
    %2246 = vmatprep.subr.mxu0 0.0
    %2247 = vmatpush1.msra.mxu0 0.0
    %2248 = vmatprep.subr.mxu0 0.0
    %2249 = vmatpush1.msra.mxu0 0.0
    %2250 = vmatprep.subr.mxu0 0.0
    %2251 = vmatpush1.msra.mxu0 0.0
    %2252 = vmatprep.subr.mxu0 0.0
    %2253 = vmatpush1.msra.mxu0 0.0
    %2254 = vmatprep.subr.mxu0 0.0
    %2255 = vmatpush1.msra.mxu0 0.0
    %2256 = vmatprep.subr.mxu0 0.0
    %2257 = vmatpush1.msra.mxu0 0.0
    %2258 = vmatprep.subr.mxu0 0.0
    %2259 = vmatpush1.msra.mxu0 0.0
    %2260 = vmatprep.subr.mxu0 0.0
    %2261 = vmatpush1.msra.mxu0 0.0
    %2262 = vmatprep.subr.mxu0 0.0
    %2263 = vmatpush1.msra.mxu0 0.0
    %2264 = vmatprep.mubr.f32.mxu0 0.0
    %2265 = vmatmul.mubr.f32.gmra.mrb[0].mxu0 %v2198
    %v2266 = vpop.f32.mrb[0].mxu0
    %v2267 = vadd.f32 0.0, %v2266
    %v2268 = vpop.f32.mrb[0].mxu0
    %v2269 = vadd.f32 0.0, %v2268
    %2270 = vdwg.mxu0
    %v2271 = vlaneseq
    %v2272 = vshrl.u32 %v2271, 7
    %v2273 = vsub.s32 0, %v2272
    %v2274 = vrot.slane %v2193, %v2273
    %v2275 = vlaneseq
    %v2276 = vshrl.u32 %v2275, 7
    %v2277 = vsub.s32 0, %v2276
    %v2278 = vrot.slane %v2195, %v2277
    %v2279 = vmul.f32 %v1882, %v2274
    %v2280 = vmul.f32 %v1883, %v2278
    %v2281 = vmul.f32 %v1884, %v2274
    %v2282 = vmul.f32 %v1885, %v2278
    %v2283 = vmul.f32 %v1886, %v2274
    %v2284 = vmul.f32 %v1887, %v2278
    %v2285 = vmul.f32 %v1888, %v2274
    %v2286 = vmul.f32 %v1889, %v2278
    %v2287 = vlaneseq
    %v2288 = vshrl.u32 %v2287, 7
    %v2289 = vsub.s32 0, %v2288
    %v2290 = vrot.slane %v2267, %v2289
    %v2291 = vlaneseq
    %v2292 = vshrl.u32 %v2291, 7
    %v2293 = vsub.s32 0, %v2292
    %v2294 = vrot.slane %v2269, %v2293
    %v2295 = vadd.f32 %v2279, %v2290
    %v2296 = vadd.f32 %v2280, %v2294
    %v2297 = vadd.f32 %v2281, %v2290
    %v2298 = vadd.f32 %v2282, %v2294
    %v2299 = vadd.f32 %v2283, %v2290
    %v2300 = vadd.f32 %v2284, %v2294
    %v2301 = vadd.f32 %v2285, %v2290
    %v2302 = vadd.f32 %v2286, %v2294
    %vm2303 = vcmp.gt.f32.partialorder %v2295, 0.0
    %vm2304 = vcmp.gt.f32.partialorder %v2296, 0.0
    %vm2305 = vcmp.gt.f32.partialorder %v2297, 0.0
    %vm2306 = vcmp.gt.f32.partialorder %v2298, 0.0
    %vm2307 = vcmp.gt.f32.partialorder %v2299, 0.0
    %vm2308 = vcmp.gt.f32.partialorder %v2300, 0.0
    %vm2309 = vcmp.gt.f32.partialorder %v2301, 0.0
    %vm2310 = vcmp.gt.f32.partialorder %v2302, 0.0
    %v2311 = vmul.f32 %v2295, 0.2
    %v2312 = vmul.f32 %v2296, 0.2
    %v2313 = vmul.f32 %v2297, 0.2
    %v2314 = vmul.f32 %v2298, 0.2
    %v2315 = vmul.f32 %v2299, 0.2
    %v2316 = vmul.f32 %v2300, 0.2
    %v2317 = vmul.f32 %v2301, 0.2
    %v2318 = vmul.f32 %v2302, 0.2
    %v2319 = vsel %vm2303, %v2295, %v2311
    %v2320 = vsel %vm2304, %v2296, %v2312
    %v2321 = vsel %vm2305, %v2297, %v2313
    %v2322 = vsel %vm2306, %v2298, %v2314
    %v2323 = vsel %vm2307, %v2299, %v2315
    %v2324 = vsel %vm2308, %v2300, %v2316
    %v2325 = vsel %vm2309, %v2301, %v2317
    %v2326 = vsel %vm2310, %v2302, %v2318
    %v2335 = vrot.slane %v2319, 6
    %v2336 = vrot.slane %v2320, 6
    %v2337 = vrot.slane %v2321, 6
    %v2338 = vsel %vm272, %v2335, %v2337
    %v2339 = vrot.slane %v2322, 6
    %v2340 = vsel %vm272, %v2336, %v2339
    %v2341 = vrot.slane %v2323, 6
    %v2342 = vsel %vm272, %v2337, %v2341
    %v2343 = vrot.slane %v2324, 6
    %v2344 = vsel %vm272, %v2339, %v2343
    %v2345 = vrot.slane %v2325, 6
    %v2346 = vsel %vm272, %v2341, %v2345
    %v2347 = vrot.slane %v2326, 6
    %v2348 = vsel %vm272, %v2343, %v2347
    %2359 = vst [vmem:[#allocation2] sm:$0xfc] %v2335
    %2360 = vst [vmem:[#allocation2 + $0x8] sm:$0xfc] %v2336
    %2361 = vst [vmem:[#allocation2 + $0x10] sm:$0xff] %v2338
    %2362 = vst [vmem:[#allocation2 + $0x18] sm:$0xff] %v2340
    %2363 = vst [vmem:[#allocation2 + $0x20] sm:$0xff] %v2342
    %2364 = vst [vmem:[#allocation2 + $0x28] sm:$0xff] %v2344
    %2365 = vst [vmem:[#allocation2 + $0x30] sm:$0xff] %v2346
    %2366 = vst [vmem:[#allocation2 + $0x38] sm:$0xff] %v2348
    %2367 = vst [vmem:[#allocation2 + $0x40] sm:$0x3] %v2345
    %2368 = vst [vmem:[#allocation2 + $0x48] sm:$0x3] %v2347
    %v2369 = vld [vmem:[#allocation2] sm:$0xff]
    %v2370 = vld [vmem:[#allocation2 + $0x8] sm:$0xff]
    %v2371 = vld [vmem:[#allocation2 + $0x10] sm:$0xff]
    %v2372 = vld [vmem:[#allocation2 + $0x18] sm:$0xff]
    %v2373 = vld [vmem:[#allocation2 + $0x20] sm:$0xff]
    %v2374 = vld [vmem:[#allocation2 + $0x28] sm:$0xff]
    %v2375 = vld [vmem:[#allocation2 + $0x30] sm:$0xff]
    %v2376 = vld [vmem:[#allocation2 + $0x38] sm:$0xff]
    %s2377 = scalar_lea.vmem [#allocation6], 3072
    %v2378 = vld [vmem:[%s2377] sm:$0xff]
    %v2379 = vld [vmem:[%s2377 + $0x8] sm:$0xff]
    %v2380 = vld [vmem:[%s2377 + $0x10] sm:$0xff]
    %v2381 = vld [vmem:[%s2377 + $0x18] sm:$0xff]
    %v2382 = vld [vmem:[%s2377 + $0x20] sm:$0xff]
    %v2383 = vld [vmem:[%s2377 + $0x28] sm:$0xff]
    %v2384 = vld [vmem:[%s2377 + $0x30] sm:$0xff]
    %v2385 = vld [vmem:[%s2377 + $0x38] sm:$0xff]
    %v2386 = vld [vmem:[%s2377 + $0x40] sm:$0xff]
    %v2387 = vld [vmem:[%s2377 + $0x48] sm:$0xff]
    %v2388 = vld [vmem:[%s2377 + $0x50] sm:$0xff]
    %v2389 = vld [vmem:[%s2377 + $0x58] sm:$0xff]
    %v2390 = vld [vmem:[%s2377 + $0x60] sm:$0xff]
    %v2391 = vld [vmem:[%s2377 + $0x68] sm:$0xff]
    %v2392 = vld [vmem:[%s2377 + $0x70] sm:$0xff]
    %v2393 = vld [vmem:[%s2377 + $0x78] sm:$0xff]
    %v2394 = vld [vmem:[%s2377 + $0x80] sm:$0xff]
    %v2395 = vld [vmem:[%s2377 + $0x88] sm:$0xff]
    %v2396 = vld [vmem:[%s2377 + $0x90] sm:$0xff]
    %v2397 = vld [vmem:[%s2377 + $0x98] sm:$0xff]
    %v2398 = vld [vmem:[%s2377 + $0xa0] sm:$0xff]
    %v2399 = vld [vmem:[%s2377 + $0xa8] sm:$0xff]
    %v2400 = vld [vmem:[%s2377 + $0xb0] sm:$0xff]
    %v2401 = vld [vmem:[%s2377 + $0xb8] sm:$0xff]
    %v2402 = vld [vmem:[%s2377 + $0xc0] sm:$0xff]
    %v2403 = vld [vmem:[%s2377 + $0xc8] sm:$0xff]
    %v2404 = vld [vmem:[%s2377 + $0xd0] sm:$0xff]
    %v2405 = vld [vmem:[%s2377 + $0xd8] sm:$0xff]
    %v2406 = vld [vmem:[%s2377 + $0xe0] sm:$0xff]
    %v2407 = vld [vmem:[%s2377 + $0xe8] sm:$0xff]
    %v2408 = vld [vmem:[%s2377 + $0xf0] sm:$0xff]
    %v2409 = vld [vmem:[%s2377 + $0xf8] sm:$0xff]
    %v2410 = vld [vmem:[%s2377 + $0x100] sm:$0xff]
    %v2411 = vld [vmem:[%s2377 + $0x108] sm:$0xff]
    %v2412 = vld [vmem:[%s2377 + $0x110] sm:$0xff]
    %v2413 = vld [vmem:[%s2377 + $0x118] sm:$0xff]
    %v2414 = vld [vmem:[%s2377 + $0x120] sm:$0xff]
    %v2415 = vld [vmem:[%s2377 + $0x128] sm:$0xff]
    %v2416 = vld [vmem:[%s2377 + $0x130] sm:$0xff]
    %v2417 = vld [vmem:[%s2377 + $0x138] sm:$0xff]
    %v2418 = vld [vmem:[%s2377 + $0x140] sm:$0xff]
    %v2419 = vld [vmem:[%s2377 + $0x148] sm:$0xff]
    %v2420 = vld [vmem:[%s2377 + $0x150] sm:$0xff]
    %v2421 = vld [vmem:[%s2377 + $0x158] sm:$0xff]
    %v2422 = vld [vmem:[%s2377 + $0x160] sm:$0xff]
    %v2423 = vld [vmem:[%s2377 + $0x168] sm:$0xff]
    %v2424 = vld [vmem:[%s2377 + $0x170] sm:$0xff]
    %v2425 = vld [vmem:[%s2377 + $0x178] sm:$0xff]
    %v2426 = vld [vmem:[%s2377 + $0x180] sm:$0xff]
    %v2427 = vld [vmem:[%s2377 + $0x188] sm:$0xff]
    %v2428 = vld [vmem:[%s2377 + $0x190] sm:$0xff]
    %v2429 = vld [vmem:[%s2377 + $0x198] sm:$0xff]
    %v2430 = vld [vmem:[%s2377 + $0x1a0] sm:$0xff]
    %v2431 = vld [vmem:[%s2377 + $0x1a8] sm:$0xff]
    %v2432 = vld [vmem:[%s2377 + $0x1b0] sm:$0xff]
    %v2433 = vld [vmem:[%s2377 + $0x1b8] sm:$0xff]
    %v2434 = vld [vmem:[%s2377 + $0x1c0] sm:$0xff]
    %v2435 = vld [vmem:[%s2377 + $0x1c8] sm:$0xff]
    %v2436 = vld [vmem:[%s2377 + $0x1d0] sm:$0xff]
    %v2437 = vld [vmem:[%s2377 + $0x1d8] sm:$0xff]
    %v2438 = vld [vmem:[%s2377 + $0x1e0] sm:$0xff]
    %v2439 = vld [vmem:[%s2377 + $0x1e8] sm:$0xff]
    %v2440 = vld [vmem:[%s2377 + $0x1f0] sm:$0xff]
    %v2441 = vld [vmem:[%s2377 + $0x1f8] sm:$0xff]
    %v2442 = vld [vmem:[#allocation2] sm:$0xfc]
    %v2443 = vld [vmem:[#allocation2 + $0x8] sm:$0xfc]
    %v2444 = vld [vmem:[#allocation2 + $0x40] sm:$0x3]
    %v2445 = vld [vmem:[#allocation2 + $0x48] sm:$0x3]
    %s2446 = scalar_lea.vmem [#allocation6], 3584
    %v2447 = vld [vmem:[%s2446] sm:$0xff]
    %v2448 = vld [vmem:[%s2446 + $0x8] sm:$0xff]
    %v2449 = vld [vmem:[%s2446 + $0x10] sm:$0xff]
    %v2450 = vld [vmem:[%s2446 + $0x18] sm:$0xff]
    %v2451 = vld [vmem:[%s2446 + $0x20] sm:$0xff]
    %v2452 = vld [vmem:[%s2446 + $0x28] sm:$0xff]
    %v2453 = vld [vmem:[%s2446 + $0x30] sm:$0xff]
    %v2454 = vld [vmem:[%s2446 + $0x38] sm:$0xff]
    %v2455 = vld [vmem:[%s2446 + $0x40] sm:$0xff]
    %v2456 = vld [vmem:[%s2446 + $0x48] sm:$0xff]
    %v2457 = vld [vmem:[%s2446 + $0x50] sm:$0xff]
    %v2458 = vld [vmem:[%s2446 + $0x58] sm:$0xff]
    %v2459 = vld [vmem:[%s2446 + $0x60] sm:$0xff]
    %v2460 = vld [vmem:[%s2446 + $0x68] sm:$0xff]
    %v2461 = vld [vmem:[%s2446 + $0x70] sm:$0xff]
    %v2462 = vld [vmem:[%s2446 + $0x78] sm:$0xff]
    %v2463 = vld [vmem:[%s2446 + $0x80] sm:$0xff]
    %v2464 = vld [vmem:[%s2446 + $0x88] sm:$0xff]
    %v2465 = vld [vmem:[%s2446 + $0x90] sm:$0xff]
    %v2466 = vld [vmem:[%s2446 + $0x98] sm:$0xff]
    %v2467 = vld [vmem:[%s2446 + $0xa0] sm:$0xff]
    %v2468 = vld [vmem:[%s2446 + $0xa8] sm:$0xff]
    %v2469 = vld [vmem:[%s2446 + $0xb0] sm:$0xff]
    %v2470 = vld [vmem:[%s2446 + $0xb8] sm:$0xff]
    %v2471 = vld [vmem:[%s2446 + $0xc0] sm:$0xff]
    %v2472 = vld [vmem:[%s2446 + $0xc8] sm:$0xff]
    %v2473 = vld [vmem:[%s2446 + $0xd0] sm:$0xff]
    %v2474 = vld [vmem:[%s2446 + $0xd8] sm:$0xff]
    %v2475 = vld [vmem:[%s2446 + $0xe0] sm:$0xff]
    %v2476 = vld [vmem:[%s2446 + $0xe8] sm:$0xff]
    %v2477 = vld [vmem:[%s2446 + $0xf0] sm:$0xff]
    %v2478 = vld [vmem:[%s2446 + $0xf8] sm:$0xff]
    %v2479 = vld [vmem:[%s2446 + $0x100] sm:$0xff]
    %v2480 = vld [vmem:[%s2446 + $0x108] sm:$0xff]
    %v2481 = vld [vmem:[%s2446 + $0x110] sm:$0xff]
    %v2482 = vld [vmem:[%s2446 + $0x118] sm:$0xff]
    %v2483 = vld [vmem:[%s2446 + $0x120] sm:$0xff]
    %v2484 = vld [vmem:[%s2446 + $0x128] sm:$0xff]
    %v2485 = vld [vmem:[%s2446 + $0x130] sm:$0xff]
    %v2486 = vld [vmem:[%s2446 + $0x138] sm:$0xff]
    %v2487 = vld [vmem:[%s2446 + $0x140] sm:$0xff]
    %v2488 = vld [vmem:[%s2446 + $0x148] sm:$0xff]
    %v2489 = vld [vmem:[%s2446 + $0x150] sm:$0xff]
    %v2490 = vld [vmem:[%s2446 + $0x158] sm:$0xff]
    %v2491 = vld [vmem:[%s2446 + $0x160] sm:$0xff]
    %v2492 = vld [vmem:[%s2446 + $0x168] sm:$0xff]
    %v2493 = vld [vmem:[%s2446 + $0x170] sm:$0xff]
    %v2494 = vld [vmem:[%s2446 + $0x178] sm:$0xff]
    %v2495 = vld [vmem:[%s2446 + $0x180] sm:$0xff]
    %v2496 = vld [vmem:[%s2446 + $0x188] sm:$0xff]
    %v2497 = vld [vmem:[%s2446 + $0x190] sm:$0xff]
    %v2498 = vld [vmem:[%s2446 + $0x198] sm:$0xff]
    %v2499 = vld [vmem:[%s2446 + $0x1a0] sm:$0xff]
    %v2500 = vld [vmem:[%s2446 + $0x1a8] sm:$0xff]
    %v2501 = vld [vmem:[%s2446 + $0x1b0] sm:$0xff]
    %v2502 = vld [vmem:[%s2446 + $0x1b8] sm:$0xff]
    %v2503 = vld [vmem:[%s2446 + $0x1c0] sm:$0xff]
    %v2504 = vld [vmem:[%s2446 + $0x1c8] sm:$0xff]
    %v2505 = vld [vmem:[%s2446 + $0x1d0] sm:$0xff]
    %v2506 = vld [vmem:[%s2446 + $0x1d8] sm:$0xff]
    %v2507 = vld [vmem:[%s2446 + $0x1e0] sm:$0xff]
    %v2508 = vld [vmem:[%s2446 + $0x1e8] sm:$0xff]
    %v2509 = vld [vmem:[%s2446 + $0x1f0] sm:$0xff]
    %v2510 = vld [vmem:[%s2446 + $0x1f8] sm:$0xff]
    %v2521 = vrot.slane %v2442, 2
    %v2522 = vrot.slane %v2371, 2
    %v2523 = vsel %vm458, %v2521, %v2522
    %v2524 = vrot.slane %v2443, 2
    %v2525 = vrot.slane %v2372, 2
    %v2526 = vsel %vm458, %v2524, %v2525
    %v2527 = vrot.slane %v2373, 2
    %v2528 = vsel %vm458, %v2522, %v2527
    %v2529 = vrot.slane %v2374, 2
    %v2530 = vsel %vm458, %v2525, %v2529
    %v2531 = vrot.slane %v2375, 2
    %v2532 = vsel %vm458, %v2527, %v2531
    %v2533 = vrot.slane %v2376, 2
    %v2534 = vsel %vm458, %v2529, %v2533
    %v2535 = vrot.slane %v2444, 2
    %v2536 = vsel %vm458, %v2531, %v2535
    %v2537 = vrot.slane %v2445, 2
    %v2538 = vsel %vm458, %v2533, %v2537
    %2547 = vmatprep.subr.mxu0 %v2448
    %2548 = vmatpush1.msra.mxu0 %v2447
    %2549 = vmatprep.subr.mxu0 %v2450
    %2550 = vmatpush1.msra.mxu0 %v2449
    %2551 = vmatprep.subr.mxu0 %v2452
    %2552 = vmatpush1.msra.mxu0 %v2451
    %2553 = vmatprep.subr.mxu0 %v2454
    %2554 = vmatpush1.msra.mxu0 %v2453
    %2555 = vmatprep.subr.mxu0 %v2456
    %2556 = vmatpush1.msra.mxu0 %v2455
    %2557 = vmatprep.subr.mxu0 %v2458
    %2558 = vmatpush1.msra.mxu0 %v2457
    %2559 = vmatprep.subr.mxu0 %v2460
    %2560 = vmatpush1.msra.mxu0 %v2459
    %2561 = vmatprep.subr.mxu0 %v2462
    %2562 = vmatpush1.msra.mxu0 %v2461
    %2563 = vmatprep.subr.mxu0 %v2464
    %2564 = vmatpush1.msra.mxu0 %v2463
    %2565 = vmatprep.subr.mxu0 %v2466
    %2566 = vmatpush1.msra.mxu0 %v2465
    %2567 = vmatprep.subr.mxu0 %v2468
    %2568 = vmatpush1.msra.mxu0 %v2467
    %2569 = vmatprep.subr.mxu0 %v2470
    %2570 = vmatpush1.msra.mxu0 %v2469
    %2571 = vmatprep.subr.mxu0 %v2472
    %2572 = vmatpush1.msra.mxu0 %v2471
    %2573 = vmatprep.subr.mxu0 %v2474
    %2574 = vmatpush1.msra.mxu0 %v2473
    %2575 = vmatprep.subr.mxu0 %v2476
    %2576 = vmatpush1.msra.mxu0 %v2475
    %2577 = vmatprep.subr.mxu0 %v2478
    %2578 = vmatpush1.msra.mxu0 %v2477
    %2579 = vmatprep.subr.mxu0 %v2480
    %2580 = vmatpush1.msra.mxu0 %v2479
    %2581 = vmatprep.subr.mxu0 %v2482
    %2582 = vmatpush1.msra.mxu0 %v2481
    %2583 = vmatprep.subr.mxu0 %v2484
    %2584 = vmatpush1.msra.mxu0 %v2483
    %2585 = vmatprep.subr.mxu0 %v2486
    %2586 = vmatpush1.msra.mxu0 %v2485
    %2587 = vmatprep.subr.mxu0 %v2488
    %2588 = vmatpush1.msra.mxu0 %v2487
    %2589 = vmatprep.subr.mxu0 %v2490
    %2590 = vmatpush1.msra.mxu0 %v2489
    %2591 = vmatprep.subr.mxu0 %v2492
    %2592 = vmatpush1.msra.mxu0 %v2491
    %2593 = vmatprep.subr.mxu0 %v2494
    %2594 = vmatpush1.msra.mxu0 %v2493
    %2595 = vmatprep.subr.mxu0 %v2496
    %2596 = vmatpush1.msra.mxu0 %v2495
    %2597 = vmatprep.subr.mxu0 %v2498
    %2598 = vmatpush1.msra.mxu0 %v2497
    %2599 = vmatprep.subr.mxu0 %v2500
    %2600 = vmatpush1.msra.mxu0 %v2499
    %2601 = vmatprep.subr.mxu0 %v2502
    %2602 = vmatpush1.msra.mxu0 %v2501
    %2603 = vmatprep.subr.mxu0 %v2504
    %2604 = vmatpush1.msra.mxu0 %v2503
    %2605 = vmatprep.subr.mxu0 %v2506
    %2606 = vmatpush1.msra.mxu0 %v2505
    %2607 = vmatprep.subr.mxu0 %v2508
    %2608 = vmatpush1.msra.mxu0 %v2507
    %2609 = vmatprep.subr.mxu0 %v2510
    %2610 = vmatpush1.msra.mxu0 %v2509
    %2611 = vmatprep.mubr.f32.mxu0 %v2526
    %2612 = vmatmul.mubr.f32.gmra.mrb[0].mxu0 %v2523
    %v2613 = vpop.f32.mrb[0].mxu0
    %v2614 = vadd.f32 0.0, %v2613
    %v2615 = vpop.f32.mrb[0].mxu0
    %v2616 = vadd.f32 0.0, %v2615
    %2617 = vmatprep.mubr.f32.mxu0 %v2530
    %2618 = vmatmul.mubr.f32.gmra.mrb[0].mxu0 %v2528
    %v2619 = vpop.f32.mrb[0].mxu0
    %v2620 = vadd.f32 0.0, %v2619
    %v2621 = vpop.f32.mrb[0].mxu0
    %v2622 = vadd.f32 0.0, %v2621
    %2623 = vmatprep.mubr.f32.mxu0 %v2534
    %2624 = vmatmul.mubr.f32.gmra.mrb[0].mxu0 %v2532
    %v2625 = vpop.f32.mrb[0].mxu0
    %v2626 = vadd.f32 0.0, %v2625
    %v2627 = vpop.f32.mrb[0].mxu0
    %v2628 = vadd.f32 0.0, %v2627
    %2629 = vmatprep.mubr.f32.mxu0 %v2538
    %2630 = vmatmul.mubr.f32.gmra.mrb[0].mxu0 %v2536
    %v2631 = vpop.f32.mrb[0].mxu0
    %v2632 = vadd.f32 0.0, %v2631
    %v2633 = vpop.f32.mrb[0].mxu0
    %v2634 = vadd.f32 0.0, %v2633
    %2635 = vdwg.mxu0
    %2636 = vmatprep.subr.mxu0 %v2379
    %2637 = vmatpush1.msra.mxu0 %v2378
    %2638 = vmatprep.subr.mxu0 %v2381
    %2639 = vmatpush1.msra.mxu0 %v2380
    %2640 = vmatprep.subr.mxu0 %v2383
    %2641 = vmatpush1.msra.mxu0 %v2382
    %2642 = vmatprep.subr.mxu0 %v2385
    %2643 = vmatpush1.msra.mxu0 %v2384
    %2644 = vmatprep.subr.mxu0 %v2387
    %2645 = vmatpush1.msra.mxu0 %v2386
    %2646 = vmatprep.subr.mxu0 %v2389
    %2647 = vmatpush1.msra.mxu0 %v2388
    %2648 = vmatprep.subr.mxu0 %v2391
    %2649 = vmatpush1.msra.mxu0 %v2390
    %2650 = vmatprep.subr.mxu0 %v2393
    %2651 = vmatpush1.msra.mxu0 %v2392
    %2652 = vmatprep.subr.mxu0 %v2395
    %2653 = vmatpush1.msra.mxu0 %v2394
    %2654 = vmatprep.subr.mxu0 %v2397
    %2655 = vmatpush1.msra.mxu0 %v2396
    %2656 = vmatprep.subr.mxu0 %v2399
    %2657 = vmatpush1.msra.mxu0 %v2398
    %2658 = vmatprep.subr.mxu0 %v2401
    %2659 = vmatpush1.msra.mxu0 %v2400
    %2660 = vmatprep.subr.mxu0 %v2403
    %2661 = vmatpush1.msra.mxu0 %v2402
    %2662 = vmatprep.subr.mxu0 %v2405
    %2663 = vmatpush1.msra.mxu0 %v2404
    %2664 = vmatprep.subr.mxu0 %v2407
    %2665 = vmatpush1.msra.mxu0 %v2406
    %2666 = vmatprep.subr.mxu0 %v2409
    %2667 = vmatpush1.msra.mxu0 %v2408
    %2668 = vmatprep.subr.mxu0 %v2411
    %2669 = vmatpush1.msra.mxu0 %v2410
    %2670 = vmatprep.subr.mxu0 %v2413
    %2671 = vmatpush1.msra.mxu0 %v2412
    %2672 = vmatprep.subr.mxu0 %v2415
    %2673 = vmatpush1.msra.mxu0 %v2414
    %2674 = vmatprep.subr.mxu0 %v2417
    %2675 = vmatpush1.msra.mxu0 %v2416
    %2676 = vmatprep.subr.mxu0 %v2419
    %2677 = vmatpush1.msra.mxu0 %v2418
    %2678 = vmatprep.subr.mxu0 %v2421
    %2679 = vmatpush1.msra.mxu0 %v2420
    %2680 = vmatprep.subr.mxu0 %v2423
    %2681 = vmatpush1.msra.mxu0 %v2422
    %2682 = vmatprep.subr.mxu0 %v2425
    %2683 = vmatpush1.msra.mxu0 %v2424
    %2684 = vmatprep.subr.mxu0 %v2427
    %2685 = vmatpush1.msra.mxu0 %v2426
    %2686 = vmatprep.subr.mxu0 %v2429
    %2687 = vmatpush1.msra.mxu0 %v2428
    %2688 = vmatprep.subr.mxu0 %v2431
    %2689 = vmatpush1.msra.mxu0 %v2430
    %2690 = vmatprep.subr.mxu0 %v2433
    %2691 = vmatpush1.msra.mxu0 %v2432
    %2692 = vmatprep.subr.mxu0 %v2435
    %2693 = vmatpush1.msra.mxu0 %v2434
    %2694 = vmatprep.subr.mxu0 %v2437
    %2695 = vmatpush1.msra.mxu0 %v2436
    %2696 = vmatprep.subr.mxu0 %v2439
    %2697 = vmatpush1.msra.mxu0 %v2438
    %2698 = vmatprep.subr.mxu0 %v2441
    %2699 = vmatpush1.msra.mxu0 %v2440
    %2700 = vmatprep.mubr.f32.mxu0 %v2370
    %2701 = vmatmul.mubr.f32.gmra.mrb[0].mxu0 %v2369
    %v2702 = vpop.f32.mrb[0].mxu0
    %v2703 = vadd.f32 %v2614, %v2702
    %v2704 = vpop.f32.mrb[0].mxu0
    %v2705 = vadd.f32 %v2616, %v2704
    %2706 = vmatprep.mubr.f32.mxu0 %v2372
    %2707 = vmatmul.mubr.f32.gmra.mrb[0].mxu0 %v2371
    %v2708 = vpop.f32.mrb[0].mxu0
    %v2709 = vadd.f32 %v2620, %v2708
    %v2710 = vpop.f32.mrb[0].mxu0
    %v2711 = vadd.f32 %v2622, %v2710
    %2712 = vmatprep.mubr.f32.mxu0 %v2374
    %2713 = vmatmul.mubr.f32.gmra.mrb[0].mxu0 %v2373
    %v2714 = vpop.f32.mrb[0].mxu0
    %v2715 = vadd.f32 %v2626, %v2714
    %v2716 = vpop.f32.mrb[0].mxu0
    %v2717 = vadd.f32 %v2628, %v2716
    %2718 = vmatprep.mubr.f32.mxu0 %v2376
    %2719 = vmatmul.mubr.f32.gmra.mrb[0].mxu0 %v2375
    %v2720 = vpop.f32.mrb[0].mxu0
    %v2721 = vadd.f32 %v2632, %v2720
    %v2722 = vpop.f32.mrb[0].mxu0
    %v2723 = vadd.f32 %v2634, %v2722
    %2724 = vdwg.mxu0
    %v2725 = vld [vmem:[#allocation2] sm:$0xf0]
    %v2726 = vld [vmem:[#allocation2 + $0x8] sm:$0xf0]
    %v2727 = vld [vmem:[#allocation2 + $0x40] sm:$0xf]
    %v2728 = vld [vmem:[#allocation2 + $0x48] sm:$0xf]
    %s2729 = scalar_lea.vmem [#allocation6], 4096
    %v2730 = vld [vmem:[%s2729] sm:$0xff]
    %v2731 = vld [vmem:[%s2729 + $0x8] sm:$0xff]
    %v2732 = vld [vmem:[%s2729 + $0x10] sm:$0xff]
    %v2733 = vld [vmem:[%s2729 + $0x18] sm:$0xff]
    %v2734 = vld [vmem:[%s2729 + $0x20] sm:$0xff]
    %v2735 = vld [vmem:[%s2729 + $0x28] sm:$0xff]
    %v2736 = vld [vmem:[%s2729 + $0x30] sm:$0xff]
    %v2737 = vld [vmem:[%s2729 + $0x38] sm:$0xff]
    %v2738 = vld [vmem:[%s2729 + $0x40] sm:$0xff]
    %v2739 = vld [vmem:[%s2729 + $0x48] sm:$0xff]
    %v2740 = vld [vmem:[%s2729 + $0x50] sm:$0xff]
    %v2741 = vld [vmem:[%s2729 + $0x58] sm:$0xff]
    %v2742 = vld [vmem:[%s2729 + $0x60] sm:$0xff]
    %v2743 = vld [vmem:[%s2729 + $0x68] sm:$0xff]
    %v2744 = vld [vmem:[%s2729 + $0x70] sm:$0xff]
    %v2745 = vld [vmem:[%s2729 + $0x78] sm:$0xff]
    %v2746 = vld [vmem:[%s2729 + $0x80] sm:$0xff]
    %v2747 = vld [vmem:[%s2729 + $0x88] sm:$0xff]
    %v2748 = vld [vmem:[%s2729 + $0x90] sm:$0xff]
    %v2749 = vld [vmem:[%s2729 + $0x98] sm:$0xff]
    %v2750 = vld [vmem:[%s2729 + $0xa0] sm:$0xff]
    %v2751 = vld [vmem:[%s2729 + $0xa8] sm:$0xff]
    %v2752 = vld [vmem:[%s2729 + $0xb0] sm:$0xff]
    %v2753 = vld [vmem:[%s2729 + $0xb8] sm:$0xff]
    %v2754 = vld [vmem:[%s2729 + $0xc0] sm:$0xff]
    %v2755 = vld [vmem:[%s2729 + $0xc8] sm:$0xff]
    %v2756 = vld [vmem:[%s2729 + $0xd0] sm:$0xff]
    %v2757 = vld [vmem:[%s2729 + $0xd8] sm:$0xff]
    %v2758 = vld [vmem:[%s2729 + $0xe0] sm:$0xff]
    %v2759 = vld [vmem:[%s2729 + $0xe8] sm:$0xff]
    %v2760 = vld [vmem:[%s2729 + $0xf0] sm:$0xff]
    %v2761 = vld [vmem:[%s2729 + $0xf8] sm:$0xff]
    %v2762 = vld [vmem:[%s2729 + $0x100] sm:$0xff]
    %v2763 = vld [vmem:[%s2729 + $0x108] sm:$0xff]
    %v2764 = vld [vmem:[%s2729 + $0x110] sm:$0xff]
    %v2765 = vld [vmem:[%s2729 + $0x118] sm:$0xff]
    %v2766 = vld [vmem:[%s2729 + $0x120] sm:$0xff]
    %v2767 = vld [vmem:[%s2729 + $0x128] sm:$0xff]
    %v2768 = vld [vmem:[%s2729 + $0x130] sm:$0xff]
    %v2769 = vld [vmem:[%s2729 + $0x138] sm:$0xff]
    %v2770 = vld [vmem:[%s2729 + $0x140] sm:$0xff]
    %v2771 = vld [vmem:[%s2729 + $0x148] sm:$0xff]
    %v2772 = vld [vmem:[%s2729 + $0x150] sm:$0xff]
    %v2773 = vld [vmem:[%s2729 + $0x158] sm:$0xff]
    %v2774 = vld [vmem:[%s2729 + $0x160] sm:$0xff]
    %v2775 = vld [vmem:[%s2729 + $0x168] sm:$0xff]
    %v2776 = vld [vmem:[%s2729 + $0x170] sm:$0xff]
    %v2777 = vld [vmem:[%s2729 + $0x178] sm:$0xff]
    %v2778 = vld [vmem:[%s2729 + $0x180] sm:$0xff]
    %v2779 = vld [vmem:[%s2729 + $0x188] sm:$0xff]
    %v2780 = vld [vmem:[%s2729 + $0x190] sm:$0xff]
    %v2781 = vld [vmem:[%s2729 + $0x198] sm:$0xff]
    %v2782 = vld [vmem:[%s2729 + $0x1a0] sm:$0xff]
    %v2783 = vld [vmem:[%s2729 + $0x1a8] sm:$0xff]
    %v2784 = vld [vmem:[%s2729 + $0x1b0] sm:$0xff]
    %v2785 = vld [vmem:[%s2729 + $0x1b8] sm:$0xff]
    %v2786 = vld [vmem:[%s2729 + $0x1c0] sm:$0xff]
    %v2787 = vld [vmem:[%s2729 + $0x1c8] sm:$0xff]
    %v2788 = vld [vmem:[%s2729 + $0x1d0] sm:$0xff]
    %v2789 = vld [vmem:[%s2729 + $0x1d8] sm:$0xff]
    %v2790 = vld [vmem:[%s2729 + $0x1e0] sm:$0xff]
    %v2791 = vld [vmem:[%s2729 + $0x1e8] sm:$0xff]
    %v2792 = vld [vmem:[%s2729 + $0x1f0] sm:$0xff]
    %v2793 = vld [vmem:[%s2729 + $0x1f8] sm:$0xff]
    %v2798 = vrot.slane %v2725, 4
    %v2799 = vrot.slane %v2371, 4
    %v2800 = vsel %vm736, %v2798, %v2799
    %v2801 = vrot.slane %v2726, 4
    %v2802 = vrot.slane %v2372, 4
    %v2803 = vsel %vm736, %v2801, %v2802
    %v2804 = vrot.slane %v2373, 4
    %v2805 = vsel %vm736, %v2799, %v2804
    %v2806 = vrot.slane %v2374, 4
    %v2807 = vsel %vm736, %v2802, %v2806
    %v2808 = vrot.slane %v2375, 4
    %v2809 = vsel %vm736, %v2804, %v2808
    %v2810 = vrot.slane %v2376, 4
    %v2811 = vsel %vm736, %v2806, %v2810
    %v2812 = vrot.slane %v2727, 4
    %v2813 = vsel %vm736, %v2808, %v2812
    %v2814 = vrot.slane %v2728, 4
    %v2815 = vsel %vm736, %v2810, %v2814
    %2824 = vmatprep.subr.mxu0 %v2731
    %2825 = vmatpush1.msra.mxu0 %v2730
    %2826 = vmatprep.subr.mxu0 %v2733
    %2827 = vmatpush1.msra.mxu0 %v2732
    %2828 = vmatprep.subr.mxu0 %v2735
    %2829 = vmatpush1.msra.mxu0 %v2734
    %2830 = vmatprep.subr.mxu0 %v2737
    %2831 = vmatpush1.msra.mxu0 %v2736
    %2832 = vmatprep.subr.mxu0 %v2739
    %2833 = vmatpush1.msra.mxu0 %v2738
    %2834 = vmatprep.subr.mxu0 %v2741
    %2835 = vmatpush1.msra.mxu0 %v2740
    %2836 = vmatprep.subr.mxu0 %v2743
    %2837 = vmatpush1.msra.mxu0 %v2742
    %2838 = vmatprep.subr.mxu0 %v2745
    %2839 = vmatpush1.msra.mxu0 %v2744
    %2840 = vmatprep.subr.mxu0 %v2747
    %2841 = vmatpush1.msra.mxu0 %v2746
    %2842 = vmatprep.subr.mxu0 %v2749
    %2843 = vmatpush1.msra.mxu0 %v2748
    %2844 = vmatprep.subr.mxu0 %v2751
    %2845 = vmatpush1.msra.mxu0 %v2750
    %2846 = vmatprep.subr.mxu0 %v2753
    %2847 = vmatpush1.msra.mxu0 %v2752
    %2848 = vmatprep.subr.mxu0 %v2755
    %2849 = vmatpush1.msra.mxu0 %v2754
    %2850 = vmatprep.subr.mxu0 %v2757
    %2851 = vmatpush1.msra.mxu0 %v2756
    %2852 = vmatprep.subr.mxu0 %v2759
    %2853 = vmatpush1.msra.mxu0 %v2758
    %2854 = vmatprep.subr.mxu0 %v2761
    %2855 = vmatpush1.msra.mxu0 %v2760
    %2856 = vmatprep.subr.mxu0 %v2763
    %2857 = vmatpush1.msra.mxu0 %v2762
    %2858 = vmatprep.subr.mxu0 %v2765
    %2859 = vmatpush1.msra.mxu0 %v2764
    %2860 = vmatprep.subr.mxu0 %v2767
    %2861 = vmatpush1.msra.mxu0 %v2766
    %2862 = vmatprep.subr.mxu0 %v2769
    %2863 = vmatpush1.msra.mxu0 %v2768
    %2864 = vmatprep.subr.mxu0 %v2771
    %2865 = vmatpush1.msra.mxu0 %v2770
    %2866 = vmatprep.subr.mxu0 %v2773
    %2867 = vmatpush1.msra.mxu0 %v2772
    %2868 = vmatprep.subr.mxu0 %v2775
    %2869 = vmatpush1.msra.mxu0 %v2774
    %2870 = vmatprep.subr.mxu0 %v2777
    %2871 = vmatpush1.msra.mxu0 %v2776
    %2872 = vmatprep.subr.mxu0 %v2779
    %2873 = vmatpush1.msra.mxu0 %v2778
    %2874 = vmatprep.subr.mxu0 %v2781
    %2875 = vmatpush1.msra.mxu0 %v2780
    %2876 = vmatprep.subr.mxu0 %v2783
    %2877 = vmatpush1.msra.mxu0 %v2782
    %2878 = vmatprep.subr.mxu0 %v2785
    %2879 = vmatpush1.msra.mxu0 %v2784
    %2880 = vmatprep.subr.mxu0 %v2787
    %2881 = vmatpush1.msra.mxu0 %v2786
    %2882 = vmatprep.subr.mxu0 %v2789
    %2883 = vmatpush1.msra.mxu0 %v2788
    %2884 = vmatprep.subr.mxu0 %v2791
    %2885 = vmatpush1.msra.mxu0 %v2790
    %2886 = vmatprep.subr.mxu0 %v2793
    %2887 = vmatpush1.msra.mxu0 %v2792
    %2888 = vmatprep.mubr.f32.mxu0 %v2803
    %2889 = vmatmul.mubr.f32.gmra.mrb[0].mxu0 %v2800
    %v2890 = vpop.f32.mrb[0].mxu0
    %v2891 = vadd.f32 0.0, %v2890
    %v2892 = vpop.f32.mrb[0].mxu0
    %v2893 = vadd.f32 0.0, %v2892
    %2894 = vmatprep.mubr.f32.mxu0 %v2807
    %2895 = vmatmul.mubr.f32.gmra.mrb[0].mxu0 %v2805
    %v2896 = vpop.f32.mrb[0].mxu0
    %v2897 = vadd.f32 0.0, %v2896
    %v2898 = vpop.f32.mrb[0].mxu0
    %v2899 = vadd.f32 0.0, %v2898
    %2900 = vmatprep.mubr.f32.mxu0 %v2811
    %2901 = vmatmul.mubr.f32.gmra.mrb[0].mxu0 %v2809
    %v2902 = vpop.f32.mrb[0].mxu0
    %v2903 = vadd.f32 0.0, %v2902
    %v2904 = vpop.f32.mrb[0].mxu0
    %v2905 = vadd.f32 0.0, %v2904
    %2906 = vmatprep.mubr.f32.mxu0 %v2815
    %2907 = vmatmul.mubr.f32.gmra.mrb[0].mxu0 %v2813
    %v2908 = vpop.f32.mrb[0].mxu0
    %v2909 = vadd.f32 0.0, %v2908
    %v2910 = vpop.f32.mrb[0].mxu0
    %v2911 = vadd.f32 0.0, %v2910
    %2912 = vdwg.mxu0
    %v2913 = vadd.f32 %v2703, %v2891
    %v2914 = vadd.f32 %v2705, %v2893
    %v2915 = vadd.f32 %v2709, %v2897
    %v2916 = vadd.f32 %v2711, %v2899
    %v2917 = vadd.f32 %v2715, %v2903
    %v2918 = vadd.f32 %v2717, %v2905
    %v2919 = vadd.f32 %v2721, %v2909
    %v2920 = vadd.f32 %v2723, %v2911
    %v2921 = vadd.f32 %v2913, %v2915
    %v2922 = vadd.f32 %v2921, %v2917
    %v2923 = vadd.f32 %v2922, %v2919
    %v2924 = vrot.slane %v2923, 4
    %v2925 = vadd.f32 %v2923, %v2924
    %v2926 = vrot.slane %v2925, 2
    %v2927 = vadd.f32 %v2925, %v2926
    %v2928 = vrot.slane %v2927, 1
    %v2929 = vadd.f32 %v2927, %v2928
    %v2930 = vadd.f32 %v2914, %v2916
    %v2931 = vadd.f32 %v2930, %v2918
    %v2932 = vadd.f32 %v2931, %v2920
    %v2933 = vrot.slane %v2932, 4
    %v2934 = vadd.f32 %v2932, %v2933
    %v2935 = vrot.slane %v2934, 2
    %v2936 = vadd.f32 %v2934, %v2935
    %v2937 = vrot.slane %v2936, 1
    %v2938 = vadd.f32 %v2936, %v2937
    %v2939 = vmul.f32 %v2913, %v2913
    %v2940 = vmul.f32 %v2914, %v2914
    %v2941 = vmul.f32 %v2915, %v2915
    %v2942 = vmul.f32 %v2916, %v2916
    %v2943 = vmul.f32 %v2917, %v2917
    %v2944 = vmul.f32 %v2918, %v2918
    %v2945 = vmul.f32 %v2919, %v2919
    %v2946 = vmul.f32 %v2920, %v2920
    %v2947 = vadd.f32 %v2939, %v2941
    %v2948 = vadd.f32 %v2947, %v2943
    %v2949 = vadd.f32 %v2948, %v2945
    %v2950 = vrot.slane %v2949, 4
    %v2951 = vadd.f32 %v2949, %v2950
    %v2952 = vrot.slane %v2951, 2
    %v2953 = vadd.f32 %v2951, %v2952
    %v2954 = vrot.slane %v2953, 1
    %v2955 = vadd.f32 %v2953, %v2954
    %v2956 = vadd.f32 %v2940, %v2942
    %v2957 = vadd.f32 %v2956, %v2944
    %v2958 = vadd.f32 %v2957, %v2946
    %v2959 = vrot.slane %v2958, 4
    %v2960 = vadd.f32 %v2958, %v2959
    %v2961 = vrot.slane %v2960, 2
    %v2962 = vadd.f32 %v2960, %v2961
    %v2963 = vrot.slane %v2962, 1
    %v2964 = vadd.f32 %v2962, %v2963
    %v2965 = vld [vmem:[#allocation11] sm:$0xff]
    %v2966 = vld [vmem:[#allocation11 + $0x8] sm:$0xff]
    %v2967 = vld [vmem:[#allocation11 + $0x10] sm:$0xff]
    %v2968 = vld [vmem:[#allocation11 + $0x18] sm:$0xff]
    %v2969 = vld [vmem:[#allocation11 + $0x20] sm:$0xff]
    %v2970 = vld [vmem:[#allocation11 + $0x28] sm:$0xff]
    %v2971 = vld [vmem:[#allocation11 + $0x30] sm:$0xff]
    %v2972 = vld [vmem:[#allocation11 + $0x38] sm:$0xff]
    %v2973 = vld [vmem:[#allocation11 + $0x40] sm:$0xff]
    %v2974 = vld [vmem:[#allocation11 + $0x48] sm:$0xff]
    %v2975 = vld [vmem:[#allocation11 + $0x50] sm:$0xff]
    %v2976 = vld [vmem:[#allocation11 + $0x58] sm:$0xff]
    %v2977 = vld [vmem:[#allocation11 + $0x60] sm:$0xff]
    %v2978 = vld [vmem:[#allocation11 + $0x68] sm:$0xff]
    %v2979 = vld [vmem:[#allocation11 + $0x70] sm:$0xff]
    %v2980 = vld [vmem:[#allocation11 + $0x78] sm:$0xff]
    %v2981 = vld [vmem:[#allocation11 + $0x80] sm:$0xff]
    %v2982 = vld [vmem:[#allocation11 + $0x88] sm:$0xff]
    %v2983 = vld [vmem:[#allocation11 + $0x90] sm:$0xff]
    %v2984 = vld [vmem:[#allocation11 + $0x98] sm:$0xff]
    %v2985 = vld [vmem:[#allocation11 + $0xa0] sm:$0xff]
    %v2986 = vld [vmem:[#allocation11 + $0xa8] sm:$0xff]
    %v2987 = vld [vmem:[#allocation11 + $0xb0] sm:$0xff]
    %v2988 = vld [vmem:[#allocation11 + $0xb8] sm:$0xff]
    %v2989 = vld [vmem:[#allocation11 + $0xc0] sm:$0xff]
    %v2990 = vld [vmem:[#allocation11 + $0xc8] sm:$0xff]
    %v2991 = vld [vmem:[#allocation11 + $0xd0] sm:$0xff]
    %v2992 = vld [vmem:[#allocation11 + $0xd8] sm:$0xff]
    %v2993 = vld [vmem:[#allocation11 + $0xe0] sm:$0xff]
    %v2994 = vld [vmem:[#allocation11 + $0xe8] sm:$0xff]
    %v2995 = vld [vmem:[#allocation11 + $0xf0] sm:$0xff]
    %v2996 = vld [vmem:[#allocation11 + $0xf8] sm:$0xff]
    %2997 = vmatprep.subr.mxu0 0.0
    %2998 = vmatpush1.msra.mxu0 %v2965
    %2999 = vmatprep.subr.mxu0 0.0
    %3000 = vmatpush1.msra.mxu0 %v2966
    %3001 = vmatprep.subr.mxu0 0.0
    %3002 = vmatpush1.msra.mxu0 %v2967
    %3003 = vmatprep.subr.mxu0 0.0
    %3004 = vmatpush1.msra.mxu0 %v2968
    %3005 = vmatprep.subr.mxu0 0.0
    %3006 = vmatpush1.msra.mxu0 %v2969
    %3007 = vmatprep.subr.mxu0 0.0
    %3008 = vmatpush1.msra.mxu0 %v2970
    %3009 = vmatprep.subr.mxu0 0.0
    %3010 = vmatpush1.msra.mxu0 %v2971
    %3011 = vmatprep.subr.mxu0 0.0
    %3012 = vmatpush1.msra.mxu0 %v2972
    %3013 = vmatprep.subr.mxu0 0.0
    %3014 = vmatpush1.msra.mxu0 %v2973
    %3015 = vmatprep.subr.mxu0 0.0
    %3016 = vmatpush1.msra.mxu0 %v2974
    %3017 = vmatprep.subr.mxu0 0.0
    %3018 = vmatpush1.msra.mxu0 %v2975
    %3019 = vmatprep.subr.mxu0 0.0
    %3020 = vmatpush1.msra.mxu0 %v2976
    %3021 = vmatprep.subr.mxu0 0.0
    %3022 = vmatpush1.msra.mxu0 %v2977
    %3023 = vmatprep.subr.mxu0 0.0
    %3024 = vmatpush1.msra.mxu0 %v2978
    %3025 = vmatprep.subr.mxu0 0.0
    %3026 = vmatpush1.msra.mxu0 %v2979
    %3027 = vmatprep.subr.mxu0 0.0
    %3028 = vmatpush1.msra.mxu0 %v2980
    %3029 = vmatprep.subr.mxu0 0.0
    %3030 = vmatpush1.msra.mxu0 %v2981
    %3031 = vmatprep.subr.mxu0 0.0
    %3032 = vmatpush1.msra.mxu0 %v2982
    %3033 = vmatprep.subr.mxu0 0.0
    %3034 = vmatpush1.msra.mxu0 %v2983
    %3035 = vmatprep.subr.mxu0 0.0
    %3036 = vmatpush1.msra.mxu0 %v2984
    %3037 = vmatprep.subr.mxu0 0.0
    %3038 = vmatpush1.msra.mxu0 %v2985
    %3039 = vmatprep.subr.mxu0 0.0
    %3040 = vmatpush1.msra.mxu0 %v2986
    %3041 = vmatprep.subr.mxu0 0.0
    %3042 = vmatpush1.msra.mxu0 %v2987
    %3043 = vmatprep.subr.mxu0 0.0
    %3044 = vmatpush1.msra.mxu0 %v2988
    %3045 = vmatprep.subr.mxu0 0.0
    %3046 = vmatpush1.msra.mxu0 %v2989
    %3047 = vmatprep.subr.mxu0 0.0
    %3048 = vmatpush1.msra.mxu0 %v2990
    %3049 = vmatprep.subr.mxu0 0.0
    %3050 = vmatpush1.msra.mxu0 %v2991
    %3051 = vmatprep.subr.mxu0 0.0
    %3052 = vmatpush1.msra.mxu0 %v2992
    %3053 = vmatprep.subr.mxu0 0.0
    %3054 = vmatpush1.msra.mxu0 %v2993
    %3055 = vmatprep.subr.mxu0 0.0
    %3056 = vmatpush1.msra.mxu0 %v2994
    %3057 = vmatprep.subr.mxu0 0.0
    %3058 = vmatpush1.msra.mxu0 %v2995
    %3059 = vmatprep.subr.mxu0 0.0
    %3060 = vmatpush1.msra.mxu0 %v2996
    %3061 = vmatprep.mubr.f32.mxu0 %v2938
    %3062 = vmatmul.mubr.f32.gmra.mrb[0].mxu0 %v2929
    %v3063 = vpop.f32.mrb[0].mxu0
    %v3064 = vadd.f32 0.0, %v3063
    %v3065 = vpop.f32.mrb[0].mxu0
    %3066 = vdwg.mxu0
    %v3067 = vmul.f32 %v3064, 0.001953125
    %3068 = vmatprep.subr.mxu0 0.0
    %3069 = vmatpush1.msra.mxu0 %v2965
    %3070 = vmatprep.subr.mxu0 0.0
    %3071 = vmatpush1.msra.mxu0 %v2966
    %3072 = vmatprep.subr.mxu0 0.0
    %3073 = vmatpush1.msra.mxu0 %v2967
    %3074 = vmatprep.subr.mxu0 0.0
    %3075 = vmatpush1.msra.mxu0 %v2968
    %3076 = vmatprep.subr.mxu0 0.0
    %3077 = vmatpush1.msra.mxu0 %v2969
    %3078 = vmatprep.subr.mxu0 0.0
    %3079 = vmatpush1.msra.mxu0 %v2970
    %3080 = vmatprep.subr.mxu0 0.0
    %3081 = vmatpush1.msra.mxu0 %v2971
    %3082 = vmatprep.subr.mxu0 0.0
    %3083 = vmatpush1.msra.mxu0 %v2972
    %3084 = vmatprep.subr.mxu0 0.0
    %3085 = vmatpush1.msra.mxu0 %v2973
    %3086 = vmatprep.subr.mxu0 0.0
    %3087 = vmatpush1.msra.mxu0 %v2974
    %3088 = vmatprep.subr.mxu0 0.0
    %3089 = vmatpush1.msra.mxu0 %v2975
    %3090 = vmatprep.subr.mxu0 0.0
    %3091 = vmatpush1.msra.mxu0 %v2976
    %3092 = vmatprep.subr.mxu0 0.0
    %3093 = vmatpush1.msra.mxu0 %v2977
    %3094 = vmatprep.subr.mxu0 0.0
    %3095 = vmatpush1.msra.mxu0 %v2978
    %3096 = vmatprep.subr.mxu0 0.0
    %3097 = vmatpush1.msra.mxu0 %v2979
    %3098 = vmatprep.subr.mxu0 0.0
    %3099 = vmatpush1.msra.mxu0 %v2980
    %3100 = vmatprep.subr.mxu0 0.0
    %3101 = vmatpush1.msra.mxu0 %v2981
    %3102 = vmatprep.subr.mxu0 0.0
    %3103 = vmatpush1.msra.mxu0 %v2982
    %3104 = vmatprep.subr.mxu0 0.0
    %3105 = vmatpush1.msra.mxu0 %v2983
    %3106 = vmatprep.subr.mxu0 0.0
    %3107 = vmatpush1.msra.mxu0 %v2984
    %3108 = vmatprep.subr.mxu0 0.0
    %3109 = vmatpush1.msra.mxu0 %v2985
    %3110 = vmatprep.subr.mxu0 0.0
    %3111 = vmatpush1.msra.mxu0 %v2986
    %3112 = vmatprep.subr.mxu0 0.0
    %3113 = vmatpush1.msra.mxu0 %v2987
    %3114 = vmatprep.subr.mxu0 0.0
    %3115 = vmatpush1.msra.mxu0 %v2988
    %3116 = vmatprep.subr.mxu0 0.0
    %3117 = vmatpush1.msra.mxu0 %v2989
    %3118 = vmatprep.subr.mxu0 0.0
    %3119 = vmatpush1.msra.mxu0 %v2990
    %3120 = vmatprep.subr.mxu0 0.0
    %3121 = vmatpush1.msra.mxu0 %v2991
    %3122 = vmatprep.subr.mxu0 0.0
    %3123 = vmatpush1.msra.mxu0 %v2992
    %3124 = vmatprep.subr.mxu0 0.0
    %3125 = vmatpush1.msra.mxu0 %v2993
    %3126 = vmatprep.subr.mxu0 0.0
    %3127 = vmatpush1.msra.mxu0 %v2994
    %3128 = vmatprep.subr.mxu0 0.0
    %3129 = vmatpush1.msra.mxu0 %v2995
    %3130 = vmatprep.subr.mxu0 0.0
    %3131 = vmatpush1.msra.mxu0 %v2996
    %3132 = vmatprep.mubr.f32.mxu0 %v2964
    %3133 = vmatmul.mubr.f32.gmra.mrb[0].mxu0 %v2955
    %v3134 = vpop.f32.mrb[0].mxu0
    %v3135 = vadd.f32 0.0, %v3134
    %v3136 = vpop.f32.mrb[0].mxu0
    %3137 = vdwg.mxu0
    %v3138 = vmul.f32 %v3135, 0.001953125
    %v3139 = vmul.f32 %v3067, %v3067
    %v3140 = vsub.f32 %v3138, %v3139
    %s3141 = scalar_lea.vmem [#allocation8], 2
    %v3142 = vld [vmem:[%s3141] sm:$0x1]
    %v3143 = vadd.f32 %v3140, 1e-05
    %v3144 = vrsqrt.pop %v3143
    %v3145 = vmul.f32 %v3142, %v3144
    %s3146 = scalar_lea.vmem [#allocation9], 2
    %v3147 = vld [vmem:[%s3146] sm:$0x1]
    %v3148 = vmul.f32 %v3067, %v3145
    %v3149 = vsub.f32 %v3147, %v3148
    %v3150 = vld [vmem:[#allocation12] sm:$0xff]
    %v3151 = vld [vmem:[#allocation12 + $0x8] sm:$0xff]
    %v3152 = vld [vmem:[#allocation12 + $0x10] sm:$0xff]
    %v3153 = vld [vmem:[#allocation12 + $0x18] sm:$0xff]
    %v3155 = vsel %vm1091, %v3145, 0
    %3157 = vmatprep.subr.mxu0 %v3151
    %3158 = vmatpush1.msra.mxu0 %v3150
    %3159 = vmatprep.subr.mxu0 %v3153
    %3160 = vmatpush1.msra.mxu0 %v3152
    %3161 = vmatprep.subr.mxu0 0.0
    %3162 = vmatpush1.msra.mxu0 0.0
    %3163 = vmatprep.subr.mxu0 0.0
    %3164 = vmatpush1.msra.mxu0 0.0
    %3165 = vmatprep.subr.mxu0 0.0
    %3166 = vmatpush1.msra.mxu0 0.0
    %3167 = vmatprep.subr.mxu0 0.0
    %3168 = vmatpush1.msra.mxu0 0.0
    %3169 = vmatprep.subr.mxu0 0.0
    %3170 = vmatpush1.msra.mxu0 0.0
    %3171 = vmatprep.subr.mxu0 0.0
    %3172 = vmatpush1.msra.mxu0 0.0
    %3173 = vmatprep.subr.mxu0 0.0
    %3174 = vmatpush1.msra.mxu0 0.0
    %3175 = vmatprep.subr.mxu0 0.0
    %3176 = vmatpush1.msra.mxu0 0.0
    %3177 = vmatprep.subr.mxu0 0.0
    %3178 = vmatpush1.msra.mxu0 0.0
    %3179 = vmatprep.subr.mxu0 0.0
    %3180 = vmatpush1.msra.mxu0 0.0
    %3181 = vmatprep.subr.mxu0 0.0
    %3182 = vmatpush1.msra.mxu0 0.0
    %3183 = vmatprep.subr.mxu0 0.0
    %3184 = vmatpush1.msra.mxu0 0.0
    %3185 = vmatprep.subr.mxu0 0.0
    %3186 = vmatpush1.msra.mxu0 0.0
    %3187 = vmatprep.subr.mxu0 0.0
    %3188 = vmatpush1.msra.mxu0 0.0
    %3189 = vmatprep.subr.mxu0 0.0
    %3190 = vmatpush1.msra.mxu0 0.0
    %3191 = vmatprep.subr.mxu0 0.0
    %3192 = vmatpush1.msra.mxu0 0.0
    %3193 = vmatprep.subr.mxu0 0.0
    %3194 = vmatpush1.msra.mxu0 0.0
    %3195 = vmatprep.subr.mxu0 0.0
    %3196 = vmatpush1.msra.mxu0 0.0
    %3197 = vmatprep.subr.mxu0 0.0
    %3198 = vmatpush1.msra.mxu0 0.0
    %3199 = vmatprep.subr.mxu0 0.0
    %3200 = vmatpush1.msra.mxu0 0.0
    %3201 = vmatprep.subr.mxu0 0.0
    %3202 = vmatpush1.msra.mxu0 0.0
    %3203 = vmatprep.subr.mxu0 0.0
    %3204 = vmatpush1.msra.mxu0 0.0
    %3205 = vmatprep.subr.mxu0 0.0
    %3206 = vmatpush1.msra.mxu0 0.0
    %3207 = vmatprep.subr.mxu0 0.0
    %3208 = vmatpush1.msra.mxu0 0.0
    %3209 = vmatprep.subr.mxu0 0.0
    %3210 = vmatpush1.msra.mxu0 0.0
    %3211 = vmatprep.subr.mxu0 0.0
    %3212 = vmatpush1.msra.mxu0 0.0
    %3213 = vmatprep.subr.mxu0 0.0
    %3214 = vmatpush1.msra.mxu0 0.0
    %3215 = vmatprep.subr.mxu0 0.0
    %3216 = vmatpush1.msra.mxu0 0.0
    %3217 = vmatprep.subr.mxu0 0.0
    %3218 = vmatpush1.msra.mxu0 0.0
    %3219 = vmatprep.subr.mxu0 0.0
    %3220 = vmatpush1.msra.mxu0 0.0
    %3221 = vmatprep.mubr.f32.mxu0 0.0
    %3222 = vmatmul.mubr.f32.gmra.mrb[0].mxu0 %v3155
    %v3223 = vpop.f32.mrb[0].mxu0
    %v3224 = vadd.f32 0.0, %v3223
    %v3225 = vpop.f32.mrb[0].mxu0
    %v3226 = vadd.f32 0.0, %v3225
    %3227 = vdwg.mxu0
    %v3229 = vsel %vm1091, %v3149, 0
    %3231 = vmatprep.subr.mxu0 %v3151
    %3232 = vmatpush1.msra.mxu0 %v3150
    %3233 = vmatprep.subr.mxu0 %v3153
    %3234 = vmatpush1.msra.mxu0 %v3152
    %3235 = vmatprep.subr.mxu0 0.0
    %3236 = vmatpush1.msra.mxu0 0.0
    %3237 = vmatprep.subr.mxu0 0.0
    %3238 = vmatpush1.msra.mxu0 0.0
    %3239 = vmatprep.subr.mxu0 0.0
    %3240 = vmatpush1.msra.mxu0 0.0
    %3241 = vmatprep.subr.mxu0 0.0
    %3242 = vmatpush1.msra.mxu0 0.0
    %3243 = vmatprep.subr.mxu0 0.0
    %3244 = vmatpush1.msra.mxu0 0.0
    %3245 = vmatprep.subr.mxu0 0.0
    %3246 = vmatpush1.msra.mxu0 0.0
    %3247 = vmatprep.subr.mxu0 0.0
    %3248 = vmatpush1.msra.mxu0 0.0
    %3249 = vmatprep.subr.mxu0 0.0
    %3250 = vmatpush1.msra.mxu0 0.0
    %3251 = vmatprep.subr.mxu0 0.0
    %3252 = vmatpush1.msra.mxu0 0.0
    %3253 = vmatprep.subr.mxu0 0.0
    %3254 = vmatpush1.msra.mxu0 0.0
    %3255 = vmatprep.subr.mxu0 0.0
    %3256 = vmatpush1.msra.mxu0 0.0
    %3257 = vmatprep.subr.mxu0 0.0
    %3258 = vmatpush1.msra.mxu0 0.0
    %3259 = vmatprep.subr.mxu0 0.0
    %3260 = vmatpush1.msra.mxu0 0.0
    %3261 = vmatprep.subr.mxu0 0.0
    %3262 = vmatpush1.msra.mxu0 0.0
    %3263 = vmatprep.subr.mxu0 0.0
    %3264 = vmatpush1.msra.mxu0 0.0
    %3265 = vmatprep.subr.mxu0 0.0
    %3266 = vmatpush1.msra.mxu0 0.0
    %3267 = vmatprep.subr.mxu0 0.0
    %3268 = vmatpush1.msra.mxu0 0.0
    %3269 = vmatprep.subr.mxu0 0.0
    %3270 = vmatpush1.msra.mxu0 0.0
    %3271 = vmatprep.subr.mxu0 0.0
    %3272 = vmatpush1.msra.mxu0 0.0
    %3273 = vmatprep.subr.mxu0 0.0
    %3274 = vmatpush1.msra.mxu0 0.0
    %3275 = vmatprep.subr.mxu0 0.0
    %3276 = vmatpush1.msra.mxu0 0.0
    %3277 = vmatprep.subr.mxu0 0.0
    %3278 = vmatpush1.msra.mxu0 0.0
    %3279 = vmatprep.subr.mxu0 0.0
    %3280 = vmatpush1.msra.mxu0 0.0
    %3281 = vmatprep.subr.mxu0 0.0
    %3282 = vmatpush1.msra.mxu0 0.0
    %3283 = vmatprep.subr.mxu0 0.0
    %3284 = vmatpush1.msra.mxu0 0.0
    %3285 = vmatprep.subr.mxu0 0.0
    %3286 = vmatpush1.msra.mxu0 0.0
    %3287 = vmatprep.subr.mxu0 0.0
    %3288 = vmatpush1.msra.mxu0 0.0
    %3289 = vmatprep.subr.mxu0 0.0
    %3290 = vmatpush1.msra.mxu0 0.0
    %3291 = vmatprep.subr.mxu0 0.0
    %3292 = vmatpush1.msra.mxu0 0.0
    %3293 = vmatprep.subr.mxu0 0.0
    %3294 = vmatpush1.msra.mxu0 0.0
    %3295 = vmatprep.mubr.f32.mxu0 0.0
    %3296 = vmatmul.mubr.f32.gmra.mrb[0].mxu0 %v3229
    %v3297 = vpop.f32.mrb[0].mxu0
    %v3298 = vadd.f32 0.0, %v3297
    %v3299 = vpop.f32.mrb[0].mxu0
    %v3300 = vadd.f32 0.0, %v3299
    %3301 = vdwg.mxu0
    %v3302 = vlaneseq
    %v3303 = vshrl.u32 %v3302, 7
    %v3304 = vsub.s32 0, %v3303
    %v3305 = vrot.slane %v3224, %v3304
    %v3306 = vlaneseq
    %v3307 = vshrl.u32 %v3306, 7
    %v3308 = vsub.s32 0, %v3307
    %v3309 = vrot.slane %v3226, %v3308
    %v3310 = vmul.f32 %v2913, %v3305
    %v3311 = vmul.f32 %v2914, %v3309
    %v3312 = vmul.f32 %v2915, %v3305
    %v3313 = vmul.f32 %v2916, %v3309
    %v3314 = vmul.f32 %v2917, %v3305
    %v3315 = vmul.f32 %v2918, %v3309
    %v3316 = vmul.f32 %v2919, %v3305
    %v3317 = vmul.f32 %v2920, %v3309
    %v3318 = vlaneseq
    %v3319 = vshrl.u32 %v3318, 7
    %v3320 = vsub.s32 0, %v3319
    %v3321 = vrot.slane %v3298, %v3320
    %v3322 = vlaneseq
    %v3323 = vshrl.u32 %v3322, 7
    %v3324 = vsub.s32 0, %v3323
    %v3325 = vrot.slane %v3300, %v3324
    %v3326 = vadd.f32 %v3310, %v3321
    %v3327 = vadd.f32 %v3311, %v3325
    %v3328 = vadd.f32 %v3312, %v3321
    %v3329 = vadd.f32 %v3313, %v3325
    %v3330 = vadd.f32 %v3314, %v3321
    %v3331 = vadd.f32 %v3315, %v3325
    %v3332 = vadd.f32 %v3316, %v3321
    %v3333 = vadd.f32 %v3317, %v3325
    %vm3334 = vcmp.gt.f32.partialorder %v3326, 0.0
    %vm3335 = vcmp.gt.f32.partialorder %v3327, 0.0
    %vm3336 = vcmp.gt.f32.partialorder %v3328, 0.0
    %vm3337 = vcmp.gt.f32.partialorder %v3329, 0.0
    %vm3338 = vcmp.gt.f32.partialorder %v3330, 0.0
    %vm3339 = vcmp.gt.f32.partialorder %v3331, 0.0
    %vm3340 = vcmp.gt.f32.partialorder %v3332, 0.0
    %vm3341 = vcmp.gt.f32.partialorder %v3333, 0.0
    %v3342 = vmul.f32 %v3326, 0.2
    %v3343 = vmul.f32 %v3327, 0.2
    %v3344 = vmul.f32 %v3328, 0.2
    %v3345 = vmul.f32 %v3329, 0.2
    %v3346 = vmul.f32 %v3330, 0.2
    %v3347 = vmul.f32 %v3331, 0.2
    %v3348 = vmul.f32 %v3332, 0.2
    %v3349 = vmul.f32 %v3333, 0.2
    %v3350 = vsel %vm3334, %v3326, %v3342
    %v3351 = vsel %vm3335, %v3327, %v3343
    %v3352 = vsel %vm3336, %v3328, %v3344
    %v3353 = vsel %vm3337, %v3329, %v3345
    %v3354 = vsel %vm3338, %v3330, %v3346
    %v3355 = vsel %vm3339, %v3331, %v3347
    %v3356 = vsel %vm3340, %v3332, %v3348
    %v3357 = vsel %vm3341, %v3333, %v3349
    %v3366 = vrot.slane %v3350, 6
    %v3367 = vrot.slane %v3351, 6
    %v3368 = vrot.slane %v3352, 6
    %v3369 = vsel %vm272, %v3366, %v3368
    %v3370 = vrot.slane %v3353, 6
    %v3371 = vsel %vm272, %v3367, %v3370
    %v3372 = vrot.slane %v3354, 6
    %v3373 = vsel %vm272, %v3368, %v3372
    %v3374 = vrot.slane %v3355, 6
    %v3375 = vsel %vm272, %v3370, %v3374
    %v3376 = vrot.slane %v3356, 6
    %v3377 = vsel %vm272, %v3372, %v3376
    %v3378 = vrot.slane %v3357, 6
    %v3379 = vsel %vm272, %v3374, %v3378
    %3390 = vst [vmem:[#allocation2] sm:$0xfc] %v3366
    %3391 = vst [vmem:[#allocation2 + $0x8] sm:$0xfc] %v3367
    %3392 = vst [vmem:[#allocation2 + $0x10] sm:$0xff] %v3369
    %3393 = vst [vmem:[#allocation2 + $0x18] sm:$0xff] %v3371
    %3394 = vst [vmem:[#allocation2 + $0x20] sm:$0xff] %v3373
    %3395 = vst [vmem:[#allocation2 + $0x28] sm:$0xff] %v3375
    %3396 = vst [vmem:[#allocation2 + $0x30] sm:$0xff] %v3377
    %3397 = vst [vmem:[#allocation2 + $0x38] sm:$0xff] %v3379
    %3398 = vst [vmem:[#allocation2 + $0x40] sm:$0x3] %v3376
    %3399 = vst [vmem:[#allocation2 + $0x48] sm:$0x3] %v3378
    %v3400 = vld [vmem:[#allocation2] sm:$0xff]
    %v3401 = vld [vmem:[#allocation2 + $0x8] sm:$0xff]
    %v3402 = vld [vmem:[#allocation2 + $0x10] sm:$0xff]
    %v3403 = vld [vmem:[#allocation2 + $0x18] sm:$0xff]
    %v3404 = vld [vmem:[#allocation2 + $0x20] sm:$0xff]
    %v3405 = vld [vmem:[#allocation2 + $0x28] sm:$0xff]
    %v3406 = vld [vmem:[#allocation2 + $0x30] sm:$0xff]
    %v3407 = vld [vmem:[#allocation2 + $0x38] sm:$0xff]
    %s3408 = scalar_lea.vmem [#allocation6], 4608
    %v3409 = vld [vmem:[%s3408] sm:$0xff]
    %v3410 = vld [vmem:[%s3408 + $0x8] sm:$0xff]
    %v3411 = vld [vmem:[%s3408 + $0x10] sm:$0xff]
    %v3412 = vld [vmem:[%s3408 + $0x18] sm:$0xff]
    %v3413 = vld [vmem:[%s3408 + $0x20] sm:$0xff]
    %v3414 = vld [vmem:[%s3408 + $0x28] sm:$0xff]
    %v3415 = vld [vmem:[%s3408 + $0x30] sm:$0xff]
    %v3416 = vld [vmem:[%s3408 + $0x38] sm:$0xff]
    %v3417 = vld [vmem:[%s3408 + $0x40] sm:$0xff]
    %v3418 = vld [vmem:[%s3408 + $0x48] sm:$0xff]
    %v3419 = vld [vmem:[%s3408 + $0x50] sm:$0xff]
    %v3420 = vld [vmem:[%s3408 + $0x58] sm:$0xff]
    %v3421 = vld [vmem:[%s3408 + $0x60] sm:$0xff]
    %v3422 = vld [vmem:[%s3408 + $0x68] sm:$0xff]
    %v3423 = vld [vmem:[%s3408 + $0x70] sm:$0xff]
    %v3424 = vld [vmem:[%s3408 + $0x78] sm:$0xff]
    %v3425 = vld [vmem:[%s3408 + $0x80] sm:$0xff]
    %v3426 = vld [vmem:[%s3408 + $0x88] sm:$0xff]
    %v3427 = vld [vmem:[%s3408 + $0x90] sm:$0xff]
    %v3428 = vld [vmem:[%s3408 + $0x98] sm:$0xff]
    %v3429 = vld [vmem:[%s3408 + $0xa0] sm:$0xff]
    %v3430 = vld [vmem:[%s3408 + $0xa8] sm:$0xff]
    %v3431 = vld [vmem:[%s3408 + $0xb0] sm:$0xff]
    %v3432 = vld [vmem:[%s3408 + $0xb8] sm:$0xff]
    %v3433 = vld [vmem:[%s3408 + $0xc0] sm:$0xff]
    %v3434 = vld [vmem:[%s3408 + $0xc8] sm:$0xff]
    %v3435 = vld [vmem:[%s3408 + $0xd0] sm:$0xff]
    %v3436 = vld [vmem:[%s3408 + $0xd8] sm:$0xff]
    %v3437 = vld [vmem:[%s3408 + $0xe0] sm:$0xff]
    %v3438 = vld [vmem:[%s3408 + $0xe8] sm:$0xff]
    %v3439 = vld [vmem:[%s3408 + $0xf0] sm:$0xff]
    %v3440 = vld [vmem:[%s3408 + $0xf8] sm:$0xff]
    %v3441 = vld [vmem:[%s3408 + $0x100] sm:$0xff]
    %v3442 = vld [vmem:[%s3408 + $0x108] sm:$0xff]
    %v3443 = vld [vmem:[%s3408 + $0x110] sm:$0xff]
    %v3444 = vld [vmem:[%s3408 + $0x118] sm:$0xff]
    %v3445 = vld [vmem:[%s3408 + $0x120] sm:$0xff]
    %v3446 = vld [vmem:[%s3408 + $0x128] sm:$0xff]
    %v3447 = vld [vmem:[%s3408 + $0x130] sm:$0xff]
    %v3448 = vld [vmem:[%s3408 + $0x138] sm:$0xff]
    %v3449 = vld [vmem:[%s3408 + $0x140] sm:$0xff]
    %v3450 = vld [vmem:[%s3408 + $0x148] sm:$0xff]
    %v3451 = vld [vmem:[%s3408 + $0x150] sm:$0xff]
    %v3452 = vld [vmem:[%s3408 + $0x158] sm:$0xff]
    %v3453 = vld [vmem:[%s3408 + $0x160] sm:$0xff]
    %v3454 = vld [vmem:[%s3408 + $0x168] sm:$0xff]
    %v3455 = vld [vmem:[%s3408 + $0x170] sm:$0xff]
    %v3456 = vld [vmem:[%s3408 + $0x178] sm:$0xff]
    %v3457 = vld [vmem:[%s3408 + $0x180] sm:$0xff]
    %v3458 = vld [vmem:[%s3408 + $0x188] sm:$0xff]
    %v3459 = vld [vmem:[%s3408 + $0x190] sm:$0xff]
    %v3460 = vld [vmem:[%s3408 + $0x198] sm:$0xff]
    %v3461 = vld [vmem:[%s3408 + $0x1a0] sm:$0xff]
    %v3462 = vld [vmem:[%s3408 + $0x1a8] sm:$0xff]
    %v3463 = vld [vmem:[%s3408 + $0x1b0] sm:$0xff]
    %v3464 = vld [vmem:[%s3408 + $0x1b8] sm:$0xff]
    %v3465 = vld [vmem:[%s3408 + $0x1c0] sm:$0xff]
    %v3466 = vld [vmem:[%s3408 + $0x1c8] sm:$0xff]
    %v3467 = vld [vmem:[%s3408 + $0x1d0] sm:$0xff]
    %v3468 = vld [vmem:[%s3408 + $0x1d8] sm:$0xff]
    %v3469 = vld [vmem:[%s3408 + $0x1e0] sm:$0xff]
    %v3470 = vld [vmem:[%s3408 + $0x1e8] sm:$0xff]
    %v3471 = vld [vmem:[%s3408 + $0x1f0] sm:$0xff]
    %v3472 = vld [vmem:[%s3408 + $0x1f8] sm:$0xff]
    %v3473 = vld [vmem:[#allocation2] sm:$0xfc]
    %v3474 = vld [vmem:[#allocation2 + $0x8] sm:$0xfc]
    %v3475 = vld [vmem:[#allocation2 + $0x40] sm:$0x3]
    %v3476 = vld [vmem:[#allocation2 + $0x48] sm:$0x3]
    %s3477 = scalar_lea.vmem [#allocation6], 5120
    %v3478 = vld [vmem:[%s3477] sm:$0xff]
    %v3479 = vld [vmem:[%s3477 + $0x8] sm:$0xff]
    %v3480 = vld [vmem:[%s3477 + $0x10] sm:$0xff]
    %v3481 = vld [vmem:[%s3477 + $0x18] sm:$0xff]
    %v3482 = vld [vmem:[%s3477 + $0x20] sm:$0xff]
    %v3483 = vld [vmem:[%s3477 + $0x28] sm:$0xff]
    %v3484 = vld [vmem:[%s3477 + $0x30] sm:$0xff]
    %v3485 = vld [vmem:[%s3477 + $0x38] sm:$0xff]
    %v3486 = vld [vmem:[%s3477 + $0x40] sm:$0xff]
    %v3487 = vld [vmem:[%s3477 + $0x48] sm:$0xff]
    %v3488 = vld [vmem:[%s3477 + $0x50] sm:$0xff]
    %v3489 = vld [vmem:[%s3477 + $0x58] sm:$0xff]
    %v3490 = vld [vmem:[%s3477 + $0x60] sm:$0xff]
    %v3491 = vld [vmem:[%s3477 + $0x68] sm:$0xff]
    %v3492 = vld [vmem:[%s3477 + $0x70] sm:$0xff]
    %v3493 = vld [vmem:[%s3477 + $0x78] sm:$0xff]
    %v3494 = vld [vmem:[%s3477 + $0x80] sm:$0xff]
    %v3495 = vld [vmem:[%s3477 + $0x88] sm:$0xff]
    %v3496 = vld [vmem:[%s3477 + $0x90] sm:$0xff]
    %v3497 = vld [vmem:[%s3477 + $0x98] sm:$0xff]
    %v3498 = vld [vmem:[%s3477 + $0xa0] sm:$0xff]
    %v3499 = vld [vmem:[%s3477 + $0xa8] sm:$0xff]
    %v3500 = vld [vmem:[%s3477 + $0xb0] sm:$0xff]
    %v3501 = vld [vmem:[%s3477 + $0xb8] sm:$0xff]
    %v3502 = vld [vmem:[%s3477 + $0xc0] sm:$0xff]
    %v3503 = vld [vmem:[%s3477 + $0xc8] sm:$0xff]
    %v3504 = vld [vmem:[%s3477 + $0xd0] sm:$0xff]
    %v3505 = vld [vmem:[%s3477 + $0xd8] sm:$0xff]
    %v3506 = vld [vmem:[%s3477 + $0xe0] sm:$0xff]
    %v3507 = vld [vmem:[%s3477 + $0xe8] sm:$0xff]
    %v3508 = vld [vmem:[%s3477 + $0xf0] sm:$0xff]
    %v3509 = vld [vmem:[%s3477 + $0xf8] sm:$0xff]
    %v3510 = vld [vmem:[%s3477 + $0x100] sm:$0xff]
    %v3511 = vld [vmem:[%s3477 + $0x108] sm:$0xff]
    %v3512 = vld [vmem:[%s3477 + $0x110] sm:$0xff]
    %v3513 = vld [vmem:[%s3477 + $0x118] sm:$0xff]
    %v3514 = vld [vmem:[%s3477 + $0x120] sm:$0xff]
    %v3515 = vld [vmem:[%s3477 + $0x128] sm:$0xff]
    %v3516 = vld [vmem:[%s3477 + $0x130] sm:$0xff]
    %v3517 = vld [vmem:[%s3477 + $0x138] sm:$0xff]
    %v3518 = vld [vmem:[%s3477 + $0x140] sm:$0xff]
    %v3519 = vld [vmem:[%s3477 + $0x148] sm:$0xff]
    %v3520 = vld [vmem:[%s3477 + $0x150] sm:$0xff]
    %v3521 = vld [vmem:[%s3477 + $0x158] sm:$0xff]
    %v3522 = vld [vmem:[%s3477 + $0x160] sm:$0xff]
    %v3523 = vld [vmem:[%s3477 + $0x168] sm:$0xff]
    %v3524 = vld [vmem:[%s3477 + $0x170] sm:$0xff]
    %v3525 = vld [vmem:[%s3477 + $0x178] sm:$0xff]
    %v3526 = vld [vmem:[%s3477 + $0x180] sm:$0xff]
    %v3527 = vld [vmem:[%s3477 + $0x188] sm:$0xff]
    %v3528 = vld [vmem:[%s3477 + $0x190] sm:$0xff]
    %v3529 = vld [vmem:[%s3477 + $0x198] sm:$0xff]
    %v3530 = vld [vmem:[%s3477 + $0x1a0] sm:$0xff]
    %v3531 = vld [vmem:[%s3477 + $0x1a8] sm:$0xff]
    %v3532 = vld [vmem:[%s3477 + $0x1b0] sm:$0xff]
    %v3533 = vld [vmem:[%s3477 + $0x1b8] sm:$0xff]
    %v3534 = vld [vmem:[%s3477 + $0x1c0] sm:$0xff]
    %v3535 = vld [vmem:[%s3477 + $0x1c8] sm:$0xff]
    %v3536 = vld [vmem:[%s3477 + $0x1d0] sm:$0xff]
    %v3537 = vld [vmem:[%s3477 + $0x1d8] sm:$0xff]
    %v3538 = vld [vmem:[%s3477 + $0x1e0] sm:$0xff]
    %v3539 = vld [vmem:[%s3477 + $0x1e8] sm:$0xff]
    %v3540 = vld [vmem:[%s3477 + $0x1f0] sm:$0xff]
    %v3541 = vld [vmem:[%s3477 + $0x1f8] sm:$0xff]
    %v3552 = vrot.slane %v3473, 2
    %v3553 = vrot.slane %v3402, 2
    %v3554 = vsel %vm458, %v3552, %v3553
    %v3555 = vrot.slane %v3474, 2
    %v3556 = vrot.slane %v3403, 2
    %v3557 = vsel %vm458, %v3555, %v3556
    %v3558 = vrot.slane %v3404, 2
    %v3559 = vsel %vm458, %v3553, %v3558
    %v3560 = vrot.slane %v3405, 2
    %v3561 = vsel %vm458, %v3556, %v3560
    %v3562 = vrot.slane %v3406, 2
    %v3563 = vsel %vm458, %v3558, %v3562
    %v3564 = vrot.slane %v3407, 2
    %v3565 = vsel %vm458, %v3560, %v3564
    %v3566 = vrot.slane %v3475, 2
    %v3567 = vsel %vm458, %v3562, %v3566
    %v3568 = vrot.slane %v3476, 2
    %v3569 = vsel %vm458, %v3564, %v3568
    %3578 = vmatprep.subr.mxu0 %v3479
    %3579 = vmatpush1.msra.mxu0 %v3478
    %3580 = vmatprep.subr.mxu0 %v3481
    %3581 = vmatpush1.msra.mxu0 %v3480
    %3582 = vmatprep.subr.mxu0 %v3483
    %3583 = vmatpush1.msra.mxu0 %v3482
    %3584 = vmatprep.subr.mxu0 %v3485
    %3585 = vmatpush1.msra.mxu0 %v3484
    %3586 = vmatprep.subr.mxu0 %v3487
    %3587 = vmatpush1.msra.mxu0 %v3486
    %3588 = vmatprep.subr.mxu0 %v3489
    %3589 = vmatpush1.msra.mxu0 %v3488
    %3590 = vmatprep.subr.mxu0 %v3491
    %3591 = vmatpush1.msra.mxu0 %v3490
    %3592 = vmatprep.subr.mxu0 %v3493
    %3593 = vmatpush1.msra.mxu0 %v3492
    %3594 = vmatprep.subr.mxu0 %v3495
    %3595 = vmatpush1.msra.mxu0 %v3494
    %3596 = vmatprep.subr.mxu0 %v3497
    %3597 = vmatpush1.msra.mxu0 %v3496
    %3598 = vmatprep.subr.mxu0 %v3499
    %3599 = vmatpush1.msra.mxu0 %v3498
    %3600 = vmatprep.subr.mxu0 %v3501
    %3601 = vmatpush1.msra.mxu0 %v3500
    %3602 = vmatprep.subr.mxu0 %v3503
    %3603 = vmatpush1.msra.mxu0 %v3502
    %3604 = vmatprep.subr.mxu0 %v3505
    %3605 = vmatpush1.msra.mxu0 %v3504
    %3606 = vmatprep.subr.mxu0 %v3507
    %3607 = vmatpush1.msra.mxu0 %v3506
    %3608 = vmatprep.subr.mxu0 %v3509
    %3609 = vmatpush1.msra.mxu0 %v3508
    %3610 = vmatprep.subr.mxu0 %v3511
    %3611 = vmatpush1.msra.mxu0 %v3510
    %3612 = vmatprep.subr.mxu0 %v3513
    %3613 = vmatpush1.msra.mxu0 %v3512
    %3614 = vmatprep.subr.mxu0 %v3515
    %3615 = vmatpush1.msra.mxu0 %v3514
    %3616 = vmatprep.subr.mxu0 %v3517
    %3617 = vmatpush1.msra.mxu0 %v3516
    %3618 = vmatprep.subr.mxu0 %v3519
    %3619 = vmatpush1.msra.mxu0 %v3518
    %3620 = vmatprep.subr.mxu0 %v3521
    %3621 = vmatpush1.msra.mxu0 %v3520
    %3622 = vmatprep.subr.mxu0 %v3523
    %3623 = vmatpush1.msra.mxu0 %v3522
    %3624 = vmatprep.subr.mxu0 %v3525
    %3625 = vmatpush1.msra.mxu0 %v3524
    %3626 = vmatprep.subr.mxu0 %v3527
    %3627 = vmatpush1.msra.mxu0 %v3526
    %3628 = vmatprep.subr.mxu0 %v3529
    %3629 = vmatpush1.msra.mxu0 %v3528
    %3630 = vmatprep.subr.mxu0 %v3531
    %3631 = vmatpush1.msra.mxu0 %v3530
    %3632 = vmatprep.subr.mxu0 %v3533
    %3633 = vmatpush1.msra.mxu0 %v3532
    %3634 = vmatprep.subr.mxu0 %v3535
    %3635 = vmatpush1.msra.mxu0 %v3534
    %3636 = vmatprep.subr.mxu0 %v3537
    %3637 = vmatpush1.msra.mxu0 %v3536
    %3638 = vmatprep.subr.mxu0 %v3539
    %3639 = vmatpush1.msra.mxu0 %v3538
    %3640 = vmatprep.subr.mxu0 %v3541
    %3641 = vmatpush1.msra.mxu0 %v3540
    %3642 = vmatprep.mubr.f32.mxu0 %v3557
    %3643 = vmatmul.mubr.f32.gmra.mrb[0].mxu0 %v3554
    %v3644 = vpop.f32.mrb[0].mxu0
    %v3645 = vadd.f32 0.0, %v3644
    %v3646 = vpop.f32.mrb[0].mxu0
    %v3647 = vadd.f32 0.0, %v3646
    %3648 = vmatprep.mubr.f32.mxu0 %v3561
    %3649 = vmatmul.mubr.f32.gmra.mrb[0].mxu0 %v3559
    %v3650 = vpop.f32.mrb[0].mxu0
    %v3651 = vadd.f32 0.0, %v3650
    %v3652 = vpop.f32.mrb[0].mxu0
    %v3653 = vadd.f32 0.0, %v3652
    %3654 = vmatprep.mubr.f32.mxu0 %v3565
    %3655 = vmatmul.mubr.f32.gmra.mrb[0].mxu0 %v3563
    %v3656 = vpop.f32.mrb[0].mxu0
    %v3657 = vadd.f32 0.0, %v3656
    %v3658 = vpop.f32.mrb[0].mxu0
    %v3659 = vadd.f32 0.0, %v3658
    %3660 = vmatprep.mubr.f32.mxu0 %v3569
    %3661 = vmatmul.mubr.f32.gmra.mrb[0].mxu0 %v3567
    %v3662 = vpop.f32.mrb[0].mxu0
    %v3663 = vadd.f32 0.0, %v3662
    %v3664 = vpop.f32.mrb[0].mxu0
    %v3665 = vadd.f32 0.0, %v3664
    %3666 = vdwg.mxu0
    %3667 = vmatprep.subr.mxu0 %v3410
    %3668 = vmatpush1.msra.mxu0 %v3409
    %3669 = vmatprep.subr.mxu0 %v3412
    %3670 = vmatpush1.msra.mxu0 %v3411
    %3671 = vmatprep.subr.mxu0 %v3414
    %3672 = vmatpush1.msra.mxu0 %v3413
    %3673 = vmatprep.subr.mxu0 %v3416
    %3674 = vmatpush1.msra.mxu0 %v3415
    %3675 = vmatprep.subr.mxu0 %v3418
    %3676 = vmatpush1.msra.mxu0 %v3417
    %3677 = vmatprep.subr.mxu0 %v3420
    %3678 = vmatpush1.msra.mxu0 %v3419
    %3679 = vmatprep.subr.mxu0 %v3422
    %3680 = vmatpush1.msra.mxu0 %v3421
    %3681 = vmatprep.subr.mxu0 %v3424
    %3682 = vmatpush1.msra.mxu0 %v3423
    %3683 = vmatprep.subr.mxu0 %v3426
    %3684 = vmatpush1.msra.mxu0 %v3425
    %3685 = vmatprep.subr.mxu0 %v3428
    %3686 = vmatpush1.msra.mxu0 %v3427
    %3687 = vmatprep.subr.mxu0 %v3430
    %3688 = vmatpush1.msra.mxu0 %v3429
    %3689 = vmatprep.subr.mxu0 %v3432
    %3690 = vmatpush1.msra.mxu0 %v3431
    %3691 = vmatprep.subr.mxu0 %v3434
    %3692 = vmatpush1.msra.mxu0 %v3433
    %3693 = vmatprep.subr.mxu0 %v3436
    %3694 = vmatpush1.msra.mxu0 %v3435
    %3695 = vmatprep.subr.mxu0 %v3438
    %3696 = vmatpush1.msra.mxu0 %v3437
    %3697 = vmatprep.subr.mxu0 %v3440
    %3698 = vmatpush1.msra.mxu0 %v3439
    %3699 = vmatprep.subr.mxu0 %v3442
    %3700 = vmatpush1.msra.mxu0 %v3441
    %3701 = vmatprep.subr.mxu0 %v3444
    %3702 = vmatpush1.msra.mxu0 %v3443
    %3703 = vmatprep.subr.mxu0 %v3446
    %3704 = vmatpush1.msra.mxu0 %v3445
    %3705 = vmatprep.subr.mxu0 %v3448
    %3706 = vmatpush1.msra.mxu0 %v3447
    %3707 = vmatprep.subr.mxu0 %v3450
    %3708 = vmatpush1.msra.mxu0 %v3449
    %3709 = vmatprep.subr.mxu0 %v3452
    %3710 = vmatpush1.msra.mxu0 %v3451
    %3711 = vmatprep.subr.mxu0 %v3454
    %3712 = vmatpush1.msra.mxu0 %v3453
    %3713 = vmatprep.subr.mxu0 %v3456
    %3714 = vmatpush1.msra.mxu0 %v3455
    %3715 = vmatprep.subr.mxu0 %v3458
    %3716 = vmatpush1.msra.mxu0 %v3457
    %3717 = vmatprep.subr.mxu0 %v3460
    %3718 = vmatpush1.msra.mxu0 %v3459
    %3719 = vmatprep.subr.mxu0 %v3462
    %3720 = vmatpush1.msra.mxu0 %v3461
    %3721 = vmatprep.subr.mxu0 %v3464
    %3722 = vmatpush1.msra.mxu0 %v3463
    %3723 = vmatprep.subr.mxu0 %v3466
    %3724 = vmatpush1.msra.mxu0 %v3465
    %3725 = vmatprep.subr.mxu0 %v3468
    %3726 = vmatpush1.msra.mxu0 %v3467
    %3727 = vmatprep.subr.mxu0 %v3470
    %3728 = vmatpush1.msra.mxu0 %v3469
    %3729 = vmatprep.subr.mxu0 %v3472
    %3730 = vmatpush1.msra.mxu0 %v3471
    %3731 = vmatprep.mubr.f32.mxu0 %v3401
    %3732 = vmatmul.mubr.f32.gmra.mrb[0].mxu0 %v3400
    %v3733 = vpop.f32.mrb[0].mxu0
    %v3734 = vadd.f32 %v3645, %v3733
    %v3735 = vpop.f32.mrb[0].mxu0
    %v3736 = vadd.f32 %v3647, %v3735
    %3737 = vmatprep.mubr.f32.mxu0 %v3403
    %3738 = vmatmul.mubr.f32.gmra.mrb[0].mxu0 %v3402
    %v3739 = vpop.f32.mrb[0].mxu0
    %v3740 = vadd.f32 %v3651, %v3739
    %v3741 = vpop.f32.mrb[0].mxu0
    %v3742 = vadd.f32 %v3653, %v3741
    %3743 = vmatprep.mubr.f32.mxu0 %v3405
    %3744 = vmatmul.mubr.f32.gmra.mrb[0].mxu0 %v3404
    %v3745 = vpop.f32.mrb[0].mxu0
    %v3746 = vadd.f32 %v3657, %v3745
    %v3747 = vpop.f32.mrb[0].mxu0
    %v3748 = vadd.f32 %v3659, %v3747
    %3749 = vmatprep.mubr.f32.mxu0 %v3407
    %3750 = vmatmul.mubr.f32.gmra.mrb[0].mxu0 %v3406
    %v3751 = vpop.f32.mrb[0].mxu0
    %v3752 = vadd.f32 %v3663, %v3751
    %v3753 = vpop.f32.mrb[0].mxu0
    %v3754 = vadd.f32 %v3665, %v3753
    %3755 = vdwg.mxu0
    %v3756 = vld [vmem:[#allocation2] sm:$0xf0]
    %v3757 = vld [vmem:[#allocation2 + $0x8] sm:$0xf0]
    %v3758 = vld [vmem:[#allocation2 + $0x40] sm:$0xf]
    %v3759 = vld [vmem:[#allocation2 + $0x48] sm:$0xf]
    %s3760 = scalar_lea.vmem [#allocation6], 5632
    %v3761 = vld [vmem:[%s3760] sm:$0xff]
    %v3762 = vld [vmem:[%s3760 + $0x8] sm:$0xff]
    %v3763 = vld [vmem:[%s3760 + $0x10] sm:$0xff]
    %v3764 = vld [vmem:[%s3760 + $0x18] sm:$0xff]
    %v3765 = vld [vmem:[%s3760 + $0x20] sm:$0xff]
    %v3766 = vld [vmem:[%s3760 + $0x28] sm:$0xff]
    %v3767 = vld [vmem:[%s3760 + $0x30] sm:$0xff]
    %v3768 = vld [vmem:[%s3760 + $0x38] sm:$0xff]
    %v3769 = vld [vmem:[%s3760 + $0x40] sm:$0xff]
    %v3770 = vld [vmem:[%s3760 + $0x48] sm:$0xff]
    %v3771 = vld [vmem:[%s3760 + $0x50] sm:$0xff]
    %v3772 = vld [vmem:[%s3760 + $0x58] sm:$0xff]
    %v3773 = vld [vmem:[%s3760 + $0x60] sm:$0xff]
    %v3774 = vld [vmem:[%s3760 + $0x68] sm:$0xff]
    %v3775 = vld [vmem:[%s3760 + $0x70] sm:$0xff]
    %v3776 = vld [vmem:[%s3760 + $0x78] sm:$0xff]
    %v3777 = vld [vmem:[%s3760 + $0x80] sm:$0xff]
    %v3778 = vld [vmem:[%s3760 + $0x88] sm:$0xff]
    %v3779 = vld [vmem:[%s3760 + $0x90] sm:$0xff]
    %v3780 = vld [vmem:[%s3760 + $0x98] sm:$0xff]
    %v3781 = vld [vmem:[%s3760 + $0xa0] sm:$0xff]
    %v3782 = vld [vmem:[%s3760 + $0xa8] sm:$0xff]
    %v3783 = vld [vmem:[%s3760 + $0xb0] sm:$0xff]
    %v3784 = vld [vmem:[%s3760 + $0xb8] sm:$0xff]
    %v3785 = vld [vmem:[%s3760 + $0xc0] sm:$0xff]
    %v3786 = vld [vmem:[%s3760 + $0xc8] sm:$0xff]
    %v3787 = vld [vmem:[%s3760 + $0xd0] sm:$0xff]
    %v3788 = vld [vmem:[%s3760 + $0xd8] sm:$0xff]
    %v3789 = vld [vmem:[%s3760 + $0xe0] sm:$0xff]
    %v3790 = vld [vmem:[%s3760 + $0xe8] sm:$0xff]
    %v3791 = vld [vmem:[%s3760 + $0xf0] sm:$0xff]
    %v3792 = vld [vmem:[%s3760 + $0xf8] sm:$0xff]
    %v3793 = vld [vmem:[%s3760 + $0x100] sm:$0xff]
    %v3794 = vld [vmem:[%s3760 + $0x108] sm:$0xff]
    %v3795 = vld [vmem:[%s3760 + $0x110] sm:$0xff]
    %v3796 = vld [vmem:[%s3760 + $0x118] sm:$0xff]
    %v3797 = vld [vmem:[%s3760 + $0x120] sm:$0xff]
    %v3798 = vld [vmem:[%s3760 + $0x128] sm:$0xff]
    %v3799 = vld [vmem:[%s3760 + $0x130] sm:$0xff]
    %v3800 = vld [vmem:[%s3760 + $0x138] sm:$0xff]
    %v3801 = vld [vmem:[%s3760 + $0x140] sm:$0xff]
    %v3802 = vld [vmem:[%s3760 + $0x148] sm:$0xff]
    %v3803 = vld [vmem:[%s3760 + $0x150] sm:$0xff]
    %v3804 = vld [vmem:[%s3760 + $0x158] sm:$0xff]
    %v3805 = vld [vmem:[%s3760 + $0x160] sm:$0xff]
    %v3806 = vld [vmem:[%s3760 + $0x168] sm:$0xff]
    %v3807 = vld [vmem:[%s3760 + $0x170] sm:$0xff]
    %v3808 = vld [vmem:[%s3760 + $0x178] sm:$0xff]
    %v3809 = vld [vmem:[%s3760 + $0x180] sm:$0xff]
    %v3810 = vld [vmem:[%s3760 + $0x188] sm:$0xff]
    %v3811 = vld [vmem:[%s3760 + $0x190] sm:$0xff]
    %v3812 = vld [vmem:[%s3760 + $0x198] sm:$0xff]
    %v3813 = vld [vmem:[%s3760 + $0x1a0] sm:$0xff]
    %v3814 = vld [vmem:[%s3760 + $0x1a8] sm:$0xff]
    %v3815 = vld [vmem:[%s3760 + $0x1b0] sm:$0xff]
    %v3816 = vld [vmem:[%s3760 + $0x1b8] sm:$0xff]
    %v3817 = vld [vmem:[%s3760 + $0x1c0] sm:$0xff]
    %v3818 = vld [vmem:[%s3760 + $0x1c8] sm:$0xff]
    %v3819 = vld [vmem:[%s3760 + $0x1d0] sm:$0xff]
    %v3820 = vld [vmem:[%s3760 + $0x1d8] sm:$0xff]
    %v3821 = vld [vmem:[%s3760 + $0x1e0] sm:$0xff]
    %v3822 = vld [vmem:[%s3760 + $0x1e8] sm:$0xff]
    %v3823 = vld [vmem:[%s3760 + $0x1f0] sm:$0xff]
    %v3824 = vld [vmem:[%s3760 + $0x1f8] sm:$0xff]
    %v3829 = vrot.slane %v3756, 4
    %v3830 = vrot.slane %v3402, 4
    %v3831 = vsel %vm736, %v3829, %v3830
    %v3832 = vrot.slane %v3757, 4
    %v3833 = vrot.slane %v3403, 4
    %v3834 = vsel %vm736, %v3832, %v3833
    %v3835 = vrot.slane %v3404, 4
    %v3836 = vsel %vm736, %v3830, %v3835
    %v3837 = vrot.slane %v3405, 4
    %v3838 = vsel %vm736, %v3833, %v3837
    %v3839 = vrot.slane %v3406, 4
    %v3840 = vsel %vm736, %v3835, %v3839
    %v3841 = vrot.slane %v3407, 4
    %v3842 = vsel %vm736, %v3837, %v3841
    %v3843 = vrot.slane %v3758, 4
    %v3844 = vsel %vm736, %v3839, %v3843
    %v3845 = vrot.slane %v3759, 4
    %v3846 = vsel %vm736, %v3841, %v3845
    %3855 = vmatprep.subr.mxu0 %v3762
    %3856 = vmatpush1.msra.mxu0 %v3761
    %3857 = vmatprep.subr.mxu0 %v3764
    %3858 = vmatpush1.msra.mxu0 %v3763
    %3859 = vmatprep.subr.mxu0 %v3766
    %3860 = vmatpush1.msra.mxu0 %v3765
    %3861 = vmatprep.subr.mxu0 %v3768
    %3862 = vmatpush1.msra.mxu0 %v3767
    %3863 = vmatprep.subr.mxu0 %v3770
    %3864 = vmatpush1.msra.mxu0 %v3769
    %3865 = vmatprep.subr.mxu0 %v3772
    %3866 = vmatpush1.msra.mxu0 %v3771
    %3867 = vmatprep.subr.mxu0 %v3774
    %3868 = vmatpush1.msra.mxu0 %v3773
    %3869 = vmatprep.subr.mxu0 %v3776
    %3870 = vmatpush1.msra.mxu0 %v3775
    %3871 = vmatprep.subr.mxu0 %v3778
    %3872 = vmatpush1.msra.mxu0 %v3777
    %3873 = vmatprep.subr.mxu0 %v3780
    %3874 = vmatpush1.msra.mxu0 %v3779
    %3875 = vmatprep.subr.mxu0 %v3782
    %3876 = vmatpush1.msra.mxu0 %v3781
    %3877 = vmatprep.subr.mxu0 %v3784
    %3878 = vmatpush1.msra.mxu0 %v3783
    %3879 = vmatprep.subr.mxu0 %v3786
    %3880 = vmatpush1.msra.mxu0 %v3785
    %3881 = vmatprep.subr.mxu0 %v3788
    %3882 = vmatpush1.msra.mxu0 %v3787
    %3883 = vmatprep.subr.mxu0 %v3790
    %3884 = vmatpush1.msra.mxu0 %v3789
    %3885 = vmatprep.subr.mxu0 %v3792
    %3886 = vmatpush1.msra.mxu0 %v3791
    %3887 = vmatprep.subr.mxu0 %v3794
    %3888 = vmatpush1.msra.mxu0 %v3793
    %3889 = vmatprep.subr.mxu0 %v3796
    %3890 = vmatpush1.msra.mxu0 %v3795
    %3891 = vmatprep.subr.mxu0 %v3798
    %3892 = vmatpush1.msra.mxu0 %v3797
    %3893 = vmatprep.subr.mxu0 %v3800
    %3894 = vmatpush1.msra.mxu0 %v3799
    %3895 = vmatprep.subr.mxu0 %v3802
    %3896 = vmatpush1.msra.mxu0 %v3801
    %3897 = vmatprep.subr.mxu0 %v3804
    %3898 = vmatpush1.msra.mxu0 %v3803
    %3899 = vmatprep.subr.mxu0 %v3806
    %3900 = vmatpush1.msra.mxu0 %v3805
    %3901 = vmatprep.subr.mxu0 %v3808
    %3902 = vmatpush1.msra.mxu0 %v3807
    %3903 = vmatprep.subr.mxu0 %v3810
    %3904 = vmatpush1.msra.mxu0 %v3809
    %3905 = vmatprep.subr.mxu0 %v3812
    %3906 = vmatpush1.msra.mxu0 %v3811
    %3907 = vmatprep.subr.mxu0 %v3814
    %3908 = vmatpush1.msra.mxu0 %v3813
    %3909 = vmatprep.subr.mxu0 %v3816
    %3910 = vmatpush1.msra.mxu0 %v3815
    %3911 = vmatprep.subr.mxu0 %v3818
    %3912 = vmatpush1.msra.mxu0 %v3817
    %3913 = vmatprep.subr.mxu0 %v3820
    %3914 = vmatpush1.msra.mxu0 %v3819
    %3915 = vmatprep.subr.mxu0 %v3822
    %3916 = vmatpush1.msra.mxu0 %v3821
    %3917 = vmatprep.subr.mxu0 %v3824
    %3918 = vmatpush1.msra.mxu0 %v3823
    %3919 = vmatprep.mubr.f32.mxu0 %v3834
    %3920 = vmatmul.mubr.f32.gmra.mrb[0].mxu0 %v3831
    %v3921 = vpop.f32.mrb[0].mxu0
    %v3922 = vadd.f32 0.0, %v3921
    %v3923 = vpop.f32.mrb[0].mxu0
    %v3924 = vadd.f32 0.0, %v3923
    %3925 = vmatprep.mubr.f32.mxu0 %v3838
    %3926 = vmatmul.mubr.f32.gmra.mrb[0].mxu0 %v3836
    %v3927 = vpop.f32.mrb[0].mxu0
    %v3928 = vadd.f32 0.0, %v3927
    %v3929 = vpop.f32.mrb[0].mxu0
    %v3930 = vadd.f32 0.0, %v3929
    %3931 = vmatprep.mubr.f32.mxu0 %v3842
    %3932 = vmatmul.mubr.f32.gmra.mrb[0].mxu0 %v3840
    %v3933 = vpop.f32.mrb[0].mxu0
    %v3934 = vadd.f32 0.0, %v3933
    %v3935 = vpop.f32.mrb[0].mxu0
    %v3936 = vadd.f32 0.0, %v3935
    %3937 = vmatprep.mubr.f32.mxu0 %v3846
    %3938 = vmatmul.mubr.f32.gmra.mrb[0].mxu0 %v3844
    %v3939 = vpop.f32.mrb[0].mxu0
    %v3940 = vadd.f32 0.0, %v3939
    %v3941 = vpop.f32.mrb[0].mxu0
    %v3942 = vadd.f32 0.0, %v3941
    %3943 = vdwg.mxu0
    %v3944 = vadd.f32 %v3734, %v3922
    %v3945 = vadd.f32 %v3736, %v3924
    %v3946 = vadd.f32 %v3740, %v3928
    %v3947 = vadd.f32 %v3742, %v3930
    %v3948 = vadd.f32 %v3746, %v3934
    %v3949 = vadd.f32 %v3748, %v3936
    %v3950 = vadd.f32 %v3752, %v3940
    %v3951 = vadd.f32 %v3754, %v3942
    %v3952 = vadd.f32 %v3944, %v3946
    %v3953 = vadd.f32 %v3952, %v3948
    %v3954 = vadd.f32 %v3953, %v3950
    %v3955 = vrot.slane %v3954, 4
    %v3956 = vadd.f32 %v3954, %v3955
    %v3957 = vrot.slane %v3956, 2
    %v3958 = vadd.f32 %v3956, %v3957
    %v3959 = vrot.slane %v3958, 1
    %v3960 = vadd.f32 %v3958, %v3959
    %v3961 = vadd.f32 %v3945, %v3947
    %v3962 = vadd.f32 %v3961, %v3949
    %v3963 = vadd.f32 %v3962, %v3951
    %v3964 = vrot.slane %v3963, 4
    %v3965 = vadd.f32 %v3963, %v3964
    %v3966 = vrot.slane %v3965, 2
    %v3967 = vadd.f32 %v3965, %v3966
    %v3968 = vrot.slane %v3967, 1
    %v3969 = vadd.f32 %v3967, %v3968
    %v3970 = vmul.f32 %v3944, %v3944
    %v3971 = vmul.f32 %v3945, %v3945
    %v3972 = vmul.f32 %v3946, %v3946
    %v3973 = vmul.f32 %v3947, %v3947
    %v3974 = vmul.f32 %v3948, %v3948
    %v3975 = vmul.f32 %v3949, %v3949
    %v3976 = vmul.f32 %v3950, %v3950
    %v3977 = vmul.f32 %v3951, %v3951
    %v3978 = vadd.f32 %v3970, %v3972
    %v3979 = vadd.f32 %v3978, %v3974
    %v3980 = vadd.f32 %v3979, %v3976
    %v3981 = vrot.slane %v3980, 4
    %v3982 = vadd.f32 %v3980, %v3981
    %v3983 = vrot.slane %v3982, 2
    %v3984 = vadd.f32 %v3982, %v3983
    %v3985 = vrot.slane %v3984, 1
    %v3986 = vadd.f32 %v3984, %v3985
    %v3987 = vadd.f32 %v3971, %v3973
    %v3988 = vadd.f32 %v3987, %v3975
    %v3989 = vadd.f32 %v3988, %v3977
    %v3990 = vrot.slane %v3989, 4
    %v3991 = vadd.f32 %v3989, %v3990
    %v3992 = vrot.slane %v3991, 2
    %v3993 = vadd.f32 %v3991, %v3992
    %v3994 = vrot.slane %v3993, 1
    %v3995 = vadd.f32 %v3993, %v3994
    %v3996 = vld [vmem:[#allocation11] sm:$0xff]
    %v3997 = vld [vmem:[#allocation11 + $0x8] sm:$0xff]
    %v3998 = vld [vmem:[#allocation11 + $0x10] sm:$0xff]
    %v3999 = vld [vmem:[#allocation11 + $0x18] sm:$0xff]
    %v4000 = vld [vmem:[#allocation11 + $0x20] sm:$0xff]
    %v4001 = vld [vmem:[#allocation11 + $0x28] sm:$0xff]
    %v4002 = vld [vmem:[#allocation11 + $0x30] sm:$0xff]
    %v4003 = vld [vmem:[#allocation11 + $0x38] sm:$0xff]
    %v4004 = vld [vmem:[#allocation11 + $0x40] sm:$0xff]
    %v4005 = vld [vmem:[#allocation11 + $0x48] sm:$0xff]
    %v4006 = vld [vmem:[#allocation11 + $0x50] sm:$0xff]
    %v4007 = vld [vmem:[#allocation11 + $0x58] sm:$0xff]
    %v4008 = vld [vmem:[#allocation11 + $0x60] sm:$0xff]
    %v4009 = vld [vmem:[#allocation11 + $0x68] sm:$0xff]
    %v4010 = vld [vmem:[#allocation11 + $0x70] sm:$0xff]
    %v4011 = vld [vmem:[#allocation11 + $0x78] sm:$0xff]
    %v4012 = vld [vmem:[#allocation11 + $0x80] sm:$0xff]
    %v4013 = vld [vmem:[#allocation11 + $0x88] sm:$0xff]
    %v4014 = vld [vmem:[#allocation11 + $0x90] sm:$0xff]
    %v4015 = vld [vmem:[#allocation11 + $0x98] sm:$0xff]
    %v4016 = vld [vmem:[#allocation11 + $0xa0] sm:$0xff]
    %v4017 = vld [vmem:[#allocation11 + $0xa8] sm:$0xff]
    %v4018 = vld [vmem:[#allocation11 + $0xb0] sm:$0xff]
    %v4019 = vld [vmem:[#allocation11 + $0xb8] sm:$0xff]
    %v4020 = vld [vmem:[#allocation11 + $0xc0] sm:$0xff]
    %v4021 = vld [vmem:[#allocation11 + $0xc8] sm:$0xff]
    %v4022 = vld [vmem:[#allocation11 + $0xd0] sm:$0xff]
    %v4023 = vld [vmem:[#allocation11 + $0xd8] sm:$0xff]
    %v4024 = vld [vmem:[#allocation11 + $0xe0] sm:$0xff]
    %v4025 = vld [vmem:[#allocation11 + $0xe8] sm:$0xff]
    %v4026 = vld [vmem:[#allocation11 + $0xf0] sm:$0xff]
    %v4027 = vld [vmem:[#allocation11 + $0xf8] sm:$0xff]
    %4028 = vmatprep.subr.mxu0 0.0
    %4029 = vmatpush1.msra.mxu0 %v3996
    %4030 = vmatprep.subr.mxu0 0.0
    %4031 = vmatpush1.msra.mxu0 %v3997
    %4032 = vmatprep.subr.mxu0 0.0
    %4033 = vmatpush1.msra.mxu0 %v3998
    %4034 = vmatprep.subr.mxu0 0.0
    %4035 = vmatpush1.msra.mxu0 %v3999
    %4036 = vmatprep.subr.mxu0 0.0
    %4037 = vmatpush1.msra.mxu0 %v4000
    %4038 = vmatprep.subr.mxu0 0.0
    %4039 = vmatpush1.msra.mxu0 %v4001
    %4040 = vmatprep.subr.mxu0 0.0
    %4041 = vmatpush1.msra.mxu0 %v4002
    %4042 = vmatprep.subr.mxu0 0.0
    %4043 = vmatpush1.msra.mxu0 %v4003
    %4044 = vmatprep.subr.mxu0 0.0
    %4045 = vmatpush1.msra.mxu0 %v4004
    %4046 = vmatprep.subr.mxu0 0.0
    %4047 = vmatpush1.msra.mxu0 %v4005
    %4048 = vmatprep.subr.mxu0 0.0
    %4049 = vmatpush1.msra.mxu0 %v4006
    %4050 = vmatprep.subr.mxu0 0.0
    %4051 = vmatpush1.msra.mxu0 %v4007
    %4052 = vmatprep.subr.mxu0 0.0
    %4053 = vmatpush1.msra.mxu0 %v4008
    %4054 = vmatprep.subr.mxu0 0.0
    %4055 = vmatpush1.msra.mxu0 %v4009
    %4056 = vmatprep.subr.mxu0 0.0
    %4057 = vmatpush1.msra.mxu0 %v4010
    %4058 = vmatprep.subr.mxu0 0.0
    %4059 = vmatpush1.msra.mxu0 %v4011
    %4060 = vmatprep.subr.mxu0 0.0
    %4061 = vmatpush1.msra.mxu0 %v4012
    %4062 = vmatprep.subr.mxu0 0.0
    %4063 = vmatpush1.msra.mxu0 %v4013
    %4064 = vmatprep.subr.mxu0 0.0
    %4065 = vmatpush1.msra.mxu0 %v4014
    %4066 = vmatprep.subr.mxu0 0.0
    %4067 = vmatpush1.msra.mxu0 %v4015
    %4068 = vmatprep.subr.mxu0 0.0
    %4069 = vmatpush1.msra.mxu0 %v4016
    %4070 = vmatprep.subr.mxu0 0.0
    %4071 = vmatpush1.msra.mxu0 %v4017
    %4072 = vmatprep.subr.mxu0 0.0
    %4073 = vmatpush1.msra.mxu0 %v4018
    %4074 = vmatprep.subr.mxu0 0.0
    %4075 = vmatpush1.msra.mxu0 %v4019
    %4076 = vmatprep.subr.mxu0 0.0
    %4077 = vmatpush1.msra.mxu0 %v4020
    %4078 = vmatprep.subr.mxu0 0.0
    %4079 = vmatpush1.msra.mxu0 %v4021
    %4080 = vmatprep.subr.mxu0 0.0
    %4081 = vmatpush1.msra.mxu0 %v4022
    %4082 = vmatprep.subr.mxu0 0.0
    %4083 = vmatpush1.msra.mxu0 %v4023
    %4084 = vmatprep.subr.mxu0 0.0
    %4085 = vmatpush1.msra.mxu0 %v4024
    %4086 = vmatprep.subr.mxu0 0.0
    %4087 = vmatpush1.msra.mxu0 %v4025
    %4088 = vmatprep.subr.mxu0 0.0
    %4089 = vmatpush1.msra.mxu0 %v4026
    %4090 = vmatprep.subr.mxu0 0.0
    %4091 = vmatpush1.msra.mxu0 %v4027
    %4092 = vmatprep.mubr.f32.mxu0 %v3969
    %4093 = vmatmul.mubr.f32.gmra.mrb[0].mxu0 %v3960
    %v4094 = vpop.f32.mrb[0].mxu0
    %v4095 = vadd.f32 0.0, %v4094
    %v4096 = vpop.f32.mrb[0].mxu0
    %4097 = vdwg.mxu0
    %v4098 = vmul.f32 %v4095, 0.001953125
    %4099 = vmatprep.subr.mxu0 0.0
    %4100 = vmatpush1.msra.mxu0 %v3996
    %4101 = vmatprep.subr.mxu0 0.0
    %4102 = vmatpush1.msra.mxu0 %v3997
    %4103 = vmatprep.subr.mxu0 0.0
    %4104 = vmatpush1.msra.mxu0 %v3998
    %4105 = vmatprep.subr.mxu0 0.0
    %4106 = vmatpush1.msra.mxu0 %v3999
    %4107 = vmatprep.subr.mxu0 0.0
    %4108 = vmatpush1.msra.mxu0 %v4000
    %4109 = vmatprep.subr.mxu0 0.0
    %4110 = vmatpush1.msra.mxu0 %v4001
    %4111 = vmatprep.subr.mxu0 0.0
    %4112 = vmatpush1.msra.mxu0 %v4002
    %4113 = vmatprep.subr.mxu0 0.0
    %4114 = vmatpush1.msra.mxu0 %v4003
    %4115 = vmatprep.subr.mxu0 0.0
    %4116 = vmatpush1.msra.mxu0 %v4004
    %4117 = vmatprep.subr.mxu0 0.0
    %4118 = vmatpush1.msra.mxu0 %v4005
    %4119 = vmatprep.subr.mxu0 0.0
    %4120 = vmatpush1.msra.mxu0 %v4006
    %4121 = vmatprep.subr.mxu0 0.0
    %4122 = vmatpush1.msra.mxu0 %v4007
    %4123 = vmatprep.subr.mxu0 0.0
    %4124 = vmatpush1.msra.mxu0 %v4008
    %4125 = vmatprep.subr.mxu0 0.0
    %4126 = vmatpush1.msra.mxu0 %v4009
    %4127 = vmatprep.subr.mxu0 0.0
    %4128 = vmatpush1.msra.mxu0 %v4010
    %4129 = vmatprep.subr.mxu0 0.0
    %4130 = vmatpush1.msra.mxu0 %v4011
    %4131 = vmatprep.subr.mxu0 0.0
    %4132 = vmatpush1.msra.mxu0 %v4012
    %4133 = vmatprep.subr.mxu0 0.0
    %4134 = vmatpush1.msra.mxu0 %v4013
    %4135 = vmatprep.subr.mxu0 0.0
    %4136 = vmatpush1.msra.mxu0 %v4014
    %4137 = vmatprep.subr.mxu0 0.0
    %4138 = vmatpush1.msra.mxu0 %v4015
    %4139 = vmatprep.subr.mxu0 0.0
    %4140 = vmatpush1.msra.mxu0 %v4016
    %4141 = vmatprep.subr.mxu0 0.0
    %4142 = vmatpush1.msra.mxu0 %v4017
    %4143 = vmatprep.subr.mxu0 0.0
    %4144 = vmatpush1.msra.mxu0 %v4018
    %4145 = vmatprep.subr.mxu0 0.0
    %4146 = vmatpush1.msra.mxu0 %v4019
    %4147 = vmatprep.subr.mxu0 0.0
    %4148 = vmatpush1.msra.mxu0 %v4020
    %4149 = vmatprep.subr.mxu0 0.0
    %4150 = vmatpush1.msra.mxu0 %v4021
    %4151 = vmatprep.subr.mxu0 0.0
    %4152 = vmatpush1.msra.mxu0 %v4022
    %4153 = vmatprep.subr.mxu0 0.0
    %4154 = vmatpush1.msra.mxu0 %v4023
    %4155 = vmatprep.subr.mxu0 0.0
    %4156 = vmatpush1.msra.mxu0 %v4024
    %4157 = vmatprep.subr.mxu0 0.0
    %4158 = vmatpush1.msra.mxu0 %v4025
    %4159 = vmatprep.subr.mxu0 0.0
    %4160 = vmatpush1.msra.mxu0 %v4026
    %4161 = vmatprep.subr.mxu0 0.0
    %4162 = vmatpush1.msra.mxu0 %v4027
    %4163 = vmatprep.mubr.f32.mxu0 %v3995
    %4164 = vmatmul.mubr.f32.gmra.mrb[0].mxu0 %v3986
    %v4165 = vpop.f32.mrb[0].mxu0
    %v4166 = vadd.f32 0.0, %v4165
    %v4167 = vpop.f32.mrb[0].mxu0
    %4168 = vdwg.mxu0
    %v4169 = vmul.f32 %v4166, 0.001953125
    %v4170 = vmul.f32 %v4098, %v4098
    %v4171 = vsub.f32 %v4169, %v4170
    %s4172 = scalar_lea.vmem [#allocation8], 3
    %v4173 = vld [vmem:[%s4172] sm:$0x1]
    %v4174 = vadd.f32 %v4171, 1e-05
    %v4175 = vrsqrt.pop %v4174
    %v4176 = vmul.f32 %v4173, %v4175
    %s4177 = scalar_lea.vmem [#allocation9], 3
    %v4178 = vld [vmem:[%s4177] sm:$0x1]
    %v4179 = vmul.f32 %v4098, %v4176
    %v4180 = vsub.f32 %v4178, %v4179
    %v4181 = vld [vmem:[#allocation12] sm:$0xff]
    %v4182 = vld [vmem:[#allocation12 + $0x8] sm:$0xff]
    %v4183 = vld [vmem:[#allocation12 + $0x10] sm:$0xff]
    %v4184 = vld [vmem:[#allocation12 + $0x18] sm:$0xff]
    %v4186 = vsel %vm1091, %v4176, 0
    %4188 = vmatprep.subr.mxu0 %v4182
    %4189 = vmatpush1.msra.mxu0 %v4181
    %4190 = vmatprep.subr.mxu0 %v4184
    %4191 = vmatpush1.msra.mxu0 %v4183
    %4192 = vmatprep.subr.mxu0 0.0
    %4193 = vmatpush1.msra.mxu0 0.0
    %4194 = vmatprep.subr.mxu0 0.0
    %4195 = vmatpush1.msra.mxu0 0.0
    %4196 = vmatprep.subr.mxu0 0.0
    %4197 = vmatpush1.msra.mxu0 0.0
    %4198 = vmatprep.subr.mxu0 0.0
    %4199 = vmatpush1.msra.mxu0 0.0
    %4200 = vmatprep.subr.mxu0 0.0
    %4201 = vmatpush1.msra.mxu0 0.0
    %4202 = vmatprep.subr.mxu0 0.0
    %4203 = vmatpush1.msra.mxu0 0.0
    %4204 = vmatprep.subr.mxu0 0.0
    %4205 = vmatpush1.msra.mxu0 0.0
    %4206 = vmatprep.subr.mxu0 0.0
    %4207 = vmatpush1.msra.mxu0 0.0
    %4208 = vmatprep.subr.mxu0 0.0
    %4209 = vmatpush1.msra.mxu0 0.0
    %4210 = vmatprep.subr.mxu0 0.0
    %4211 = vmatpush1.msra.mxu0 0.0
    %4212 = vmatprep.subr.mxu0 0.0
    %4213 = vmatpush1.msra.mxu0 0.0
    %4214 = vmatprep.subr.mxu0 0.0
    %4215 = vmatpush1.msra.mxu0 0.0
    %4216 = vmatprep.subr.mxu0 0.0
    %4217 = vmatpush1.msra.mxu0 0.0
    %4218 = vmatprep.subr.mxu0 0.0
    %4219 = vmatpush1.msra.mxu0 0.0
    %4220 = vmatprep.subr.mxu0 0.0
    %4221 = vmatpush1.msra.mxu0 0.0
    %4222 = vmatprep.subr.mxu0 0.0
    %4223 = vmatpush1.msra.mxu0 0.0
    %4224 = vmatprep.subr.mxu0 0.0
    %4225 = vmatpush1.msra.mxu0 0.0
    %4226 = vmatprep.subr.mxu0 0.0
    %4227 = vmatpush1.msra.mxu0 0.0
    %4228 = vmatprep.subr.mxu0 0.0
    %4229 = vmatpush1.msra.mxu0 0.0
    %4230 = vmatprep.subr.mxu0 0.0
    %4231 = vmatpush1.msra.mxu0 0.0
    %4232 = vmatprep.subr.mxu0 0.0
    %4233 = vmatpush1.msra.mxu0 0.0
    %4234 = vmatprep.subr.mxu0 0.0
    %4235 = vmatpush1.msra.mxu0 0.0
    %4236 = vmatprep.subr.mxu0 0.0
    %4237 = vmatpush1.msra.mxu0 0.0
    %4238 = vmatprep.subr.mxu0 0.0
    %4239 = vmatpush1.msra.mxu0 0.0
    %4240 = vmatprep.subr.mxu0 0.0
    %4241 = vmatpush1.msra.mxu0 0.0
    %4242 = vmatprep.subr.mxu0 0.0
    %4243 = vmatpush1.msra.mxu0 0.0
    %4244 = vmatprep.subr.mxu0 0.0
    %4245 = vmatpush1.msra.mxu0 0.0
    %4246 = vmatprep.subr.mxu0 0.0
    %4247 = vmatpush1.msra.mxu0 0.0
    %4248 = vmatprep.subr.mxu0 0.0
    %4249 = vmatpush1.msra.mxu0 0.0
    %4250 = vmatprep.subr.mxu0 0.0
    %4251 = vmatpush1.msra.mxu0 0.0
    %4252 = vmatprep.mubr.f32.mxu0 0.0
    %4253 = vmatmul.mubr.f32.gmra.mrb[0].mxu0 %v4186
    %v4254 = vpop.f32.mrb[0].mxu0
    %v4255 = vadd.f32 0.0, %v4254
    %v4256 = vpop.f32.mrb[0].mxu0
    %v4257 = vadd.f32 0.0, %v4256
    %4258 = vdwg.mxu0
    %v4260 = vsel %vm1091, %v4180, 0
    %4262 = vmatprep.subr.mxu0 %v4182
    %4263 = vmatpush1.msra.mxu0 %v4181
    %4264 = vmatprep.subr.mxu0 %v4184
    %4265 = vmatpush1.msra.mxu0 %v4183
    %4266 = vmatprep.subr.mxu0 0.0
    %4267 = vmatpush1.msra.mxu0 0.0
    %4268 = vmatprep.subr.mxu0 0.0
    %4269 = vmatpush1.msra.mxu0 0.0
    %4270 = vmatprep.subr.mxu0 0.0
    %4271 = vmatpush1.msra.mxu0 0.0
    %4272 = vmatprep.subr.mxu0 0.0
    %4273 = vmatpush1.msra.mxu0 0.0
    %4274 = vmatprep.subr.mxu0 0.0
    %4275 = vmatpush1.msra.mxu0 0.0
    %4276 = vmatprep.subr.mxu0 0.0
    %4277 = vmatpush1.msra.mxu0 0.0
    %4278 = vmatprep.subr.mxu0 0.0
    %4279 = vmatpush1.msra.mxu0 0.0
    %4280 = vmatprep.subr.mxu0 0.0
    %4281 = vmatpush1.msra.mxu0 0.0
    %4282 = vmatprep.subr.mxu0 0.0
    %4283 = vmatpush1.msra.mxu0 0.0
    %4284 = vmatprep.subr.mxu0 0.0
    %4285 = vmatpush1.msra.mxu0 0.0
    %4286 = vmatprep.subr.mxu0 0.0
    %4287 = vmatpush1.msra.mxu0 0.0
    %4288 = vmatprep.subr.mxu0 0.0
    %4289 = vmatpush1.msra.mxu0 0.0
    %4290 = vmatprep.subr.mxu0 0.0
    %4291 = vmatpush1.msra.mxu0 0.0
    %4292 = vmatprep.subr.mxu0 0.0
    %4293 = vmatpush1.msra.mxu0 0.0
    %4294 = vmatprep.subr.mxu0 0.0
    %4295 = vmatpush1.msra.mxu0 0.0
    %4296 = vmatprep.subr.mxu0 0.0
    %4297 = vmatpush1.msra.mxu0 0.0
    %4298 = vmatprep.subr.mxu0 0.0
    %4299 = vmatpush1.msra.mxu0 0.0
    %4300 = vmatprep.subr.mxu0 0.0
    %4301 = vmatpush1.msra.mxu0 0.0
    %4302 = vmatprep.subr.mxu0 0.0
    %4303 = vmatpush1.msra.mxu0 0.0
    %4304 = vmatprep.subr.mxu0 0.0
    %4305 = vmatpush1.msra.mxu0 0.0
    %4306 = vmatprep.subr.mxu0 0.0
    %4307 = vmatpush1.msra.mxu0 0.0
    %4308 = vmatprep.subr.mxu0 0.0
    %4309 = vmatpush1.msra.mxu0 0.0
    %4310 = vmatprep.subr.mxu0 0.0
    %4311 = vmatpush1.msra.mxu0 0.0
    %4312 = vmatprep.subr.mxu0 0.0
    %4313 = vmatpush1.msra.mxu0 0.0
    %4314 = vmatprep.subr.mxu0 0.0
    %4315 = vmatpush1.msra.mxu0 0.0
    %4316 = vmatprep.subr.mxu0 0.0
    %4317 = vmatpush1.msra.mxu0 0.0
    %4318 = vmatprep.subr.mxu0 0.0
    %4319 = vmatpush1.msra.mxu0 0.0
    %4320 = vmatprep.subr.mxu0 0.0
    %4321 = vmatpush1.msra.mxu0 0.0
    %4322 = vmatprep.subr.mxu0 0.0
    %4323 = vmatpush1.msra.mxu0 0.0
    %4324 = vmatprep.subr.mxu0 0.0
    %4325 = vmatpush1.msra.mxu0 0.0
    %4326 = vmatprep.mubr.f32.mxu0 0.0
    %4327 = vmatmul.mubr.f32.gmra.mrb[0].mxu0 %v4260
    %v4328 = vpop.f32.mrb[0].mxu0
    %v4329 = vadd.f32 0.0, %v4328
    %v4330 = vpop.f32.mrb[0].mxu0
    %v4331 = vadd.f32 0.0, %v4330
    %4332 = vdwg.mxu0
    %v4333 = vlaneseq
    %v4334 = vshrl.u32 %v4333, 7
    %v4335 = vsub.s32 0, %v4334
    %v4336 = vrot.slane %v4255, %v4335
    %v4337 = vlaneseq
    %v4338 = vshrl.u32 %v4337, 7
    %v4339 = vsub.s32 0, %v4338
    %v4340 = vrot.slane %v4257, %v4339
    %v4341 = vmul.f32 %v3944, %v4336
    %v4342 = vmul.f32 %v3945, %v4340
    %v4343 = vmul.f32 %v3946, %v4336
    %v4344 = vmul.f32 %v3947, %v4340
    %v4345 = vmul.f32 %v3948, %v4336
    %v4346 = vmul.f32 %v3949, %v4340
    %v4347 = vmul.f32 %v3950, %v4336
    %v4348 = vmul.f32 %v3951, %v4340
    %v4349 = vlaneseq
    %v4350 = vshrl.u32 %v4349, 7
    %v4351 = vsub.s32 0, %v4350
    %v4352 = vrot.slane %v4329, %v4351
    %v4353 = vlaneseq
    %v4354 = vshrl.u32 %v4353, 7
    %v4355 = vsub.s32 0, %v4354
    %v4356 = vrot.slane %v4331, %v4355
    %v4357 = vadd.f32 %v4341, %v4352
    %v4358 = vadd.f32 %v4342, %v4356
    %v4359 = vadd.f32 %v4343, %v4352
    %v4360 = vadd.f32 %v4344, %v4356
    %v4361 = vadd.f32 %v4345, %v4352
    %v4362 = vadd.f32 %v4346, %v4356
    %v4363 = vadd.f32 %v4347, %v4352
    %v4364 = vadd.f32 %v4348, %v4356
    %vm4365 = vcmp.gt.f32.partialorder %v4357, 0.0
    %vm4366 = vcmp.gt.f32.partialorder %v4358, 0.0
    %vm4367 = vcmp.gt.f32.partialorder %v4359, 0.0
    %vm4368 = vcmp.gt.f32.partialorder %v4360, 0.0
    %vm4369 = vcmp.gt.f32.partialorder %v4361, 0.0
    %vm4370 = vcmp.gt.f32.partialorder %v4362, 0.0
    %vm4371 = vcmp.gt.f32.partialorder %v4363, 0.0
    %vm4372 = vcmp.gt.f32.partialorder %v4364, 0.0
    %v4373 = vmul.f32 %v4357, 0.2
    %v4374 = vmul.f32 %v4358, 0.2
    %v4375 = vmul.f32 %v4359, 0.2
    %v4376 = vmul.f32 %v4360, 0.2
    %v4377 = vmul.f32 %v4361, 0.2
    %v4378 = vmul.f32 %v4362, 0.2
    %v4379 = vmul.f32 %v4363, 0.2
    %v4380 = vmul.f32 %v4364, 0.2
    %v4381 = vsel %vm4365, %v4357, %v4373
    %v4382 = vsel %vm4366, %v4358, %v4374
    %v4383 = vsel %vm4367, %v4359, %v4375
    %v4384 = vsel %vm4368, %v4360, %v4376
    %v4385 = vsel %vm4369, %v4361, %v4377
    %v4386 = vsel %vm4370, %v4362, %v4378
    %v4387 = vsel %vm4371, %v4363, %v4379
    %v4388 = vsel %vm4372, %v4364, %v4380
    %v4389 = vld [vmem:[#allocation14] sm:$0xff]
    %v4390 = vld [vmem:[#allocation14 + $0x8] sm:$0xff]
    %v4391 = vld [vmem:[#allocation14 + $0x10] sm:$0xff]
    %v4392 = vld [vmem:[#allocation14 + $0x18] sm:$0xff]
    %v4393 = vld [vmem:[#allocation14 + $0x20] sm:$0xff]
    %v4394 = vld [vmem:[#allocation14 + $0x28] sm:$0xff]
    %v4395 = vld [vmem:[#allocation14 + $0x30] sm:$0xff]
    %v4396 = vld [vmem:[#allocation14 + $0x38] sm:$0xff]
    %v4397 = vld [vmem:[#allocation14 + $0x40] sm:$0xff]
    %v4398 = vld [vmem:[#allocation14 + $0x48] sm:$0xff]
    %v4399 = vld [vmem:[#allocation14 + $0x50] sm:$0xff]
    %v4400 = vld [vmem:[#allocation14 + $0x58] sm:$0xff]
    %v4401 = vld [vmem:[#allocation14 + $0x60] sm:$0xff]
    %v4402 = vld [vmem:[#allocation14 + $0x68] sm:$0xff]
    %v4403 = vld [vmem:[#allocation14 + $0x70] sm:$0xff]
    %v4404 = vld [vmem:[#allocation14 + $0x78] sm:$0xff]
    %v4405 = vld [vmem:[#allocation14 + $0x80] sm:$0xff]
    %v4406 = vld [vmem:[#allocation14 + $0x88] sm:$0xff]
    %v4407 = vld [vmem:[#allocation14 + $0x90] sm:$0xff]
    %v4408 = vld [vmem:[#allocation14 + $0x98] sm:$0xff]
    %v4409 = vld [vmem:[#allocation14 + $0xa0] sm:$0xff]
    %v4410 = vld [vmem:[#allocation14 + $0xa8] sm:$0xff]
    %v4411 = vld [vmem:[#allocation14 + $0xb0] sm:$0xff]
    %v4412 = vld [vmem:[#allocation14 + $0xb8] sm:$0xff]
    %v4413 = vld [vmem:[#allocation14 + $0xc0] sm:$0xff]
    %v4414 = vld [vmem:[#allocation14 + $0xc8] sm:$0xff]
    %v4415 = vld [vmem:[#allocation14 + $0xd0] sm:$0xff]
    %v4416 = vld [vmem:[#allocation14 + $0xd8] sm:$0xff]
    %v4417 = vld [vmem:[#allocation14 + $0xe0] sm:$0xff]
    %v4418 = vld [vmem:[#allocation14 + $0xe8] sm:$0xff]
    %v4419 = vld [vmem:[#allocation14 + $0xf0] sm:$0xff]
    %v4420 = vld [vmem:[#allocation14 + $0xf8] sm:$0xff]
    %v4421 = vld [vmem:[#allocation15] sm:$0x1]
    %v4423 = vlaneseq
    %v4424 = vshrl.u32 %v4423, 7
    %v4425 = vsub.s32 0, %v4424
    %v4426 = vrot.slane %v4421, %v4425
    %4428 = vmatprep.subr.mxu0 0.0
    %4429 = vmatpush1.msra.mxu0 %v4389
    %4430 = vmatprep.subr.mxu0 0.0
    %4431 = vmatpush1.msra.mxu0 %v4390
    %4432 = vmatprep.subr.mxu0 0.0
    %4433 = vmatpush1.msra.mxu0 %v4391
    %4434 = vmatprep.subr.mxu0 0.0
    %4435 = vmatpush1.msra.mxu0 %v4392
    %4436 = vmatprep.subr.mxu0 0.0
    %4437 = vmatpush1.msra.mxu0 %v4393
    %4438 = vmatprep.subr.mxu0 0.0
    %4439 = vmatpush1.msra.mxu0 %v4394
    %4440 = vmatprep.subr.mxu0 0.0
    %4441 = vmatpush1.msra.mxu0 %v4395
    %4442 = vmatprep.subr.mxu0 0.0
    %4443 = vmatpush1.msra.mxu0 %v4396
    %4444 = vmatprep.subr.mxu0 0.0
    %4445 = vmatpush1.msra.mxu0 %v4397
    %4446 = vmatprep.subr.mxu0 0.0
    %4447 = vmatpush1.msra.mxu0 %v4398
    %4448 = vmatprep.subr.mxu0 0.0
    %4449 = vmatpush1.msra.mxu0 %v4399
    %4450 = vmatprep.subr.mxu0 0.0
    %4451 = vmatpush1.msra.mxu0 %v4400
    %4452 = vmatprep.subr.mxu0 0.0
    %4453 = vmatpush1.msra.mxu0 %v4401
    %4454 = vmatprep.subr.mxu0 0.0
    %4455 = vmatpush1.msra.mxu0 %v4402
    %4456 = vmatprep.subr.mxu0 0.0
    %4457 = vmatpush1.msra.mxu0 %v4403
    %4458 = vmatprep.subr.mxu0 0.0
    %4459 = vmatpush1.msra.mxu0 %v4404
    %4460 = vmatprep.subr.mxu0 0.0
    %4461 = vmatpush1.msra.mxu0 %v4405
    %4462 = vmatprep.subr.mxu0 0.0
    %4463 = vmatpush1.msra.mxu0 %v4406
    %4464 = vmatprep.subr.mxu0 0.0
    %4465 = vmatpush1.msra.mxu0 %v4407
    %4466 = vmatprep.subr.mxu0 0.0
    %4467 = vmatpush1.msra.mxu0 %v4408
    %4468 = vmatprep.subr.mxu0 0.0
    %4469 = vmatpush1.msra.mxu0 %v4409
    %4470 = vmatprep.subr.mxu0 0.0
    %4471 = vmatpush1.msra.mxu0 %v4410
    %4472 = vmatprep.subr.mxu0 0.0
    %4473 = vmatpush1.msra.mxu0 %v4411
    %4474 = vmatprep.subr.mxu0 0.0
    %4475 = vmatpush1.msra.mxu0 %v4412
    %4476 = vmatprep.subr.mxu0 0.0
    %4477 = vmatpush1.msra.mxu0 %v4413
    %4478 = vmatprep.subr.mxu0 0.0
    %4479 = vmatpush1.msra.mxu0 %v4414
    %4480 = vmatprep.subr.mxu0 0.0
    %4481 = vmatpush1.msra.mxu0 %v4415
    %4482 = vmatprep.subr.mxu0 0.0
    %4483 = vmatpush1.msra.mxu0 %v4416
    %4484 = vmatprep.subr.mxu0 0.0
    %4485 = vmatpush1.msra.mxu0 %v4417
    %4486 = vmatprep.subr.mxu0 0.0
    %4487 = vmatpush1.msra.mxu0 %v4418
    %4488 = vmatprep.subr.mxu0 0.0
    %4489 = vmatpush1.msra.mxu0 %v4419
    %4490 = vmatprep.subr.mxu0 0.0
    %4491 = vmatpush1.msra.mxu0 %v4420
    %4492 = vmatprep.mubr.f32.mxu0 %v4382
    %4493 = vmatmul.mubr.f32.gmra.mrb[0].mxu0 %v4381
    %v4494 = vpop.f32.mrb[0].mxu0
    %v4495 = vadd.f32 %v4426, %v4494
    %v4496 = vpop.f32.mrb[0].mxu0
    %4497 = vmatprep.mubr.f32.mxu0 %v4384
    %4498 = vmatmul.mubr.f32.gmra.mrb[0].mxu0 %v4383
    %v4499 = vpop.f32.mrb[0].mxu0
    %v4500 = vadd.f32 %v4426, %v4499
    %v4501 = vpop.f32.mrb[0].mxu0
    %4502 = vmatprep.mubr.f32.mxu0 %v4386
    %4503 = vmatmul.mubr.f32.gmra.mrb[0].mxu0 %v4385
    %v4504 = vpop.f32.mrb[0].mxu0
    %v4505 = vadd.f32 %v4426, %v4504
    %v4506 = vpop.f32.mrb[0].mxu0
    %4507 = vmatprep.mubr.f32.mxu0 %v4388
    %4508 = vmatmul.mubr.f32.gmra.mrb[0].mxu0 %v4387
    %v4509 = vpop.f32.mrb[0].mxu0
    %v4510 = vadd.f32 %v4426, %v4509
    %v4511 = vpop.f32.mrb[0].mxu0
    %4512 = vdwg.mxu0
    %v4513 = vld [vmem:[#allocation17] sm:$0xff]
    %v4514 = vld [vmem:[#allocation17 + $0x8] sm:$0xff]
    %v4515 = vld [vmem:[#allocation17 + $0x10] sm:$0xff]
    %v4516 = vld [vmem:[#allocation17 + $0x18] sm:$0xff]
    %v4517 = vld [vmem:[#allocation17 + $0x20] sm:$0xff]
    %v4518 = vld [vmem:[#allocation17 + $0x28] sm:$0xff]
    %v4519 = vld [vmem:[#allocation17 + $0x30] sm:$0xff]
    %v4520 = vld [vmem:[#allocation17 + $0x38] sm:$0xff]
    %v4521 = vld [vmem:[#allocation17 + $0x40] sm:$0xff]
    %v4522 = vld [vmem:[#allocation17 + $0x48] sm:$0xff]
    %v4523 = vld [vmem:[#allocation17 + $0x50] sm:$0xff]
    %v4524 = vld [vmem:[#allocation17 + $0x58] sm:$0xff]
    %v4525 = vld [vmem:[#allocation17 + $0x60] sm:$0xff]
    %v4526 = vld [vmem:[#allocation17 + $0x68] sm:$0xff]
    %v4527 = vld [vmem:[#allocation17 + $0x70] sm:$0xff]
    %v4528 = vld [vmem:[#allocation17 + $0x78] sm:$0xff]
    %v4529 = vld [vmem:[#allocation17 + $0x80] sm:$0xff]
    %v4530 = vld [vmem:[#allocation17 + $0x88] sm:$0xff]
    %v4531 = vld [vmem:[#allocation17 + $0x90] sm:$0xff]
    %v4532 = vld [vmem:[#allocation17 + $0x98] sm:$0xff]
    %v4533 = vld [vmem:[#allocation17 + $0xa0] sm:$0xff]
    %v4534 = vld [vmem:[#allocation17 + $0xa8] sm:$0xff]
    %v4535 = vld [vmem:[#allocation17 + $0xb0] sm:$0xff]
    %v4536 = vld [vmem:[#allocation17 + $0xb8] sm:$0xff]
    %v4537 = vld [vmem:[#allocation17 + $0xc0] sm:$0xff]
    %v4538 = vld [vmem:[#allocation17 + $0xc8] sm:$0xff]
    %v4539 = vld [vmem:[#allocation17 + $0xd0] sm:$0xff]
    %v4540 = vld [vmem:[#allocation17 + $0xd8] sm:$0xff]
    %v4541 = vld [vmem:[#allocation17 + $0xe0] sm:$0xff]
    %v4542 = vld [vmem:[#allocation17 + $0xe8] sm:$0xff]
    %v4543 = vld [vmem:[#allocation17 + $0xf0] sm:$0xff]
    %v4544 = vld [vmem:[#allocation17 + $0xf8] sm:$0xff]
    %v4545 = vld [vmem:[#allocation18] sm:$0x1]
    %v4547 = vlaneseq
    %v4548 = vshrl.u32 %v4547, 7
    %v4549 = vsub.s32 0, %v4548
    %v4550 = vrot.slane %v4545, %v4549
    %4552 = vmatprep.subr.mxu0 0.0
    %4553 = vmatpush1.msra.mxu0 %v4513
    %4554 = vmatprep.subr.mxu0 0.0
    %4555 = vmatpush1.msra.mxu0 %v4514
    %4556 = vmatprep.subr.mxu0 0.0
    %4557 = vmatpush1.msra.mxu0 %v4515
    %4558 = vmatprep.subr.mxu0 0.0
    %4559 = vmatpush1.msra.mxu0 %v4516
    %4560 = vmatprep.subr.mxu0 0.0
    %4561 = vmatpush1.msra.mxu0 %v4517
    %4562 = vmatprep.subr.mxu0 0.0
    %4563 = vmatpush1.msra.mxu0 %v4518
    %4564 = vmatprep.subr.mxu0 0.0
    %4565 = vmatpush1.msra.mxu0 %v4519
    %4566 = vmatprep.subr.mxu0 0.0
    %4567 = vmatpush1.msra.mxu0 %v4520
    %4568 = vmatprep.subr.mxu0 0.0
    %4569 = vmatpush1.msra.mxu0 %v4521
    %4570 = vmatprep.subr.mxu0 0.0
    %4571 = vmatpush1.msra.mxu0 %v4522
    %4572 = vmatprep.subr.mxu0 0.0
    %4573 = vmatpush1.msra.mxu0 %v4523
    %4574 = vmatprep.subr.mxu0 0.0
    %4575 = vmatpush1.msra.mxu0 %v4524
    %4576 = vmatprep.subr.mxu0 0.0
    %4577 = vmatpush1.msra.mxu0 %v4525
    %4578 = vmatprep.subr.mxu0 0.0
    %4579 = vmatpush1.msra.mxu0 %v4526
    %4580 = vmatprep.subr.mxu0 0.0
    %4581 = vmatpush1.msra.mxu0 %v4527
    %4582 = vmatprep.subr.mxu0 0.0
    %4583 = vmatpush1.msra.mxu0 %v4528
    %4584 = vmatprep.subr.mxu0 0.0
    %4585 = vmatpush1.msra.mxu0 %v4529
    %4586 = vmatprep.subr.mxu0 0.0
    %4587 = vmatpush1.msra.mxu0 %v4530
    %4588 = vmatprep.subr.mxu0 0.0
    %4589 = vmatpush1.msra.mxu0 %v4531
    %4590 = vmatprep.subr.mxu0 0.0
    %4591 = vmatpush1.msra.mxu0 %v4532
    %4592 = vmatprep.subr.mxu0 0.0
    %4593 = vmatpush1.msra.mxu0 %v4533
    %4594 = vmatprep.subr.mxu0 0.0
    %4595 = vmatpush1.msra.mxu0 %v4534
    %4596 = vmatprep.subr.mxu0 0.0
    %4597 = vmatpush1.msra.mxu0 %v4535
    %4598 = vmatprep.subr.mxu0 0.0
    %4599 = vmatpush1.msra.mxu0 %v4536
    %4600 = vmatprep.subr.mxu0 0.0
    %4601 = vmatpush1.msra.mxu0 %v4537
    %4602 = vmatprep.subr.mxu0 0.0
    %4603 = vmatpush1.msra.mxu0 %v4538
    %4604 = vmatprep.subr.mxu0 0.0
    %4605 = vmatpush1.msra.mxu0 %v4539
    %4606 = vmatprep.subr.mxu0 0.0
    %4607 = vmatpush1.msra.mxu0 %v4540
    %4608 = vmatprep.subr.mxu0 0.0
    %4609 = vmatpush1.msra.mxu0 %v4541
    %4610 = vmatprep.subr.mxu0 0.0
    %4611 = vmatpush1.msra.mxu0 %v4542
    %4612 = vmatprep.subr.mxu0 0.0
    %4613 = vmatpush1.msra.mxu0 %v4543
    %4614 = vmatprep.subr.mxu0 0.0
    %4615 = vmatpush1.msra.mxu0 %v4544
    %4616 = vmatprep.mubr.f32.mxu0 %v4382
    %4617 = vmatmul.mubr.f32.gmra.mrb[0].mxu0 %v4381
    %v4618 = vpop.f32.mrb[0].mxu0
    %v4619 = vadd.f32 %v4550, %v4618
    %v4620 = vpop.f32.mrb[0].mxu0
    %4621 = vmatprep.mubr.f32.mxu0 %v4384
    %4622 = vmatmul.mubr.f32.gmra.mrb[0].mxu0 %v4383
    %v4623 = vpop.f32.mrb[0].mxu0
    %v4624 = vadd.f32 %v4550, %v4623
    %v4625 = vpop.f32.mrb[0].mxu0
    %4626 = vmatprep.mubr.f32.mxu0 %v4386
    %4627 = vmatmul.mubr.f32.gmra.mrb[0].mxu0 %v4385
    %v4628 = vpop.f32.mrb[0].mxu0
    %v4629 = vadd.f32 %v4550, %v4628
    %v4630 = vpop.f32.mrb[0].mxu0
    %4631 = vmatprep.mubr.f32.mxu0 %v4388
    %4632 = vmatmul.mubr.f32.gmra.mrb[0].mxu0 %v4387
    %v4633 = vpop.f32.mrb[0].mxu0
    %v4634 = vadd.f32 %v4550, %v4633
    %v4635 = vpop.f32.mrb[0].mxu0
    %4636 = vdwg.mxu0
    %vm4637 = vcmask 261120
    %4638 = vst.msk [vmem:[#allocation28] sm:$0xff] %vm4637, %v4495
    %4639 = vst.msk [vmem:[#allocation28 + $0x8] sm:$0xff] %vm4637, %v4500
    %4640 = vst.msk [vmem:[#allocation28 + $0x10] sm:$0xff] %vm4637, %v4505
    %4641 = vst.msk [vmem:[#allocation28 + $0x18] sm:$0xff] %vm4637, %v4510
    %4642 = vst.msk [vmem:[#allocation30] sm:$0xff] %vm4637, %v4619
    %4643 = vst.msk [vmem:[#allocation30 + $0x8] sm:$0xff] %vm4637, %v4624
    %4644 = vst.msk [vmem:[#allocation30 + $0x10] sm:$0xff] %vm4637, %v4629
    %4645 = vst.msk [vmem:[#allocation30 + $0x18] sm:$0xff] %vm4637, %v4634
    %v4646 = vld [vmem:[#allocation20] sm:$0xff]
    %v4647 = vld [vmem:[#allocation20 + $0x8] sm:$0xff]
    %v4648 = vld [vmem:[#allocation20 + $0x10] sm:$0xff]
    %v4649 = vld [vmem:[#allocation20 + $0x18] sm:$0xff]
    %v4650 = vmul.f32 %v4619, 1.442695
    %v4651 = vpow.pop %v4650
    %v4652 = vmul.f32 %v4624, 1.442695
    %v4653 = vpow.pop %v4652
    %v4654 = vmul.f32 %v4629, 1.442695
    %v4655 = vpow.pop %v4654
    %v4656 = vmul.f32 %v4634, 1.442695
    %v4657 = vpow.pop %v4656
    %v4658 = vmul.f32 %v4646, %v4651
    %v4659 = vmul.f32 %v4647, %v4653
    %v4660 = vmul.f32 %v4648, %v4655
    %v4661 = vmul.f32 %v4649, %v4657
    %v4662 = vadd.f32 %v4495, %v4658
    %v4663 = vadd.f32 %v4500, %v4659
    %v4664 = vadd.f32 %v4505, %v4660
    %v4665 = vadd.f32 %v4510, %v4661
    %v4666 = vld [vmem:[#allocation21] sm:$0xff]
    %v4667 = vld [vmem:[#allocation21 + $0x8] sm:$0xff]
    %v4668 = vld [vmem:[#allocation21 + $0x10] sm:$0xff]
    %v4669 = vld [vmem:[#allocation21 + $0x18] sm:$0xff]
    %v4670 = vld [vmem:[#allocation21 + $0x20] sm:$0xff]
    %v4671 = vld [vmem:[#allocation21 + $0x28] sm:$0xff]
    %v4672 = vld [vmem:[#allocation21 + $0x30] sm:$0xff]
    %v4673 = vld [vmem:[#allocation21 + $0x38] sm:$0xff]
    %v4674 = vld [vmem:[#allocation23] sm:$0x3]
    %v4676 = vlaneseq
    %v4677 = vshrl.u32 %v4676, 7
    %v4678 = vsub.s32 0, %v4677
    %v4679 = vrot.slane %v4674, %v4678
    %v4680 = vlaneseq
    %v4681 = vshrl.u32 %v4680, 7
    %v4682 = vsub.s32 1, %v4681
    %v4683 = vrot.slane %v4674, %v4682
    %v4687 = vsel %vm4637, %v4662, 0
    %v4690 = vsel %vm4637, %v4663, 0
    %v4693 = vsel %vm4637, %v4664, 0
    %v4696 = vsel %vm4637, %v4665, 0
    %4698 = vmatprep.subr.mxu0 %v4667
    %4699 = vmatpush1.msra.mxu0 %v4666
    %4700 = vmatprep.subr.mxu0 %v4669
    %4701 = vmatpush1.msra.mxu0 %v4668
    %4702 = vmatprep.subr.mxu0 %v4671
    %4703 = vmatpush1.msra.mxu0 %v4670
    %4704 = vmatprep.subr.mxu0 %v4673
    %4705 = vmatpush1.msra.mxu0 %v4672
    %4706 = vmatprep.subr.mxu0 0.0
    %4707 = vmatpush1.msra.mxu0 0.0
    %4708 = vmatprep.subr.mxu0 0.0
    %4709 = vmatpush1.msra.mxu0 0.0
    %4710 = vmatprep.subr.mxu0 0.0
    %4711 = vmatpush1.msra.mxu0 0.0
    %4712 = vmatprep.subr.mxu0 0.0
    %4713 = vmatpush1.msra.mxu0 0.0
    %4714 = vmatprep.subr.mxu0 0.0
    %4715 = vmatpush1.msra.mxu0 0.0
    %4716 = vmatprep.subr.mxu0 0.0
    %4717 = vmatpush1.msra.mxu0 0.0
    %4718 = vmatprep.subr.mxu0 0.0
    %4719 = vmatpush1.msra.mxu0 0.0
    %4720 = vmatprep.subr.mxu0 0.0
    %4721 = vmatpush1.msra.mxu0 0.0
    %4722 = vmatprep.subr.mxu0 0.0
    %4723 = vmatpush1.msra.mxu0 0.0
    %4724 = vmatprep.subr.mxu0 0.0
    %4725 = vmatpush1.msra.mxu0 0.0
    %4726 = vmatprep.subr.mxu0 0.0
    %4727 = vmatpush1.msra.mxu0 0.0
    %4728 = vmatprep.subr.mxu0 0.0
    %4729 = vmatpush1.msra.mxu0 0.0
    %4730 = vmatprep.subr.mxu0 0.0
    %4731 = vmatpush1.msra.mxu0 0.0
    %4732 = vmatprep.subr.mxu0 0.0
    %4733 = vmatpush1.msra.mxu0 0.0
    %4734 = vmatprep.subr.mxu0 0.0
    %4735 = vmatpush1.msra.mxu0 0.0
    %4736 = vmatprep.subr.mxu0 0.0
    %4737 = vmatpush1.msra.mxu0 0.0
    %4738 = vmatprep.subr.mxu0 0.0
    %4739 = vmatpush1.msra.mxu0 0.0
    %4740 = vmatprep.subr.mxu0 0.0
    %4741 = vmatpush1.msra.mxu0 0.0
    %4742 = vmatprep.subr.mxu0 0.0
    %4743 = vmatpush1.msra.mxu0 0.0
    %4744 = vmatprep.subr.mxu0 0.0
    %4745 = vmatpush1.msra.mxu0 0.0
    %4746 = vmatprep.subr.mxu0 0.0
    %4747 = vmatpush1.msra.mxu0 0.0
    %4748 = vmatprep.subr.mxu0 0.0
    %4749 = vmatpush1.msra.mxu0 0.0
    %4750 = vmatprep.subr.mxu0 0.0
    %4751 = vmatpush1.msra.mxu0 0.0
    %4752 = vmatprep.subr.mxu0 0.0
    %4753 = vmatpush1.msra.mxu0 0.0
    %4754 = vmatprep.subr.mxu0 0.0
    %4755 = vmatpush1.msra.mxu0 0.0
    %4756 = vmatprep.subr.mxu0 0.0
    %4757 = vmatpush1.msra.mxu0 0.0
    %4758 = vmatprep.subr.mxu0 0.0
    %4759 = vmatpush1.msra.mxu0 0.0
    %4760 = vmatprep.subr.mxu0 0.0
    %4761 = vmatpush1.msra.mxu0 0.0
    %4762 = vmatprep.mubr.f32.mxu0 0.0
    %4763 = vmatmul.mubr.f32.gmra.mrb[0].mxu0 %v4687
    %v4764 = vpop.f32.mrb[0].mxu0
    %v4765 = vadd.f32 %v4679, %v4764
    %v4766 = vpop.f32.mrb[0].mxu0
    %v4767 = vadd.f32 %v4683, %v4766
    %4768 = vmatprep.mubr.f32.mxu0 0.0
    %4769 = vmatmul.mubr.f32.gmra.mrb[0].mxu0 %v4690
    %v4770 = vpop.f32.mrb[0].mxu0
    %v4771 = vadd.f32 %v4679, %v4770
    %v4772 = vpop.f32.mrb[0].mxu0
    %v4773 = vadd.f32 %v4683, %v4772
    %4774 = vmatprep.mubr.f32.mxu0 0.0
    %4775 = vmatmul.mubr.f32.gmra.mrb[0].mxu0 %v4693
    %v4776 = vpop.f32.mrb[0].mxu0
    %v4777 = vadd.f32 %v4679, %v4776
    %v4778 = vpop.f32.mrb[0].mxu0
    %v4779 = vadd.f32 %v4683, %v4778
    %4780 = vmatprep.mubr.f32.mxu0 0.0
    %4781 = vmatmul.mubr.f32.gmra.mrb[0].mxu0 %v4696
    %v4782 = vpop.f32.mrb[0].mxu0
    %v4783 = vadd.f32 %v4679, %v4782
    %v4784 = vpop.f32.mrb[0].mxu0
    %v4785 = vadd.f32 %v4683, %v4784
    %4786 = vdwg.mxu0
    %v4795 = vrot.slane %v4765, 6
    %v4796 = vrot.slane %v4767, 6
    %v4797 = vrot.slane %v4771, 6
    %v4798 = vsel %vm272, %v4795, %v4797
    %v4799 = vrot.slane %v4773, 6
    %v4800 = vsel %vm272, %v4796, %v4799
    %v4801 = vrot.slane %v4777, 6
    %v4802 = vsel %vm272, %v4797, %v4801
    %v4803 = vrot.slane %v4779, 6
    %v4804 = vsel %vm272, %v4799, %v4803
    %v4805 = vrot.slane %v4783, 6
    %v4806 = vsel %vm272, %v4801, %v4805
    %v4807 = vrot.slane %v4785, 6
    %v4808 = vsel %vm272, %v4803, %v4807
    %4819 = vst [vmem:[#allocation2] sm:$0xfc] %v4795
    %4820 = vst [vmem:[#allocation2 + $0x8] sm:$0xfc] %v4796
    %4821 = vst [vmem:[#allocation2 + $0x10] sm:$0xff] %v4798
    %4822 = vst [vmem:[#allocation2 + $0x18] sm:$0xff] %v4800
    %4823 = vst [vmem:[#allocation2 + $0x20] sm:$0xff] %v4802
    %4824 = vst [vmem:[#allocation2 + $0x28] sm:$0xff] %v4804
    %4825 = vst [vmem:[#allocation2 + $0x30] sm:$0xff] %v4806
    %4826 = vst [vmem:[#allocation2 + $0x38] sm:$0xff] %v4808
    %4827 = vst [vmem:[#allocation2 + $0x40] sm:$0x3] %v4805
    %4828 = vst [vmem:[#allocation2 + $0x48] sm:$0x3] %v4807
    %v4829 = vld [vmem:[#allocation2] sm:$0xff]
    %v4830 = vld [vmem:[#allocation2 + $0x8] sm:$0xff]
    %v4831 = vld [vmem:[#allocation2 + $0x10] sm:$0xff]
    %v4832 = vld [vmem:[#allocation2 + $0x18] sm:$0xff]
    %v4833 = vld [vmem:[#allocation2 + $0x20] sm:$0xff]
    %v4834 = vld [vmem:[#allocation2 + $0x28] sm:$0xff]
    %v4835 = vld [vmem:[#allocation2 + $0x30] sm:$0xff]
    %v4836 = vld [vmem:[#allocation2 + $0x38] sm:$0xff]
    %v4837 = vld [vmem:[#allocation24] sm:$0xff]
    %v4838 = vld [vmem:[#allocation24 + $0x8] sm:$0xff]
    %v4839 = vld [vmem:[#allocation24 + $0x10] sm:$0xff]
    %v4840 = vld [vmem:[#allocation24 + $0x18] sm:$0xff]
    %v4841 = vld [vmem:[#allocation24 + $0x20] sm:$0xff]
    %v4842 = vld [vmem:[#allocation24 + $0x28] sm:$0xff]
    %v4843 = vld [vmem:[#allocation24 + $0x30] sm:$0xff]
    %v4844 = vld [vmem:[#allocation24 + $0x38] sm:$0xff]
    %v4845 = vld [vmem:[#allocation24 + $0x40] sm:$0xff]
    %v4846 = vld [vmem:[#allocation24 + $0x48] sm:$0xff]
    %v4847 = vld [vmem:[#allocation24 + $0x50] sm:$0xff]
    %v4848 = vld [vmem:[#allocation24 + $0x58] sm:$0xff]
    %v4849 = vld [vmem:[#allocation24 + $0x60] sm:$0xff]
    %v4850 = vld [vmem:[#allocation24 + $0x68] sm:$0xff]
    %v4851 = vld [vmem:[#allocation24 + $0x70] sm:$0xff]
    %v4852 = vld [vmem:[#allocation24 + $0x78] sm:$0xff]
    %v4853 = vld [vmem:[#allocation24 + $0x80] sm:$0xff]
    %v4854 = vld [vmem:[#allocation24 + $0x88] sm:$0xff]
    %v4855 = vld [vmem:[#allocation24 + $0x90] sm:$0xff]
    %v4856 = vld [vmem:[#allocation24 + $0x98] sm:$0xff]
    %v4857 = vld [vmem:[#allocation24 + $0xa0] sm:$0xff]
    %v4858 = vld [vmem:[#allocation24 + $0xa8] sm:$0xff]
    %v4859 = vld [vmem:[#allocation24 + $0xb0] sm:$0xff]
    %v4860 = vld [vmem:[#allocation24 + $0xb8] sm:$0xff]
    %v4861 = vld [vmem:[#allocation24 + $0xc0] sm:$0xff]
    %v4862 = vld [vmem:[#allocation24 + $0xc8] sm:$0xff]
    %v4863 = vld [vmem:[#allocation24 + $0xd0] sm:$0xff]
    %v4864 = vld [vmem:[#allocation24 + $0xd8] sm:$0xff]
    %v4865 = vld [vmem:[#allocation24 + $0xe0] sm:$0xff]
    %v4866 = vld [vmem:[#allocation24 + $0xe8] sm:$0xff]
    %v4867 = vld [vmem:[#allocation24 + $0xf0] sm:$0xff]
    %v4868 = vld [vmem:[#allocation24 + $0xf8] sm:$0xff]
    %v4869 = vld [vmem:[#allocation24 + $0x100] sm:$0xff]
    %v4870 = vld [vmem:[#allocation24 + $0x108] sm:$0xff]
    %v4871 = vld [vmem:[#allocation24 + $0x110] sm:$0xff]
    %v4872 = vld [vmem:[#allocation24 + $0x118] sm:$0xff]
    %v4873 = vld [vmem:[#allocation24 + $0x120] sm:$0xff]
    %v4874 = vld [vmem:[#allocation24 + $0x128] sm:$0xff]
    %v4875 = vld [vmem:[#allocation24 + $0x130] sm:$0xff]
    %v4876 = vld [vmem:[#allocation24 + $0x138] sm:$0xff]
    %v4877 = vld [vmem:[#allocation24 + $0x140] sm:$0xff]
    %v4878 = vld [vmem:[#allocation24 + $0x148] sm:$0xff]
    %v4879 = vld [vmem:[#allocation24 + $0x150] sm:$0xff]
    %v4880 = vld [vmem:[#allocation24 + $0x158] sm:$0xff]
    %v4881 = vld [vmem:[#allocation24 + $0x160] sm:$0xff]
    %v4882 = vld [vmem:[#allocation24 + $0x168] sm:$0xff]
    %v4883 = vld [vmem:[#allocation24 + $0x170] sm:$0xff]
    %v4884 = vld [vmem:[#allocation24 + $0x178] sm:$0xff]
    %v4885 = vld [vmem:[#allocation24 + $0x180] sm:$0xff]
    %v4886 = vld [vmem:[#allocation24 + $0x188] sm:$0xff]
    %v4887 = vld [vmem:[#allocation24 + $0x190] sm:$0xff]
    %v4888 = vld [vmem:[#allocation24 + $0x198] sm:$0xff]
    %v4889 = vld [vmem:[#allocation24 + $0x1a0] sm:$0xff]
    %v4890 = vld [vmem:[#allocation24 + $0x1a8] sm:$0xff]
    %v4891 = vld [vmem:[#allocation24 + $0x1b0] sm:$0xff]
    %v4892 = vld [vmem:[#allocation24 + $0x1b8] sm:$0xff]
    %v4893 = vld [vmem:[#allocation24 + $0x1c0] sm:$0xff]
    %v4894 = vld [vmem:[#allocation24 + $0x1c8] sm:$0xff]
    %v4895 = vld [vmem:[#allocation24 + $0x1d0] sm:$0xff]
    %v4896 = vld [vmem:[#allocation24 + $0x1d8] sm:$0xff]
    %v4897 = vld [vmem:[#allocation24 + $0x1e0] sm:$0xff]
    %v4898 = vld [vmem:[#allocation24 + $0x1e8] sm:$0xff]
    %v4899 = vld [vmem:[#allocation24 + $0x1f0] sm:$0xff]
    %v4900 = vld [vmem:[#allocation24 + $0x1f8] sm:$0xff]
    %v4901 = vld [vmem:[#allocation2] sm:$0xfc]
    %v4902 = vld [vmem:[#allocation2 + $0x8] sm:$0xfc]
    %v4903 = vld [vmem:[#allocation2 + $0x40] sm:$0x3]
    %v4904 = vld [vmem:[#allocation2 + $0x48] sm:$0x3]
    %s4905 = scalar_lea.vmem [#allocation24], 512
    %v4906 = vld [vmem:[%s4905] sm:$0xff]
    %v4907 = vld [vmem:[%s4905 + $0x8] sm:$0xff]
    %v4908 = vld [vmem:[%s4905 + $0x10] sm:$0xff]
    %v4909 = vld [vmem:[%s4905 + $0x18] sm:$0xff]
    %v4910 = vld [vmem:[%s4905 + $0x20] sm:$0xff]
    %v4911 = vld [vmem:[%s4905 + $0x28] sm:$0xff]
    %v4912 = vld [vmem:[%s4905 + $0x30] sm:$0xff]
    %v4913 = vld [vmem:[%s4905 + $0x38] sm:$0xff]
    %v4914 = vld [vmem:[%s4905 + $0x40] sm:$0xff]
    %v4915 = vld [vmem:[%s4905 + $0x48] sm:$0xff]
    %v4916 = vld [vmem:[%s4905 + $0x50] sm:$0xff]
    %v4917 = vld [vmem:[%s4905 + $0x58] sm:$0xff]
    %v4918 = vld [vmem:[%s4905 + $0x60] sm:$0xff]
    %v4919 = vld [vmem:[%s4905 + $0x68] sm:$0xff]
    %v4920 = vld [vmem:[%s4905 + $0x70] sm:$0xff]
    %v4921 = vld [vmem:[%s4905 + $0x78] sm:$0xff]
    %v4922 = vld [vmem:[%s4905 + $0x80] sm:$0xff]
    %v4923 = vld [vmem:[%s4905 + $0x88] sm:$0xff]
    %v4924 = vld [vmem:[%s4905 + $0x90] sm:$0xff]
    %v4925 = vld [vmem:[%s4905 + $0x98] sm:$0xff]
    %v4926 = vld [vmem:[%s4905 + $0xa0] sm:$0xff]
    %v4927 = vld [vmem:[%s4905 + $0xa8] sm:$0xff]
    %v4928 = vld [vmem:[%s4905 + $0xb0] sm:$0xff]
    %v4929 = vld [vmem:[%s4905 + $0xb8] sm:$0xff]
    %v4930 = vld [vmem:[%s4905 + $0xc0] sm:$0xff]
    %v4931 = vld [vmem:[%s4905 + $0xc8] sm:$0xff]
    %v4932 = vld [vmem:[%s4905 + $0xd0] sm:$0xff]
    %v4933 = vld [vmem:[%s4905 + $0xd8] sm:$0xff]
    %v4934 = vld [vmem:[%s4905 + $0xe0] sm:$0xff]
    %v4935 = vld [vmem:[%s4905 + $0xe8] sm:$0xff]
    %v4936 = vld [vmem:[%s4905 + $0xf0] sm:$0xff]
    %v4937 = vld [vmem:[%s4905 + $0xf8] sm:$0xff]
    %v4938 = vld [vmem:[%s4905 + $0x100] sm:$0xff]
    %v4939 = vld [vmem:[%s4905 + $0x108] sm:$0xff]
    %v4940 = vld [vmem:[%s4905 + $0x110] sm:$0xff]
    %v4941 = vld [vmem:[%s4905 + $0x118] sm:$0xff]
    %v4942 = vld [vmem:[%s4905 + $0x120] sm:$0xff]
    %v4943 = vld [vmem:[%s4905 + $0x128] sm:$0xff]
    %v4944 = vld [vmem:[%s4905 + $0x130] sm:$0xff]
    %v4945 = vld [vmem:[%s4905 + $0x138] sm:$0xff]
    %v4946 = vld [vmem:[%s4905 + $0x140] sm:$0xff]
    %v4947 = vld [vmem:[%s4905 + $0x148] sm:$0xff]
    %v4948 = vld [vmem:[%s4905 + $0x150] sm:$0xff]
    %v4949 = vld [vmem:[%s4905 + $0x158] sm:$0xff]
    %v4950 = vld [vmem:[%s4905 + $0x160] sm:$0xff]
    %v4951 = vld [vmem:[%s4905 + $0x168] sm:$0xff]
    %v4952 = vld [vmem:[%s4905 + $0x170] sm:$0xff]
    %v4953 = vld [vmem:[%s4905 + $0x178] sm:$0xff]
    %v4954 = vld [vmem:[%s4905 + $0x180] sm:$0xff]
    %v4955 = vld [vmem:[%s4905 + $0x188] sm:$0xff]
    %v4956 = vld [vmem:[%s4905 + $0x190] sm:$0xff]
    %v4957 = vld [vmem:[%s4905 + $0x198] sm:$0xff]
    %v4958 = vld [vmem:[%s4905 + $0x1a0] sm:$0xff]
    %v4959 = vld [vmem:[%s4905 + $0x1a8] sm:$0xff]
    %v4960 = vld [vmem:[%s4905 + $0x1b0] sm:$0xff]
    %v4961 = vld [vmem:[%s4905 + $0x1b8] sm:$0xff]
    %v4962 = vld [vmem:[%s4905 + $0x1c0] sm:$0xff]
    %v4963 = vld [vmem:[%s4905 + $0x1c8] sm:$0xff]
    %v4964 = vld [vmem:[%s4905 + $0x1d0] sm:$0xff]
    %v4965 = vld [vmem:[%s4905 + $0x1d8] sm:$0xff]
    %v4966 = vld [vmem:[%s4905 + $0x1e0] sm:$0xff]
    %v4967 = vld [vmem:[%s4905 + $0x1e8] sm:$0xff]
    %v4968 = vld [vmem:[%s4905 + $0x1f0] sm:$0xff]
    %v4969 = vld [vmem:[%s4905 + $0x1f8] sm:$0xff]
    %v4980 = vrot.slane %v4901, 2
    %v4981 = vrot.slane %v4831, 2
    %v4982 = vsel %vm458, %v4980, %v4981
    %v4983 = vrot.slane %v4902, 2
    %v4984 = vrot.slane %v4832, 2
    %v4985 = vsel %vm458, %v4983, %v4984
    %v4986 = vrot.slane %v4833, 2
    %v4987 = vsel %vm458, %v4981, %v4986
    %v4988 = vrot.slane %v4834, 2
    %v4989 = vsel %vm458, %v4984, %v4988
    %v4990 = vrot.slane %v4835, 2
    %v4991 = vsel %vm458, %v4986, %v4990
    %v4992 = vrot.slane %v4836, 2
    %v4993 = vsel %vm458, %v4988, %v4992
    %v4994 = vrot.slane %v4903, 2
    %v4995 = vsel %vm458, %v4990, %v4994
    %v4996 = vrot.slane %v4904, 2
    %v4997 = vsel %vm458, %v4992, %v4996
    %5006 = vmatprep.subr.mxu0 %v4907
    %5007 = vmatpush1.msra.mxu0 %v4906
    %5008 = vmatprep.subr.mxu0 %v4909
    %5009 = vmatpush1.msra.mxu0 %v4908
    %5010 = vmatprep.subr.mxu0 %v4911
    %5011 = vmatpush1.msra.mxu0 %v4910
    %5012 = vmatprep.subr.mxu0 %v4913
    %5013 = vmatpush1.msra.mxu0 %v4912
    %5014 = vmatprep.subr.mxu0 %v4915
    %5015 = vmatpush1.msra.mxu0 %v4914
    %5016 = vmatprep.subr.mxu0 %v4917
    %5017 = vmatpush1.msra.mxu0 %v4916
    %5018 = vmatprep.subr.mxu0 %v4919
    %5019 = vmatpush1.msra.mxu0 %v4918
    %5020 = vmatprep.subr.mxu0 %v4921
    %5021 = vmatpush1.msra.mxu0 %v4920
    %5022 = vmatprep.subr.mxu0 %v4923
    %5023 = vmatpush1.msra.mxu0 %v4922
    %5024 = vmatprep.subr.mxu0 %v4925
    %5025 = vmatpush1.msra.mxu0 %v4924
    %5026 = vmatprep.subr.mxu0 %v4927
    %5027 = vmatpush1.msra.mxu0 %v4926
    %5028 = vmatprep.subr.mxu0 %v4929
    %5029 = vmatpush1.msra.mxu0 %v4928
    %5030 = vmatprep.subr.mxu0 %v4931
    %5031 = vmatpush1.msra.mxu0 %v4930
    %5032 = vmatprep.subr.mxu0 %v4933
    %5033 = vmatpush1.msra.mxu0 %v4932
    %5034 = vmatprep.subr.mxu0 %v4935
    %5035 = vmatpush1.msra.mxu0 %v4934
    %5036 = vmatprep.subr.mxu0 %v4937
    %5037 = vmatpush1.msra.mxu0 %v4936
    %5038 = vmatprep.subr.mxu0 %v4939
    %5039 = vmatpush1.msra.mxu0 %v4938
    %5040 = vmatprep.subr.mxu0 %v4941
    %5041 = vmatpush1.msra.mxu0 %v4940
    %5042 = vmatprep.subr.mxu0 %v4943
    %5043 = vmatpush1.msra.mxu0 %v4942
    %5044 = vmatprep.subr.mxu0 %v4945
    %5045 = vmatpush1.msra.mxu0 %v4944
    %5046 = vmatprep.subr.mxu0 %v4947
    %5047 = vmatpush1.msra.mxu0 %v4946
    %5048 = vmatprep.subr.mxu0 %v4949
    %5049 = vmatpush1.msra.mxu0 %v4948
    %5050 = vmatprep.subr.mxu0 %v4951
    %5051 = vmatpush1.msra.mxu0 %v4950
    %5052 = vmatprep.subr.mxu0 %v4953
    %5053 = vmatpush1.msra.mxu0 %v4952
    %5054 = vmatprep.subr.mxu0 %v4955
    %5055 = vmatpush1.msra.mxu0 %v4954
    %5056 = vmatprep.subr.mxu0 %v4957
    %5057 = vmatpush1.msra.mxu0 %v4956
    %5058 = vmatprep.subr.mxu0 %v4959
    %5059 = vmatpush1.msra.mxu0 %v4958
    %5060 = vmatprep.subr.mxu0 %v4961
    %5061 = vmatpush1.msra.mxu0 %v4960
    %5062 = vmatprep.subr.mxu0 %v4963
    %5063 = vmatpush1.msra.mxu0 %v4962
    %5064 = vmatprep.subr.mxu0 %v4965
    %5065 = vmatpush1.msra.mxu0 %v4964
    %5066 = vmatprep.subr.mxu0 %v4967
    %5067 = vmatpush1.msra.mxu0 %v4966
    %5068 = vmatprep.subr.mxu0 %v4969
    %5069 = vmatpush1.msra.mxu0 %v4968
    %5070 = vmatprep.mubr.f32.mxu0 %v4985
    %5071 = vmatmul.mubr.f32.gmra.mrb[0].mxu0 %v4982
    %v5072 = vpop.f32.mrb[0].mxu0
    %v5073 = vadd.f32 0.0, %v5072
    %v5074 = vpop.f32.mrb[0].mxu0
    %v5075 = vadd.f32 0.0, %v5074
    %5076 = vmatprep.mubr.f32.mxu0 %v4989
    %5077 = vmatmul.mubr.f32.gmra.mrb[0].mxu0 %v4987
    %v5078 = vpop.f32.mrb[0].mxu0
    %v5079 = vadd.f32 0.0, %v5078
    %v5080 = vpop.f32.mrb[0].mxu0
    %v5081 = vadd.f32 0.0, %v5080
    %5082 = vmatprep.mubr.f32.mxu0 %v4993
    %5083 = vmatmul.mubr.f32.gmra.mrb[0].mxu0 %v4991
    %v5084 = vpop.f32.mrb[0].mxu0
    %v5085 = vadd.f32 0.0, %v5084
    %v5086 = vpop.f32.mrb[0].mxu0
    %v5087 = vadd.f32 0.0, %v5086
    %5088 = vmatprep.mubr.f32.mxu0 %v4997
    %5089 = vmatmul.mubr.f32.gmra.mrb[0].mxu0 %v4995
    %v5090 = vpop.f32.mrb[0].mxu0
    %v5091 = vadd.f32 0.0, %v5090
    %v5092 = vpop.f32.mrb[0].mxu0
    %v5093 = vadd.f32 0.0, %v5092
    %5094 = vdwg.mxu0
    %5095 = vmatprep.subr.mxu0 %v4838
    %5096 = vmatpush1.msra.mxu0 %v4837
    %5097 = vmatprep.subr.mxu0 %v4840
    %5098 = vmatpush1.msra.mxu0 %v4839
    %5099 = vmatprep.subr.mxu0 %v4842
    %5100 = vmatpush1.msra.mxu0 %v4841
    %5101 = vmatprep.subr.mxu0 %v4844
    %5102 = vmatpush1.msra.mxu0 %v4843
    %5103 = vmatprep.subr.mxu0 %v4846
    %5104 = vmatpush1.msra.mxu0 %v4845
    %5105 = vmatprep.subr.mxu0 %v4848
    %5106 = vmatpush1.msra.mxu0 %v4847
    %5107 = vmatprep.subr.mxu0 %v4850
    %5108 = vmatpush1.msra.mxu0 %v4849
    %5109 = vmatprep.subr.mxu0 %v4852
    %5110 = vmatpush1.msra.mxu0 %v4851
    %5111 = vmatprep.subr.mxu0 %v4854
    %5112 = vmatpush1.msra.mxu0 %v4853
    %5113 = vmatprep.subr.mxu0 %v4856
    %5114 = vmatpush1.msra.mxu0 %v4855
    %5115 = vmatprep.subr.mxu0 %v4858
    %5116 = vmatpush1.msra.mxu0 %v4857
    %5117 = vmatprep.subr.mxu0 %v4860
    %5118 = vmatpush1.msra.mxu0 %v4859
    %5119 = vmatprep.subr.mxu0 %v4862
    %5120 = vmatpush1.msra.mxu0 %v4861
    %5121 = vmatprep.subr.mxu0 %v4864
    %5122 = vmatpush1.msra.mxu0 %v4863
    %5123 = vmatprep.subr.mxu0 %v4866
    %5124 = vmatpush1.msra.mxu0 %v4865
    %5125 = vmatprep.subr.mxu0 %v4868
    %5126 = vmatpush1.msra.mxu0 %v4867
    %5127 = vmatprep.subr.mxu0 %v4870
    %5128 = vmatpush1.msra.mxu0 %v4869
    %5129 = vmatprep.subr.mxu0 %v4872
    %5130 = vmatpush1.msra.mxu0 %v4871
    %5131 = vmatprep.subr.mxu0 %v4874
    %5132 = vmatpush1.msra.mxu0 %v4873
    %5133 = vmatprep.subr.mxu0 %v4876
    %5134 = vmatpush1.msra.mxu0 %v4875
    %5135 = vmatprep.subr.mxu0 %v4878
    %5136 = vmatpush1.msra.mxu0 %v4877
    %5137 = vmatprep.subr.mxu0 %v4880
    %5138 = vmatpush1.msra.mxu0 %v4879
    %5139 = vmatprep.subr.mxu0 %v4882
    %5140 = vmatpush1.msra.mxu0 %v4881
    %5141 = vmatprep.subr.mxu0 %v4884
    %5142 = vmatpush1.msra.mxu0 %v4883
    %5143 = vmatprep.subr.mxu0 %v4886
    %5144 = vmatpush1.msra.mxu0 %v4885
    %5145 = vmatprep.subr.mxu0 %v4888
    %5146 = vmatpush1.msra.mxu0 %v4887
    %5147 = vmatprep.subr.mxu0 %v4890
    %5148 = vmatpush1.msra.mxu0 %v4889
    %5149 = vmatprep.subr.mxu0 %v4892
    %5150 = vmatpush1.msra.mxu0 %v4891
    %5151 = vmatprep.subr.mxu0 %v4894
    %5152 = vmatpush1.msra.mxu0 %v4893
    %5153 = vmatprep.subr.mxu0 %v4896
    %5154 = vmatpush1.msra.mxu0 %v4895
    %5155 = vmatprep.subr.mxu0 %v4898
    %5156 = vmatpush1.msra.mxu0 %v4897
    %5157 = vmatprep.subr.mxu0 %v4900
    %5158 = vmatpush1.msra.mxu0 %v4899
    %5159 = vmatprep.mubr.f32.mxu0 %v4830
    %5160 = vmatmul.mubr.f32.gmra.mrb[0].mxu0 %v4829
    %v5161 = vpop.f32.mrb[0].mxu0
    %v5162 = vadd.f32 %v5073, %v5161
    %v5163 = vpop.f32.mrb[0].mxu0
    %v5164 = vadd.f32 %v5075, %v5163
    %5165 = vmatprep.mubr.f32.mxu0 %v4832
    %5166 = vmatmul.mubr.f32.gmra.mrb[0].mxu0 %v4831
    %v5167 = vpop.f32.mrb[0].mxu0
    %v5168 = vadd.f32 %v5079, %v5167
    %v5169 = vpop.f32.mrb[0].mxu0
    %v5170 = vadd.f32 %v5081, %v5169
    %5171 = vmatprep.mubr.f32.mxu0 %v4834
    %5172 = vmatmul.mubr.f32.gmra.mrb[0].mxu0 %v4833
    %v5173 = vpop.f32.mrb[0].mxu0
    %v5174 = vadd.f32 %v5085, %v5173
    %v5175 = vpop.f32.mrb[0].mxu0
    %v5176 = vadd.f32 %v5087, %v5175
    %5177 = vmatprep.mubr.f32.mxu0 %v4836
    %5178 = vmatmul.mubr.f32.gmra.mrb[0].mxu0 %v4835
    %v5179 = vpop.f32.mrb[0].mxu0
    %v5180 = vadd.f32 %v5091, %v5179
    %v5181 = vpop.f32.mrb[0].mxu0
    %v5182 = vadd.f32 %v5093, %v5181
    %5183 = vdwg.mxu0
    %v5184 = vld [vmem:[#allocation2] sm:$0xf0]
    %v5185 = vld [vmem:[#allocation2 + $0x8] sm:$0xf0]
    %v5186 = vld [vmem:[#allocation2 + $0x40] sm:$0xf]
    %v5187 = vld [vmem:[#allocation2 + $0x48] sm:$0xf]
    %s5188 = scalar_lea.vmem [#allocation24], 1024
    %v5189 = vld [vmem:[%s5188] sm:$0xff]
    %v5190 = vld [vmem:[%s5188 + $0x8] sm:$0xff]
    %v5191 = vld [vmem:[%s5188 + $0x10] sm:$0xff]
    %v5192 = vld [vmem:[%s5188 + $0x18] sm:$0xff]
    %v5193 = vld [vmem:[%s5188 + $0x20] sm:$0xff]
    %v5194 = vld [vmem:[%s5188 + $0x28] sm:$0xff]
    %v5195 = vld [vmem:[%s5188 + $0x30] sm:$0xff]
    %v5196 = vld [vmem:[%s5188 + $0x38] sm:$0xff]
    %v5197 = vld [vmem:[%s5188 + $0x40] sm:$0xff]
    %v5198 = vld [vmem:[%s5188 + $0x48] sm:$0xff]
    %v5199 = vld [vmem:[%s5188 + $0x50] sm:$0xff]
    %v5200 = vld [vmem:[%s5188 + $0x58] sm:$0xff]
    %v5201 = vld [vmem:[%s5188 + $0x60] sm:$0xff]
    %v5202 = vld [vmem:[%s5188 + $0x68] sm:$0xff]
    %v5203 = vld [vmem:[%s5188 + $0x70] sm:$0xff]
    %v5204 = vld [vmem:[%s5188 + $0x78] sm:$0xff]
    %v5205 = vld [vmem:[%s5188 + $0x80] sm:$0xff]
    %v5206 = vld [vmem:[%s5188 + $0x88] sm:$0xff]
    %v5207 = vld [vmem:[%s5188 + $0x90] sm:$0xff]
    %v5208 = vld [vmem:[%s5188 + $0x98] sm:$0xff]
    %v5209 = vld [vmem:[%s5188 + $0xa0] sm:$0xff]
    %v5210 = vld [vmem:[%s5188 + $0xa8] sm:$0xff]
    %v5211 = vld [vmem:[%s5188 + $0xb0] sm:$0xff]
    %v5212 = vld [vmem:[%s5188 + $0xb8] sm:$0xff]
    %v5213 = vld [vmem:[%s5188 + $0xc0] sm:$0xff]
    %v5214 = vld [vmem:[%s5188 + $0xc8] sm:$0xff]
    %v5215 = vld [vmem:[%s5188 + $0xd0] sm:$0xff]
    %v5216 = vld [vmem:[%s5188 + $0xd8] sm:$0xff]
    %v5217 = vld [vmem:[%s5188 + $0xe0] sm:$0xff]
    %v5218 = vld [vmem:[%s5188 + $0xe8] sm:$0xff]
    %v5219 = vld [vmem:[%s5188 + $0xf0] sm:$0xff]
    %v5220 = vld [vmem:[%s5188 + $0xf8] sm:$0xff]
    %v5221 = vld [vmem:[%s5188 + $0x100] sm:$0xff]
    %v5222 = vld [vmem:[%s5188 + $0x108] sm:$0xff]
    %v5223 = vld [vmem:[%s5188 + $0x110] sm:$0xff]
    %v5224 = vld [vmem:[%s5188 + $0x118] sm:$0xff]
    %v5225 = vld [vmem:[%s5188 + $0x120] sm:$0xff]
    %v5226 = vld [vmem:[%s5188 + $0x128] sm:$0xff]
    %v5227 = vld [vmem:[%s5188 + $0x130] sm:$0xff]
    %v5228 = vld [vmem:[%s5188 + $0x138] sm:$0xff]
    %v5229 = vld [vmem:[%s5188 + $0x140] sm:$0xff]
    %v5230 = vld [vmem:[%s5188 + $0x148] sm:$0xff]
    %v5231 = vld [vmem:[%s5188 + $0x150] sm:$0xff]
    %v5232 = vld [vmem:[%s5188 + $0x158] sm:$0xff]
    %v5233 = vld [vmem:[%s5188 + $0x160] sm:$0xff]
    %v5234 = vld [vmem:[%s5188 + $0x168] sm:$0xff]
    %v5235 = vld [vmem:[%s5188 + $0x170] sm:$0xff]
    %v5236 = vld [vmem:[%s5188 + $0x178] sm:$0xff]
    %v5237 = vld [vmem:[%s5188 + $0x180] sm:$0xff]
    %v5238 = vld [vmem:[%s5188 + $0x188] sm:$0xff]
    %v5239 = vld [vmem:[%s5188 + $0x190] sm:$0xff]
    %v5240 = vld [vmem:[%s5188 + $0x198] sm:$0xff]
    %v5241 = vld [vmem:[%s5188 + $0x1a0] sm:$0xff]
    %v5242 = vld [vmem:[%s5188 + $0x1a8] sm:$0xff]
    %v5243 = vld [vmem:[%s5188 + $0x1b0] sm:$0xff]
    %v5244 = vld [vmem:[%s5188 + $0x1b8] sm:$0xff]
    %v5245 = vld [vmem:[%s5188 + $0x1c0] sm:$0xff]
    %v5246 = vld [vmem:[%s5188 + $0x1c8] sm:$0xff]
    %v5247 = vld [vmem:[%s5188 + $0x1d0] sm:$0xff]
    %v5248 = vld [vmem:[%s5188 + $0x1d8] sm:$0xff]
    %v5249 = vld [vmem:[%s5188 + $0x1e0] sm:$0xff]
    %v5250 = vld [vmem:[%s5188 + $0x1e8] sm:$0xff]
    %v5251 = vld [vmem:[%s5188 + $0x1f0] sm:$0xff]
    %v5252 = vld [vmem:[%s5188 + $0x1f8] sm:$0xff]
    %v5257 = vrot.slane %v5184, 4
    %v5258 = vrot.slane %v4831, 4
    %v5259 = vsel %vm736, %v5257, %v5258
    %v5260 = vrot.slane %v5185, 4
    %v5261 = vrot.slane %v4832, 4
    %v5262 = vsel %vm736, %v5260, %v5261
    %v5263 = vrot.slane %v4833, 4
    %v5264 = vsel %vm736, %v5258, %v5263
    %v5265 = vrot.slane %v4834, 4
    %v5266 = vsel %vm736, %v5261, %v5265
    %v5267 = vrot.slane %v4835, 4
    %v5268 = vsel %vm736, %v5263, %v5267
    %v5269 = vrot.slane %v4836, 4
    %v5270 = vsel %vm736, %v5265, %v5269
    %v5271 = vrot.slane %v5186, 4
    %v5272 = vsel %vm736, %v5267, %v5271
    %v5273 = vrot.slane %v5187, 4
    %v5274 = vsel %vm736, %v5269, %v5273
    %5283 = vmatprep.subr.mxu0 %v5190
    %5284 = vmatpush1.msra.mxu0 %v5189
    %5285 = vmatprep.subr.mxu0 %v5192
    %5286 = vmatpush1.msra.mxu0 %v5191
    %5287 = vmatprep.subr.mxu0 %v5194
    %5288 = vmatpush1.msra.mxu0 %v5193
    %5289 = vmatprep.subr.mxu0 %v5196
    %5290 = vmatpush1.msra.mxu0 %v5195
    %5291 = vmatprep.subr.mxu0 %v5198
    %5292 = vmatpush1.msra.mxu0 %v5197
    %5293 = vmatprep.subr.mxu0 %v5200
    %5294 = vmatpush1.msra.mxu0 %v5199
    %5295 = vmatprep.subr.mxu0 %v5202
    %5296 = vmatpush1.msra.mxu0 %v5201
    %5297 = vmatprep.subr.mxu0 %v5204
    %5298 = vmatpush1.msra.mxu0 %v5203
    %5299 = vmatprep.subr.mxu0 %v5206
    %5300 = vmatpush1.msra.mxu0 %v5205
    %5301 = vmatprep.subr.mxu0 %v5208
    %5302 = vmatpush1.msra.mxu0 %v5207
    %5303 = vmatprep.subr.mxu0 %v5210
    %5304 = vmatpush1.msra.mxu0 %v5209
    %5305 = vmatprep.subr.mxu0 %v5212
    %5306 = vmatpush1.msra.mxu0 %v5211
    %5307 = vmatprep.subr.mxu0 %v5214
    %5308 = vmatpush1.msra.mxu0 %v5213
    %5309 = vmatprep.subr.mxu0 %v5216
    %5310 = vmatpush1.msra.mxu0 %v5215
    %5311 = vmatprep.subr.mxu0 %v5218
    %5312 = vmatpush1.msra.mxu0 %v5217
    %5313 = vmatprep.subr.mxu0 %v5220
    %5314 = vmatpush1.msra.mxu0 %v5219
    %5315 = vmatprep.subr.mxu0 %v5222
    %5316 = vmatpush1.msra.mxu0 %v5221
    %5317 = vmatprep.subr.mxu0 %v5224
    %5318 = vmatpush1.msra.mxu0 %v5223
    %5319 = vmatprep.subr.mxu0 %v5226
    %5320 = vmatpush1.msra.mxu0 %v5225
    %5321 = vmatprep.subr.mxu0 %v5228
    %5322 = vmatpush1.msra.mxu0 %v5227
    %5323 = vmatprep.subr.mxu0 %v5230
    %5324 = vmatpush1.msra.mxu0 %v5229
    %5325 = vmatprep.subr.mxu0 %v5232
    %5326 = vmatpush1.msra.mxu0 %v5231
    %5327 = vmatprep.subr.mxu0 %v5234
    %5328 = vmatpush1.msra.mxu0 %v5233
    %5329 = vmatprep.subr.mxu0 %v5236
    %5330 = vmatpush1.msra.mxu0 %v5235
    %5331 = vmatprep.subr.mxu0 %v5238
    %5332 = vmatpush1.msra.mxu0 %v5237
    %5333 = vmatprep.subr.mxu0 %v5240
    %5334 = vmatpush1.msra.mxu0 %v5239
    %5335 = vmatprep.subr.mxu0 %v5242
    %5336 = vmatpush1.msra.mxu0 %v5241
    %5337 = vmatprep.subr.mxu0 %v5244
    %5338 = vmatpush1.msra.mxu0 %v5243
    %5339 = vmatprep.subr.mxu0 %v5246
    %5340 = vmatpush1.msra.mxu0 %v5245
    %5341 = vmatprep.subr.mxu0 %v5248
    %5342 = vmatpush1.msra.mxu0 %v5247
    %5343 = vmatprep.subr.mxu0 %v5250
    %5344 = vmatpush1.msra.mxu0 %v5249
    %5345 = vmatprep.subr.mxu0 %v5252
    %5346 = vmatpush1.msra.mxu0 %v5251
    %5347 = vmatprep.mubr.f32.mxu0 %v5262
    %5348 = vmatmul.mubr.f32.gmra.mrb[0].mxu0 %v5259
    %v5349 = vpop.f32.mrb[0].mxu0
    %v5350 = vadd.f32 0.0, %v5349
    %v5351 = vpop.f32.mrb[0].mxu0
    %v5352 = vadd.f32 0.0, %v5351
    %5353 = vmatprep.mubr.f32.mxu0 %v5266
    %5354 = vmatmul.mubr.f32.gmra.mrb[0].mxu0 %v5264
    %v5355 = vpop.f32.mrb[0].mxu0
    %v5356 = vadd.f32 0.0, %v5355
    %v5357 = vpop.f32.mrb[0].mxu0
    %v5358 = vadd.f32 0.0, %v5357
    %5359 = vmatprep.mubr.f32.mxu0 %v5270
    %5360 = vmatmul.mubr.f32.gmra.mrb[0].mxu0 %v5268
    %v5361 = vpop.f32.mrb[0].mxu0
    %v5362 = vadd.f32 0.0, %v5361
    %v5363 = vpop.f32.mrb[0].mxu0
    %v5364 = vadd.f32 0.0, %v5363
    %5365 = vmatprep.mubr.f32.mxu0 %v5274
    %5366 = vmatmul.mubr.f32.gmra.mrb[0].mxu0 %v5272
    %v5367 = vpop.f32.mrb[0].mxu0
    %v5368 = vadd.f32 0.0, %v5367
    %v5369 = vpop.f32.mrb[0].mxu0
    %v5370 = vadd.f32 0.0, %v5369
    %5371 = vdwg.mxu0
    %v5372 = vadd.f32 %v5162, %v5350
    %v5373 = vadd.f32 %v5164, %v5352
    %v5374 = vadd.f32 %v5168, %v5356
    %v5375 = vadd.f32 %v5170, %v5358
    %v5376 = vadd.f32 %v5174, %v5362
    %v5377 = vadd.f32 %v5176, %v5364
    %v5378 = vadd.f32 %v5180, %v5368
    %v5379 = vadd.f32 %v5182, %v5370
    %v5380 = vld [vmem:[#allocation26] sm:$0x3]
    %v5382 = vlaneseq
    %v5383 = vshrl.u32 %v5382, 7
    %v5384 = vsub.s32 0, %v5383
    %v5385 = vrot.slane %v5380, %v5384
    %v5386 = vlaneseq
    %v5387 = vshrl.u32 %v5386, 7
    %v5388 = vsub.s32 1, %v5387
    %v5389 = vrot.slane %v5380, %v5388
    %v5392 = vadd.f32 %v5372, %v5385
    %v5393 = vadd.f32 %v5373, %v5389
    %v5394 = vadd.f32 %v5374, %v5385
    %v5395 = vadd.f32 %v5375, %v5389
    %v5396 = vadd.f32 %v5376, %v5385
    %v5397 = vadd.f32 %v5377, %v5389
    %v5398 = vadd.f32 %v5378, %v5385
    %v5399 = vadd.f32 %v5379, %v5389
    %v5400 = vmax.f32 %v5392, 0.0
    %v5401 = vmax.f32 %v5393, 0.0
    %v5402 = vmax.f32 %v5394, 0.0
    %v5403 = vmax.f32 %v5395, 0.0
    %v5404 = vmax.f32 %v5396, 0.0
    %v5405 = vmax.f32 %v5397, 0.0
    %v5406 = vmax.f32 %v5398, 0.0
    %v5407 = vmax.f32 %v5399, 0.0
    %v5416 = vrot.slane %v5400, 6
    %v5417 = vrot.slane %v5401, 6
    %v5418 = vrot.slane %v5402, 6
    %v5419 = vsel %vm272, %v5416, %v5418
    %v5420 = vrot.slane %v5403, 6
    %v5421 = vsel %vm272, %v5417, %v5420
    %v5422 = vrot.slane %v5404, 6
    %v5423 = vsel %vm272, %v5418, %v5422
    %v5424 = vrot.slane %v5405, 6
    %v5425 = vsel %vm272, %v5420, %v5424
    %v5426 = vrot.slane %v5406, 6
    %v5427 = vsel %vm272, %v5422, %v5426
    %v5428 = vrot.slane %v5407, 6
    %v5429 = vsel %vm272, %v5424, %v5428
    %5440 = vst [vmem:[#allocation2] sm:$0xfc] %v5416
    %5441 = vst [vmem:[#allocation2 + $0x8] sm:$0xfc] %v5417
    %5442 = vst [vmem:[#allocation2 + $0x10] sm:$0xff] %v5419
    %5443 = vst [vmem:[#allocation2 + $0x18] sm:$0xff] %v5421
    %5444 = vst [vmem:[#allocation2 + $0x20] sm:$0xff] %v5423
    %5445 = vst [vmem:[#allocation2 + $0x28] sm:$0xff] %v5425
    %5446 = vst [vmem:[#allocation2 + $0x30] sm:$0xff] %v5427
    %5447 = vst [vmem:[#allocation2 + $0x38] sm:$0xff] %v5429
    %5448 = vst [vmem:[#allocation2 + $0x40] sm:$0x3] %v5426
    %5449 = vst [vmem:[#allocation2 + $0x48] sm:$0x3] %v5428
    %v5450 = vld [vmem:[#allocation2] sm:$0xff]
    %v5451 = vld [vmem:[#allocation2 + $0x8] sm:$0xff]
    %v5452 = vld [vmem:[#allocation2 + $0x10] sm:$0xff]
    %v5453 = vld [vmem:[#allocation2 + $0x18] sm:$0xff]
    %v5454 = vld [vmem:[#allocation2 + $0x20] sm:$0xff]
    %v5455 = vld [vmem:[#allocation2 + $0x28] sm:$0xff]
    %v5456 = vld [vmem:[#allocation2 + $0x30] sm:$0xff]
    %v5457 = vld [vmem:[#allocation2 + $0x38] sm:$0xff]
    %s5458 = scalar_lea.vmem [#allocation24], 1536
    %v5459 = vld [vmem:[%s5458] sm:$0xff]
    %v5460 = vld [vmem:[%s5458 + $0x8] sm:$0xff]
    %v5461 = vld [vmem:[%s5458 + $0x10] sm:$0xff]
    %v5462 = vld [vmem:[%s5458 + $0x18] sm:$0xff]
    %v5463 = vld [vmem:[%s5458 + $0x20] sm:$0xff]
    %v5464 = vld [vmem:[%s5458 + $0x28] sm:$0xff]
    %v5465 = vld [vmem:[%s5458 + $0x30] sm:$0xff]
    %v5466 = vld [vmem:[%s5458 + $0x38] sm:$0xff]
    %v5467 = vld [vmem:[%s5458 + $0x40] sm:$0xff]
    %v5468 = vld [vmem:[%s5458 + $0x48] sm:$0xff]
    %v5469 = vld [vmem:[%s5458 + $0x50] sm:$0xff]
    %v5470 = vld [vmem:[%s5458 + $0x58] sm:$0xff]
    %v5471 = vld [vmem:[%s5458 + $0x60] sm:$0xff]
    %v5472 = vld [vmem:[%s5458 + $0x68] sm:$0xff]
    %v5473 = vld [vmem:[%s5458 + $0x70] sm:$0xff]
    %v5474 = vld [vmem:[%s5458 + $0x78] sm:$0xff]
    %v5475 = vld [vmem:[%s5458 + $0x80] sm:$0xff]
    %v5476 = vld [vmem:[%s5458 + $0x88] sm:$0xff]
    %v5477 = vld [vmem:[%s5458 + $0x90] sm:$0xff]
    %v5478 = vld [vmem:[%s5458 + $0x98] sm:$0xff]
    %v5479 = vld [vmem:[%s5458 + $0xa0] sm:$0xff]
    %v5480 = vld [vmem:[%s5458 + $0xa8] sm:$0xff]
    %v5481 = vld [vmem:[%s5458 + $0xb0] sm:$0xff]
    %v5482 = vld [vmem:[%s5458 + $0xb8] sm:$0xff]
    %v5483 = vld [vmem:[%s5458 + $0xc0] sm:$0xff]
    %v5484 = vld [vmem:[%s5458 + $0xc8] sm:$0xff]
    %v5485 = vld [vmem:[%s5458 + $0xd0] sm:$0xff]
    %v5486 = vld [vmem:[%s5458 + $0xd8] sm:$0xff]
    %v5487 = vld [vmem:[%s5458 + $0xe0] sm:$0xff]
    %v5488 = vld [vmem:[%s5458 + $0xe8] sm:$0xff]
    %v5489 = vld [vmem:[%s5458 + $0xf0] sm:$0xff]
    %v5490 = vld [vmem:[%s5458 + $0xf8] sm:$0xff]
    %v5491 = vld [vmem:[%s5458 + $0x100] sm:$0xff]
    %v5492 = vld [vmem:[%s5458 + $0x108] sm:$0xff]
    %v5493 = vld [vmem:[%s5458 + $0x110] sm:$0xff]
    %v5494 = vld [vmem:[%s5458 + $0x118] sm:$0xff]
    %v5495 = vld [vmem:[%s5458 + $0x120] sm:$0xff]
    %v5496 = vld [vmem:[%s5458 + $0x128] sm:$0xff]
    %v5497 = vld [vmem:[%s5458 + $0x130] sm:$0xff]
    %v5498 = vld [vmem:[%s5458 + $0x138] sm:$0xff]
    %v5499 = vld [vmem:[%s5458 + $0x140] sm:$0xff]
    %v5500 = vld [vmem:[%s5458 + $0x148] sm:$0xff]
    %v5501 = vld [vmem:[%s5458 + $0x150] sm:$0xff]
    %v5502 = vld [vmem:[%s5458 + $0x158] sm:$0xff]
    %v5503 = vld [vmem:[%s5458 + $0x160] sm:$0xff]
    %v5504 = vld [vmem:[%s5458 + $0x168] sm:$0xff]
    %v5505 = vld [vmem:[%s5458 + $0x170] sm:$0xff]
    %v5506 = vld [vmem:[%s5458 + $0x178] sm:$0xff]
    %v5507 = vld [vmem:[%s5458 + $0x180] sm:$0xff]
    %v5508 = vld [vmem:[%s5458 + $0x188] sm:$0xff]
    %v5509 = vld [vmem:[%s5458 + $0x190] sm:$0xff]
    %v5510 = vld [vmem:[%s5458 + $0x198] sm:$0xff]
    %v5511 = vld [vmem:[%s5458 + $0x1a0] sm:$0xff]
    %v5512 = vld [vmem:[%s5458 + $0x1a8] sm:$0xff]
    %v5513 = vld [vmem:[%s5458 + $0x1b0] sm:$0xff]
    %v5514 = vld [vmem:[%s5458 + $0x1b8] sm:$0xff]
    %v5515 = vld [vmem:[%s5458 + $0x1c0] sm:$0xff]
    %v5516 = vld [vmem:[%s5458 + $0x1c8] sm:$0xff]
    %v5517 = vld [vmem:[%s5458 + $0x1d0] sm:$0xff]
    %v5518 = vld [vmem:[%s5458 + $0x1d8] sm:$0xff]
    %v5519 = vld [vmem:[%s5458 + $0x1e0] sm:$0xff]
    %v5520 = vld [vmem:[%s5458 + $0x1e8] sm:$0xff]
    %v5521 = vld [vmem:[%s5458 + $0x1f0] sm:$0xff]
    %v5522 = vld [vmem:[%s5458 + $0x1f8] sm:$0xff]
    %v5523 = vld [vmem:[#allocation2] sm:$0xfc]
    %v5524 = vld [vmem:[#allocation2 + $0x8] sm:$0xfc]
    %v5525 = vld [vmem:[#allocation2 + $0x40] sm:$0x3]
    %v5526 = vld [vmem:[#allocation2 + $0x48] sm:$0x3]
    %s5527 = scalar_lea.vmem [#allocation24], 2048
    %v5528 = vld [vmem:[%s5527] sm:$0xff]
    %v5529 = vld [vmem:[%s5527 + $0x8] sm:$0xff]
    %v5530 = vld [vmem:[%s5527 + $0x10] sm:$0xff]
    %v5531 = vld [vmem:[%s5527 + $0x18] sm:$0xff]
    %v5532 = vld [vmem:[%s5527 + $0x20] sm:$0xff]
    %v5533 = vld [vmem:[%s5527 + $0x28] sm:$0xff]
    %v5534 = vld [vmem:[%s5527 + $0x30] sm:$0xff]
    %v5535 = vld [vmem:[%s5527 + $0x38] sm:$0xff]
    %v5536 = vld [vmem:[%s5527 + $0x40] sm:$0xff]
    %v5537 = vld [vmem:[%s5527 + $0x48] sm:$0xff]
    %v5538 = vld [vmem:[%s5527 + $0x50] sm:$0xff]
    %v5539 = vld [vmem:[%s5527 + $0x58] sm:$0xff]
    %v5540 = vld [vmem:[%s5527 + $0x60] sm:$0xff]
    %v5541 = vld [vmem:[%s5527 + $0x68] sm:$0xff]
    %v5542 = vld [vmem:[%s5527 + $0x70] sm:$0xff]
    %v5543 = vld [vmem:[%s5527 + $0x78] sm:$0xff]
    %v5544 = vld [vmem:[%s5527 + $0x80] sm:$0xff]
    %v5545 = vld [vmem:[%s5527 + $0x88] sm:$0xff]
    %v5546 = vld [vmem:[%s5527 + $0x90] sm:$0xff]
    %v5547 = vld [vmem:[%s5527 + $0x98] sm:$0xff]
    %v5548 = vld [vmem:[%s5527 + $0xa0] sm:$0xff]
    %v5549 = vld [vmem:[%s5527 + $0xa8] sm:$0xff]
    %v5550 = vld [vmem:[%s5527 + $0xb0] sm:$0xff]
    %v5551 = vld [vmem:[%s5527 + $0xb8] sm:$0xff]
    %v5552 = vld [vmem:[%s5527 + $0xc0] sm:$0xff]
    %v5553 = vld [vmem:[%s5527 + $0xc8] sm:$0xff]
    %v5554 = vld [vmem:[%s5527 + $0xd0] sm:$0xff]
    %v5555 = vld [vmem:[%s5527 + $0xd8] sm:$0xff]
    %v5556 = vld [vmem:[%s5527 + $0xe0] sm:$0xff]
    %v5557 = vld [vmem:[%s5527 + $0xe8] sm:$0xff]
    %v5558 = vld [vmem:[%s5527 + $0xf0] sm:$0xff]
    %v5559 = vld [vmem:[%s5527 + $0xf8] sm:$0xff]
    %v5560 = vld [vmem:[%s5527 + $0x100] sm:$0xff]
    %v5561 = vld [vmem:[%s5527 + $0x108] sm:$0xff]
    %v5562 = vld [vmem:[%s5527 + $0x110] sm:$0xff]
    %v5563 = vld [vmem:[%s5527 + $0x118] sm:$0xff]
    %v5564 = vld [vmem:[%s5527 + $0x120] sm:$0xff]
    %v5565 = vld [vmem:[%s5527 + $0x128] sm:$0xff]
    %v5566 = vld [vmem:[%s5527 + $0x130] sm:$0xff]
    %v5567 = vld [vmem:[%s5527 + $0x138] sm:$0xff]
    %v5568 = vld [vmem:[%s5527 + $0x140] sm:$0xff]
    %v5569 = vld [vmem:[%s5527 + $0x148] sm:$0xff]
    %v5570 = vld [vmem:[%s5527 + $0x150] sm:$0xff]
    %v5571 = vld [vmem:[%s5527 + $0x158] sm:$0xff]
    %v5572 = vld [vmem:[%s5527 + $0x160] sm:$0xff]
    %v5573 = vld [vmem:[%s5527 + $0x168] sm:$0xff]
    %v5574 = vld [vmem:[%s5527 + $0x170] sm:$0xff]
    %v5575 = vld [vmem:[%s5527 + $0x178] sm:$0xff]
    %v5576 = vld [vmem:[%s5527 + $0x180] sm:$0xff]
    %v5577 = vld [vmem:[%s5527 + $0x188] sm:$0xff]
    %v5578 = vld [vmem:[%s5527 + $0x190] sm:$0xff]
    %v5579 = vld [vmem:[%s5527 + $0x198] sm:$0xff]
    %v5580 = vld [vmem:[%s5527 + $0x1a0] sm:$0xff]
    %v5581 = vld [vmem:[%s5527 + $0x1a8] sm:$0xff]
    %v5582 = vld [vmem:[%s5527 + $0x1b0] sm:$0xff]
    %v5583 = vld [vmem:[%s5527 + $0x1b8] sm:$0xff]
    %v5584 = vld [vmem:[%s5527 + $0x1c0] sm:$0xff]
    %v5585 = vld [vmem:[%s5527 + $0x1c8] sm:$0xff]
    %v5586 = vld [vmem:[%s5527 + $0x1d0] sm:$0xff]
    %v5587 = vld [vmem:[%s5527 + $0x1d8] sm:$0xff]
    %v5588 = vld [vmem:[%s5527 + $0x1e0] sm:$0xff]
    %v5589 = vld [vmem:[%s5527 + $0x1e8] sm:$0xff]
    %v5590 = vld [vmem:[%s5527 + $0x1f0] sm:$0xff]
    %v5591 = vld [vmem:[%s5527 + $0x1f8] sm:$0xff]
    %v5602 = vrot.slane %v5523, 2
    %v5603 = vrot.slane %v5452, 2
    %v5604 = vsel %vm458, %v5602, %v5603
    %v5605 = vrot.slane %v5524, 2
    %v5606 = vrot.slane %v5453, 2
    %v5607 = vsel %vm458, %v5605, %v5606
    %v5608 = vrot.slane %v5454, 2
    %v5609 = vsel %vm458, %v5603, %v5608
    %v5610 = vrot.slane %v5455, 2
    %v5611 = vsel %vm458, %v5606, %v5610
    %v5612 = vrot.slane %v5456, 2
    %v5613 = vsel %vm458, %v5608, %v5612
    %v5614 = vrot.slane %v5457, 2
    %v5615 = vsel %vm458, %v5610, %v5614
    %v5616 = vrot.slane %v5525, 2
    %v5617 = vsel %vm458, %v5612, %v5616
    %v5618 = vrot.slane %v5526, 2
    %v5619 = vsel %vm458, %v5614, %v5618
    %5628 = vmatprep.subr.mxu0 %v5529
    %5629 = vmatpush1.msra.mxu0 %v5528
    %5630 = vmatprep.subr.mxu0 %v5531
    %5631 = vmatpush1.msra.mxu0 %v5530
    %5632 = vmatprep.subr.mxu0 %v5533
    %5633 = vmatpush1.msra.mxu0 %v5532
    %5634 = vmatprep.subr.mxu0 %v5535
    %5635 = vmatpush1.msra.mxu0 %v5534
    %5636 = vmatprep.subr.mxu0 %v5537
    %5637 = vmatpush1.msra.mxu0 %v5536
    %5638 = vmatprep.subr.mxu0 %v5539
    %5639 = vmatpush1.msra.mxu0 %v5538
    %5640 = vmatprep.subr.mxu0 %v5541
    %5641 = vmatpush1.msra.mxu0 %v5540
    %5642 = vmatprep.subr.mxu0 %v5543
    %5643 = vmatpush1.msra.mxu0 %v5542
    %5644 = vmatprep.subr.mxu0 %v5545
    %5645 = vmatpush1.msra.mxu0 %v5544
    %5646 = vmatprep.subr.mxu0 %v5547
    %5647 = vmatpush1.msra.mxu0 %v5546
    %5648 = vmatprep.subr.mxu0 %v5549
    %5649 = vmatpush1.msra.mxu0 %v5548
    %5650 = vmatprep.subr.mxu0 %v5551
    %5651 = vmatpush1.msra.mxu0 %v5550
    %5652 = vmatprep.subr.mxu0 %v5553
    %5653 = vmatpush1.msra.mxu0 %v5552
    %5654 = vmatprep.subr.mxu0 %v5555
    %5655 = vmatpush1.msra.mxu0 %v5554
    %5656 = vmatprep.subr.mxu0 %v5557
    %5657 = vmatpush1.msra.mxu0 %v5556
    %5658 = vmatprep.subr.mxu0 %v5559
    %5659 = vmatpush1.msra.mxu0 %v5558
    %5660 = vmatprep.subr.mxu0 %v5561
    %5661 = vmatpush1.msra.mxu0 %v5560
    %5662 = vmatprep.subr.mxu0 %v5563
    %5663 = vmatpush1.msra.mxu0 %v5562
    %5664 = vmatprep.subr.mxu0 %v5565
    %5665 = vmatpush1.msra.mxu0 %v5564
    %5666 = vmatprep.subr.mxu0 %v5567
    %5667 = vmatpush1.msra.mxu0 %v5566
    %5668 = vmatprep.subr.mxu0 %v5569
    %5669 = vmatpush1.msra.mxu0 %v5568
    %5670 = vmatprep.subr.mxu0 %v5571
    %5671 = vmatpush1.msra.mxu0 %v5570
    %5672 = vmatprep.subr.mxu0 %v5573
    %5673 = vmatpush1.msra.mxu0 %v5572
    %5674 = vmatprep.subr.mxu0 %v5575
    %5675 = vmatpush1.msra.mxu0 %v5574
    %5676 = vmatprep.subr.mxu0 %v5577
    %5677 = vmatpush1.msra.mxu0 %v5576
    %5678 = vmatprep.subr.mxu0 %v5579
    %5679 = vmatpush1.msra.mxu0 %v5578
    %5680 = vmatprep.subr.mxu0 %v5581
    %5681 = vmatpush1.msra.mxu0 %v5580
    %5682 = vmatprep.subr.mxu0 %v5583
    %5683 = vmatpush1.msra.mxu0 %v5582
    %5684 = vmatprep.subr.mxu0 %v5585
    %5685 = vmatpush1.msra.mxu0 %v5584
    %5686 = vmatprep.subr.mxu0 %v5587
    %5687 = vmatpush1.msra.mxu0 %v5586
    %5688 = vmatprep.subr.mxu0 %v5589
    %5689 = vmatpush1.msra.mxu0 %v5588
    %5690 = vmatprep.subr.mxu0 %v5591
    %5691 = vmatpush1.msra.mxu0 %v5590
    %5692 = vmatprep.mubr.f32.mxu0 %v5607
    %5693 = vmatmul.mubr.f32.gmra.mrb[0].mxu0 %v5604
    %v5694 = vpop.f32.mrb[0].mxu0
    %v5695 = vadd.f32 0.0, %v5694
    %v5696 = vpop.f32.mrb[0].mxu0
    %v5697 = vadd.f32 0.0, %v5696
    %5698 = vmatprep.mubr.f32.mxu0 %v5611
    %5699 = vmatmul.mubr.f32.gmra.mrb[0].mxu0 %v5609
    %v5700 = vpop.f32.mrb[0].mxu0
    %v5701 = vadd.f32 0.0, %v5700
    %v5702 = vpop.f32.mrb[0].mxu0
    %v5703 = vadd.f32 0.0, %v5702
    %5704 = vmatprep.mubr.f32.mxu0 %v5615
    %5705 = vmatmul.mubr.f32.gmra.mrb[0].mxu0 %v5613
    %v5706 = vpop.f32.mrb[0].mxu0
    %v5707 = vadd.f32 0.0, %v5706
    %v5708 = vpop.f32.mrb[0].mxu0
    %v5709 = vadd.f32 0.0, %v5708
    %5710 = vmatprep.mubr.f32.mxu0 %v5619
    %5711 = vmatmul.mubr.f32.gmra.mrb[0].mxu0 %v5617
    %v5712 = vpop.f32.mrb[0].mxu0
    %v5713 = vadd.f32 0.0, %v5712
    %v5714 = vpop.f32.mrb[0].mxu0
    %v5715 = vadd.f32 0.0, %v5714
    %5716 = vdwg.mxu0
    %5717 = vmatprep.subr.mxu0 %v5460
    %5718 = vmatpush1.msra.mxu0 %v5459
    %5719 = vmatprep.subr.mxu0 %v5462
    %5720 = vmatpush1.msra.mxu0 %v5461
    %5721 = vmatprep.subr.mxu0 %v5464
    %5722 = vmatpush1.msra.mxu0 %v5463
    %5723 = vmatprep.subr.mxu0 %v5466
    %5724 = vmatpush1.msra.mxu0 %v5465
    %5725 = vmatprep.subr.mxu0 %v5468
    %5726 = vmatpush1.msra.mxu0 %v5467
    %5727 = vmatprep.subr.mxu0 %v5470
    %5728 = vmatpush1.msra.mxu0 %v5469
    %5729 = vmatprep.subr.mxu0 %v5472
    %5730 = vmatpush1.msra.mxu0 %v5471
    %5731 = vmatprep.subr.mxu0 %v5474
    %5732 = vmatpush1.msra.mxu0 %v5473
    %5733 = vmatprep.subr.mxu0 %v5476
    %5734 = vmatpush1.msra.mxu0 %v5475
    %5735 = vmatprep.subr.mxu0 %v5478
    %5736 = vmatpush1.msra.mxu0 %v5477
    %5737 = vmatprep.subr.mxu0 %v5480
    %5738 = vmatpush1.msra.mxu0 %v5479
    %5739 = vmatprep.subr.mxu0 %v5482
    %5740 = vmatpush1.msra.mxu0 %v5481
    %5741 = vmatprep.subr.mxu0 %v5484
    %5742 = vmatpush1.msra.mxu0 %v5483
    %5743 = vmatprep.subr.mxu0 %v5486
    %5744 = vmatpush1.msra.mxu0 %v5485
    %5745 = vmatprep.subr.mxu0 %v5488
    %5746 = vmatpush1.msra.mxu0 %v5487
    %5747 = vmatprep.subr.mxu0 %v5490
    %5748 = vmatpush1.msra.mxu0 %v5489
    %5749 = vmatprep.subr.mxu0 %v5492
    %5750 = vmatpush1.msra.mxu0 %v5491
    %5751 = vmatprep.subr.mxu0 %v5494
    %5752 = vmatpush1.msra.mxu0 %v5493
    %5753 = vmatprep.subr.mxu0 %v5496
    %5754 = vmatpush1.msra.mxu0 %v5495
    %5755 = vmatprep.subr.mxu0 %v5498
    %5756 = vmatpush1.msra.mxu0 %v5497
    %5757 = vmatprep.subr.mxu0 %v5500
    %5758 = vmatpush1.msra.mxu0 %v5499
    %5759 = vmatprep.subr.mxu0 %v5502
    %5760 = vmatpush1.msra.mxu0 %v5501
    %5761 = vmatprep.subr.mxu0 %v5504
    %5762 = vmatpush1.msra.mxu0 %v5503
    %5763 = vmatprep.subr.mxu0 %v5506
    %5764 = vmatpush1.msra.mxu0 %v5505
    %5765 = vmatprep.subr.mxu0 %v5508
    %5766 = vmatpush1.msra.mxu0 %v5507
    %5767 = vmatprep.subr.mxu0 %v5510
    %5768 = vmatpush1.msra.mxu0 %v5509
    %5769 = vmatprep.subr.mxu0 %v5512
    %5770 = vmatpush1.msra.mxu0 %v5511
    %5771 = vmatprep.subr.mxu0 %v5514
    %5772 = vmatpush1.msra.mxu0 %v5513
    %5773 = vmatprep.subr.mxu0 %v5516
    %5774 = vmatpush1.msra.mxu0 %v5515
    %5775 = vmatprep.subr.mxu0 %v5518
    %5776 = vmatpush1.msra.mxu0 %v5517
    %5777 = vmatprep.subr.mxu0 %v5520
    %5778 = vmatpush1.msra.mxu0 %v5519
    %5779 = vmatprep.subr.mxu0 %v5522
    %5780 = vmatpush1.msra.mxu0 %v5521
    %5781 = vmatprep.mubr.f32.mxu0 %v5451
    %5782 = vmatmul.mubr.f32.gmra.mrb[0].mxu0 %v5450
    %v5783 = vpop.f32.mrb[0].mxu0
    %v5784 = vadd.f32 %v5695, %v5783
    %v5785 = vpop.f32.mrb[0].mxu0
    %v5786 = vadd.f32 %v5697, %v5785
    %5787 = vmatprep.mubr.f32.mxu0 %v5453
    %5788 = vmatmul.mubr.f32.gmra.mrb[0].mxu0 %v5452
    %v5789 = vpop.f32.mrb[0].mxu0
    %v5790 = vadd.f32 %v5701, %v5789
    %v5791 = vpop.f32.mrb[0].mxu0
    %v5792 = vadd.f32 %v5703, %v5791
    %5793 = vmatprep.mubr.f32.mxu0 %v5455
    %5794 = vmatmul.mubr.f32.gmra.mrb[0].mxu0 %v5454
    %v5795 = vpop.f32.mrb[0].mxu0
    %v5796 = vadd.f32 %v5707, %v5795
    %v5797 = vpop.f32.mrb[0].mxu0
    %v5798 = vadd.f32 %v5709, %v5797
    %5799 = vmatprep.mubr.f32.mxu0 %v5457
    %5800 = vmatmul.mubr.f32.gmra.mrb[0].mxu0 %v5456
    %v5801 = vpop.f32.mrb[0].mxu0
    %v5802 = vadd.f32 %v5713, %v5801
    %v5803 = vpop.f32.mrb[0].mxu0
    %v5804 = vadd.f32 %v5715, %v5803
    %5805 = vdwg.mxu0
    %v5806 = vld [vmem:[#allocation2] sm:$0xf0]
    %v5807 = vld [vmem:[#allocation2 + $0x8] sm:$0xf0]
    %v5808 = vld [vmem:[#allocation2 + $0x40] sm:$0xf]
    %v5809 = vld [vmem:[#allocation2 + $0x48] sm:$0xf]
    %s5810 = scalar_lea.vmem [#allocation24], 2560
    %v5811 = vld [vmem:[%s5810] sm:$0xff]
    %v5812 = vld [vmem:[%s5810 + $0x8] sm:$0xff]
    %v5813 = vld [vmem:[%s5810 + $0x10] sm:$0xff]
    %v5814 = vld [vmem:[%s5810 + $0x18] sm:$0xff]
    %v5815 = vld [vmem:[%s5810 + $0x20] sm:$0xff]
    %v5816 = vld [vmem:[%s5810 + $0x28] sm:$0xff]
    %v5817 = vld [vmem:[%s5810 + $0x30] sm:$0xff]
    %v5818 = vld [vmem:[%s5810 + $0x38] sm:$0xff]
    %v5819 = vld [vmem:[%s5810 + $0x40] sm:$0xff]
    %v5820 = vld [vmem:[%s5810 + $0x48] sm:$0xff]
    %v5821 = vld [vmem:[%s5810 + $0x50] sm:$0xff]
    %v5822 = vld [vmem:[%s5810 + $0x58] sm:$0xff]
    %v5823 = vld [vmem:[%s5810 + $0x60] sm:$0xff]
    %v5824 = vld [vmem:[%s5810 + $0x68] sm:$0xff]
    %v5825 = vld [vmem:[%s5810 + $0x70] sm:$0xff]
    %v5826 = vld [vmem:[%s5810 + $0x78] sm:$0xff]
    %v5827 = vld [vmem:[%s5810 + $0x80] sm:$0xff]
    %v5828 = vld [vmem:[%s5810 + $0x88] sm:$0xff]
    %v5829 = vld [vmem:[%s5810 + $0x90] sm:$0xff]
    %v5830 = vld [vmem:[%s5810 + $0x98] sm:$0xff]
    %v5831 = vld [vmem:[%s5810 + $0xa0] sm:$0xff]
    %v5832 = vld [vmem:[%s5810 + $0xa8] sm:$0xff]
    %v5833 = vld [vmem:[%s5810 + $0xb0] sm:$0xff]
    %v5834 = vld [vmem:[%s5810 + $0xb8] sm:$0xff]
    %v5835 = vld [vmem:[%s5810 + $0xc0] sm:$0xff]
    %v5836 = vld [vmem:[%s5810 + $0xc8] sm:$0xff]
    %v5837 = vld [vmem:[%s5810 + $0xd0] sm:$0xff]
    %v5838 = vld [vmem:[%s5810 + $0xd8] sm:$0xff]
    %v5839 = vld [vmem:[%s5810 + $0xe0] sm:$0xff]
    %v5840 = vld [vmem:[%s5810 + $0xe8] sm:$0xff]
    %v5841 = vld [vmem:[%s5810 + $0xf0] sm:$0xff]
    %v5842 = vld [vmem:[%s5810 + $0xf8] sm:$0xff]
    %v5843 = vld [vmem:[%s5810 + $0x100] sm:$0xff]
    %v5844 = vld [vmem:[%s5810 + $0x108] sm:$0xff]
    %v5845 = vld [vmem:[%s5810 + $0x110] sm:$0xff]
    %v5846 = vld [vmem:[%s5810 + $0x118] sm:$0xff]
    %v5847 = vld [vmem:[%s5810 + $0x120] sm:$0xff]
    %v5848 = vld [vmem:[%s5810 + $0x128] sm:$0xff]
    %v5849 = vld [vmem:[%s5810 + $0x130] sm:$0xff]
    %v5850 = vld [vmem:[%s5810 + $0x138] sm:$0xff]
    %v5851 = vld [vmem:[%s5810 + $0x140] sm:$0xff]
    %v5852 = vld [vmem:[%s5810 + $0x148] sm:$0xff]
    %v5853 = vld [vmem:[%s5810 + $0x150] sm:$0xff]
    %v5854 = vld [vmem:[%s5810 + $0x158] sm:$0xff]
    %v5855 = vld [vmem:[%s5810 + $0x160] sm:$0xff]
    %v5856 = vld [vmem:[%s5810 + $0x168] sm:$0xff]
    %v5857 = vld [vmem:[%s5810 + $0x170] sm:$0xff]
    %v5858 = vld [vmem:[%s5810 + $0x178] sm:$0xff]
    %v5859 = vld [vmem:[%s5810 + $0x180] sm:$0xff]
    %v5860 = vld [vmem:[%s5810 + $0x188] sm:$0xff]
    %v5861 = vld [vmem:[%s5810 + $0x190] sm:$0xff]
    %v5862 = vld [vmem:[%s5810 + $0x198] sm:$0xff]
    %v5863 = vld [vmem:[%s5810 + $0x1a0] sm:$0xff]
    %v5864 = vld [vmem:[%s5810 + $0x1a8] sm:$0xff]
    %v5865 = vld [vmem:[%s5810 + $0x1b0] sm:$0xff]
    %v5866 = vld [vmem:[%s5810 + $0x1b8] sm:$0xff]
    %v5867 = vld [vmem:[%s5810 + $0x1c0] sm:$0xff]
    %v5868 = vld [vmem:[%s5810 + $0x1c8] sm:$0xff]
    %v5869 = vld [vmem:[%s5810 + $0x1d0] sm:$0xff]
    %v5870 = vld [vmem:[%s5810 + $0x1d8] sm:$0xff]
    %v5871 = vld [vmem:[%s5810 + $0x1e0] sm:$0xff]
    %v5872 = vld [vmem:[%s5810 + $0x1e8] sm:$0xff]
    %v5873 = vld [vmem:[%s5810 + $0x1f0] sm:$0xff]
    %v5874 = vld [vmem:[%s5810 + $0x1f8] sm:$0xff]
    %v5879 = vrot.slane %v5806, 4
    %v5880 = vrot.slane %v5452, 4
    %v5881 = vsel %vm736, %v5879, %v5880
    %v5882 = vrot.slane %v5807, 4
    %v5883 = vrot.slane %v5453, 4
    %v5884 = vsel %vm736, %v5882, %v5883
    %v5885 = vrot.slane %v5454, 4
    %v5886 = vsel %vm736, %v5880, %v5885
    %v5887 = vrot.slane %v5455, 4
    %v5888 = vsel %vm736, %v5883, %v5887
    %v5889 = vrot.slane %v5456, 4
    %v5890 = vsel %vm736, %v5885, %v5889
    %v5891 = vrot.slane %v5457, 4
    %v5892 = vsel %vm736, %v5887, %v5891
    %v5893 = vrot.slane %v5808, 4
    %v5894 = vsel %vm736, %v5889, %v5893
    %v5895 = vrot.slane %v5809, 4
    %v5896 = vsel %vm736, %v5891, %v5895
    %5905 = vmatprep.subr.mxu0 %v5812
    %5906 = vmatpush1.msra.mxu0 %v5811
    %5907 = vmatprep.subr.mxu0 %v5814
    %5908 = vmatpush1.msra.mxu0 %v5813
    %5909 = vmatprep.subr.mxu0 %v5816
    %5910 = vmatpush1.msra.mxu0 %v5815
    %5911 = vmatprep.subr.mxu0 %v5818
    %5912 = vmatpush1.msra.mxu0 %v5817
    %5913 = vmatprep.subr.mxu0 %v5820
    %5914 = vmatpush1.msra.mxu0 %v5819
    %5915 = vmatprep.subr.mxu0 %v5822
    %5916 = vmatpush1.msra.mxu0 %v5821
    %5917 = vmatprep.subr.mxu0 %v5824
    %5918 = vmatpush1.msra.mxu0 %v5823
    %5919 = vmatprep.subr.mxu0 %v5826
    %5920 = vmatpush1.msra.mxu0 %v5825
    %5921 = vmatprep.subr.mxu0 %v5828
    %5922 = vmatpush1.msra.mxu0 %v5827
    %5923 = vmatprep.subr.mxu0 %v5830
    %5924 = vmatpush1.msra.mxu0 %v5829
    %5925 = vmatprep.subr.mxu0 %v5832
    %5926 = vmatpush1.msra.mxu0 %v5831
    %5927 = vmatprep.subr.mxu0 %v5834
    %5928 = vmatpush1.msra.mxu0 %v5833
    %5929 = vmatprep.subr.mxu0 %v5836
    %5930 = vmatpush1.msra.mxu0 %v5835
    %5931 = vmatprep.subr.mxu0 %v5838
    %5932 = vmatpush1.msra.mxu0 %v5837
    %5933 = vmatprep.subr.mxu0 %v5840
    %5934 = vmatpush1.msra.mxu0 %v5839
    %5935 = vmatprep.subr.mxu0 %v5842
    %5936 = vmatpush1.msra.mxu0 %v5841
    %5937 = vmatprep.subr.mxu0 %v5844
    %5938 = vmatpush1.msra.mxu0 %v5843
    %5939 = vmatprep.subr.mxu0 %v5846
    %5940 = vmatpush1.msra.mxu0 %v5845
    %5941 = vmatprep.subr.mxu0 %v5848
    %5942 = vmatpush1.msra.mxu0 %v5847
    %5943 = vmatprep.subr.mxu0 %v5850
    %5944 = vmatpush1.msra.mxu0 %v5849
    %5945 = vmatprep.subr.mxu0 %v5852
    %5946 = vmatpush1.msra.mxu0 %v5851
    %5947 = vmatprep.subr.mxu0 %v5854
    %5948 = vmatpush1.msra.mxu0 %v5853
    %5949 = vmatprep.subr.mxu0 %v5856
    %5950 = vmatpush1.msra.mxu0 %v5855
    %5951 = vmatprep.subr.mxu0 %v5858
    %5952 = vmatpush1.msra.mxu0 %v5857
    %5953 = vmatprep.subr.mxu0 %v5860
    %5954 = vmatpush1.msra.mxu0 %v5859
    %5955 = vmatprep.subr.mxu0 %v5862
    %5956 = vmatpush1.msra.mxu0 %v5861
    %5957 = vmatprep.subr.mxu0 %v5864
    %5958 = vmatpush1.msra.mxu0 %v5863
    %5959 = vmatprep.subr.mxu0 %v5866
    %5960 = vmatpush1.msra.mxu0 %v5865
    %5961 = vmatprep.subr.mxu0 %v5868
    %5962 = vmatpush1.msra.mxu0 %v5867
    %5963 = vmatprep.subr.mxu0 %v5870
    %5964 = vmatpush1.msra.mxu0 %v5869
    %5965 = vmatprep.subr.mxu0 %v5872
    %5966 = vmatpush1.msra.mxu0 %v5871
    %5967 = vmatprep.subr.mxu0 %v5874
    %5968 = vmatpush1.msra.mxu0 %v5873
    %5969 = vmatprep.mubr.f32.mxu0 %v5884
    %5970 = vmatmul.mubr.f32.gmra.mrb[0].mxu0 %v5881
    %v5971 = vpop.f32.mrb[0].mxu0
    %v5972 = vadd.f32 0.0, %v5971
    %v5973 = vpop.f32.mrb[0].mxu0
    %v5974 = vadd.f32 0.0, %v5973
    %5975 = vmatprep.mubr.f32.mxu0 %v5888
    %5976 = vmatmul.mubr.f32.gmra.mrb[0].mxu0 %v5886
    %v5977 = vpop.f32.mrb[0].mxu0
    %v5978 = vadd.f32 0.0, %v5977
    %v5979 = vpop.f32.mrb[0].mxu0
    %v5980 = vadd.f32 0.0, %v5979
    %5981 = vmatprep.mubr.f32.mxu0 %v5892
    %5982 = vmatmul.mubr.f32.gmra.mrb[0].mxu0 %v5890
    %v5983 = vpop.f32.mrb[0].mxu0
    %v5984 = vadd.f32 0.0, %v5983
    %v5985 = vpop.f32.mrb[0].mxu0
    %v5986 = vadd.f32 0.0, %v5985
    %5987 = vmatprep.mubr.f32.mxu0 %v5896
    %5988 = vmatmul.mubr.f32.gmra.mrb[0].mxu0 %v5894
    %v5989 = vpop.f32.mrb[0].mxu0
    %v5990 = vadd.f32 0.0, %v5989
    %v5991 = vpop.f32.mrb[0].mxu0
    %v5992 = vadd.f32 0.0, %v5991
    %5993 = vdwg.mxu0
    %v5994 = vadd.f32 %v5784, %v5972
    %v5995 = vadd.f32 %v5786, %v5974
    %v5996 = vadd.f32 %v5790, %v5978
    %v5997 = vadd.f32 %v5792, %v5980
    %v5998 = vadd.f32 %v5796, %v5984
    %v5999 = vadd.f32 %v5798, %v5986
    %v6000 = vadd.f32 %v5802, %v5990
    %v6001 = vadd.f32 %v5804, %v5992
    %s6002 = scalar_lea.vmem [#allocation26], 2
    %v6003 = vld [vmem:[%s6002] sm:$0x3]
    %v6005 = vlaneseq
    %v6006 = vshrl.u32 %v6005, 7
    %v6007 = vsub.s32 0, %v6006
    %v6008 = vrot.slane %v6003, %v6007
    %v6009 = vlaneseq
    %v6010 = vshrl.u32 %v6009, 7
    %v6011 = vsub.s32 1, %v6010
    %v6012 = vrot.slane %v6003, %v6011
    %v6015 = vadd.f32 %v5994, %v6008
    %v6016 = vadd.f32 %v5995, %v6012
    %v6017 = vadd.f32 %v5996, %v6008
    %v6018 = vadd.f32 %v5997, %v6012
    %v6019 = vadd.f32 %v5998, %v6008
    %v6020 = vadd.f32 %v5999, %v6012
    %v6021 = vadd.f32 %v6000, %v6008
    %v6022 = vadd.f32 %v6001, %v6012
    %v6023 = vmax.f32 %v6015, 0.0
    %v6024 = vmax.f32 %v6016, 0.0
    %v6025 = vmax.f32 %v6017, 0.0
    %v6026 = vmax.f32 %v6018, 0.0
    %v6027 = vmax.f32 %v6019, 0.0
    %v6028 = vmax.f32 %v6020, 0.0
    %v6029 = vmax.f32 %v6021, 0.0
    %v6030 = vmax.f32 %v6022, 0.0
    %v6039 = vrot.slane %v6023, 6
    %v6040 = vrot.slane %v6024, 6
    %v6041 = vrot.slane %v6025, 6
    %v6042 = vsel %vm272, %v6039, %v6041
    %v6043 = vrot.slane %v6026, 6
    %v6044 = vsel %vm272, %v6040, %v6043
    %v6045 = vrot.slane %v6027, 6
    %v6046 = vsel %vm272, %v6041, %v6045
    %v6047 = vrot.slane %v6028, 6
    %v6048 = vsel %vm272, %v6043, %v6047
    %v6049 = vrot.slane %v6029, 6
    %v6050 = vsel %vm272, %v6045, %v6049
    %v6051 = vrot.slane %v6030, 6
    %v6052 = vsel %vm272, %v6047, %v6051
    %6063 = vst [vmem:[#allocation2] sm:$0xfc] %v6039
    %6064 = vst [vmem:[#allocation2 + $0x8] sm:$0xfc] %v6040
    %6065 = vst [vmem:[#allocation2 + $0x10] sm:$0xff] %v6042
    %6066 = vst [vmem:[#allocation2 + $0x18] sm:$0xff] %v6044
    %6067 = vst [vmem:[#allocation2 + $0x20] sm:$0xff] %v6046
    %6068 = vst [vmem:[#allocation2 + $0x28] sm:$0xff] %v6048
    %6069 = vst [vmem:[#allocation2 + $0x30] sm:$0xff] %v6050
    %6070 = vst [vmem:[#allocation2 + $0x38] sm:$0xff] %v6052
    %6071 = vst [vmem:[#allocation2 + $0x40] sm:$0x3] %v6049
    %6072 = vst [vmem:[#allocation2 + $0x48] sm:$0x3] %v6051
    %v6073 = vld [vmem:[#allocation2] sm:$0xff]
    %v6074 = vld [vmem:[#allocation2 + $0x8] sm:$0xff]
    %v6075 = vld [vmem:[#allocation2 + $0x10] sm:$0xff]
    %v6076 = vld [vmem:[#allocation2 + $0x18] sm:$0xff]
    %v6077 = vld [vmem:[#allocation2 + $0x20] sm:$0xff]
    %v6078 = vld [vmem:[#allocation2 + $0x28] sm:$0xff]
    %v6079 = vld [vmem:[#allocation2 + $0x30] sm:$0xff]
    %v6080 = vld [vmem:[#allocation2 + $0x38] sm:$0xff]
    %s6081 = scalar_lea.vmem [#allocation24], 3072
    %v6082 = vld [vmem:[%s6081] sm:$0xff]
    %v6083 = vld [vmem:[%s6081 + $0x8] sm:$0xff]
    %v6084 = vld [vmem:[%s6081 + $0x10] sm:$0xff]
    %v6085 = vld [vmem:[%s6081 + $0x18] sm:$0xff]
    %v6086 = vld [vmem:[%s6081 + $0x20] sm:$0xff]
    %v6087 = vld [vmem:[%s6081 + $0x28] sm:$0xff]
    %v6088 = vld [vmem:[%s6081 + $0x30] sm:$0xff]
    %v6089 = vld [vmem:[%s6081 + $0x38] sm:$0xff]
    %v6090 = vld [vmem:[%s6081 + $0x40] sm:$0xff]
    %v6091 = vld [vmem:[%s6081 + $0x48] sm:$0xff]
    %v6092 = vld [vmem:[%s6081 + $0x50] sm:$0xff]
    %v6093 = vld [vmem:[%s6081 + $0x58] sm:$0xff]
    %v6094 = vld [vmem:[%s6081 + $0x60] sm:$0xff]
    %v6095 = vld [vmem:[%s6081 + $0x68] sm:$0xff]
    %v6096 = vld [vmem:[%s6081 + $0x70] sm:$0xff]
    %v6097 = vld [vmem:[%s6081 + $0x78] sm:$0xff]
    %v6098 = vld [vmem:[%s6081 + $0x80] sm:$0xff]
    %v6099 = vld [vmem:[%s6081 + $0x88] sm:$0xff]
    %v6100 = vld [vmem:[%s6081 + $0x90] sm:$0xff]
    %v6101 = vld [vmem:[%s6081 + $0x98] sm:$0xff]
    %v6102 = vld [vmem:[%s6081 + $0xa0] sm:$0xff]
    %v6103 = vld [vmem:[%s6081 + $0xa8] sm:$0xff]
    %v6104 = vld [vmem:[%s6081 + $0xb0] sm:$0xff]
    %v6105 = vld [vmem:[%s6081 + $0xb8] sm:$0xff]
    %v6106 = vld [vmem:[%s6081 + $0xc0] sm:$0xff]
    %v6107 = vld [vmem:[%s6081 + $0xc8] sm:$0xff]
    %v6108 = vld [vmem:[%s6081 + $0xd0] sm:$0xff]
    %v6109 = vld [vmem:[%s6081 + $0xd8] sm:$0xff]
    %v6110 = vld [vmem:[%s6081 + $0xe0] sm:$0xff]
    %v6111 = vld [vmem:[%s6081 + $0xe8] sm:$0xff]
    %v6112 = vld [vmem:[%s6081 + $0xf0] sm:$0xff]
    %v6113 = vld [vmem:[%s6081 + $0xf8] sm:$0xff]
    %v6114 = vld [vmem:[%s6081 + $0x100] sm:$0xff]
    %v6115 = vld [vmem:[%s6081 + $0x108] sm:$0xff]
    %v6116 = vld [vmem:[%s6081 + $0x110] sm:$0xff]
    %v6117 = vld [vmem:[%s6081 + $0x118] sm:$0xff]
    %v6118 = vld [vmem:[%s6081 + $0x120] sm:$0xff]
    %v6119 = vld [vmem:[%s6081 + $0x128] sm:$0xff]
    %v6120 = vld [vmem:[%s6081 + $0x130] sm:$0xff]
    %v6121 = vld [vmem:[%s6081 + $0x138] sm:$0xff]
    %v6122 = vld [vmem:[%s6081 + $0x140] sm:$0xff]
    %v6123 = vld [vmem:[%s6081 + $0x148] sm:$0xff]
    %v6124 = vld [vmem:[%s6081 + $0x150] sm:$0xff]
    %v6125 = vld [vmem:[%s6081 + $0x158] sm:$0xff]
    %v6126 = vld [vmem:[%s6081 + $0x160] sm:$0xff]
    %v6127 = vld [vmem:[%s6081 + $0x168] sm:$0xff]
    %v6128 = vld [vmem:[%s6081 + $0x170] sm:$0xff]
    %v6129 = vld [vmem:[%s6081 + $0x178] sm:$0xff]
    %v6130 = vld [vmem:[%s6081 + $0x180] sm:$0xff]
    %v6131 = vld [vmem:[%s6081 + $0x188] sm:$0xff]
    %v6132 = vld [vmem:[%s6081 + $0x190] sm:$0xff]
    %v6133 = vld [vmem:[%s6081 + $0x198] sm:$0xff]
    %v6134 = vld [vmem:[%s6081 + $0x1a0] sm:$0xff]
    %v6135 = vld [vmem:[%s6081 + $0x1a8] sm:$0xff]
    %v6136 = vld [vmem:[%s6081 + $0x1b0] sm:$0xff]
    %v6137 = vld [vmem:[%s6081 + $0x1b8] sm:$0xff]
    %v6138 = vld [vmem:[%s6081 + $0x1c0] sm:$0xff]
    %v6139 = vld [vmem:[%s6081 + $0x1c8] sm:$0xff]
    %v6140 = vld [vmem:[%s6081 + $0x1d0] sm:$0xff]
    %v6141 = vld [vmem:[%s6081 + $0x1d8] sm:$0xff]
    %v6142 = vld [vmem:[%s6081 + $0x1e0] sm:$0xff]
    %v6143 = vld [vmem:[%s6081 + $0x1e8] sm:$0xff]
    %v6144 = vld [vmem:[%s6081 + $0x1f0] sm:$0xff]
    %v6145 = vld [vmem:[%s6081 + $0x1f8] sm:$0xff]
    %v6146 = vld [vmem:[#allocation2] sm:$0xfc]
    %v6147 = vld [vmem:[#allocation2 + $0x8] sm:$0xfc]
    %v6148 = vld [vmem:[#allocation2 + $0x40] sm:$0x3]
    %v6149 = vld [vmem:[#allocation2 + $0x48] sm:$0x3]
    %s6150 = scalar_lea.vmem [#allocation24], 3584
    %v6151 = vld [vmem:[%s6150] sm:$0xff]
    %v6152 = vld [vmem:[%s6150 + $0x8] sm:$0xff]
    %v6153 = vld [vmem:[%s6150 + $0x10] sm:$0xff]
    %v6154 = vld [vmem:[%s6150 + $0x18] sm:$0xff]
    %v6155 = vld [vmem:[%s6150 + $0x20] sm:$0xff]
    %v6156 = vld [vmem:[%s6150 + $0x28] sm:$0xff]
    %v6157 = vld [vmem:[%s6150 + $0x30] sm:$0xff]
    %v6158 = vld [vmem:[%s6150 + $0x38] sm:$0xff]
    %v6159 = vld [vmem:[%s6150 + $0x40] sm:$0xff]
    %v6160 = vld [vmem:[%s6150 + $0x48] sm:$0xff]
    %v6161 = vld [vmem:[%s6150 + $0x50] sm:$0xff]
    %v6162 = vld [vmem:[%s6150 + $0x58] sm:$0xff]
    %v6163 = vld [vmem:[%s6150 + $0x60] sm:$0xff]
    %v6164 = vld [vmem:[%s6150 + $0x68] sm:$0xff]
    %v6165 = vld [vmem:[%s6150 + $0x70] sm:$0xff]
    %v6166 = vld [vmem:[%s6150 + $0x78] sm:$0xff]
    %v6167 = vld [vmem:[%s6150 + $0x80] sm:$0xff]
    %v6168 = vld [vmem:[%s6150 + $0x88] sm:$0xff]
    %v6169 = vld [vmem:[%s6150 + $0x90] sm:$0xff]
    %v6170 = vld [vmem:[%s6150 + $0x98] sm:$0xff]
    %v6171 = vld [vmem:[%s6150 + $0xa0] sm:$0xff]
    %v6172 = vld [vmem:[%s6150 + $0xa8] sm:$0xff]
    %v6173 = vld [vmem:[%s6150 + $0xb0] sm:$0xff]
    %v6174 = vld [vmem:[%s6150 + $0xb8] sm:$0xff]
    %v6175 = vld [vmem:[%s6150 + $0xc0] sm:$0xff]
    %v6176 = vld [vmem:[%s6150 + $0xc8] sm:$0xff]
    %v6177 = vld [vmem:[%s6150 + $0xd0] sm:$0xff]
    %v6178 = vld [vmem:[%s6150 + $0xd8] sm:$0xff]
    %v6179 = vld [vmem:[%s6150 + $0xe0] sm:$0xff]
    %v6180 = vld [vmem:[%s6150 + $0xe8] sm:$0xff]
    %v6181 = vld [vmem:[%s6150 + $0xf0] sm:$0xff]
    %v6182 = vld [vmem:[%s6150 + $0xf8] sm:$0xff]
    %v6183 = vld [vmem:[%s6150 + $0x100] sm:$0xff]
    %v6184 = vld [vmem:[%s6150 + $0x108] sm:$0xff]
    %v6185 = vld [vmem:[%s6150 + $0x110] sm:$0xff]
    %v6186 = vld [vmem:[%s6150 + $0x118] sm:$0xff]
    %v6187 = vld [vmem:[%s6150 + $0x120] sm:$0xff]
    %v6188 = vld [vmem:[%s6150 + $0x128] sm:$0xff]
    %v6189 = vld [vmem:[%s6150 + $0x130] sm:$0xff]
    %v6190 = vld [vmem:[%s6150 + $0x138] sm:$0xff]
    %v6191 = vld [vmem:[%s6150 + $0x140] sm:$0xff]
    %v6192 = vld [vmem:[%s6150 + $0x148] sm:$0xff]
    %v6193 = vld [vmem:[%s6150 + $0x150] sm:$0xff]
    %v6194 = vld [vmem:[%s6150 + $0x158] sm:$0xff]
    %v6195 = vld [vmem:[%s6150 + $0x160] sm:$0xff]
    %v6196 = vld [vmem:[%s6150 + $0x168] sm:$0xff]
    %v6197 = vld [vmem:[%s6150 + $0x170] sm:$0xff]
    %v6198 = vld [vmem:[%s6150 + $0x178] sm:$0xff]
    %v6199 = vld [vmem:[%s6150 + $0x180] sm:$0xff]
    %v6200 = vld [vmem:[%s6150 + $0x188] sm:$0xff]
    %v6201 = vld [vmem:[%s6150 + $0x190] sm:$0xff]
    %v6202 = vld [vmem:[%s6150 + $0x198] sm:$0xff]
    %v6203 = vld [vmem:[%s6150 + $0x1a0] sm:$0xff]
    %v6204 = vld [vmem:[%s6150 + $0x1a8] sm:$0xff]
    %v6205 = vld [vmem:[%s6150 + $0x1b0] sm:$0xff]
    %v6206 = vld [vmem:[%s6150 + $0x1b8] sm:$0xff]
    %v6207 = vld [vmem:[%s6150 + $0x1c0] sm:$0xff]
    %v6208 = vld [vmem:[%s6150 + $0x1c8] sm:$0xff]
    %v6209 = vld [vmem:[%s6150 + $0x1d0] sm:$0xff]
    %v6210 = vld [vmem:[%s6150 + $0x1d8] sm:$0xff]
    %v6211 = vld [vmem:[%s6150 + $0x1e0] sm:$0xff]
    %v6212 = vld [vmem:[%s6150 + $0x1e8] sm:$0xff]
    %v6213 = vld [vmem:[%s6150 + $0x1f0] sm:$0xff]
    %v6214 = vld [vmem:[%s6150 + $0x1f8] sm:$0xff]
    %v6225 = vrot.slane %v6146, 2
    %v6226 = vrot.slane %v6075, 2
    %v6227 = vsel %vm458, %v6225, %v6226
    %v6228 = vrot.slane %v6147, 2
    %v6229 = vrot.slane %v6076, 2
    %v6230 = vsel %vm458, %v6228, %v6229
    %v6231 = vrot.slane %v6077, 2
    %v6232 = vsel %vm458, %v6226, %v6231
    %v6233 = vrot.slane %v6078, 2
    %v6234 = vsel %vm458, %v6229, %v6233
    %v6235 = vrot.slane %v6079, 2
    %v6236 = vsel %vm458, %v6231, %v6235
    %v6237 = vrot.slane %v6080, 2
    %v6238 = vsel %vm458, %v6233, %v6237
    %v6239 = vrot.slane %v6148, 2
    %v6240 = vsel %vm458, %v6235, %v6239
    %v6241 = vrot.slane %v6149, 2
    %v6242 = vsel %vm458, %v6237, %v6241
    %6251 = vmatprep.subr.mxu0 %v6152
    %6252 = vmatpush1.msra.mxu0 %v6151
    %6253 = vmatprep.subr.mxu0 %v6154
    %6254 = vmatpush1.msra.mxu0 %v6153
    %6255 = vmatprep.subr.mxu0 %v6156
    %6256 = vmatpush1.msra.mxu0 %v6155
    %6257 = vmatprep.subr.mxu0 %v6158
    %6258 = vmatpush1.msra.mxu0 %v6157
    %6259 = vmatprep.subr.mxu0 %v6160
    %6260 = vmatpush1.msra.mxu0 %v6159
    %6261 = vmatprep.subr.mxu0 %v6162
    %6262 = vmatpush1.msra.mxu0 %v6161
    %6263 = vmatprep.subr.mxu0 %v6164
    %6264 = vmatpush1.msra.mxu0 %v6163
    %6265 = vmatprep.subr.mxu0 %v6166
    %6266 = vmatpush1.msra.mxu0 %v6165
    %6267 = vmatprep.subr.mxu0 %v6168
    %6268 = vmatpush1.msra.mxu0 %v6167
    %6269 = vmatprep.subr.mxu0 %v6170
    %6270 = vmatpush1.msra.mxu0 %v6169
    %6271 = vmatprep.subr.mxu0 %v6172
    %6272 = vmatpush1.msra.mxu0 %v6171
    %6273 = vmatprep.subr.mxu0 %v6174
    %6274 = vmatpush1.msra.mxu0 %v6173
    %6275 = vmatprep.subr.mxu0 %v6176
    %6276 = vmatpush1.msra.mxu0 %v6175
    %6277 = vmatprep.subr.mxu0 %v6178
    %6278 = vmatpush1.msra.mxu0 %v6177
    %6279 = vmatprep.subr.mxu0 %v6180
    %6280 = vmatpush1.msra.mxu0 %v6179
    %6281 = vmatprep.subr.mxu0 %v6182
    %6282 = vmatpush1.msra.mxu0 %v6181
    %6283 = vmatprep.subr.mxu0 %v6184
    %6284 = vmatpush1.msra.mxu0 %v6183
    %6285 = vmatprep.subr.mxu0 %v6186
    %6286 = vmatpush1.msra.mxu0 %v6185
    %6287 = vmatprep.subr.mxu0 %v6188
    %6288 = vmatpush1.msra.mxu0 %v6187
    %6289 = vmatprep.subr.mxu0 %v6190
    %6290 = vmatpush1.msra.mxu0 %v6189
    %6291 = vmatprep.subr.mxu0 %v6192
    %6292 = vmatpush1.msra.mxu0 %v6191
    %6293 = vmatprep.subr.mxu0 %v6194
    %6294 = vmatpush1.msra.mxu0 %v6193
    %6295 = vmatprep.subr.mxu0 %v6196
    %6296 = vmatpush1.msra.mxu0 %v6195
    %6297 = vmatprep.subr.mxu0 %v6198
    %6298 = vmatpush1.msra.mxu0 %v6197
    %6299 = vmatprep.subr.mxu0 %v6200
    %6300 = vmatpush1.msra.mxu0 %v6199
    %6301 = vmatprep.subr.mxu0 %v6202
    %6302 = vmatpush1.msra.mxu0 %v6201
    %6303 = vmatprep.subr.mxu0 %v6204
    %6304 = vmatpush1.msra.mxu0 %v6203
    %6305 = vmatprep.subr.mxu0 %v6206
    %6306 = vmatpush1.msra.mxu0 %v6205
    %6307 = vmatprep.subr.mxu0 %v6208
    %6308 = vmatpush1.msra.mxu0 %v6207
    %6309 = vmatprep.subr.mxu0 %v6210
    %6310 = vmatpush1.msra.mxu0 %v6209
    %6311 = vmatprep.subr.mxu0 %v6212
    %6312 = vmatpush1.msra.mxu0 %v6211
    %6313 = vmatprep.subr.mxu0 %v6214
    %6314 = vmatpush1.msra.mxu0 %v6213
    %6315 = vmatprep.mubr.f32.mxu0 %v6230
    %6316 = vmatmul.mubr.f32.gmra.mrb[0].mxu0 %v6227
    %v6317 = vpop.f32.mrb[0].mxu0
    %v6318 = vadd.f32 0.0, %v6317
    %v6319 = vpop.f32.mrb[0].mxu0
    %v6320 = vadd.f32 0.0, %v6319
    %6321 = vmatprep.mubr.f32.mxu0 %v6234
    %6322 = vmatmul.mubr.f32.gmra.mrb[0].mxu0 %v6232
    %v6323 = vpop.f32.mrb[0].mxu0
    %v6324 = vadd.f32 0.0, %v6323
    %v6325 = vpop.f32.mrb[0].mxu0
    %v6326 = vadd.f32 0.0, %v6325
    %6327 = vmatprep.mubr.f32.mxu0 %v6238
    %6328 = vmatmul.mubr.f32.gmra.mrb[0].mxu0 %v6236
    %v6329 = vpop.f32.mrb[0].mxu0
    %v6330 = vadd.f32 0.0, %v6329
    %v6331 = vpop.f32.mrb[0].mxu0
    %v6332 = vadd.f32 0.0, %v6331
    %6333 = vmatprep.mubr.f32.mxu0 %v6242
    %6334 = vmatmul.mubr.f32.gmra.mrb[0].mxu0 %v6240
    %v6335 = vpop.f32.mrb[0].mxu0
    %v6336 = vadd.f32 0.0, %v6335
    %v6337 = vpop.f32.mrb[0].mxu0
    %v6338 = vadd.f32 0.0, %v6337
    %6339 = vdwg.mxu0
    %6340 = vmatprep.subr.mxu0 %v6083
    %6341 = vmatpush1.msra.mxu0 %v6082
    %6342 = vmatprep.subr.mxu0 %v6085
    %6343 = vmatpush1.msra.mxu0 %v6084
    %6344 = vmatprep.subr.mxu0 %v6087
    %6345 = vmatpush1.msra.mxu0 %v6086
    %6346 = vmatprep.subr.mxu0 %v6089
    %6347 = vmatpush1.msra.mxu0 %v6088
    %6348 = vmatprep.subr.mxu0 %v6091
    %6349 = vmatpush1.msra.mxu0 %v6090
    %6350 = vmatprep.subr.mxu0 %v6093
    %6351 = vmatpush1.msra.mxu0 %v6092
    %6352 = vmatprep.subr.mxu0 %v6095
    %6353 = vmatpush1.msra.mxu0 %v6094
    %6354 = vmatprep.subr.mxu0 %v6097
    %6355 = vmatpush1.msra.mxu0 %v6096
    %6356 = vmatprep.subr.mxu0 %v6099
    %6357 = vmatpush1.msra.mxu0 %v6098
    %6358 = vmatprep.subr.mxu0 %v6101
    %6359 = vmatpush1.msra.mxu0 %v6100
    %6360 = vmatprep.subr.mxu0 %v6103
    %6361 = vmatpush1.msra.mxu0 %v6102
    %6362 = vmatprep.subr.mxu0 %v6105
    %6363 = vmatpush1.msra.mxu0 %v6104
    %6364 = vmatprep.subr.mxu0 %v6107
    %6365 = vmatpush1.msra.mxu0 %v6106
    %6366 = vmatprep.subr.mxu0 %v6109
    %6367 = vmatpush1.msra.mxu0 %v6108
    %6368 = vmatprep.subr.mxu0 %v6111
    %6369 = vmatpush1.msra.mxu0 %v6110
    %6370 = vmatprep.subr.mxu0 %v6113
    %6371 = vmatpush1.msra.mxu0 %v6112
    %6372 = vmatprep.subr.mxu0 %v6115
    %6373 = vmatpush1.msra.mxu0 %v6114
    %6374 = vmatprep.subr.mxu0 %v6117
    %6375 = vmatpush1.msra.mxu0 %v6116
    %6376 = vmatprep.subr.mxu0 %v6119
    %6377 = vmatpush1.msra.mxu0 %v6118
    %6378 = vmatprep.subr.mxu0 %v6121
    %6379 = vmatpush1.msra.mxu0 %v6120
    %6380 = vmatprep.subr.mxu0 %v6123
    %6381 = vmatpush1.msra.mxu0 %v6122
    %6382 = vmatprep.subr.mxu0 %v6125
    %6383 = vmatpush1.msra.mxu0 %v6124
    %6384 = vmatprep.subr.mxu0 %v6127
    %6385 = vmatpush1.msra.mxu0 %v6126
    %6386 = vmatprep.subr.mxu0 %v6129
    %6387 = vmatpush1.msra.mxu0 %v6128
    %6388 = vmatprep.subr.mxu0 %v6131
    %6389 = vmatpush1.msra.mxu0 %v6130
    %6390 = vmatprep.subr.mxu0 %v6133
    %6391 = vmatpush1.msra.mxu0 %v6132
    %6392 = vmatprep.subr.mxu0 %v6135
    %6393 = vmatpush1.msra.mxu0 %v6134
    %6394 = vmatprep.subr.mxu0 %v6137
    %6395 = vmatpush1.msra.mxu0 %v6136
    %6396 = vmatprep.subr.mxu0 %v6139
    %6397 = vmatpush1.msra.mxu0 %v6138
    %6398 = vmatprep.subr.mxu0 %v6141
    %6399 = vmatpush1.msra.mxu0 %v6140
    %6400 = vmatprep.subr.mxu0 %v6143
    %6401 = vmatpush1.msra.mxu0 %v6142
    %6402 = vmatprep.subr.mxu0 %v6145
    %6403 = vmatpush1.msra.mxu0 %v6144
    %6404 = vmatprep.mubr.f32.mxu0 %v6074
    %6405 = vmatmul.mubr.f32.gmra.mrb[0].mxu0 %v6073
    %v6406 = vpop.f32.mrb[0].mxu0
    %v6407 = vadd.f32 %v6318, %v6406
    %v6408 = vpop.f32.mrb[0].mxu0
    %v6409 = vadd.f32 %v6320, %v6408
    %6410 = vmatprep.mubr.f32.mxu0 %v6076
    %6411 = vmatmul.mubr.f32.gmra.mrb[0].mxu0 %v6075
    %v6412 = vpop.f32.mrb[0].mxu0
    %v6413 = vadd.f32 %v6324, %v6412
    %v6414 = vpop.f32.mrb[0].mxu0
    %v6415 = vadd.f32 %v6326, %v6414
    %6416 = vmatprep.mubr.f32.mxu0 %v6078
    %6417 = vmatmul.mubr.f32.gmra.mrb[0].mxu0 %v6077
    %v6418 = vpop.f32.mrb[0].mxu0
    %v6419 = vadd.f32 %v6330, %v6418
    %v6420 = vpop.f32.mrb[0].mxu0
    %v6421 = vadd.f32 %v6332, %v6420
    %6422 = vmatprep.mubr.f32.mxu0 %v6080
    %6423 = vmatmul.mubr.f32.gmra.mrb[0].mxu0 %v6079
    %v6424 = vpop.f32.mrb[0].mxu0
    %v6425 = vadd.f32 %v6336, %v6424
    %v6426 = vpop.f32.mrb[0].mxu0
    %v6427 = vadd.f32 %v6338, %v6426
    %6428 = vdwg.mxu0
    %v6429 = vld [vmem:[#allocation2] sm:$0xf0]
    %v6430 = vld [vmem:[#allocation2 + $0x8] sm:$0xf0]
    %v6431 = vld [vmem:[#allocation2 + $0x40] sm:$0xf]
    %v6432 = vld [vmem:[#allocation2 + $0x48] sm:$0xf]
    %s6433 = scalar_lea.vmem [#allocation24], 4096
    %v6434 = vld [vmem:[%s6433] sm:$0xff]
    %v6435 = vld [vmem:[%s6433 + $0x8] sm:$0xff]
    %v6436 = vld [vmem:[%s6433 + $0x10] sm:$0xff]
    %v6437 = vld [vmem:[%s6433 + $0x18] sm:$0xff]
    %v6438 = vld [vmem:[%s6433 + $0x20] sm:$0xff]
    %v6439 = vld [vmem:[%s6433 + $0x28] sm:$0xff]
    %v6440 = vld [vmem:[%s6433 + $0x30] sm:$0xff]
    %v6441 = vld [vmem:[%s6433 + $0x38] sm:$0xff]
    %v6442 = vld [vmem:[%s6433 + $0x40] sm:$0xff]
    %v6443 = vld [vmem:[%s6433 + $0x48] sm:$0xff]
    %v6444 = vld [vmem:[%s6433 + $0x50] sm:$0xff]
    %v6445 = vld [vmem:[%s6433 + $0x58] sm:$0xff]
    %v6446 = vld [vmem:[%s6433 + $0x60] sm:$0xff]
    %v6447 = vld [vmem:[%s6433 + $0x68] sm:$0xff]
    %v6448 = vld [vmem:[%s6433 + $0x70] sm:$0xff]
    %v6449 = vld [vmem:[%s6433 + $0x78] sm:$0xff]
    %v6450 = vld [vmem:[%s6433 + $0x80] sm:$0xff]
    %v6451 = vld [vmem:[%s6433 + $0x88] sm:$0xff]
    %v6452 = vld [vmem:[%s6433 + $0x90] sm:$0xff]
    %v6453 = vld [vmem:[%s6433 + $0x98] sm:$0xff]
    %v6454 = vld [vmem:[%s6433 + $0xa0] sm:$0xff]
    %v6455 = vld [vmem:[%s6433 + $0xa8] sm:$0xff]
    %v6456 = vld [vmem:[%s6433 + $0xb0] sm:$0xff]
    %v6457 = vld [vmem:[%s6433 + $0xb8] sm:$0xff]
    %v6458 = vld [vmem:[%s6433 + $0xc0] sm:$0xff]
    %v6459 = vld [vmem:[%s6433 + $0xc8] sm:$0xff]
    %v6460 = vld [vmem:[%s6433 + $0xd0] sm:$0xff]
    %v6461 = vld [vmem:[%s6433 + $0xd8] sm:$0xff]
    %v6462 = vld [vmem:[%s6433 + $0xe0] sm:$0xff]
    %v6463 = vld [vmem:[%s6433 + $0xe8] sm:$0xff]
    %v6464 = vld [vmem:[%s6433 + $0xf0] sm:$0xff]
    %v6465 = vld [vmem:[%s6433 + $0xf8] sm:$0xff]
    %v6466 = vld [vmem:[%s6433 + $0x100] sm:$0xff]
    %v6467 = vld [vmem:[%s6433 + $0x108] sm:$0xff]
    %v6468 = vld [vmem:[%s6433 + $0x110] sm:$0xff]
    %v6469 = vld [vmem:[%s6433 + $0x118] sm:$0xff]
    %v6470 = vld [vmem:[%s6433 + $0x120] sm:$0xff]
    %v6471 = vld [vmem:[%s6433 + $0x128] sm:$0xff]
    %v6472 = vld [vmem:[%s6433 + $0x130] sm:$0xff]
    %v6473 = vld [vmem:[%s6433 + $0x138] sm:$0xff]
    %v6474 = vld [vmem:[%s6433 + $0x140] sm:$0xff]
    %v6475 = vld [vmem:[%s6433 + $0x148] sm:$0xff]
    %v6476 = vld [vmem:[%s6433 + $0x150] sm:$0xff]
    %v6477 = vld [vmem:[%s6433 + $0x158] sm:$0xff]
    %v6478 = vld [vmem:[%s6433 + $0x160] sm:$0xff]
    %v6479 = vld [vmem:[%s6433 + $0x168] sm:$0xff]
    %v6480 = vld [vmem:[%s6433 + $0x170] sm:$0xff]
    %v6481 = vld [vmem:[%s6433 + $0x178] sm:$0xff]
    %v6482 = vld [vmem:[%s6433 + $0x180] sm:$0xff]
    %v6483 = vld [vmem:[%s6433 + $0x188] sm:$0xff]
    %v6484 = vld [vmem:[%s6433 + $0x190] sm:$0xff]
    %v6485 = vld [vmem:[%s6433 + $0x198] sm:$0xff]
    %v6486 = vld [vmem:[%s6433 + $0x1a0] sm:$0xff]
    %v6487 = vld [vmem:[%s6433 + $0x1a8] sm:$0xff]
    %v6488 = vld [vmem:[%s6433 + $0x1b0] sm:$0xff]
    %v6489 = vld [vmem:[%s6433 + $0x1b8] sm:$0xff]
    %v6490 = vld [vmem:[%s6433 + $0x1c0] sm:$0xff]
    %v6491 = vld [vmem:[%s6433 + $0x1c8] sm:$0xff]
    %v6492 = vld [vmem:[%s6433 + $0x1d0] sm:$0xff]
    %v6493 = vld [vmem:[%s6433 + $0x1d8] sm:$0xff]
    %v6494 = vld [vmem:[%s6433 + $0x1e0] sm:$0xff]
    %v6495 = vld [vmem:[%s6433 + $0x1e8] sm:$0xff]
    %v6496 = vld [vmem:[%s6433 + $0x1f0] sm:$0xff]
    %v6497 = vld [vmem:[%s6433 + $0x1f8] sm:$0xff]
    %v6502 = vrot.slane %v6429, 4
    %v6503 = vrot.slane %v6075, 4
    %v6504 = vsel %vm736, %v6502, %v6503
    %v6505 = vrot.slane %v6430, 4
    %v6506 = vrot.slane %v6076, 4
    %v6507 = vsel %vm736, %v6505, %v6506
    %v6508 = vrot.slane %v6077, 4
    %v6509 = vsel %vm736, %v6503, %v6508
    %v6510 = vrot.slane %v6078, 4
    %v6511 = vsel %vm736, %v6506, %v6510
    %v6512 = vrot.slane %v6079, 4
    %v6513 = vsel %vm736, %v6508, %v6512
    %v6514 = vrot.slane %v6080, 4
    %v6515 = vsel %vm736, %v6510, %v6514
    %v6516 = vrot.slane %v6431, 4
    %v6517 = vsel %vm736, %v6512, %v6516
    %v6518 = vrot.slane %v6432, 4
    %v6519 = vsel %vm736, %v6514, %v6518
    %6528 = vmatprep.subr.mxu0 %v6435
    %6529 = vmatpush1.msra.mxu0 %v6434
    %6530 = vmatprep.subr.mxu0 %v6437
    %6531 = vmatpush1.msra.mxu0 %v6436
    %6532 = vmatprep.subr.mxu0 %v6439
    %6533 = vmatpush1.msra.mxu0 %v6438
    %6534 = vmatprep.subr.mxu0 %v6441
    %6535 = vmatpush1.msra.mxu0 %v6440
    %6536 = vmatprep.subr.mxu0 %v6443
    %6537 = vmatpush1.msra.mxu0 %v6442
    %6538 = vmatprep.subr.mxu0 %v6445
    %6539 = vmatpush1.msra.mxu0 %v6444
    %6540 = vmatprep.subr.mxu0 %v6447
    %6541 = vmatpush1.msra.mxu0 %v6446
    %6542 = vmatprep.subr.mxu0 %v6449
    %6543 = vmatpush1.msra.mxu0 %v6448
    %6544 = vmatprep.subr.mxu0 %v6451
    %6545 = vmatpush1.msra.mxu0 %v6450
    %6546 = vmatprep.subr.mxu0 %v6453
    %6547 = vmatpush1.msra.mxu0 %v6452
    %6548 = vmatprep.subr.mxu0 %v6455
    %6549 = vmatpush1.msra.mxu0 %v6454
    %6550 = vmatprep.subr.mxu0 %v6457
    %6551 = vmatpush1.msra.mxu0 %v6456
    %6552 = vmatprep.subr.mxu0 %v6459
    %6553 = vmatpush1.msra.mxu0 %v6458
    %6554 = vmatprep.subr.mxu0 %v6461
    %6555 = vmatpush1.msra.mxu0 %v6460
    %6556 = vmatprep.subr.mxu0 %v6463
    %6557 = vmatpush1.msra.mxu0 %v6462
    %6558 = vmatprep.subr.mxu0 %v6465
    %6559 = vmatpush1.msra.mxu0 %v6464
    %6560 = vmatprep.subr.mxu0 %v6467
    %6561 = vmatpush1.msra.mxu0 %v6466
    %6562 = vmatprep.subr.mxu0 %v6469
    %6563 = vmatpush1.msra.mxu0 %v6468
    %6564 = vmatprep.subr.mxu0 %v6471
    %6565 = vmatpush1.msra.mxu0 %v6470
    %6566 = vmatprep.subr.mxu0 %v6473
    %6567 = vmatpush1.msra.mxu0 %v6472
    %6568 = vmatprep.subr.mxu0 %v6475
    %6569 = vmatpush1.msra.mxu0 %v6474
    %6570 = vmatprep.subr.mxu0 %v6477
    %6571 = vmatpush1.msra.mxu0 %v6476
    %6572 = vmatprep.subr.mxu0 %v6479
    %6573 = vmatpush1.msra.mxu0 %v6478
    %6574 = vmatprep.subr.mxu0 %v6481
    %6575 = vmatpush1.msra.mxu0 %v6480
    %6576 = vmatprep.subr.mxu0 %v6483
    %6577 = vmatpush1.msra.mxu0 %v6482
    %6578 = vmatprep.subr.mxu0 %v6485
    %6579 = vmatpush1.msra.mxu0 %v6484
    %6580 = vmatprep.subr.mxu0 %v6487
    %6581 = vmatpush1.msra.mxu0 %v6486
    %6582 = vmatprep.subr.mxu0 %v6489
    %6583 = vmatpush1.msra.mxu0 %v6488
    %6584 = vmatprep.subr.mxu0 %v6491
    %6585 = vmatpush1.msra.mxu0 %v6490
    %6586 = vmatprep.subr.mxu0 %v6493
    %6587 = vmatpush1.msra.mxu0 %v6492
    %6588 = vmatprep.subr.mxu0 %v6495
    %6589 = vmatpush1.msra.mxu0 %v6494
    %6590 = vmatprep.subr.mxu0 %v6497
    %6591 = vmatpush1.msra.mxu0 %v6496
    %6592 = vmatprep.mubr.f32.mxu0 %v6507
    %6593 = vmatmul.mubr.f32.gmra.mrb[0].mxu0 %v6504
    %v6594 = vpop.f32.mrb[0].mxu0
    %v6595 = vadd.f32 0.0, %v6594
    %v6596 = vpop.f32.mrb[0].mxu0
    %v6597 = vadd.f32 0.0, %v6596
    %6598 = vmatprep.mubr.f32.mxu0 %v6511
    %6599 = vmatmul.mubr.f32.gmra.mrb[0].mxu0 %v6509
    %v6600 = vpop.f32.mrb[0].mxu0
    %v6601 = vadd.f32 0.0, %v6600
    %v6602 = vpop.f32.mrb[0].mxu0
    %v6603 = vadd.f32 0.0, %v6602
    %6604 = vmatprep.mubr.f32.mxu0 %v6515
    %6605 = vmatmul.mubr.f32.gmra.mrb[0].mxu0 %v6513
    %v6606 = vpop.f32.mrb[0].mxu0
    %v6607 = vadd.f32 0.0, %v6606
    %v6608 = vpop.f32.mrb[0].mxu0
    %v6609 = vadd.f32 0.0, %v6608
    %6610 = vmatprep.mubr.f32.mxu0 %v6519
    %6611 = vmatmul.mubr.f32.gmra.mrb[0].mxu0 %v6517
    %v6612 = vpop.f32.mrb[0].mxu0
    %v6613 = vadd.f32 0.0, %v6612
    %v6614 = vpop.f32.mrb[0].mxu0
    %v6615 = vadd.f32 0.0, %v6614
    %6616 = vdwg.mxu0
    %v6617 = vadd.f32 %v6407, %v6595
    %v6618 = vadd.f32 %v6409, %v6597
    %v6619 = vadd.f32 %v6413, %v6601
    %v6620 = vadd.f32 %v6415, %v6603
    %v6621 = vadd.f32 %v6419, %v6607
    %v6622 = vadd.f32 %v6421, %v6609
    %v6623 = vadd.f32 %v6425, %v6613
    %v6624 = vadd.f32 %v6427, %v6615
    %s6625 = scalar_lea.vmem [#allocation26], 4
    %v6626 = vld [vmem:[%s6625] sm:$0x3]
    %v6628 = vlaneseq
    %v6629 = vshrl.u32 %v6628, 7
    %v6630 = vsub.s32 0, %v6629
    %v6631 = vrot.slane %v6626, %v6630
    %v6632 = vlaneseq
    %v6633 = vshrl.u32 %v6632, 7
    %v6634 = vsub.s32 1, %v6633
    %v6635 = vrot.slane %v6626, %v6634
    %v6638 = vadd.f32 %v6617, %v6631
    %v6639 = vadd.f32 %v6618, %v6635
    %v6640 = vadd.f32 %v6619, %v6631
    %v6641 = vadd.f32 %v6620, %v6635
    %v6642 = vadd.f32 %v6621, %v6631
    %v6643 = vadd.f32 %v6622, %v6635
    %v6644 = vadd.f32 %v6623, %v6631
    %v6645 = vadd.f32 %v6624, %v6635
    %v6646 = vmax.f32 %v6638, 0.0
    %v6647 = vmax.f32 %v6639, 0.0
    %v6648 = vmax.f32 %v6640, 0.0
    %v6649 = vmax.f32 %v6641, 0.0
    %v6650 = vmax.f32 %v6642, 0.0
    %v6651 = vmax.f32 %v6643, 0.0
    %v6652 = vmax.f32 %v6644, 0.0
    %v6653 = vmax.f32 %v6645, 0.0
    %v6662 = vrot.slane %v6646, 6
    %v6663 = vrot.slane %v6647, 6
    %v6664 = vrot.slane %v6648, 6
    %v6665 = vsel %vm272, %v6662, %v6664
    %v6666 = vrot.slane %v6649, 6
    %v6667 = vsel %vm272, %v6663, %v6666
    %v6668 = vrot.slane %v6650, 6
    %v6669 = vsel %vm272, %v6664, %v6668
    %v6670 = vrot.slane %v6651, 6
    %v6671 = vsel %vm272, %v6666, %v6670
    %v6672 = vrot.slane %v6652, 6
    %v6673 = vsel %vm272, %v6668, %v6672
    %v6674 = vrot.slane %v6653, 6
    %v6675 = vsel %vm272, %v6670, %v6674
    %6686 = vst [vmem:[#allocation2] sm:$0xfc] %v6662
    %6687 = vst [vmem:[#allocation2 + $0x8] sm:$0xfc] %v6663
    %6688 = vst [vmem:[#allocation2 + $0x10] sm:$0xff] %v6665
    %6689 = vst [vmem:[#allocation2 + $0x18] sm:$0xff] %v6667
    %6690 = vst [vmem:[#allocation2 + $0x20] sm:$0xff] %v6669
    %6691 = vst [vmem:[#allocation2 + $0x28] sm:$0xff] %v6671
    %6692 = vst [vmem:[#allocation2 + $0x30] sm:$0xff] %v6673
    %6693 = vst [vmem:[#allocation2 + $0x38] sm:$0xff] %v6675
    %6694 = vst [vmem:[#allocation2 + $0x40] sm:$0x3] %v6672
    %6695 = vst [vmem:[#allocation2 + $0x48] sm:$0x3] %v6674
    %v6696 = vld [vmem:[#allocation2] sm:$0xff]
    %v6697 = vld [vmem:[#allocation2 + $0x8] sm:$0xff]
    %v6698 = vld [vmem:[#allocation2 + $0x10] sm:$0xff]
    %v6699 = vld [vmem:[#allocation2 + $0x18] sm:$0xff]
    %v6700 = vld [vmem:[#allocation2 + $0x20] sm:$0xff]
    %v6701 = vld [vmem:[#allocation2 + $0x28] sm:$0xff]
    %v6702 = vld [vmem:[#allocation2 + $0x30] sm:$0xff]
    %v6703 = vld [vmem:[#allocation2 + $0x38] sm:$0xff]
    %s6704 = scalar_lea.vmem [#allocation24], 4608
    %v6705 = vld [vmem:[%s6704] sm:$0xff]
    %v6706 = vld [vmem:[%s6704 + $0x8] sm:$0xff]
    %v6707 = vld [vmem:[%s6704 + $0x10] sm:$0xff]
    %v6708 = vld [vmem:[%s6704 + $0x18] sm:$0xff]
    %v6709 = vld [vmem:[%s6704 + $0x20] sm:$0xff]
    %v6710 = vld [vmem:[%s6704 + $0x28] sm:$0xff]
    %v6711 = vld [vmem:[%s6704 + $0x30] sm:$0xff]
    %v6712 = vld [vmem:[%s6704 + $0x38] sm:$0xff]
    %v6713 = vld [vmem:[%s6704 + $0x40] sm:$0xff]
    %v6714 = vld [vmem:[%s6704 + $0x48] sm:$0xff]
    %v6715 = vld [vmem:[%s6704 + $0x50] sm:$0xff]
    %v6716 = vld [vmem:[%s6704 + $0x58] sm:$0xff]
    %v6717 = vld [vmem:[%s6704 + $0x60] sm:$0xff]
    %v6718 = vld [vmem:[%s6704 + $0x68] sm:$0xff]
    %v6719 = vld [vmem:[%s6704 + $0x70] sm:$0xff]
    %v6720 = vld [vmem:[%s6704 + $0x78] sm:$0xff]
    %v6721 = vld [vmem:[%s6704 + $0x80] sm:$0xff]
    %v6722 = vld [vmem:[%s6704 + $0x88] sm:$0xff]
    %v6723 = vld [vmem:[%s6704 + $0x90] sm:$0xff]
    %v6724 = vld [vmem:[%s6704 + $0x98] sm:$0xff]
    %v6725 = vld [vmem:[%s6704 + $0xa0] sm:$0xff]
    %v6726 = vld [vmem:[%s6704 + $0xa8] sm:$0xff]
    %v6727 = vld [vmem:[%s6704 + $0xb0] sm:$0xff]
    %v6728 = vld [vmem:[%s6704 + $0xb8] sm:$0xff]
    %v6729 = vld [vmem:[%s6704 + $0xc0] sm:$0xff]
    %v6730 = vld [vmem:[%s6704 + $0xc8] sm:$0xff]
    %v6731 = vld [vmem:[%s6704 + $0xd0] sm:$0xff]
    %v6732 = vld [vmem:[%s6704 + $0xd8] sm:$0xff]
    %v6733 = vld [vmem:[%s6704 + $0xe0] sm:$0xff]
    %v6734 = vld [vmem:[%s6704 + $0xe8] sm:$0xff]
    %v6735 = vld [vmem:[%s6704 + $0xf0] sm:$0xff]
    %v6736 = vld [vmem:[%s6704 + $0xf8] sm:$0xff]
    %v6737 = vld [vmem:[%s6704 + $0x100] sm:$0xff]
    %v6738 = vld [vmem:[%s6704 + $0x108] sm:$0xff]
    %v6739 = vld [vmem:[%s6704 + $0x110] sm:$0xff]
    %v6740 = vld [vmem:[%s6704 + $0x118] sm:$0xff]
    %v6741 = vld [vmem:[%s6704 + $0x120] sm:$0xff]
    %v6742 = vld [vmem:[%s6704 + $0x128] sm:$0xff]
    %v6743 = vld [vmem:[%s6704 + $0x130] sm:$0xff]
    %v6744 = vld [vmem:[%s6704 + $0x138] sm:$0xff]
    %v6745 = vld [vmem:[%s6704 + $0x140] sm:$0xff]
    %v6746 = vld [vmem:[%s6704 + $0x148] sm:$0xff]
    %v6747 = vld [vmem:[%s6704 + $0x150] sm:$0xff]
    %v6748 = vld [vmem:[%s6704 + $0x158] sm:$0xff]
    %v6749 = vld [vmem:[%s6704 + $0x160] sm:$0xff]
    %v6750 = vld [vmem:[%s6704 + $0x168] sm:$0xff]
    %v6751 = vld [vmem:[%s6704 + $0x170] sm:$0xff]
    %v6752 = vld [vmem:[%s6704 + $0x178] sm:$0xff]
    %v6753 = vld [vmem:[%s6704 + $0x180] sm:$0xff]
    %v6754 = vld [vmem:[%s6704 + $0x188] sm:$0xff]
    %v6755 = vld [vmem:[%s6704 + $0x190] sm:$0xff]
    %v6756 = vld [vmem:[%s6704 + $0x198] sm:$0xff]
    %v6757 = vld [vmem:[%s6704 + $0x1a0] sm:$0xff]
    %v6758 = vld [vmem:[%s6704 + $0x1a8] sm:$0xff]
    %v6759 = vld [vmem:[%s6704 + $0x1b0] sm:$0xff]
    %v6760 = vld [vmem:[%s6704 + $0x1b8] sm:$0xff]
    %v6761 = vld [vmem:[%s6704 + $0x1c0] sm:$0xff]
    %v6762 = vld [vmem:[%s6704 + $0x1c8] sm:$0xff]
    %v6763 = vld [vmem:[%s6704 + $0x1d0] sm:$0xff]
    %v6764 = vld [vmem:[%s6704 + $0x1d8] sm:$0xff]
    %v6765 = vld [vmem:[%s6704 + $0x1e0] sm:$0xff]
    %v6766 = vld [vmem:[%s6704 + $0x1e8] sm:$0xff]
    %v6767 = vld [vmem:[%s6704 + $0x1f0] sm:$0xff]
    %v6768 = vld [vmem:[%s6704 + $0x1f8] sm:$0xff]
    %v6769 = vld [vmem:[#allocation2] sm:$0xfc]
    %v6770 = vld [vmem:[#allocation2 + $0x8] sm:$0xfc]
    %v6771 = vld [vmem:[#allocation2 + $0x40] sm:$0x3]
    %v6772 = vld [vmem:[#allocation2 + $0x48] sm:$0x3]
    %s6773 = scalar_lea.vmem [#allocation24], 5120
    %v6774 = vld [vmem:[%s6773] sm:$0xff]
    %v6775 = vld [vmem:[%s6773 + $0x8] sm:$0xff]
    %v6776 = vld [vmem:[%s6773 + $0x10] sm:$0xff]
    %v6777 = vld [vmem:[%s6773 + $0x18] sm:$0xff]
    %v6778 = vld [vmem:[%s6773 + $0x20] sm:$0xff]
    %v6779 = vld [vmem:[%s6773 + $0x28] sm:$0xff]
    %v6780 = vld [vmem:[%s6773 + $0x30] sm:$0xff]
    %v6781 = vld [vmem:[%s6773 + $0x38] sm:$0xff]
    %v6782 = vld [vmem:[%s6773 + $0x40] sm:$0xff]
    %v6783 = vld [vmem:[%s6773 + $0x48] sm:$0xff]
    %v6784 = vld [vmem:[%s6773 + $0x50] sm:$0xff]
    %v6785 = vld [vmem:[%s6773 + $0x58] sm:$0xff]
    %v6786 = vld [vmem:[%s6773 + $0x60] sm:$0xff]
    %v6787 = vld [vmem:[%s6773 + $0x68] sm:$0xff]
    %v6788 = vld [vmem:[%s6773 + $0x70] sm:$0xff]
    %v6789 = vld [vmem:[%s6773 + $0x78] sm:$0xff]
    %v6790 = vld [vmem:[%s6773 + $0x80] sm:$0xff]
    %v6791 = vld [vmem:[%s6773 + $0x88] sm:$0xff]
    %v6792 = vld [vmem:[%s6773 + $0x90] sm:$0xff]
    %v6793 = vld [vmem:[%s6773 + $0x98] sm:$0xff]
    %v6794 = vld [vmem:[%s6773 + $0xa0] sm:$0xff]
    %v6795 = vld [vmem:[%s6773 + $0xa8] sm:$0xff]
    %v6796 = vld [vmem:[%s6773 + $0xb0] sm:$0xff]
    %v6797 = vld [vmem:[%s6773 + $0xb8] sm:$0xff]
    %v6798 = vld [vmem:[%s6773 + $0xc0] sm:$0xff]
    %v6799 = vld [vmem:[%s6773 + $0xc8] sm:$0xff]
    %v6800 = vld [vmem:[%s6773 + $0xd0] sm:$0xff]
    %v6801 = vld [vmem:[%s6773 + $0xd8] sm:$0xff]
    %v6802 = vld [vmem:[%s6773 + $0xe0] sm:$0xff]
    %v6803 = vld [vmem:[%s6773 + $0xe8] sm:$0xff]
    %v6804 = vld [vmem:[%s6773 + $0xf0] sm:$0xff]
    %v6805 = vld [vmem:[%s6773 + $0xf8] sm:$0xff]
    %v6806 = vld [vmem:[%s6773 + $0x100] sm:$0xff]
    %v6807 = vld [vmem:[%s6773 + $0x108] sm:$0xff]
    %v6808 = vld [vmem:[%s6773 + $0x110] sm:$0xff]
    %v6809 = vld [vmem:[%s6773 + $0x118] sm:$0xff]
    %v6810 = vld [vmem:[%s6773 + $0x120] sm:$0xff]
    %v6811 = vld [vmem:[%s6773 + $0x128] sm:$0xff]
    %v6812 = vld [vmem:[%s6773 + $0x130] sm:$0xff]
    %v6813 = vld [vmem:[%s6773 + $0x138] sm:$0xff]
    %v6814 = vld [vmem:[%s6773 + $0x140] sm:$0xff]
    %v6815 = vld [vmem:[%s6773 + $0x148] sm:$0xff]
    %v6816 = vld [vmem:[%s6773 + $0x150] sm:$0xff]
    %v6817 = vld [vmem:[%s6773 + $0x158] sm:$0xff]
    %v6818 = vld [vmem:[%s6773 + $0x160] sm:$0xff]
    %v6819 = vld [vmem:[%s6773 + $0x168] sm:$0xff]
    %v6820 = vld [vmem:[%s6773 + $0x170] sm:$0xff]
    %v6821 = vld [vmem:[%s6773 + $0x178] sm:$0xff]
    %v6822 = vld [vmem:[%s6773 + $0x180] sm:$0xff]
    %v6823 = vld [vmem:[%s6773 + $0x188] sm:$0xff]
    %v6824 = vld [vmem:[%s6773 + $0x190] sm:$0xff]
    %v6825 = vld [vmem:[%s6773 + $0x198] sm:$0xff]
    %v6826 = vld [vmem:[%s6773 + $0x1a0] sm:$0xff]
    %v6827 = vld [vmem:[%s6773 + $0x1a8] sm:$0xff]
    %v6828 = vld [vmem:[%s6773 + $0x1b0] sm:$0xff]
    %v6829 = vld [vmem:[%s6773 + $0x1b8] sm:$0xff]
    %v6830 = vld [vmem:[%s6773 + $0x1c0] sm:$0xff]
    %v6831 = vld [vmem:[%s6773 + $0x1c8] sm:$0xff]
    %v6832 = vld [vmem:[%s6773 + $0x1d0] sm:$0xff]
    %v6833 = vld [vmem:[%s6773 + $0x1d8] sm:$0xff]
    %v6834 = vld [vmem:[%s6773 + $0x1e0] sm:$0xff]
    %v6835 = vld [vmem:[%s6773 + $0x1e8] sm:$0xff]
    %v6836 = vld [vmem:[%s6773 + $0x1f0] sm:$0xff]
    %v6837 = vld [vmem:[%s6773 + $0x1f8] sm:$0xff]
    %v6848 = vrot.slane %v6769, 2
    %v6849 = vrot.slane %v6698, 2
    %v6850 = vsel %vm458, %v6848, %v6849
    %v6851 = vrot.slane %v6770, 2
    %v6852 = vrot.slane %v6699, 2
    %v6853 = vsel %vm458, %v6851, %v6852
    %v6854 = vrot.slane %v6700, 2
    %v6855 = vsel %vm458, %v6849, %v6854
    %v6856 = vrot.slane %v6701, 2
    %v6857 = vsel %vm458, %v6852, %v6856
    %v6858 = vrot.slane %v6702, 2
    %v6859 = vsel %vm458, %v6854, %v6858
    %v6860 = vrot.slane %v6703, 2
    %v6861 = vsel %vm458, %v6856, %v6860
    %v6862 = vrot.slane %v6771, 2
    %v6863 = vsel %vm458, %v6858, %v6862
    %v6864 = vrot.slane %v6772, 2
    %v6865 = vsel %vm458, %v6860, %v6864
    %6874 = vmatprep.subr.mxu0 %v6775
    %6875 = vmatpush1.msra.mxu0 %v6774
    %6876 = vmatprep.subr.mxu0 %v6777
    %6877 = vmatpush1.msra.mxu0 %v6776
    %6878 = vmatprep.subr.mxu0 %v6779
    %6879 = vmatpush1.msra.mxu0 %v6778
    %6880 = vmatprep.subr.mxu0 %v6781
    %6881 = vmatpush1.msra.mxu0 %v6780
    %6882 = vmatprep.subr.mxu0 %v6783
    %6883 = vmatpush1.msra.mxu0 %v6782
    %6884 = vmatprep.subr.mxu0 %v6785
    %6885 = vmatpush1.msra.mxu0 %v6784
    %6886 = vmatprep.subr.mxu0 %v6787
    %6887 = vmatpush1.msra.mxu0 %v6786
    %6888 = vmatprep.subr.mxu0 %v6789
    %6889 = vmatpush1.msra.mxu0 %v6788
    %6890 = vmatprep.subr.mxu0 %v6791
    %6891 = vmatpush1.msra.mxu0 %v6790
    %6892 = vmatprep.subr.mxu0 %v6793
    %6893 = vmatpush1.msra.mxu0 %v6792
    %6894 = vmatprep.subr.mxu0 %v6795
    %6895 = vmatpush1.msra.mxu0 %v6794
    %6896 = vmatprep.subr.mxu0 %v6797
    %6897 = vmatpush1.msra.mxu0 %v6796
    %6898 = vmatprep.subr.mxu0 %v6799
    %6899 = vmatpush1.msra.mxu0 %v6798
    %6900 = vmatprep.subr.mxu0 %v6801
    %6901 = vmatpush1.msra.mxu0 %v6800
    %6902 = vmatprep.subr.mxu0 %v6803
    %6903 = vmatpush1.msra.mxu0 %v6802
    %6904 = vmatprep.subr.mxu0 %v6805
    %6905 = vmatpush1.msra.mxu0 %v6804
    %6906 = vmatprep.subr.mxu0 %v6807
    %6907 = vmatpush1.msra.mxu0 %v6806
    %6908 = vmatprep.subr.mxu0 %v6809
    %6909 = vmatpush1.msra.mxu0 %v6808
    %6910 = vmatprep.subr.mxu0 %v6811
    %6911 = vmatpush1.msra.mxu0 %v6810
    %6912 = vmatprep.subr.mxu0 %v6813
    %6913 = vmatpush1.msra.mxu0 %v6812
    %6914 = vmatprep.subr.mxu0 %v6815
    %6915 = vmatpush1.msra.mxu0 %v6814
    %6916 = vmatprep.subr.mxu0 %v6817
    %6917 = vmatpush1.msra.mxu0 %v6816
    %6918 = vmatprep.subr.mxu0 %v6819
    %6919 = vmatpush1.msra.mxu0 %v6818
    %6920 = vmatprep.subr.mxu0 %v6821
    %6921 = vmatpush1.msra.mxu0 %v6820
    %6922 = vmatprep.subr.mxu0 %v6823
    %6923 = vmatpush1.msra.mxu0 %v6822
    %6924 = vmatprep.subr.mxu0 %v6825
    %6925 = vmatpush1.msra.mxu0 %v6824
    %6926 = vmatprep.subr.mxu0 %v6827
    %6927 = vmatpush1.msra.mxu0 %v6826
    %6928 = vmatprep.subr.mxu0 %v6829
    %6929 = vmatpush1.msra.mxu0 %v6828
    %6930 = vmatprep.subr.mxu0 %v6831
    %6931 = vmatpush1.msra.mxu0 %v6830
    %6932 = vmatprep.subr.mxu0 %v6833
    %6933 = vmatpush1.msra.mxu0 %v6832
    %6934 = vmatprep.subr.mxu0 %v6835
    %6935 = vmatpush1.msra.mxu0 %v6834
    %6936 = vmatprep.subr.mxu0 %v6837
    %6937 = vmatpush1.msra.mxu0 %v6836
    %6938 = vmatprep.mubr.f32.mxu0 %v6853
    %6939 = vmatmul.mubr.f32.gmra.mrb[0].mxu0 %v6850
    %v6940 = vpop.f32.mrb[0].mxu0
    %v6941 = vadd.f32 0.0, %v6940
    %v6942 = vpop.f32.mrb[0].mxu0
    %v6943 = vadd.f32 0.0, %v6942
    %6944 = vmatprep.mubr.f32.mxu0 %v6857
    %6945 = vmatmul.mubr.f32.gmra.mrb[0].mxu0 %v6855
    %v6946 = vpop.f32.mrb[0].mxu0
    %v6947 = vadd.f32 0.0, %v6946
    %v6948 = vpop.f32.mrb[0].mxu0
    %v6949 = vadd.f32 0.0, %v6948
    %6950 = vmatprep.mubr.f32.mxu0 %v6861
    %6951 = vmatmul.mubr.f32.gmra.mrb[0].mxu0 %v6859
    %v6952 = vpop.f32.mrb[0].mxu0
    %v6953 = vadd.f32 0.0, %v6952
    %v6954 = vpop.f32.mrb[0].mxu0
    %v6955 = vadd.f32 0.0, %v6954
    %6956 = vmatprep.mubr.f32.mxu0 %v6865
    %6957 = vmatmul.mubr.f32.gmra.mrb[0].mxu0 %v6863
    %v6958 = vpop.f32.mrb[0].mxu0
    %v6959 = vadd.f32 0.0, %v6958
    %v6960 = vpop.f32.mrb[0].mxu0
    %v6961 = vadd.f32 0.0, %v6960
    %6962 = vdwg.mxu0
    %6963 = vmatprep.subr.mxu0 %v6706
    %6964 = vmatpush1.msra.mxu0 %v6705
    %6965 = vmatprep.subr.mxu0 %v6708
    %6966 = vmatpush1.msra.mxu0 %v6707
    %6967 = vmatprep.subr.mxu0 %v6710
    %6968 = vmatpush1.msra.mxu0 %v6709
    %6969 = vmatprep.subr.mxu0 %v6712
    %6970 = vmatpush1.msra.mxu0 %v6711
    %6971 = vmatprep.subr.mxu0 %v6714
    %6972 = vmatpush1.msra.mxu0 %v6713
    %6973 = vmatprep.subr.mxu0 %v6716
    %6974 = vmatpush1.msra.mxu0 %v6715
    %6975 = vmatprep.subr.mxu0 %v6718
    %6976 = vmatpush1.msra.mxu0 %v6717
    %6977 = vmatprep.subr.mxu0 %v6720
    %6978 = vmatpush1.msra.mxu0 %v6719
    %6979 = vmatprep.subr.mxu0 %v6722
    %6980 = vmatpush1.msra.mxu0 %v6721
    %6981 = vmatprep.subr.mxu0 %v6724
    %6982 = vmatpush1.msra.mxu0 %v6723
    %6983 = vmatprep.subr.mxu0 %v6726
    %6984 = vmatpush1.msra.mxu0 %v6725
    %6985 = vmatprep.subr.mxu0 %v6728
    %6986 = vmatpush1.msra.mxu0 %v6727
    %6987 = vmatprep.subr.mxu0 %v6730
    %6988 = vmatpush1.msra.mxu0 %v6729
    %6989 = vmatprep.subr.mxu0 %v6732
    %6990 = vmatpush1.msra.mxu0 %v6731
    %6991 = vmatprep.subr.mxu0 %v6734
    %6992 = vmatpush1.msra.mxu0 %v6733
    %6993 = vmatprep.subr.mxu0 %v6736
    %6994 = vmatpush1.msra.mxu0 %v6735
    %6995 = vmatprep.subr.mxu0 %v6738
    %6996 = vmatpush1.msra.mxu0 %v6737
    %6997 = vmatprep.subr.mxu0 %v6740
    %6998 = vmatpush1.msra.mxu0 %v6739
    %6999 = vmatprep.subr.mxu0 %v6742
    %7000 = vmatpush1.msra.mxu0 %v6741
    %7001 = vmatprep.subr.mxu0 %v6744
    %7002 = vmatpush1.msra.mxu0 %v6743
    %7003 = vmatprep.subr.mxu0 %v6746
    %7004 = vmatpush1.msra.mxu0 %v6745
    %7005 = vmatprep.subr.mxu0 %v6748
    %7006 = vmatpush1.msra.mxu0 %v6747
    %7007 = vmatprep.subr.mxu0 %v6750
    %7008 = vmatpush1.msra.mxu0 %v6749
    %7009 = vmatprep.subr.mxu0 %v6752
    %7010 = vmatpush1.msra.mxu0 %v6751
    %7011 = vmatprep.subr.mxu0 %v6754
    %7012 = vmatpush1.msra.mxu0 %v6753
    %7013 = vmatprep.subr.mxu0 %v6756
    %7014 = vmatpush1.msra.mxu0 %v6755
    %7015 = vmatprep.subr.mxu0 %v6758
    %7016 = vmatpush1.msra.mxu0 %v6757
    %7017 = vmatprep.subr.mxu0 %v6760
    %7018 = vmatpush1.msra.mxu0 %v6759
    %7019 = vmatprep.subr.mxu0 %v6762
    %7020 = vmatpush1.msra.mxu0 %v6761
    %7021 = vmatprep.subr.mxu0 %v6764
    %7022 = vmatpush1.msra.mxu0 %v6763
    %7023 = vmatprep.subr.mxu0 %v6766
    %7024 = vmatpush1.msra.mxu0 %v6765
    %7025 = vmatprep.subr.mxu0 %v6768
    %7026 = vmatpush1.msra.mxu0 %v6767
    %7027 = vmatprep.mubr.f32.mxu0 %v6697
    %7028 = vmatmul.mubr.f32.gmra.mrb[0].mxu0 %v6696
    %v7029 = vpop.f32.mrb[0].mxu0
    %v7030 = vadd.f32 %v6941, %v7029
    %v7031 = vpop.f32.mrb[0].mxu0
    %v7032 = vadd.f32 %v6943, %v7031
    %7033 = vmatprep.mubr.f32.mxu0 %v6699
    %7034 = vmatmul.mubr.f32.gmra.mrb[0].mxu0 %v6698
    %v7035 = vpop.f32.mrb[0].mxu0
    %v7036 = vadd.f32 %v6947, %v7035
    %v7037 = vpop.f32.mrb[0].mxu0
    %v7038 = vadd.f32 %v6949, %v7037
    %7039 = vmatprep.mubr.f32.mxu0 %v6701
    %7040 = vmatmul.mubr.f32.gmra.mrb[0].mxu0 %v6700
    %v7041 = vpop.f32.mrb[0].mxu0
    %v7042 = vadd.f32 %v6953, %v7041
    %v7043 = vpop.f32.mrb[0].mxu0
    %v7044 = vadd.f32 %v6955, %v7043
    %7045 = vmatprep.mubr.f32.mxu0 %v6703
    %7046 = vmatmul.mubr.f32.gmra.mrb[0].mxu0 %v6702
    %v7047 = vpop.f32.mrb[0].mxu0
    %v7048 = vadd.f32 %v6959, %v7047
    %v7049 = vpop.f32.mrb[0].mxu0
    %v7050 = vadd.f32 %v6961, %v7049
    %7051 = vdwg.mxu0
    %v7052 = vld [vmem:[#allocation2] sm:$0xf0]
    %v7053 = vld [vmem:[#allocation2 + $0x8] sm:$0xf0]
    %v7054 = vld [vmem:[#allocation2 + $0x40] sm:$0xf]
    %v7055 = vld [vmem:[#allocation2 + $0x48] sm:$0xf]
    %s7056 = scalar_lea.vmem [#allocation24], 5632
    %v7057 = vld [vmem:[%s7056] sm:$0xff]
    %v7058 = vld [vmem:[%s7056 + $0x8] sm:$0xff]
    %v7059 = vld [vmem:[%s7056 + $0x10] sm:$0xff]
    %v7060 = vld [vmem:[%s7056 + $0x18] sm:$0xff]
    %v7061 = vld [vmem:[%s7056 + $0x20] sm:$0xff]
    %v7062 = vld [vmem:[%s7056 + $0x28] sm:$0xff]
    %v7063 = vld [vmem:[%s7056 + $0x30] sm:$0xff]
    %v7064 = vld [vmem:[%s7056 + $0x38] sm:$0xff]
    %v7065 = vld [vmem:[%s7056 + $0x40] sm:$0xff]
    %v7066 = vld [vmem:[%s7056 + $0x48] sm:$0xff]
    %v7067 = vld [vmem:[%s7056 + $0x50] sm:$0xff]
    %v7068 = vld [vmem:[%s7056 + $0x58] sm:$0xff]
    %v7069 = vld [vmem:[%s7056 + $0x60] sm:$0xff]
    %v7070 = vld [vmem:[%s7056 + $0x68] sm:$0xff]
    %v7071 = vld [vmem:[%s7056 + $0x70] sm:$0xff]
    %v7072 = vld [vmem:[%s7056 + $0x78] sm:$0xff]
    %v7073 = vld [vmem:[%s7056 + $0x80] sm:$0xff]
    %v7074 = vld [vmem:[%s7056 + $0x88] sm:$0xff]
    %v7075 = vld [vmem:[%s7056 + $0x90] sm:$0xff]
    %v7076 = vld [vmem:[%s7056 + $0x98] sm:$0xff]
    %v7077 = vld [vmem:[%s7056 + $0xa0] sm:$0xff]
    %v7078 = vld [vmem:[%s7056 + $0xa8] sm:$0xff]
    %v7079 = vld [vmem:[%s7056 + $0xb0] sm:$0xff]
    %v7080 = vld [vmem:[%s7056 + $0xb8] sm:$0xff]
    %v7081 = vld [vmem:[%s7056 + $0xc0] sm:$0xff]
    %v7082 = vld [vmem:[%s7056 + $0xc8] sm:$0xff]
    %v7083 = vld [vmem:[%s7056 + $0xd0] sm:$0xff]
    %v7084 = vld [vmem:[%s7056 + $0xd8] sm:$0xff]
    %v7085 = vld [vmem:[%s7056 + $0xe0] sm:$0xff]
    %v7086 = vld [vmem:[%s7056 + $0xe8] sm:$0xff]
    %v7087 = vld [vmem:[%s7056 + $0xf0] sm:$0xff]
    %v7088 = vld [vmem:[%s7056 + $0xf8] sm:$0xff]
    %v7089 = vld [vmem:[%s7056 + $0x100] sm:$0xff]
    %v7090 = vld [vmem:[%s7056 + $0x108] sm:$0xff]
    %v7091 = vld [vmem:[%s7056 + $0x110] sm:$0xff]
    %v7092 = vld [vmem:[%s7056 + $0x118] sm:$0xff]
    %v7093 = vld [vmem:[%s7056 + $0x120] sm:$0xff]
    %v7094 = vld [vmem:[%s7056 + $0x128] sm:$0xff]
    %v7095 = vld [vmem:[%s7056 + $0x130] sm:$0xff]
    %v7096 = vld [vmem:[%s7056 + $0x138] sm:$0xff]
    %v7097 = vld [vmem:[%s7056 + $0x140] sm:$0xff]
    %v7098 = vld [vmem:[%s7056 + $0x148] sm:$0xff]
    %v7099 = vld [vmem:[%s7056 + $0x150] sm:$0xff]
    %v7100 = vld [vmem:[%s7056 + $0x158] sm:$0xff]
    %v7101 = vld [vmem:[%s7056 + $0x160] sm:$0xff]
    %v7102 = vld [vmem:[%s7056 + $0x168] sm:$0xff]
    %v7103 = vld [vmem:[%s7056 + $0x170] sm:$0xff]
    %v7104 = vld [vmem:[%s7056 + $0x178] sm:$0xff]
    %v7105 = vld [vmem:[%s7056 + $0x180] sm:$0xff]
    %v7106 = vld [vmem:[%s7056 + $0x188] sm:$0xff]
    %v7107 = vld [vmem:[%s7056 + $0x190] sm:$0xff]
    %v7108 = vld [vmem:[%s7056 + $0x198] sm:$0xff]
    %v7109 = vld [vmem:[%s7056 + $0x1a0] sm:$0xff]
    %v7110 = vld [vmem:[%s7056 + $0x1a8] sm:$0xff]
    %v7111 = vld [vmem:[%s7056 + $0x1b0] sm:$0xff]
    %v7112 = vld [vmem:[%s7056 + $0x1b8] sm:$0xff]
    %v7113 = vld [vmem:[%s7056 + $0x1c0] sm:$0xff]
    %v7114 = vld [vmem:[%s7056 + $0x1c8] sm:$0xff]
    %v7115 = vld [vmem:[%s7056 + $0x1d0] sm:$0xff]
    %v7116 = vld [vmem:[%s7056 + $0x1d8] sm:$0xff]
    %v7117 = vld [vmem:[%s7056 + $0x1e0] sm:$0xff]
    %v7118 = vld [vmem:[%s7056 + $0x1e8] sm:$0xff]
    %v7119 = vld [vmem:[%s7056 + $0x1f0] sm:$0xff]
    %v7120 = vld [vmem:[%s7056 + $0x1f8] sm:$0xff]
    %v7125 = vrot.slane %v7052, 4
    %v7126 = vrot.slane %v6698, 4
    %v7127 = vsel %vm736, %v7125, %v7126
    %v7128 = vrot.slane %v7053, 4
    %v7129 = vrot.slane %v6699, 4
    %v7130 = vsel %vm736, %v7128, %v7129
    %v7131 = vrot.slane %v6700, 4
    %v7132 = vsel %vm736, %v7126, %v7131
    %v7133 = vrot.slane %v6701, 4
    %v7134 = vsel %vm736, %v7129, %v7133
    %v7135 = vrot.slane %v6702, 4
    %v7136 = vsel %vm736, %v7131, %v7135
    %v7137 = vrot.slane %v6703, 4
    %v7138 = vsel %vm736, %v7133, %v7137
    %v7139 = vrot.slane %v7054, 4
    %v7140 = vsel %vm736, %v7135, %v7139
    %v7141 = vrot.slane %v7055, 4
    %v7142 = vsel %vm736, %v7137, %v7141
    %7151 = vmatprep.subr.mxu0 %v7058
    %7152 = vmatpush1.msra.mxu0 %v7057
    %7153 = vmatprep.subr.mxu0 %v7060
    %7154 = vmatpush1.msra.mxu0 %v7059
    %7155 = vmatprep.subr.mxu0 %v7062
    %7156 = vmatpush1.msra.mxu0 %v7061
    %7157 = vmatprep.subr.mxu0 %v7064
    %7158 = vmatpush1.msra.mxu0 %v7063
    %7159 = vmatprep.subr.mxu0 %v7066
    %7160 = vmatpush1.msra.mxu0 %v7065
    %7161 = vmatprep.subr.mxu0 %v7068
    %7162 = vmatpush1.msra.mxu0 %v7067
    %7163 = vmatprep.subr.mxu0 %v7070
    %7164 = vmatpush1.msra.mxu0 %v7069
    %7165 = vmatprep.subr.mxu0 %v7072
    %7166 = vmatpush1.msra.mxu0 %v7071
    %7167 = vmatprep.subr.mxu0 %v7074
    %7168 = vmatpush1.msra.mxu0 %v7073
    %7169 = vmatprep.subr.mxu0 %v7076
    %7170 = vmatpush1.msra.mxu0 %v7075
    %7171 = vmatprep.subr.mxu0 %v7078
    %7172 = vmatpush1.msra.mxu0 %v7077
    %7173 = vmatprep.subr.mxu0 %v7080
    %7174 = vmatpush1.msra.mxu0 %v7079
    %7175 = vmatprep.subr.mxu0 %v7082
    %7176 = vmatpush1.msra.mxu0 %v7081
    %7177 = vmatprep.subr.mxu0 %v7084
    %7178 = vmatpush1.msra.mxu0 %v7083
    %7179 = vmatprep.subr.mxu0 %v7086
    %7180 = vmatpush1.msra.mxu0 %v7085
    %7181 = vmatprep.subr.mxu0 %v7088
    %7182 = vmatpush1.msra.mxu0 %v7087
    %7183 = vmatprep.subr.mxu0 %v7090
    %7184 = vmatpush1.msra.mxu0 %v7089
    %7185 = vmatprep.subr.mxu0 %v7092
    %7186 = vmatpush1.msra.mxu0 %v7091
    %7187 = vmatprep.subr.mxu0 %v7094
    %7188 = vmatpush1.msra.mxu0 %v7093
    %7189 = vmatprep.subr.mxu0 %v7096
    %7190 = vmatpush1.msra.mxu0 %v7095
    %7191 = vmatprep.subr.mxu0 %v7098
    %7192 = vmatpush1.msra.mxu0 %v7097
    %7193 = vmatprep.subr.mxu0 %v7100
    %7194 = vmatpush1.msra.mxu0 %v7099
    %7195 = vmatprep.subr.mxu0 %v7102
    %7196 = vmatpush1.msra.mxu0 %v7101
    %7197 = vmatprep.subr.mxu0 %v7104
    %7198 = vmatpush1.msra.mxu0 %v7103
    %7199 = vmatprep.subr.mxu0 %v7106
    %7200 = vmatpush1.msra.mxu0 %v7105
    %7201 = vmatprep.subr.mxu0 %v7108
    %7202 = vmatpush1.msra.mxu0 %v7107
    %7203 = vmatprep.subr.mxu0 %v7110
    %7204 = vmatpush1.msra.mxu0 %v7109
    %7205 = vmatprep.subr.mxu0 %v7112
    %7206 = vmatpush1.msra.mxu0 %v7111
    %7207 = vmatprep.subr.mxu0 %v7114
    %7208 = vmatpush1.msra.mxu0 %v7113
    %7209 = vmatprep.subr.mxu0 %v7116
    %7210 = vmatpush1.msra.mxu0 %v7115
    %7211 = vmatprep.subr.mxu0 %v7118
    %7212 = vmatpush1.msra.mxu0 %v7117
    %7213 = vmatprep.subr.mxu0 %v7120
    %7214 = vmatpush1.msra.mxu0 %v7119
    %7215 = vmatprep.mubr.f32.mxu0 %v7130
    %7216 = vmatmul.mubr.f32.gmra.mrb[0].mxu0 %v7127
    %v7217 = vpop.f32.mrb[0].mxu0
    %v7218 = vadd.f32 0.0, %v7217
    %v7219 = vpop.f32.mrb[0].mxu0
    %v7220 = vadd.f32 0.0, %v7219
    %7221 = vmatprep.mubr.f32.mxu0 %v7134
    %7222 = vmatmul.mubr.f32.gmra.mrb[0].mxu0 %v7132
    %v7223 = vpop.f32.mrb[0].mxu0
    %v7224 = vadd.f32 0.0, %v7223
    %v7225 = vpop.f32.mrb[0].mxu0
    %v7226 = vadd.f32 0.0, %v7225
    %7227 = vmatprep.mubr.f32.mxu0 %v7138
    %7228 = vmatmul.mubr.f32.gmra.mrb[0].mxu0 %v7136
    %v7229 = vpop.f32.mrb[0].mxu0
    %v7230 = vadd.f32 0.0, %v7229
    %v7231 = vpop.f32.mrb[0].mxu0
    %v7232 = vadd.f32 0.0, %v7231
    %7233 = vmatprep.mubr.f32.mxu0 %v7142
    %7234 = vmatmul.mubr.f32.gmra.mrb[0].mxu0 %v7140
    %v7235 = vpop.f32.mrb[0].mxu0
    %v7236 = vadd.f32 0.0, %v7235
    %v7237 = vpop.f32.mrb[0].mxu0
    %v7238 = vadd.f32 0.0, %v7237
    %7239 = vdwg.mxu0
    %v7240 = vadd.f32 %v7030, %v7218
    %v7241 = vadd.f32 %v7032, %v7220
    %v7242 = vadd.f32 %v7036, %v7224
    %v7243 = vadd.f32 %v7038, %v7226
    %v7244 = vadd.f32 %v7042, %v7230
    %v7245 = vadd.f32 %v7044, %v7232
    %v7246 = vadd.f32 %v7048, %v7236
    %v7247 = vadd.f32 %v7050, %v7238
    %s7248 = scalar_lea.vmem [#allocation26], 6
    %v7249 = vld [vmem:[%s7248] sm:$0x3]
    %v7251 = vlaneseq
    %v7252 = vshrl.u32 %v7251, 7
    %v7253 = vsub.s32 0, %v7252
    %v7254 = vrot.slane %v7249, %v7253
    %v7255 = vlaneseq
    %v7256 = vshrl.u32 %v7255, 7
    %v7257 = vsub.s32 1, %v7256
    %v7258 = vrot.slane %v7249, %v7257
    %v7261 = vadd.f32 %v7240, %v7254
    %v7262 = vadd.f32 %v7241, %v7258
    %v7263 = vadd.f32 %v7242, %v7254
    %v7264 = vadd.f32 %v7243, %v7258
    %v7265 = vadd.f32 %v7244, %v7254
    %v7266 = vadd.f32 %v7245, %v7258
    %v7267 = vadd.f32 %v7246, %v7254
    %v7268 = vadd.f32 %v7247, %v7258
    %v7269 = vmax.f32 %v7261, 0.0
    %v7270 = vmax.f32 %v7262, 0.0
    %v7271 = vmax.f32 %v7263, 0.0
    %v7272 = vmax.f32 %v7264, 0.0
    %v7273 = vmax.f32 %v7265, 0.0
    %v7274 = vmax.f32 %v7266, 0.0
    %v7275 = vmax.f32 %v7267, 0.0
    %v7276 = vmax.f32 %v7268, 0.0
    %7277 = vst [vmem:[#allocation27] sm:$0xff] %v7269
    %7278 = vst [vmem:[#allocation27 + $0x8] sm:$0xff] %v7270
    %7279 = vst [vmem:[#allocation27 + $0x10] sm:$0xff] %v7271
    %7280 = vst [vmem:[#allocation27 + $0x18] sm:$0xff] %v7272
    %7281 = vst [vmem:[#allocation27 + $0x20] sm:$0xff] %v7273
    %7282 = vst [vmem:[#allocation27 + $0x28] sm:$0xff] %v7274
    %7283 = vst [vmem:[#allocation27 + $0x30] sm:$0xff] %v7275
    %7284 = vst [vmem:[#allocation27 + $0x38] sm:$0xff] %v7276
    // Predicated region
    $region122: #{vae5_forward.1} parent=1 // pred_check
      _
    $region123: #{vae5_forward.1} parent=1 // pred_check_branch
      %7286 = sbr.rel (0) target = $region125
    $region124: #{vae5_forward.1} parent=1 // pred_region
      %s7288 = ssub.s32 1024, 1024
      %7289 = vsyncadd [#allocation5], %s7288
      %s7290 = sshll.u32 [#allocation27], 4
      %s7291 = int_to_ptr.vmem [resolvable:$true] %s7290
      %7296 = dma.vmem_to_hbm [thread:$0]  %s7291, 1024, %s15, [#allocation5], 256, 256, 16
    $region125: #{vae5_forward.1} parent=1 // pred_fallthru
      _
    // Predicated region
    $region126: #{vae5_forward.1} parent=1 // pred_check
      _
    $region127: #{vae5_forward.1} parent=1 // pred_check_branch
      %7298 = sbr.rel (0) target = $region129
    $region128: #{vae5_forward.1} parent=1 // pred_region
      %s7300 = ssub.s32 512, 512
      %7301 = vsyncadd [#allocation29], %s7300
      %s7302 = sshll.u32 [#allocation28], 4
      %s7303 = int_to_ptr.vmem [resolvable:$true] %s7302
      %7308 = dma.vmem_to_hbm [thread:$0]  %s7303, 512, %s16, [#allocation29], 128, 128, 8
    $region129: #{vae5_forward.1} parent=1 // pred_fallthru
      _
    // Predicated region
    $region130: #{vae5_forward.1} parent=1 // pred_check
      _
    $region131: #{vae5_forward.1} parent=1 // pred_check_branch
      %7310 = sbr.rel (0) target = $region133
    $region132: #{vae5_forward.1} parent=1 // pred_region
      %s7312 = ssub.s32 512, 512
      %7313 = vsyncadd [#allocation29], %s7312
      %s7314 = sshll.u32 [#allocation30], 4
      %s7315 = int_to_ptr.vmem [resolvable:$true] %s7314
      %7320 = dma.vmem_to_hbm [thread:$0]  %s7315, 512, %s17, [#allocation29], 128, 128, 8
    $region133: #{vae5_forward.1} parent=1 // pred_fallthru
      _
    // Predicated region
    $region134: #{vae5_forward.1} parent=1 // pred_check
      _
    $region135: #{vae5_forward.1} parent=1 // pred_check_branch
      %7322 = sbr.rel (0) target = $region137
    $region136: #{vae5_forward.1} parent=1 // pred_region
      %7323 = dma.done [#allocation5], 1024
    $region137: #{vae5_forward.1} parent=1 // pred_fallthru
      _
    // Predicated region
    $region138: #{vae5_forward.1} parent=1 // pred_check
      _
    $region139: #{vae5_forward.1} parent=1 // pred_check_branch
      %7325 = sbr.rel (0) target = $region141
    $region140: #{vae5_forward.1} parent=1 // pred_region
      %7326 = dma.done [#allocation29], 512
    $region141: #{vae5_forward.1} parent=1 // pred_fallthru
      _
    // Predicated region
    $region142: #{vae5_forward.1} parent=1 // pred_check
      _
    $region143: #{vae5_forward.1} parent=1 // pred_check_branch
      %7328 = sbr.rel (0) target = $region145
    $region144: #{vae5_forward.1} parent=1 // pred_region
      %7329 = dma.done [#allocation29], 512
    $region145: #{vae5_forward.1} parent=1 // pred_fallthru
      _
    %7330 = vsyncpa [#allocation4], 1
    %7331 = vsyncpa [#allocation7], 1
    %7332 = vsyncpa [#allocation10], 1
    %7333 = vsyncpa [#allocation13], 1
    %7334 = vsyncpa [#allocation16], 1
    %7335 = vsyncpa [#allocation19], 1
    %7336 = vsyncpa [#allocation22], 1
    %7337 = vsyncpa [#allocation25], 1
    %7338 = vsyncpa [#allocation5], 1
    %7339 = vsyncpa [#allocation29], 1

</llo_original>
